<compile_context>
chip_gen: v7x
topology: tpu7x:2x2x1
jax: 0.10.0
libtpu: 0.0.40
codegen_flags: <defaults>
</compile_context>

<pallas_src>
import jax
import jax.numpy as jnp
import numpy as np
from jax.experimental import pallas as pl
from jax.experimental.pallas import tpu as pltpu

_PREC = jax.lax.Precision.HIGHEST   # reference check only
_LANE = 128


def _ceil_to(v, m):
    return ((v + m - 1) // m) * m


def _pad_axis(a, axis, target):
    if a.shape[axis] == target:
        return a
    widths = [(0, 0)] * a.ndim
    widths[axis] = (0, target - a.shape[axis])
    return jnp.pad(a, widths)


def _pick_batch_block(n, hw, c_max):
    # Fold as many images as practical into one grid step so the matmul M
    # dimension (bb*H*W) is large, while keeping the per-step activation
    # footprint comfortably inside VMEM (v7x has only 64 MiB per TensorCore).
    budget_rows = max(hw, (8 * 1024 * 1024) // (4 * c_max))
    target_rows = min(4096, budget_rows)
    bb = 1
    for d in range(1, n + 1):
        if n % d == 0 and d * hw <= target_rows:
            bb = d
    return bb


def _bottleneck_kernel(x_ref, s1_ref, b1_ref,
                       w1_ref, cb1_ref, s2_ref, b2_ref,
                       w2_ref, cb2_ref, s3_ref, b3_ref,
                       w3_ref, cb3_ref,
                       wd_ref, bd_ref,
                       out_ref):
    B, H, W, Cin = x_ref.shape        # channel dims already padded to 128*
    P = w1_ref.shape[1]
    Cout = w3_ref.shape[1]
    M = B * H * W                      # batch folded into the matmul M dim

    x = x_ref[...].reshape(M, Cin)                          # f32, lane-dense

    # relu(bn1(x))  -- f32 elementwise on the VPU
    t0 = jnp.maximum(x * s1_ref[...] + b1_ref[...], 0.0)

    # relu(bn2(conv1(.)))  -- 1x1 conv == bf16 matmul, f32 accumulation
    c1 = jnp.dot(t0.astype(jnp.bfloat16), w1_ref[...],
                 preferred_element_type=jnp.float32) + cb1_ref[...]
    t1 = jnp.maximum(c1 * s2_ref[...] + b2_ref[...], 0.0)    # (M, P) f32

    # conv2: 3x3, padding=1, stride=1.  Zero-pad the bf16 image once, then
    # 9 shifted (M,P)x(P,P) bf16 matmuls with f32 accumulation.
    # (The shifts could also be produced with pltpu.roll on the XLU to cut
    # the padded-image copy traffic further; the padded-slice form is kept.)
    t1_bf = t1.astype(jnp.bfloat16).reshape(B, H, W, P)
    zr = jnp.zeros((B, 1, W, P), jnp.bfloat16)
    t1p = jnp.concatenate([zr, t1_bf, zr], axis=1)           # (B, H+2, W, P)
    zc = jnp.zeros((B, H + 2, 1, P), jnp.bfloat16)
    t1p = jnp.concatenate([zc, t1p, zc], axis=2)             # (B, H+2, W+2, P)

    acc = None
    for t in range(9):
        dy, dx = divmod(t, 3)
        patch = t1p[:, dy:dy + H, dx:dx + W, :].reshape(M, P)
        contrib = jnp.dot(patch, w2_ref[t],
                          preferred_element_type=jnp.float32)
        acc = contrib if acc is None else acc + contrib
    acc = acc + cb2_ref[...]

    # relu(bn3(.))
    t2 = jnp.maximum(acc * s3_ref[...] + b3_ref[...], 0.0)

    # conv3: 1x1, planes -> 2*planes
    c3 = jnp.dot(t2.astype(jnp.bfloat16), w3_ref[...],
                 preferred_element_type=jnp.float32) + cb3_ref[...]

    # downsample(x): 1x1 conv applied to the raw input
    res = jnp.dot(x.astype(jnp.bfloat16), wd_ref[...],
                  preferred_element_type=jnp.float32) + bd_ref[...]

    out_ref[...] = (c3 + res).reshape(B, H, W, Cout)


def bottleneck_forward(x_nchw, params):
    x = jnp.transpose(x_nchw, (0, 2, 3, 1)).astype(jnp.float32)   # NCHW->NHWC
    N, H, W, Cin = x.shape
    P = params["w1"].shape[1]
    Cout = params["w3"].shape[1]

    # Lane-dense channel padding (multiples of 128).  On v6e, multiples of
    # 256 on the contraction/output dims would fill the 2x256x256 MXU fully.
    cin_p = _ceil_to(Cin, _LANE)
    p_p = _ceil_to(P, _LANE)
    cout_p = _ceil_to(Cout, _LANE)

    bf = jnp.bfloat16
    xp = _pad_axis(x, 3, cin_p)
    s1 = _pad_axis(params["s1"], 1, cin_p)
    b1 = _pad_axis(params["b1"], 1, cin_p)
    w1 = _pad_axis(_pad_axis(params["w1"], 0, cin_p), 1, p_p).astype(bf)
    cb1 = _pad_axis(params["cb1"], 1, p_p)
    s2 = _pad_axis(params["s2"], 1, p_p)
    b2 = _pad_axis(params["b2"], 1, p_p)
    w2 = _pad_axis(_pad_axis(params["w2"], 1, p_p), 2, p_p).astype(bf)
    cb2 = _pad_axis(params["cb2"], 1, p_p)
    s3 = _pad_axis(params["s3"], 1, p_p)
    b3 = _pad_axis(params["b3"], 1, p_p)
    w3 = _pad_axis(_pad_axis(params["w3"], 0, p_p), 1, cout_p).astype(bf)
    cb3 = _pad_axis(params["cb3"], 1, cout_p)
    wd = _pad_axis(_pad_axis(params["wd"], 0, cin_p), 1, cout_p).astype(bf)
    bd = _pad_axis(params["bd"], 1, cout_p)

    bb = _pick_batch_block(N, H * W, max(cin_p, p_p, cout_p))
    grid = (N // bb,)

    args = [xp, s1, b1, w1, cb1, s2, b2, w2, cb2, s3, b3, w3, cb3, wd, bd]

    def full_spec(a):
        nd = a.ndim
        return pl.BlockSpec(a.shape, lambda n, _nd=nd: (0,) * _nd)

    in_specs = [pl.BlockSpec((bb, H, W, cin_p), lambda n: (n, 0, 0, 0))]
    in_specs += [full_spec(a) for a in args[1:]]

    flops = 2 * N * H * W * (cin_p * p_p + 9 * p_p * p_p
                             + p_p * cout_p + cin_p * cout_p)
    bytes_accessed = sum(int(np.prod(a.shape)) * a.dtype.itemsize for a in args)
    bytes_accessed += N * H * W * cout_p * 4

    out = pl.pallas_call(
        _bottleneck_kernel,
        out_shape=jax.ShapeDtypeStruct((N, H, W, cout_p), jnp.float32),
        grid_spec=pltpu.PrefetchScalarGridSpec(
            num_scalar_prefetch=0,
            grid=grid,
            in_specs=in_specs,
            out_specs=pl.BlockSpec((bb, H, W, cout_p), lambda n: (n, 0, 0, 0)),
        ),
        compiler_params=pltpu.CompilerParams(
            # Batch blocks are fully independent -> megacore-shardable (v7x).
            dimension_semantics=("parallel",),
            # Per-step footprint here is ~2 MiB, well under the smallest
            # (v7x, 64 MiB) VMEM; re-derive / row-tile for large H, W, C.
            vmem_limit_bytes=32 * 1024 * 1024,
        ),
        cost_estimate=pl.CostEstimate(
            flops=flops, transcendentals=0, bytes_accessed=bytes_accessed),
    )(*args)

    out = out[..., :Cout]
    return jnp.transpose(out, (0, 3, 1, 2))                       # NHWC->NCHW


def init_params(key, inplanes, planes, eps=1e-5):
    cout = planes * 2
    ks = jax.random.split(key, 20)

    def bn(kg, kb, km, kv, c):
        gamma = jax.random.uniform(kg, (c,), minval=0.5, maxval=1.5)
        beta = 0.1 * jax.random.normal(kb, (c,))
        mean = 0.1 * jax.random.normal(km, (c,))
        var = jax.random.uniform(kv, (c,), minval=0.5, maxval=1.5)
        scale = gamma / jnp.sqrt(var + eps)
        bias = beta - mean * scale
        return (scale.reshape(1, c).astype(jnp.float32),
                bias.reshape(1, c).astype(jnp.float32))

    s1, b1 = bn(ks[0], ks[1], ks[2], ks[3], inplanes)
    s2, b2 = bn(ks[4], ks[5], ks[6], ks[7], planes)
    s3, b3 = bn(ks[8], ks[9], ks[10], ks[11], planes)

    # conv weights stored as (Cin, Cout); conv2 as (9, Cin, Cout) (kh,kw
    # flattened, HWIO order).
    w1 = 0.3 * jax.random.normal(ks[12], (inplanes, planes), dtype=jnp.float32)
    cb1 = 0.05 * jax.random.normal(ks[13], (1, planes), dtype=jnp.float32)
    w2 = 0.2 * jax.random.normal(ks[14], (9, planes, planes), dtype=jnp.float32)
    cb2 = 0.05 * jax.random.normal(ks[15], (1, planes), dtype=jnp.float32)
    w3 = 0.3 * jax.random.normal(ks[16], (planes, cout), dtype=jnp.float32)
    cb3 = 0.05 * jax.random.normal(ks[17], (1, cout), dtype=jnp.float32)
    wd = 0.3 * jax.random.normal(ks[18], (inplanes, cout), dtype=jnp.float32)
    bd = 0.05 * jax.random.normal(ks[19], (1, cout), dtype=jnp.float32)

    return dict(s1=s1, b1=b1, s2=s2, b2=b2, s3=s3, b3=b3,
                w1=w1, cb1=cb1, w2=w2, cb2=cb2, w3=w3, cb3=cb3,
                wd=wd, bd=bd)


def reference(x_nchw, p, planes):
    x = jnp.transpose(x_nchw, (0, 2, 3, 1)).astype(jnp.float32)

    def bn_relu(v, s, b):
        return jnp.maximum(v * s[0] + b[0], 0.0)

    t0 = bn_relu(x, p["s1"], p["b1"])
    c1 = jnp.einsum("nhwc,cp->nhwp", t0, p["w1"], precision=_PREC) + p["cb1"][0]
    t1 = bn_relu(c1, p["s2"], p["b2"])
    w2 = p["w2"].reshape(3, 3, planes, planes)                    # HWIO
    c2 = jax.lax.conv_general_dilated(
        t1, w2, window_strides=(1, 1), padding="SAME",
        dimension_numbers=("NHWC", "HWIO", "NHWC"),
        precision=_PREC) + p["cb2"][0]
    t2 = bn_relu(c2, p["s3"], p["b3"])
    c3 = jnp.einsum("nhwp,pq->nhwq", t2, p["w3"], precision=_PREC) + p["cb3"][0]
    res = jnp.einsum("nhwc,cq->nhwq", x, p["wd"], precision=_PREC) + p["bd"][0]
    out = c3 + res
    return jnp.transpose(out, (0, 3, 1, 2))


if __name__ == "__main__":
    N, Cin, H, W = 2, 4, 16, 16     # x is NCHW like the PyTorch module
    planes = 4                       # -> out channels = planes * 2 = 8
    key = jax.random.PRNGKey(0)
    kx, kp = jax.random.split(key)
    x = jax.random.normal(kx, (N, Cin, H, W), dtype=jnp.float32)
    params = init_params(kp, Cin, planes)

    out = bottleneck_forward(x, params)
    out = jax.block_until_ready(out)

    ref = reference(x, params, planes)
    # bf16 MXU operands (f32 accumulation) vs the f32-HIGHEST reference.
    np.testing.assert_allclose(np.asarray(out), np.asarray(ref),
                               rtol=2e-2, atol=2e-2)
    print("KERNEL_OK")
</pallas_src>

<mosaic_0001>
module attributes {stable_mosaic.version = 11 : i64} {
  func.func @_bottleneck_kernel(%arg0: i32, %arg1: memref<2x16x16x128xf32, #tpu.memory_space<vmem>>, %arg2: memref<1x128xf32, #tpu.memory_space<vmem>>, %arg3: memref<1x128xf32, #tpu.memory_space<vmem>>, %arg4: memref<128x128xbf16, #tpu.memory_space<vmem>>, %arg5: memref<1x128xf32, #tpu.memory_space<vmem>>, %arg6: memref<1x128xf32, #tpu.memory_space<vmem>>, %arg7: memref<1x128xf32, #tpu.memory_space<vmem>>, %arg8: memref<9x128x128xbf16, #tpu.memory_space<vmem>>, %arg9: memref<1x128xf32, #tpu.memory_space<vmem>>, %arg10: memref<1x128xf32, #tpu.memory_space<vmem>>, %arg11: memref<1x128xf32, #tpu.memory_space<vmem>>, %arg12: memref<128x128xbf16, #tpu.memory_space<vmem>>, %arg13: memref<1x128xf32, #tpu.memory_space<vmem>>, %arg14: memref<128x128xbf16, #tpu.memory_space<vmem>>, %arg15: memref<1x128xf32, #tpu.memory_space<vmem>>, %arg16: memref<2x16x16x128xf32, #tpu.memory_space<vmem>>) attributes {dimension_semantics = [#tpu.dimension_semantics<parallel>], iteration_bounds = array<i64: 1>, scalar_prefetch = 0 : i64, scratch_operands = 0 : i64, tpu.core_type = #tpu.core_type<tc>, window_params = [{transform_indices = @transform_0, window_bounds = array<i64: 2, 16, 16, 128>}, {pipeline_mode = #tpu.pipeline_mode<synchronous>, transform_indices = @transform_1, window_bounds = array<i64: 1, 128>}, {pipeline_mode = #tpu.pipeline_mode<synchronous>, transform_indices = @transform_2, window_bounds = array<i64: 1, 128>}, {pipeline_mode = #tpu.pipeline_mode<synchronous>, transform_indices = @transform_3, window_bounds = array<i64: 128, 128>}, {pipeline_mode = #tpu.pipeline_mode<synchronous>, transform_indices = @transform_4, window_bounds = array<i64: 1, 128>}, {pipeline_mode = #tpu.pipeline_mode<synchronous>, transform_indices = @transform_5, window_bounds = array<i64: 1, 128>}, {pipeline_mode = #tpu.pipeline_mode<synchronous>, transform_indices = @transform_6, window_bounds = array<i64: 1, 128>}, {pipeline_mode = #tpu.pipeline_mode<synchronous>, transform_indices = @transform_7, window_bounds = array<i64: 9, 128, 128>}, {pipeline_mode = #tpu.pipeline_mode<synchronous>, transform_indices = @transform_8, window_bounds = array<i64: 1, 128>}, {pipeline_mode = #tpu.pipeline_mode<synchronous>, transform_indices = @transform_9, window_bounds = array<i64: 1, 128>}, {pipeline_mode = #tpu.pipeline_mode<synchronous>, transform_indices = @transform_10, window_bounds = array<i64: 1, 128>}, {pipeline_mode = #tpu.pipeline_mode<synchronous>, transform_indices = @transform_11, window_bounds = array<i64: 128, 128>}, {pipeline_mode = #tpu.pipeline_mode<synchronous>, transform_indices = @transform_12, window_bounds = array<i64: 1, 128>}, {pipeline_mode = #tpu.pipeline_mode<synchronous>, transform_indices = @transform_13, window_bounds = array<i64: 128, 128>}, {pipeline_mode = #tpu.pipeline_mode<synchronous>, transform_indices = @transform_14, window_bounds = array<i64: 1, 128>}, {transform_indices = @transform_15, window_bounds = array<i64: 2, 16, 16, 128>}]} {
    %c0 = arith.constant 0 : index
    %c0_0 = arith.constant 0 : index
    %c0_1 = arith.constant 0 : index
    %c0_2 = arith.constant 0 : index
    %0 = vector.load %arg1[%c0, %c0_0, %c0_1, %c0_2] : memref<2x16x16x128xf32, #tpu.memory_space<vmem>>, vector<2x16x16x128xf32>
    %1 = vector.shape_cast %0 : vector<2x16x16x128xf32> to vector<512x128xf32>
    %c0_3 = arith.constant 0 : index
    %c0_4 = arith.constant 0 : index
    %2 = vector.load %arg2[%c0_3, %c0_4] : memref<1x128xf32, #tpu.memory_space<vmem>>, vector<1x128xf32>
    %3 = vector.broadcast %2 : vector<1x128xf32> to vector<512x128xf32>
    %4 = arith.mulf %1, %3 : vector<512x128xf32>
    %c0_5 = arith.constant 0 : index
    %c0_6 = arith.constant 0 : index
    %5 = vector.load %arg3[%c0_5, %c0_6] : memref<1x128xf32, #tpu.memory_space<vmem>>, vector<1x128xf32>
    %6 = vector.broadcast %5 : vector<1x128xf32> to vector<512x128xf32>
    %7 = arith.addf %4, %6 : vector<512x128xf32>
    %cst = arith.constant 0.000000e+00 : f32
    %8 = vector.broadcast %cst : f32 to vector<512x128xf32>
    %9 = arith.maximumf %7, %8 : vector<512x128xf32>
    %10 = arith.truncf %9 : vector<512x128xf32> to vector<512x128xbf16>
    %c0_7 = arith.constant 0 : index
    %c0_8 = arith.constant 0 : index
    %11 = vector.load %arg4[%c0_7, %c0_8] : memref<128x128xbf16, #tpu.memory_space<vmem>>, vector<128x128xbf16>
    %cst_9 = arith.constant dense<0.000000e+00> : vector<512x128xf32>
    %12 = tpu.matmul %10, %11, %cst_9 {dimension_numbers = #tpu.dot_dimension_numbers<[1], [0], [0], [1], [0, 0, 1, 1], [], []>} : vector<512x128xbf16>, vector<128x128xbf16>, vector<512x128xf32> -> vector<512x128xf32>
    %c0_10 = arith.constant 0 : index
    %c0_11 = arith.constant 0 : index
    %13 = vector.load %arg5[%c0_10, %c0_11] : memref<1x128xf32, #tpu.memory_space<vmem>>, vector<1x128xf32>
    %14 = vector.broadcast %13 : vector<1x128xf32> to vector<512x128xf32>
    %15 = arith.addf %12, %14 : vector<512x128xf32>
    %c0_12 = arith.constant 0 : index
    %c0_13 = arith.constant 0 : index
    %16 = vector.load %arg6[%c0_12, %c0_13] : memref<1x128xf32, #tpu.memory_space<vmem>>, vector<1x128xf32>
    %17 = vector.broadcast %16 : vector<1x128xf32> to vector<512x128xf32>
    %18 = arith.mulf %15, %17 : vector<512x128xf32>
    %c0_14 = arith.constant 0 : index
    %c0_15 = arith.constant 0 : index
    %19 = vector.load %arg7[%c0_14, %c0_15] : memref<1x128xf32, #tpu.memory_space<vmem>>, vector<1x128xf32>
    %20 = vector.broadcast %19 : vector<1x128xf32> to vector<512x128xf32>
    %21 = arith.addf %18, %20 : vector<512x128xf32>
    %cst_16 = arith.constant 0.000000e+00 : f32
    %22 = vector.broadcast %cst_16 : f32 to vector<512x128xf32>
    %23 = arith.maximumf %21, %22 : vector<512x128xf32>
    %24 = arith.truncf %23 : vector<512x128xf32> to vector<512x128xbf16>
    %25 = vector.shape_cast %24 : vector<512x128xbf16> to vector<2x16x16x128xbf16>
    %cst_17 = arith.constant 0.000000e+00 : bf16
    %26 = vector.broadcast %cst_17 : bf16 to vector<2x1x16x128xbf16>
    %27 = tpu.concatenate %26, %25, %26 in 1 : vector<2x1x16x128xbf16>, vector<2x16x16x128xbf16>, vector<2x1x16x128xbf16> -> vector<2x18x16x128xbf16>
    %cst_18 = arith.constant 0.000000e+00 : bf16
    %28 = vector.broadcast %cst_18 : bf16 to vector<2x18x1x128xbf16>
    %29 = tpu.concatenate %28, %27, %28 in 2 : vector<2x18x1x128xbf16>, vector<2x18x16x128xbf16>, vector<2x18x1x128xbf16> -> vector<2x18x18x128xbf16>
    %30 = vector.extract_strided_slice %29 {offsets = [0, 0, 0, 0], sizes = [2, 16, 16, 128], strides = [1, 1, 1, 1]} : vector<2x18x18x128xbf16> to vector<2x16x16x128xbf16>
    %31 = vector.shape_cast %30 : vector<2x16x16x128xbf16> to vector<512x128xbf16>
    %c0_19 = arith.constant 0 : index
    %c0_20 = arith.constant 0 : index
    %c0_21 = arith.constant 0 : index
    %32 = vector.load %arg8[%c0_19, %c0_20, %c0_21] : memref<9x128x128xbf16, #tpu.memory_space<vmem>>, vector<1x128x128xbf16>
    %33 = vector.shape_cast %32 : vector<1x128x128xbf16> to vector<128x128xbf16>
    %cst_22 = arith.constant dense<0.000000e+00> : vector<512x128xf32>
    %34 = tpu.matmul %31, %33, %cst_22 {dimension_numbers = #tpu.dot_dimension_numbers<[1], [0], [0], [1], [0, 0, 1, 1], [], []>} : vector<512x128xbf16>, vector<128x128xbf16>, vector<512x128xf32> -> vector<512x128xf32>
    %35 = vector.extract_strided_slice %29 {offsets = [0, 0, 1, 0], sizes = [2, 16, 16, 128], strides = [1, 1, 1, 1]} : vector<2x18x18x128xbf16> to vector<2x16x16x128xbf16>
    %36 = vector.shape_cast %35 : vector<2x16x16x128xbf16> to vector<512x128xbf16>
    %c1 = arith.constant 1 : index
    %c0_23 = arith.constant 0 : index
    %c0_24 = arith.constant 0 : index
    %37 = vector.load %arg8[%c1, %c0_23, %c0_24] : memref<9x128x128xbf16, #tpu.memory_space<vmem>>, vector<1x128x128xbf16>
    %38 = vector.shape_cast %37 : vector<1x128x128xbf16> to vector<128x128xbf16>
    %cst_25 = arith.constant dense<0.000000e+00> : vector<512x128xf32>
    %39 = tpu.matmul %36, %38, %cst_25 {dimension_numbers = #tpu.dot_dimension_numbers<[1], [0], [0], [1], [0, 0, 1, 1], [], []>} : vector<512x128xbf16>, vector<128x128xbf16>, vector<512x128xf32> -> vector<512x128xf32>
    %40 = arith.addf %34, %39 : vector<512x128xf32>
    %41 = vector.extract_strided_slice %29 {offsets = [0, 0, 2, 0], sizes = [2, 16, 16, 128], strides = [1, 1, 1, 1]} : vector<2x18x18x128xbf16> to vector<2x16x16x128xbf16>
    %42 = vector.shape_cast %41 : vector<2x16x16x128xbf16> to vector<512x128xbf16>
    %c2 = arith.constant 2 : index
    %c0_26 = arith.constant 0 : index
    %c0_27 = arith.constant 0 : index
    %43 = vector.load %arg8[%c2, %c0_26, %c0_27] : memref<9x128x128xbf16, #tpu.memory_space<vmem>>, vector<1x128x128xbf16>
    %44 = vector.shape_cast %43 : vector<1x128x128xbf16> to vector<128x128xbf16>
    %cst_28 = arith.constant dense<0.000000e+00> : vector<512x128xf32>
    %45 = tpu.matmul %42, %44, %cst_28 {dimension_numbers = #tpu.dot_dimension_numbers<[1], [0], [0], [1], [0, 0, 1, 1], [], []>} : vector<512x128xbf16>, vector<128x128xbf16>, vector<512x128xf32> -> vector<512x128xf32>
    %46 = arith.addf %40, %45 : vector<512x128xf32>
    %47 = vector.extract_strided_slice %29 {offsets = [0, 1, 0, 0], sizes = [2, 16, 16, 128], strides = [1, 1, 1, 1]} : vector<2x18x18x128xbf16> to vector<2x16x16x128xbf16>
    %48 = vector.shape_cast %47 : vector<2x16x16x128xbf16> to vector<512x128xbf16>
    %c3 = arith.constant 3 : index
    %c0_29 = arith.constant 0 : index
    %c0_30 = arith.constant 0 : index
    %49 = vector.load %arg8[%c3, %c0_29, %c0_30] : memref<9x128x128xbf16, #tpu.memory_space<vmem>>, vector<1x128x128xbf16>
    %50 = vector.shape_cast %49 : vector<1x128x128xbf16> to vector<128x128xbf16>
    %cst_31 = arith.constant dense<0.000000e+00> : vector<512x128xf32>
    %51 = tpu.matmul %48, %50, %cst_31 {dimension_numbers = #tpu.dot_dimension_numbers<[1], [0], [0], [1], [0, 0, 1, 1], [], []>} : vector<512x128xbf16>, vector<128x128xbf16>, vector<512x128xf32> -> vector<512x128xf32>
    %52 = arith.addf %46, %51 : vector<512x128xf32>
    %53 = vector.extract_strided_slice %29 {offsets = [0, 1, 1, 0], sizes = [2, 16, 16, 128], strides = [1, 1, 1, 1]} : vector<2x18x18x128xbf16> to vector<2x16x16x128xbf16>
    %54 = vector.shape_cast %53 : vector<2x16x16x128xbf16> to vector<512x128xbf16>
    %c4 = arith.constant 4 : index
    %c0_32 = arith.constant 0 : index
    %c0_33 = arith.constant 0 : index
    %55 = vector.load %arg8[%c4, %c0_32, %c0_33] : memref<9x128x128xbf16, #tpu.memory_space<vmem>>, vector<1x128x128xbf16>
    %56 = vector.shape_cast %55 : vector<1x128x128xbf16> to vector<128x128xbf16>
    %cst_34 = arith.constant dense<0.000000e+00> : vector<512x128xf32>
    %57 = tpu.matmul %54, %56, %cst_34 {dimension_numbers = #tpu.dot_dimension_numbers<[1], [0], [0], [1], [0, 0, 1, 1], [], []>} : vector<512x128xbf16>, vector<128x128xbf16>, vector<512x128xf32> -> vector<512x128xf32>
    %58 = arith.addf %52, %57 : vector<512x128xf32>
    %59 = vector.extract_strided_slice %29 {offsets = [0, 1, 2, 0], sizes = [2, 16, 16, 128], strides = [1, 1, 1, 1]} : vector<2x18x18x128xbf16> to vector<2x16x16x128xbf16>
    %60 = vector.shape_cast %59 : vector<2x16x16x128xbf16> to vector<512x128xbf16>
    %c5 = arith.constant 5 : index
    %c0_35 = arith.constant 0 : index
    %c0_36 = arith.constant 0 : index
    %61 = vector.load %arg8[%c5, %c0_35, %c0_36] : memref<9x128x128xbf16, #tpu.memory_space<vmem>>, vector<1x128x128xbf16>
    %62 = vector.shape_cast %61 : vector<1x128x128xbf16> to vector<128x128xbf16>
    %cst_37 = arith.constant dense<0.000000e+00> : vector<512x128xf32>
    %63 = tpu.matmul %60, %62, %cst_37 {dimension_numbers = #tpu.dot_dimension_numbers<[1], [0], [0], [1], [0, 0, 1, 1], [], []>} : vector<512x128xbf16>, vector<128x128xbf16>, vector<512x128xf32> -> vector<512x128xf32>
    %64 = arith.addf %58, %63 : vector<512x128xf32>
    %65 = vector.extract_strided_slice %29 {offsets = [0, 2, 0, 0], sizes = [2, 16, 16, 128], strides = [1, 1, 1, 1]} : vector<2x18x18x128xbf16> to vector<2x16x16x128xbf16>
    %66 = vector.shape_cast %65 : vector<2x16x16x128xbf16> to vector<512x128xbf16>
    %c6 = arith.constant 6 : index
    %c0_38 = arith.constant 0 : index
    %c0_39 = arith.constant 0 : index
    %67 = vector.load %arg8[%c6, %c0_38, %c0_39] : memref<9x128x128xbf16, #tpu.memory_space<vmem>>, vector<1x128x128xbf16>
    %68 = vector.shape_cast %67 : vector<1x128x128xbf16> to vector<128x128xbf16>
    %cst_40 = arith.constant dense<0.000000e+00> : vector<512x128xf32>
    %69 = tpu.matmul %66, %68, %cst_40 {dimension_numbers = #tpu.dot_dimension_numbers<[1], [0], [0], [1], [0, 0, 1, 1], [], []>} : vector<512x128xbf16>, vector<128x128xbf16>, vector<512x128xf32> -> vector<512x128xf32>
    %70 = arith.addf %64, %69 : vector<512x128xf32>
    %71 = vector.extract_strided_slice %29 {offsets = [0, 2, 1, 0], sizes = [2, 16, 16, 128], strides = [1, 1, 1, 1]} : vector<2x18x18x128xbf16> to vector<2x16x16x128xbf16>
    %72 = vector.shape_cast %71 : vector<2x16x16x128xbf16> to vector<512x128xbf16>
    %c7 = arith.constant 7 : index
    %c0_41 = arith.constant 0 : index
    %c0_42 = arith.constant 0 : index
    %73 = vector.load %arg8[%c7, %c0_41, %c0_42] : memref<9x128x128xbf16, #tpu.memory_space<vmem>>, vector<1x128x128xbf16>
    %74 = vector.shape_cast %73 : vector<1x128x128xbf16> to vector<128x128xbf16>
    %cst_43 = arith.constant dense<0.000000e+00> : vector<512x128xf32>
    %75 = tpu.matmul %72, %74, %cst_43 {dimension_numbers = #tpu.dot_dimension_numbers<[1], [0], [0], [1], [0, 0, 1, 1], [], []>} : vector<512x128xbf16>, vector<128x128xbf16>, vector<512x128xf32> -> vector<512x128xf32>
    %76 = arith.addf %70, %75 : vector<512x128xf32>
    %77 = vector.extract_strided_slice %29 {offsets = [0, 2, 2, 0], sizes = [2, 16, 16, 128], strides = [1, 1, 1, 1]} : vector<2x18x18x128xbf16> to vector<2x16x16x128xbf16>
    %78 = vector.shape_cast %77 : vector<2x16x16x128xbf16> to vector<512x128xbf16>
    %c8 = arith.constant 8 : index
    %c0_44 = arith.constant 0 : index
    %c0_45 = arith.constant 0 : index
    %79 = vector.load %arg8[%c8, %c0_44, %c0_45] : memref<9x128x128xbf16, #tpu.memory_space<vmem>>, vector<1x128x128xbf16>
    %80 = vector.shape_cast %79 : vector<1x128x128xbf16> to vector<128x128xbf16>
    %cst_46 = arith.constant dense<0.000000e+00> : vector<512x128xf32>
    %81 = tpu.matmul %78, %80, %cst_46 {dimension_numbers = #tpu.dot_dimension_numbers<[1], [0], [0], [1], [0, 0, 1, 1], [], []>} : vector<512x128xbf16>, vector<128x128xbf16>, vector<512x128xf32> -> vector<512x128xf32>
    %82 = arith.addf %76, %81 : vector<512x128xf32>
    %c0_47 = arith.constant 0 : index
    %c0_48 = arith.constant 0 : index
    %83 = vector.load %arg9[%c0_47, %c0_48] : memref<1x128xf32, #tpu.memory_space<vmem>>, vector<1x128xf32>
    %84 = vector.broadcast %83 : vector<1x128xf32> to vector<512x128xf32>
    %85 = arith.addf %82, %84 : vector<512x128xf32>
    %c0_49 = arith.constant 0 : index
    %c0_50 = arith.constant 0 : index
    %86 = vector.load %arg10[%c0_49, %c0_50] : memref<1x128xf32, #tpu.memory_space<vmem>>, vector<1x128xf32>
    %87 = vector.broadcast %86 : vector<1x128xf32> to vector<512x128xf32>
    %88 = arith.mulf %85, %87 : vector<512x128xf32>
    %c0_51 = arith.constant 0 : index
    %c0_52 = arith.constant 0 : index
    %89 = vector.load %arg11[%c0_51, %c0_52] : memref<1x128xf32, #tpu.memory_space<vmem>>, vector<1x128xf32>
    %90 = vector.broadcast %89 : vector<1x128xf32> to vector<512x128xf32>
    %91 = arith.addf %88, %90 : vector<512x128xf32>
    %cst_53 = arith.constant 0.000000e+00 : f32
    %92 = vector.broadcast %cst_53 : f32 to vector<512x128xf32>
    %93 = arith.maximumf %91, %92 : vector<512x128xf32>
    %94 = arith.truncf %93 : vector<512x128xf32> to vector<512x128xbf16>
    %c0_54 = arith.constant 0 : index
    %c0_55 = arith.constant 0 : index
    %95 = vector.load %arg12[%c0_54, %c0_55] : memref<128x128xbf16, #tpu.memory_space<vmem>>, vector<128x128xbf16>
    %cst_56 = arith.constant dense<0.000000e+00> : vector<512x128xf32>
    %96 = tpu.matmul %94, %95, %cst_56 {dimension_numbers = #tpu.dot_dimension_numbers<[1], [0], [0], [1], [0, 0, 1, 1], [], []>} : vector<512x128xbf16>, vector<128x128xbf16>, vector<512x128xf32> -> vector<512x128xf32>
    %c0_57 = arith.constant 0 : index
    %c0_58 = arith.constant 0 : index
    %97 = vector.load %arg13[%c0_57, %c0_58] : memref<1x128xf32, #tpu.memory_space<vmem>>, vector<1x128xf32>
    %98 = vector.broadcast %97 : vector<1x128xf32> to vector<512x128xf32>
    %99 = arith.addf %96, %98 : vector<512x128xf32>
    %100 = arith.truncf %1 : vector<512x128xf32> to vector<512x128xbf16>
    %c0_59 = arith.constant 0 : index
    %c0_60 = arith.constant 0 : index
    %101 = vector.load %arg14[%c0_59, %c0_60] : memref<128x128xbf16, #tpu.memory_space<vmem>>, vector<128x128xbf16>
    %cst_61 = arith.constant dense<0.000000e+00> : vector<512x128xf32>
    %102 = tpu.matmul %100, %101, %cst_61 {dimension_numbers = #tpu.dot_dimension_numbers<[1], [0], [0], [1], [0, 0, 1, 1], [], []>} : vector<512x128xbf16>, vector<128x128xbf16>, vector<512x128xf32> -> vector<512x128xf32>
    %c0_62 = arith.constant 0 : index
    %c0_63 = arith.constant 0 : index
    %103 = vector.load %arg15[%c0_62, %c0_63] : memref<1x128xf32, #tpu.memory_space<vmem>>, vector<1x128xf32>
    %104 = vector.broadcast %103 : vector<1x128xf32> to vector<512x128xf32>
    %105 = arith.addf %102, %104 : vector<512x128xf32>
    %106 = arith.addf %99, %105 : vector<512x128xf32>
    %107 = vector.shape_cast %106 : vector<512x128xf32> to vector<2x16x16x128xf32>
    %c0_64 = arith.constant 0 : index
    %c0_65 = arith.constant 0 : index
    %c0_66 = arith.constant 0 : index
    %c0_67 = arith.constant 0 : index
    %108 = vector.load %arg16[%c0_64, %c0_65, %c0_66, %c0_67] : memref<2x16x16x128xf32, #tpu.memory_space<vmem>>, vector<2x16x16x128xf32>
    tpu.vector_store %arg16[%c0_64, %c0_65, %c0_66, %c0_67], %107 {strides = array<i32>} : memref<2x16x16x128xf32, #tpu.memory_space<vmem>>, vector<2x16x16x128xf32>,
    return
  }
  func.func @transform_0(%arg0: i32) -> (i32, i32, i32, i32) {
    %c0_i32 = arith.constant 0 : i32
    %c0_i32_0 = arith.constant 0 : i32
    %c0_i32_1 = arith.constant 0 : i32
    %c0_i32_2 = arith.constant 0 : i32
    return %arg0, %c0_i32, %c0_i32_0, %c0_i32_1 : i32, i32, i32, i32
  }
  func.func @transform_1(%arg0: i32) -> (i32, i32) {
    %c0_i32 = arith.constant 0 : i32
    %c0_i32_0 = arith.constant 0 : i32
    %c0_i32_1 = arith.constant 0 : i32
    return %c0_i32, %c0_i32_0 : i32, i32
  }
  func.func @transform_2(%arg0: i32) -> (i32, i32) {
    %c0_i32 = arith.constant 0 : i32
    %c0_i32_0 = arith.constant 0 : i32
    %c0_i32_1 = arith.constant 0 : i32
    return %c0_i32, %c0_i32_0 : i32, i32
  }
  func.func @transform_3(%arg0: i32) -> (i32, i32) {
    %c0_i32 = arith.constant 0 : i32
    %c0_i32_0 = arith.constant 0 : i32
    %c0_i32_1 = arith.constant 0 : i32
    return %c0_i32, %c0_i32_0 : i32, i32
  }
  func.func @transform_4(%arg0: i32) -> (i32, i32) {
    %c0_i32 = arith.constant 0 : i32
    %c0_i32_0 = arith.constant 0 : i32
    %c0_i32_1 = arith.constant 0 : i32
    return %c0_i32, %c0_i32_0 : i32, i32
  }
  func.func @transform_5(%arg0: i32) -> (i32, i32) {
    %c0_i32 = arith.constant 0 : i32
    %c0_i32_0 = arith.constant 0 : i32
    %c0_i32_1 = arith.constant 0 : i32
    return %c0_i32, %c0_i32_0 : i32, i32
  }
  func.func @transform_6(%arg0: i32) -> (i32, i32) {
    %c0_i32 = arith.constant 0 : i32
    %c0_i32_0 = arith.constant 0 : i32
    %c0_i32_1 = arith.constant 0 : i32
    return %c0_i32, %c0_i32_0 : i32, i32
  }
  func.func @transform_7(%arg0: i32) -> (i32, i32, i32) {
    %c0_i32 = arith.constant 0 : i32
    %c0_i32_0 = arith.constant 0 : i32
    %c0_i32_1 = arith.constant 0 : i32
    %c0_i32_2 = arith.constant 0 : i32
    return %c0_i32, %c0_i32_0, %c0_i32_1 : i32, i32, i32
  }
  func.func @transform_8(%arg0: i32) -> (i32, i32) {
    %c0_i32 = arith.constant 0 : i32
    %c0_i32_0 = arith.constant 0 : i32
    %c0_i32_1 = arith.constant 0 : i32
    return %c0_i32, %c0_i32_0 : i32, i32
  }
  func.func @transform_9(%arg0: i32) -> (i32, i32) {
    %c0_i32 = arith.constant 0 : i32
    %c0_i32_0 = arith.constant 0 : i32
    %c0_i32_1 = arith.constant 0 : i32
    return %c0_i32, %c0_i32_0 : i32, i32
  }
  func.func @transform_10(%arg0: i32) -> (i32, i32) {
    %c0_i32 = arith.constant 0 : i32
    %c0_i32_0 = arith.constant 0 : i32
    %c0_i32_1 = arith.constant 0 : i32
    return %c0_i32, %c0_i32_0 : i32, i32
  }
  func.func @transform_11(%arg0: i32) -> (i32, i32) {
    %c0_i32 = arith.constant 0 : i32
    %c0_i32_0 = arith.constant 0 : i32
    %c0_i32_1 = arith.constant 0 : i32
    return %c0_i32, %c0_i32_0 : i32, i32
  }
  func.func @transform_12(%arg0: i32) -> (i32, i32) {
    %c0_i32 = arith.constant 0 : i32
    %c0_i32_0 = arith.constant 0 : i32
    %c0_i32_1 = arith.constant 0 : i32
    return %c0_i32, %c0_i32_0 : i32, i32
  }
  func.func @transform_13(%arg0: i32) -> (i32, i32) {
    %c0_i32 = arith.constant 0 : i32
    %c0_i32_0 = arith.constant 0 : i32
    %c0_i32_1 = arith.constant 0 : i32
    return %c0_i32, %c0_i32_0 : i32, i32
  }
  func.func @transform_14(%arg0: i32) -> (i32, i32) {
    %c0_i32 = arith.constant 0 : i32
    %c0_i32_0 = arith.constant 0 : i32
    %c0_i32_1 = arith.constant 0 : i32
    return %c0_i32, %c0_i32_0 : i32, i32
  }
  func.func @transform_15(%arg0: i32) -> (i32, i32, i32, i32) {
    %c0_i32 = arith.constant 0 : i32
    %c0_i32_0 = arith.constant 0 : i32
    %c0_i32_1 = arith.constant 0 : i32
    %c0_i32_2 = arith.constant 0 : i32
    return %arg0, %c0_i32, %c0_i32_0, %c0_i32_1 : i32, i32, i32, i32
  }
}

</mosaic_0001>

<llo_original>
// kernel: tpu_custom_call.1
$region0: #{tpu_custom_call.1}
  #allocation0 [shape = 'u32[]', space=smem, size = 0x4, offset = 0x4, fixed_abs, tag = 'smem constant byte address 0x4 - core index']
  #allocation1 [shape = 'u32[144,128]{1,0:T(1,128)}', space=vmem, size = 0x12000, scoped, tag = 'internal scratch']
  %s0 = inlined_call_operand.hbm [shape: f32[2,16,16,128], index: 0, kind: input, shape index: {}]
  %s1 = inlined_call_operand.vmem [shape: f32[1,128], index: 1, kind: input, shape index: {}]
  %s2 = inlined_call_operand.vmem [shape: f32[1,128], index: 2, kind: input, shape index: {}]
  %s3 = inlined_call_operand.hbm [shape: bf16[128,128], index: 3, kind: input, shape index: {}]
  %s4 = inlined_call_operand.vmem [shape: f32[1,128], index: 4, kind: input, shape index: {}]
  %s5 = inlined_call_operand.vmem [shape: f32[1,128], index: 5, kind: input, shape index: {}]
  %s6 = inlined_call_operand.vmem [shape: f32[1,128], index: 6, kind: input, shape index: {}]
  %s7 = inlined_call_operand.hbm [shape: bf16[9,128,128], index: 7, kind: input, shape index: {}]
  %s8 = inlined_call_operand.vmem [shape: f32[1,128], index: 8, kind: input, shape index: {}]
  %s9 = inlined_call_operand.vmem [shape: f32[1,128], index: 9, kind: input, shape index: {}]
  %s10 = inlined_call_operand.vmem [shape: f32[1,128], index: 10, kind: input, shape index: {}]
  %s11 = inlined_call_operand.hbm [shape: bf16[128,128], index: 11, kind: input, shape index: {}]
  %s12 = inlined_call_operand.vmem [shape: f32[1,128], index: 12, kind: input, shape index: {}]
  %s13 = inlined_call_operand.hbm [shape: bf16[128,128], index: 13, kind: input, shape index: {}]
  %s14 = inlined_call_operand.vmem [shape: f32[1,128], index: 14, kind: input, shape index: {}]
  %s15 = inlined_call_operand.hbm [shape: f32[2,16,16,128], index: 15, kind: output, shape index: {}]
  %s16 = sld [smem:[#allocation0]]
  $region90: #{tpu_custom_call.1} parent=0
    _
  %s18 = ssub.s32 1, %s16
  %s19 = scalar_select 0, %s18, %s16
  $region1: #{tpu_custom_call.1} parent=0
    #allocation2 [shape = 'u8[262144]{0}', space=vmem, size = 0x40000, scoped, tag = 'input window, operand 0, single buffered']
    #allocation3 [shape = 's32[1]{0}', space=sflag, size = 0x4, scoped, tag = 'scoped memory for tpu_custom_call.1']
    #allocation4 [shape = 's32[1]{0}', space=sflag, size = 0x4, scoped, tag = 'scoped memory for tpu_custom_call.1']
    #allocation5 [shape = 'u8[32768]{0}', space=vmem, size = 0x8000, scoped, tag = 'input window, operand 3, single buffered']
    #allocation6 [shape = 's32[1]{0}', space=sflag, size = 0x4, scoped, tag = 'scoped memory for tpu_custom_call.1']
    #allocation7 [shape = 'u8[294912]{0}', space=vmem, size = 0x48000, scoped, tag = 'input window, operand 7, single buffered']
    #allocation8 [shape = 'u8[32768]{0}', space=vmem, size = 0x8000, scoped, tag = 'input window, operand 11, single buffered']
    #allocation9 [shape = 's32[1]{0}', space=sflag, size = 0x4, scoped, tag = 'scoped memory for tpu_custom_call.1']
    #allocation10 [shape = 'u8[32768]{0}', space=vmem, size = 0x8000, scoped, tag = 'input window, operand 13, single buffered']
    #allocation11 [shape = 'u8[262144]{0}', space=vmem, size = 0x40000, scoped, tag = 'output window, operand 0, single buffered']
    %20 = vsyncpa [#allocation3], 0
    %21 = vsyncpa [#allocation6], 0
    %22 = vsyncpa [#allocation9], 0
    %23 = vsyncpa [#allocation4], 0
    // Predicated region
    $region2: #{tpu_custom_call.1} parent=1 // pred_check
      _
    $region3: #{tpu_custom_call.1} parent=1 // pred_check_branch
      %25 = sbr.rel (0) target = $region5
    $region4: #{tpu_custom_call.1} parent=1 // pred_region
      %s27 = ssub.s32 8192, 8192
      %28 = vsyncadd [#allocation3], %s27
      %s29 = sshll.u32 [#allocation2], 4
      %s30 = int_to_ptr.vmem [resolvable:$true] %s29
      %35 = dma.hbm_to_vmem [thread:$0]  %s0, 8192, %s30, [#allocation3], 128, 128, 8
    $region5: #{tpu_custom_call.1} parent=1 // pred_fallthru
      _
    // Predicated region
    $region6: #{tpu_custom_call.1} parent=1 // pred_check
      _
    $region7: #{tpu_custom_call.1} parent=1 // pred_check_branch
      %37 = sbr.rel (0) target = $region9
    $region8: #{tpu_custom_call.1} parent=1 // pred_region
      _
    $region9: #{tpu_custom_call.1} parent=1 // pred_fallthru
      _
    // Predicated region
    $region10: #{tpu_custom_call.1} parent=1 // pred_check
      _
    $region11: #{tpu_custom_call.1} parent=1 // pred_check_branch
      %39 = sbr.rel (0) target = $region13
    $region12: #{tpu_custom_call.1} parent=1 // pred_region
      _
    $region13: #{tpu_custom_call.1} parent=1 // pred_fallthru
      _
    // Predicated region
    $region14: #{tpu_custom_call.1} parent=1 // pred_check
      _
    $region15: #{tpu_custom_call.1} parent=1 // pred_check_branch
      %41 = sbr.rel (0) target = $region17
    $region16: #{tpu_custom_call.1} parent=1 // pred_region
      %s43 = ssub.s32 1024, 1024
      %44 = vsyncadd [#allocation6], %s43
      %s45 = sshll.u32 [#allocation5], 4
      %s46 = int_to_ptr.vmem [resolvable:$true] %s45
      %51 = dma.hbm_to_vmem [thread:$0]  %s3, 1024, %s46, [#allocation6], 64, 64, 4
    $region17: #{tpu_custom_call.1} parent=1 // pred_fallthru
      _
    // Predicated region
    $region18: #{tpu_custom_call.1} parent=1 // pred_check
      _
    $region19: #{tpu_custom_call.1} parent=1 // pred_check_branch
      %53 = sbr.rel (0) target = $region21
    $region20: #{tpu_custom_call.1} parent=1 // pred_region
      _
    $region21: #{tpu_custom_call.1} parent=1 // pred_fallthru
      _
    // Predicated region
    $region22: #{tpu_custom_call.1} parent=1 // pred_check
      _
    $region23: #{tpu_custom_call.1} parent=1 // pred_check_branch
      %55 = sbr.rel (0) target = $region25
    $region24: #{tpu_custom_call.1} parent=1 // pred_region
      _
    $region25: #{tpu_custom_call.1} parent=1 // pred_fallthru
      _
    // Predicated region
    $region26: #{tpu_custom_call.1} parent=1 // pred_check
      _
    $region27: #{tpu_custom_call.1} parent=1 // pred_check_branch
      %57 = sbr.rel (0) target = $region29
    $region28: #{tpu_custom_call.1} parent=1 // pred_region
      _
    $region29: #{tpu_custom_call.1} parent=1 // pred_fallthru
      _
    // Predicated region
    $region30: #{tpu_custom_call.1} parent=1 // pred_check
      _
    $region31: #{tpu_custom_call.1} parent=1 // pred_check_branch
      %59 = sbr.rel (0) target = $region33
    $region32: #{tpu_custom_call.1} parent=1 // pred_region
      %s61 = ssub.s32 9216, 9216
      %62 = vsyncadd [#allocation6], %s61
      %s63 = sshll.u32 [#allocation7], 4
      %s64 = int_to_ptr.vmem [resolvable:$true] %s63
      %69 = dma.hbm_to_vmem [thread:$0]  %s7, 9216, %s64, [#allocation6], 64, 64, 4
    $region33: #{tpu_custom_call.1} parent=1 // pred_fallthru
      _
    // Predicated region
    $region34: #{tpu_custom_call.1} parent=1 // pred_check
      _
    $region35: #{tpu_custom_call.1} parent=1 // pred_check_branch
      %71 = sbr.rel (0) target = $region37
    $region36: #{tpu_custom_call.1} parent=1 // pred_region
      _
    $region37: #{tpu_custom_call.1} parent=1 // pred_fallthru
      _
    // Predicated region
    $region38: #{tpu_custom_call.1} parent=1 // pred_check
      _
    $region39: #{tpu_custom_call.1} parent=1 // pred_check_branch
      %73 = sbr.rel (0) target = $region41
    $region40: #{tpu_custom_call.1} parent=1 // pred_region
      _
    $region41: #{tpu_custom_call.1} parent=1 // pred_fallthru
      _
    // Predicated region
    $region42: #{tpu_custom_call.1} parent=1 // pred_check
      _
    $region43: #{tpu_custom_call.1} parent=1 // pred_check_branch
      %75 = sbr.rel (0) target = $region45
    $region44: #{tpu_custom_call.1} parent=1 // pred_region
      _
    $region45: #{tpu_custom_call.1} parent=1 // pred_fallthru
      _
    // Predicated region
    $region46: #{tpu_custom_call.1} parent=1 // pred_check
      _
    $region47: #{tpu_custom_call.1} parent=1 // pred_check_branch
      %77 = sbr.rel (0) target = $region49
    $region48: #{tpu_custom_call.1} parent=1 // pred_region
      %s79 = ssub.s32 1024, 1024
      %80 = vsyncadd [#allocation9], %s79
      %s81 = sshll.u32 [#allocation8], 4
      %s82 = int_to_ptr.vmem [resolvable:$true] %s81
      %87 = dma.hbm_to_vmem [thread:$0]  %s11, 1024, %s82, [#allocation9], 64, 64, 4
    $region49: #{tpu_custom_call.1} parent=1 // pred_fallthru
      _
    // Predicated region
    $region50: #{tpu_custom_call.1} parent=1 // pred_check
      _
    $region51: #{tpu_custom_call.1} parent=1 // pred_check_branch
      %89 = sbr.rel (0) target = $region53
    $region52: #{tpu_custom_call.1} parent=1 // pred_region
      _
    $region53: #{tpu_custom_call.1} parent=1 // pred_fallthru
      _
    // Predicated region
    $region54: #{tpu_custom_call.1} parent=1 // pred_check
      _
    $region55: #{tpu_custom_call.1} parent=1 // pred_check_branch
      %91 = sbr.rel (0) target = $region57
    $region56: #{tpu_custom_call.1} parent=1 // pred_region
      %s93 = ssub.s32 1024, 1024
      %94 = vsyncadd [#allocation9], %s93
      %s95 = sshll.u32 [#allocation10], 4
      %s96 = int_to_ptr.vmem [resolvable:$true] %s95
      %101 = dma.hbm_to_vmem [thread:$0]  %s13, 1024, %s96, [#allocation9], 64, 64, 4
    $region57: #{tpu_custom_call.1} parent=1 // pred_fallthru
      _
    // Predicated region
    $region58: #{tpu_custom_call.1} parent=1 // pred_check
      _
    $region59: #{tpu_custom_call.1} parent=1 // pred_check_branch
      %103 = sbr.rel (0) target = $region61
    $region60: #{tpu_custom_call.1} parent=1 // pred_region
      _
    $region61: #{tpu_custom_call.1} parent=1 // pred_fallthru
      _
    // Predicated region
    $region62: #{tpu_custom_call.1} parent=1 // pred_check
      _
    $region63: #{tpu_custom_call.1} parent=1 // pred_check_branch
      %105 = sbr.rel (0) target = $region65
    $region64: #{tpu_custom_call.1} parent=1 // pred_region
      %106 = dma.done [#allocation3], 8192
    $region65: #{tpu_custom_call.1} parent=1 // pred_fallthru
      _
    // Predicated region
    $region66: #{tpu_custom_call.1} parent=1 // pred_check
      _
    $region67: #{tpu_custom_call.1} parent=1 // pred_check_branch
      %108 = sbr.rel (0) target = $region69
    $region68: #{tpu_custom_call.1} parent=1 // pred_region
      %109 = dma.done [#allocation6], 1024
    $region69: #{tpu_custom_call.1} parent=1 // pred_fallthru
      _
    // Predicated region
    $region70: #{tpu_custom_call.1} parent=1 // pred_check
      _
    $region71: #{tpu_custom_call.1} parent=1 // pred_check_branch
      %111 = sbr.rel (0) target = $region73
    $region72: #{tpu_custom_call.1} parent=1 // pred_region
      %112 = dma.done [#allocation6], 9216
    $region73: #{tpu_custom_call.1} parent=1 // pred_fallthru
      _
    // Predicated region
    $region74: #{tpu_custom_call.1} parent=1 // pred_check
      _
    $region75: #{tpu_custom_call.1} parent=1 // pred_check_branch
      %114 = sbr.rel (0) target = $region77
    $region76: #{tpu_custom_call.1} parent=1 // pred_region
      %115 = dma.done [#allocation9], 1024
    $region77: #{tpu_custom_call.1} parent=1 // pred_fallthru
      _
    // Predicated region
    $region78: #{tpu_custom_call.1} parent=1 // pred_check
      _
    $region79: #{tpu_custom_call.1} parent=1 // pred_check_branch
      %117 = sbr.rel (0) target = $region81
    $region80: #{tpu_custom_call.1} parent=1 // pred_region
      %118 = dma.done [#allocation9], 1024
    $region81: #{tpu_custom_call.1} parent=1 // pred_fallthru
      _
    %v120 = vld [vmem:[#allocation2] sm:$0xff]
    %v121 = vld [vmem:[#allocation2 + $0x8] sm:$0xff]
    %v122 = vld [vmem:[#allocation2 + $0x10] sm:$0xff]
    %v123 = vld [vmem:[#allocation2 + $0x18] sm:$0xff]
    %v124 = vld [vmem:[#allocation2 + $0x20] sm:$0xff]
    %v125 = vld [vmem:[#allocation2 + $0x28] sm:$0xff]
    %v126 = vld [vmem:[#allocation2 + $0x30] sm:$0xff]
    %v127 = vld [vmem:[#allocation2 + $0x38] sm:$0xff]
    %v128 = vld [vmem:[#allocation2 + $0x40] sm:$0xff]
    %v129 = vld [vmem:[#allocation2 + $0x48] sm:$0xff]
    %v130 = vld [vmem:[#allocation2 + $0x50] sm:$0xff]
    %v131 = vld [vmem:[#allocation2 + $0x58] sm:$0xff]
    %v132 = vld [vmem:[#allocation2 + $0x60] sm:$0xff]
    %v133 = vld [vmem:[#allocation2 + $0x68] sm:$0xff]
    %v134 = vld [vmem:[#allocation2 + $0x70] sm:$0xff]
    %v135 = vld [vmem:[#allocation2 + $0x78] sm:$0xff]
    %v136 = vld [vmem:[#allocation2 + $0x80] sm:$0xff]
    %v137 = vld [vmem:[#allocation2 + $0x88] sm:$0xff]
    %v138 = vld [vmem:[#allocation2 + $0x90] sm:$0xff]
    %v139 = vld [vmem:[#allocation2 + $0x98] sm:$0xff]
    %v140 = vld [vmem:[#allocation2 + $0xa0] sm:$0xff]
    %v141 = vld [vmem:[#allocation2 + $0xa8] sm:$0xff]
    %v142 = vld [vmem:[#allocation2 + $0xb0] sm:$0xff]
    %v143 = vld [vmem:[#allocation2 + $0xb8] sm:$0xff]
    %v144 = vld [vmem:[#allocation2 + $0xc0] sm:$0xff]
    %v145 = vld [vmem:[#allocation2 + $0xc8] sm:$0xff]
    %v146 = vld [vmem:[#allocation2 + $0xd0] sm:$0xff]
    %v147 = vld [vmem:[#allocation2 + $0xd8] sm:$0xff]
    %v148 = vld [vmem:[#allocation2 + $0xe0] sm:$0xff]
    %v149 = vld [vmem:[#allocation2 + $0xe8] sm:$0xff]
    %v150 = vld [vmem:[#allocation2 + $0xf0] sm:$0xff]
    %v151 = vld [vmem:[#allocation2 + $0xf8] sm:$0xff]
    %v152 = vld [vmem:[#allocation2 + $0x100] sm:$0xff]
    %v153 = vld [vmem:[#allocation2 + $0x108] sm:$0xff]
    %v154 = vld [vmem:[#allocation2 + $0x110] sm:$0xff]
    %v155 = vld [vmem:[#allocation2 + $0x118] sm:$0xff]
    %v156 = vld [vmem:[#allocation2 + $0x120] sm:$0xff]
    %v157 = vld [vmem:[#allocation2 + $0x128] sm:$0xff]
    %v158 = vld [vmem:[#allocation2 + $0x130] sm:$0xff]
    %v159 = vld [vmem:[#allocation2 + $0x138] sm:$0xff]
    %v160 = vld [vmem:[#allocation2 + $0x140] sm:$0xff]
    %v161 = vld [vmem:[#allocation2 + $0x148] sm:$0xff]
    %v162 = vld [vmem:[#allocation2 + $0x150] sm:$0xff]
    %v163 = vld [vmem:[#allocation2 + $0x158] sm:$0xff]
    %v164 = vld [vmem:[#allocation2 + $0x160] sm:$0xff]
    %v165 = vld [vmem:[#allocation2 + $0x168] sm:$0xff]
    %v166 = vld [vmem:[#allocation2 + $0x170] sm:$0xff]
    %v167 = vld [vmem:[#allocation2 + $0x178] sm:$0xff]
    %v168 = vld [vmem:[#allocation2 + $0x180] sm:$0xff]
    %v169 = vld [vmem:[#allocation2 + $0x188] sm:$0xff]
    %v170 = vld [vmem:[#allocation2 + $0x190] sm:$0xff]
    %v171 = vld [vmem:[#allocation2 + $0x198] sm:$0xff]
    %v172 = vld [vmem:[#allocation2 + $0x1a0] sm:$0xff]
    %v173 = vld [vmem:[#allocation2 + $0x1a8] sm:$0xff]
    %v174 = vld [vmem:[#allocation2 + $0x1b0] sm:$0xff]
    %v175 = vld [vmem:[#allocation2 + $0x1b8] sm:$0xff]
    %v176 = vld [vmem:[#allocation2 + $0x1c0] sm:$0xff]
    %v177 = vld [vmem:[#allocation2 + $0x1c8] sm:$0xff]
    %v178 = vld [vmem:[#allocation2 + $0x1d0] sm:$0xff]
    %v179 = vld [vmem:[#allocation2 + $0x1d8] sm:$0xff]
    %v180 = vld [vmem:[#allocation2 + $0x1e0] sm:$0xff]
    %v181 = vld [vmem:[#allocation2 + $0x1e8] sm:$0xff]
    %v182 = vld [vmem:[#allocation2 + $0x1f0] sm:$0xff]
    %v183 = vld [vmem:[#allocation2 + $0x1f8] sm:$0xff]
    %v184 = vld [vmem:[%s1] sm:$0x1]
    %v186 = vlaneseq
    %v187 = vshrl.u32 %v186, 7
    %v188 = vsub.s32 0, %v187
    %v189 = vrot.slane %v184, %v188
    %v191 = vmul.f32 %v120, %v189
    %v192 = vmul.f32 %v121, %v189
    %v193 = vmul.f32 %v122, %v189
    %v194 = vmul.f32 %v123, %v189
    %v195 = vmul.f32 %v124, %v189
    %v196 = vmul.f32 %v125, %v189
    %v197 = vmul.f32 %v126, %v189
    %v198 = vmul.f32 %v127, %v189
    %v199 = vmul.f32 %v128, %v189
    %v200 = vmul.f32 %v129, %v189
    %v201 = vmul.f32 %v130, %v189
    %v202 = vmul.f32 %v131, %v189
    %v203 = vmul.f32 %v132, %v189
    %v204 = vmul.f32 %v133, %v189
    %v205 = vmul.f32 %v134, %v189
    %v206 = vmul.f32 %v135, %v189
    %v207 = vmul.f32 %v136, %v189
    %v208 = vmul.f32 %v137, %v189
    %v209 = vmul.f32 %v138, %v189
    %v210 = vmul.f32 %v139, %v189
    %v211 = vmul.f32 %v140, %v189
    %v212 = vmul.f32 %v141, %v189
    %v213 = vmul.f32 %v142, %v189
    %v214 = vmul.f32 %v143, %v189
    %v215 = vmul.f32 %v144, %v189
    %v216 = vmul.f32 %v145, %v189
    %v217 = vmul.f32 %v146, %v189
    %v218 = vmul.f32 %v147, %v189
    %v219 = vmul.f32 %v148, %v189
    %v220 = vmul.f32 %v149, %v189
    %v221 = vmul.f32 %v150, %v189
    %v222 = vmul.f32 %v151, %v189
    %v223 = vmul.f32 %v152, %v189
    %v224 = vmul.f32 %v153, %v189
    %v225 = vmul.f32 %v154, %v189
    %v226 = vmul.f32 %v155, %v189
    %v227 = vmul.f32 %v156, %v189
    %v228 = vmul.f32 %v157, %v189
    %v229 = vmul.f32 %v158, %v189
    %v230 = vmul.f32 %v159, %v189
    %v231 = vmul.f32 %v160, %v189
    %v232 = vmul.f32 %v161, %v189
    %v233 = vmul.f32 %v162, %v189
    %v234 = vmul.f32 %v163, %v189
    %v235 = vmul.f32 %v164, %v189
    %v236 = vmul.f32 %v165, %v189
    %v237 = vmul.f32 %v166, %v189
    %v238 = vmul.f32 %v167, %v189
    %v239 = vmul.f32 %v168, %v189
    %v240 = vmul.f32 %v169, %v189
    %v241 = vmul.f32 %v170, %v189
    %v242 = vmul.f32 %v171, %v189
    %v243 = vmul.f32 %v172, %v189
    %v244 = vmul.f32 %v173, %v189
    %v245 = vmul.f32 %v174, %v189
    %v246 = vmul.f32 %v175, %v189
    %v247 = vmul.f32 %v176, %v189
    %v248 = vmul.f32 %v177, %v189
    %v249 = vmul.f32 %v178, %v189
    %v250 = vmul.f32 %v179, %v189
    %v251 = vmul.f32 %v180, %v189
    %v252 = vmul.f32 %v181, %v189
    %v253 = vmul.f32 %v182, %v189
    %v254 = vmul.f32 %v183, %v189
    %v255 = vld [vmem:[%s2] sm:$0x1]
    %v257 = vlaneseq
    %v258 = vshrl.u32 %v257, 7
    %v259 = vsub.s32 0, %v258
    %v260 = vrot.slane %v255, %v259
    %v262 = vadd.f32 %v191, %v260
    %v263 = vadd.f32 %v192, %v260
    %v264 = vadd.f32 %v193, %v260
    %v265 = vadd.f32 %v194, %v260
    %v266 = vadd.f32 %v195, %v260
    %v267 = vadd.f32 %v196, %v260
    %v268 = vadd.f32 %v197, %v260
    %v269 = vadd.f32 %v198, %v260
    %v270 = vadd.f32 %v199, %v260
    %v271 = vadd.f32 %v200, %v260
    %v272 = vadd.f32 %v201, %v260
    %v273 = vadd.f32 %v202, %v260
    %v274 = vadd.f32 %v203, %v260
    %v275 = vadd.f32 %v204, %v260
    %v276 = vadd.f32 %v205, %v260
    %v277 = vadd.f32 %v206, %v260
    %v278 = vadd.f32 %v207, %v260
    %v279 = vadd.f32 %v208, %v260
    %v280 = vadd.f32 %v209, %v260
    %v281 = vadd.f32 %v210, %v260
    %v282 = vadd.f32 %v211, %v260
    %v283 = vadd.f32 %v212, %v260
    %v284 = vadd.f32 %v213, %v260
    %v285 = vadd.f32 %v214, %v260
    %v286 = vadd.f32 %v215, %v260
    %v287 = vadd.f32 %v216, %v260
    %v288 = vadd.f32 %v217, %v260
    %v289 = vadd.f32 %v218, %v260
    %v290 = vadd.f32 %v219, %v260
    %v291 = vadd.f32 %v220, %v260
    %v292 = vadd.f32 %v221, %v260
    %v293 = vadd.f32 %v222, %v260
    %v294 = vadd.f32 %v223, %v260
    %v295 = vadd.f32 %v224, %v260
    %v296 = vadd.f32 %v225, %v260
    %v297 = vadd.f32 %v226, %v260
    %v298 = vadd.f32 %v227, %v260
    %v299 = vadd.f32 %v228, %v260
    %v300 = vadd.f32 %v229, %v260
    %v301 = vadd.f32 %v230, %v260
    %v302 = vadd.f32 %v231, %v260
    %v303 = vadd.f32 %v232, %v260
    %v304 = vadd.f32 %v233, %v260
    %v305 = vadd.f32 %v234, %v260
    %v306 = vadd.f32 %v235, %v260
    %v307 = vadd.f32 %v236, %v260
    %v308 = vadd.f32 %v237, %v260
    %v309 = vadd.f32 %v238, %v260
    %v310 = vadd.f32 %v239, %v260
    %v311 = vadd.f32 %v240, %v260
    %v312 = vadd.f32 %v241, %v260
    %v313 = vadd.f32 %v242, %v260
    %v314 = vadd.f32 %v243, %v260
    %v315 = vadd.f32 %v244, %v260
    %v316 = vadd.f32 %v245, %v260
    %v317 = vadd.f32 %v246, %v260
    %v318 = vadd.f32 %v247, %v260
    %v319 = vadd.f32 %v248, %v260
    %v320 = vadd.f32 %v249, %v260
    %v321 = vadd.f32 %v250, %v260
    %v322 = vadd.f32 %v251, %v260
    %v323 = vadd.f32 %v252, %v260
    %v324 = vadd.f32 %v253, %v260
    %v325 = vadd.f32 %v254, %v260
    %v326 = vmax.f32 %v262, 0.0
    %v327 = vmax.f32 %v263, 0.0
    %v328 = vmax.f32 %v264, 0.0
    %v329 = vmax.f32 %v265, 0.0
    %v330 = vmax.f32 %v266, 0.0
    %v331 = vmax.f32 %v267, 0.0
    %v332 = vmax.f32 %v268, 0.0
    %v333 = vmax.f32 %v269, 0.0
    %v334 = vmax.f32 %v270, 0.0
    %v335 = vmax.f32 %v271, 0.0
    %v336 = vmax.f32 %v272, 0.0
    %v337 = vmax.f32 %v273, 0.0
    %v338 = vmax.f32 %v274, 0.0
    %v339 = vmax.f32 %v275, 0.0
    %v340 = vmax.f32 %v276, 0.0
    %v341 = vmax.f32 %v277, 0.0
    %v342 = vmax.f32 %v278, 0.0
    %v343 = vmax.f32 %v279, 0.0
    %v344 = vmax.f32 %v280, 0.0
    %v345 = vmax.f32 %v281, 0.0
    %v346 = vmax.f32 %v282, 0.0
    %v347 = vmax.f32 %v283, 0.0
    %v348 = vmax.f32 %v284, 0.0
    %v349 = vmax.f32 %v285, 0.0
    %v350 = vmax.f32 %v286, 0.0
    %v351 = vmax.f32 %v287, 0.0
    %v352 = vmax.f32 %v288, 0.0
    %v353 = vmax.f32 %v289, 0.0
    %v354 = vmax.f32 %v290, 0.0
    %v355 = vmax.f32 %v291, 0.0
    %v356 = vmax.f32 %v292, 0.0
    %v357 = vmax.f32 %v293, 0.0
    %v358 = vmax.f32 %v294, 0.0
    %v359 = vmax.f32 %v295, 0.0
    %v360 = vmax.f32 %v296, 0.0
    %v361 = vmax.f32 %v297, 0.0
    %v362 = vmax.f32 %v298, 0.0
    %v363 = vmax.f32 %v299, 0.0
    %v364 = vmax.f32 %v300, 0.0
    %v365 = vmax.f32 %v301, 0.0
    %v366 = vmax.f32 %v302, 0.0
    %v367 = vmax.f32 %v303, 0.0
    %v368 = vmax.f32 %v304, 0.0
    %v369 = vmax.f32 %v305, 0.0
    %v370 = vmax.f32 %v306, 0.0
    %v371 = vmax.f32 %v307, 0.0
    %v372 = vmax.f32 %v308, 0.0
    %v373 = vmax.f32 %v309, 0.0
    %v374 = vmax.f32 %v310, 0.0
    %v375 = vmax.f32 %v311, 0.0
    %v376 = vmax.f32 %v312, 0.0
    %v377 = vmax.f32 %v313, 0.0
    %v378 = vmax.f32 %v314, 0.0
    %v379 = vmax.f32 %v315, 0.0
    %v380 = vmax.f32 %v316, 0.0
    %v381 = vmax.f32 %v317, 0.0
    %v382 = vmax.f32 %v318, 0.0
    %v383 = vmax.f32 %v319, 0.0
    %v384 = vmax.f32 %v320, 0.0
    %v385 = vmax.f32 %v321, 0.0
    %v386 = vmax.f32 %v322, 0.0
    %v387 = vmax.f32 %v323, 0.0
    %v388 = vmax.f32 %v324, 0.0
    %v389 = vmax.f32 %v325, 0.0
    %v390 = vpack.c.bf16 %v327, %v326
    %v391 = vpack.c.bf16 %v329, %v328
    %v392 = vpack.c.bf16 %v331, %v330
    %v393 = vpack.c.bf16 %v333, %v332
    %v394 = vpack.c.bf16 %v335, %v334
    %v395 = vpack.c.bf16 %v337, %v336
    %v396 = vpack.c.bf16 %v339, %v338
    %v397 = vpack.c.bf16 %v341, %v340
    %v398 = vpack.c.bf16 %v343, %v342
    %v399 = vpack.c.bf16 %v345, %v344
    %v400 = vpack.c.bf16 %v347, %v346
    %v401 = vpack.c.bf16 %v349, %v348
    %v402 = vpack.c.bf16 %v351, %v350
    %v403 = vpack.c.bf16 %v353, %v352
    %v404 = vpack.c.bf16 %v355, %v354
    %v405 = vpack.c.bf16 %v357, %v356
    %v406 = vpack.c.bf16 %v359, %v358
    %v407 = vpack.c.bf16 %v361, %v360
    %v408 = vpack.c.bf16 %v363, %v362
    %v409 = vpack.c.bf16 %v365, %v364
    %v410 = vpack.c.bf16 %v367, %v366
    %v411 = vpack.c.bf16 %v369, %v368
    %v412 = vpack.c.bf16 %v371, %v370
    %v413 = vpack.c.bf16 %v373, %v372
    %v414 = vpack.c.bf16 %v375, %v374
    %v415 = vpack.c.bf16 %v377, %v376
    %v416 = vpack.c.bf16 %v379, %v378
    %v417 = vpack.c.bf16 %v381, %v380
    %v418 = vpack.c.bf16 %v383, %v382
    %v419 = vpack.c.bf16 %v385, %v384
    %v420 = vpack.c.bf16 %v387, %v386
    %v421 = vpack.c.bf16 %v389, %v388
    %v422 = vld [vmem:[#allocation5] sm:$0xf]
    %v423 = vld [vmem:[#allocation5 + $0x4] sm:$0xf]
    %v424 = vld [vmem:[#allocation5 + $0x8] sm:$0xf]
    %v425 = vld [vmem:[#allocation5 + $0xc] sm:$0xf]
    %v426 = vld [vmem:[#allocation5 + $0x10] sm:$0xf]
    %v427 = vld [vmem:[#allocation5 + $0x14] sm:$0xf]
    %v428 = vld [vmem:[#allocation5 + $0x18] sm:$0xf]
    %v429 = vld [vmem:[#allocation5 + $0x1c] sm:$0xf]
    %v430 = vld [vmem:[#allocation5 + $0x20] sm:$0xf]
    %v431 = vld [vmem:[#allocation5 + $0x24] sm:$0xf]
    %v432 = vld [vmem:[#allocation5 + $0x28] sm:$0xf]
    %v433 = vld [vmem:[#allocation5 + $0x2c] sm:$0xf]
    %v434 = vld [vmem:[#allocation5 + $0x30] sm:$0xf]
    %v435 = vld [vmem:[#allocation5 + $0x34] sm:$0xf]
    %v436 = vld [vmem:[#allocation5 + $0x38] sm:$0xf]
    %v437 = vld [vmem:[#allocation5 + $0x3c] sm:$0xf]
    %v438 = vld [vmem:[%s4] sm:$0x1]
    %v440 = vlaneseq
    %v441 = vshrl.u32 %v440, 7
    %v442 = vsub.s32 0, %v441
    %v443 = vrot.slane %v438, %v442
    %v461 = vunpack.c.l.b16 %v422
    %v462 = vunpack.c.l.b16 %v423
    %v463 = vunpack.c.l.b16 %v424
    %v464 = vunpack.c.l.b16 %v425
    %v465 = vunpack.c.l.b16 %v426
    %v466 = vunpack.c.l.b16 %v427
    %v467 = vunpack.c.l.b16 %v428
    %v468 = vunpack.c.l.b16 %v429
    %v469 = vunpack.c.l.b16 %v430
    %v470 = vunpack.c.l.b16 %v431
    %v471 = vunpack.c.l.b16 %v432
    %v472 = vunpack.c.l.b16 %v433
    %v473 = vunpack.c.l.b16 %v434
    %v474 = vunpack.c.l.b16 %v435
    %v475 = vunpack.c.l.b16 %v436
    %v476 = vunpack.c.l.b16 %v437
    %v477 = vpack.c.b16 %v462, %v461
    %v478 = vpack.c.b16 %v464, %v463
    %v479 = vpack.c.b16 %v466, %v465
    %v480 = vpack.c.b16 %v468, %v467
    %v481 = vpack.c.b16 %v470, %v469
    %v482 = vpack.c.b16 %v472, %v471
    %v483 = vpack.c.b16 %v474, %v473
    %v484 = vpack.c.b16 %v476, %v475
    %493 = vmatprep.subr.bf16.mxu0 0
    %494 = vmatpush1.bf16.msra.mxu0 %v477
    %495 = vmatprep.subr.bf16.mxu0 0
    %496 = vmatpush1.bf16.msra.mxu0 %v478
    %497 = vmatprep.subr.bf16.mxu0 0
    %498 = vmatpush1.bf16.msra.mxu0 %v479
    %499 = vmatprep.subr.bf16.mxu0 0
    %500 = vmatpush1.bf16.msra.mxu0 %v480
    %501 = vmatprep.subr.bf16.mxu0 0
    %502 = vmatpush1.bf16.msra.mxu0 %v481
    %503 = vmatprep.subr.bf16.mxu0 0
    %504 = vmatpush1.bf16.msra.mxu0 %v482
    %505 = vmatprep.subr.bf16.mxu0 0
    %506 = vmatpush1.bf16.msra.mxu0 %v483
    %507 = vmatprep.subr.bf16.mxu0 0
    %508 = vmatpush1.bf16.msra.mxu0 %v484
    %509 = vmatprep.subr.bf16.mxu0 0
    %510 = vmatpush1.bf16.msra.mxu0 0
    %511 = vmatprep.subr.bf16.mxu0 0
    %512 = vmatpush1.bf16.msra.mxu0 0
    %513 = vmatprep.subr.bf16.mxu0 0
    %514 = vmatpush1.bf16.msra.mxu0 0
    %515 = vmatprep.subr.bf16.mxu0 0
    %516 = vmatpush1.bf16.msra.mxu0 0
    %517 = vmatprep.subr.bf16.mxu0 0
    %518 = vmatpush1.bf16.msra.mxu0 0
    %519 = vmatprep.subr.bf16.mxu0 0
    %520 = vmatpush1.bf16.msra.mxu0 0
    %521 = vmatprep.subr.bf16.mxu0 0
    %522 = vmatpush1.bf16.msra.mxu0 0
    %523 = vmatprep.subr.bf16.mxu0 0
    %524 = vmatpush1.bf16.msra.mxu0 0
    %525 = vmatprep.mubr.bf16.mxu0 0
    %526 = vmatmul.mubr.bf16.gmra.mrb[0].mxu0 %v390
    %v527 = vpop.f32.mrb[0].mxu0
    %v528 = vadd.f32 %v443, %v527
    %v529 = vpop.f32.mrb[0].mxu0
    %v530 = vpop.f32.mrb[0].mxu0
    %v531 = vadd.f32 %v443, %v530
    %v532 = vpop.f32.mrb[0].mxu0
    %533 = vmatprep.mubr.bf16.mxu0 0
    %534 = vmatmul.mubr.bf16.gmra.mrb[0].mxu0 %v391
    %v535 = vpop.f32.mrb[0].mxu0
    %v536 = vadd.f32 %v443, %v535
    %v537 = vpop.f32.mrb[0].mxu0
    %v538 = vpop.f32.mrb[0].mxu0
    %v539 = vadd.f32 %v443, %v538
    %v540 = vpop.f32.mrb[0].mxu0
    %541 = vmatprep.mubr.bf16.mxu0 0
    %542 = vmatmul.mubr.bf16.gmra.mrb[0].mxu0 %v392
    %v543 = vpop.f32.mrb[0].mxu0
    %v544 = vadd.f32 %v443, %v543
    %v545 = vpop.f32.mrb[0].mxu0
    %v546 = vpop.f32.mrb[0].mxu0
    %v547 = vadd.f32 %v443, %v546
    %v548 = vpop.f32.mrb[0].mxu0
    %549 = vmatprep.mubr.bf16.mxu0 0
    %550 = vmatmul.mubr.bf16.gmra.mrb[0].mxu0 %v393
    %v551 = vpop.f32.mrb[0].mxu0
    %v552 = vadd.f32 %v443, %v551
    %v553 = vpop.f32.mrb[0].mxu0
    %v554 = vpop.f32.mrb[0].mxu0
    %v555 = vadd.f32 %v443, %v554
    %v556 = vpop.f32.mrb[0].mxu0
    %557 = vmatprep.mubr.bf16.mxu0 0
    %558 = vmatmul.mubr.bf16.gmra.mrb[0].mxu0 %v394
    %v559 = vpop.f32.mrb[0].mxu0
    %v560 = vadd.f32 %v443, %v559
    %v561 = vpop.f32.mrb[0].mxu0
    %v562 = vpop.f32.mrb[0].mxu0
    %v563 = vadd.f32 %v443, %v562
    %v564 = vpop.f32.mrb[0].mxu0
    %565 = vmatprep.mubr.bf16.mxu0 0
    %566 = vmatmul.mubr.bf16.gmra.mrb[0].mxu0 %v395
    %v567 = vpop.f32.mrb[0].mxu0
    %v568 = vadd.f32 %v443, %v567
    %v569 = vpop.f32.mrb[0].mxu0
    %v570 = vpop.f32.mrb[0].mxu0
    %v571 = vadd.f32 %v443, %v570
    %v572 = vpop.f32.mrb[0].mxu0
    %573 = vmatprep.mubr.bf16.mxu0 0
    %574 = vmatmul.mubr.bf16.gmra.mrb[0].mxu0 %v396
    %v575 = vpop.f32.mrb[0].mxu0
    %v576 = vadd.f32 %v443, %v575
    %v577 = vpop.f32.mrb[0].mxu0
    %v578 = vpop.f32.mrb[0].mxu0
    %v579 = vadd.f32 %v443, %v578
    %v580 = vpop.f32.mrb[0].mxu0
    %581 = vmatprep.mubr.bf16.mxu0 0
    %582 = vmatmul.mubr.bf16.gmra.mrb[0].mxu0 %v397
    %v583 = vpop.f32.mrb[0].mxu0
    %v584 = vadd.f32 %v443, %v583
    %v585 = vpop.f32.mrb[0].mxu0
    %v586 = vpop.f32.mrb[0].mxu0
    %v587 = vadd.f32 %v443, %v586
    %v588 = vpop.f32.mrb[0].mxu0
    %589 = vmatprep.mubr.bf16.mxu0 0
    %590 = vmatmul.mubr.bf16.gmra.mrb[0].mxu0 %v398
    %v591 = vpop.f32.mrb[0].mxu0
    %v592 = vadd.f32 %v443, %v591
    %v593 = vpop.f32.mrb[0].mxu0
    %v594 = vpop.f32.mrb[0].mxu0
    %v595 = vadd.f32 %v443, %v594
    %v596 = vpop.f32.mrb[0].mxu0
    %597 = vmatprep.mubr.bf16.mxu0 0
    %598 = vmatmul.mubr.bf16.gmra.mrb[0].mxu0 %v399
    %v599 = vpop.f32.mrb[0].mxu0
    %v600 = vadd.f32 %v443, %v599
    %v601 = vpop.f32.mrb[0].mxu0
    %v602 = vpop.f32.mrb[0].mxu0
    %v603 = vadd.f32 %v443, %v602
    %v604 = vpop.f32.mrb[0].mxu0
    %605 = vmatprep.mubr.bf16.mxu0 0
    %606 = vmatmul.mubr.bf16.gmra.mrb[0].mxu0 %v400
    %v607 = vpop.f32.mrb[0].mxu0
    %v608 = vadd.f32 %v443, %v607
    %v609 = vpop.f32.mrb[0].mxu0
    %v610 = vpop.f32.mrb[0].mxu0
    %v611 = vadd.f32 %v443, %v610
    %v612 = vpop.f32.mrb[0].mxu0
    %613 = vmatprep.mubr.bf16.mxu0 0
    %614 = vmatmul.mubr.bf16.gmra.mrb[0].mxu0 %v401
    %v615 = vpop.f32.mrb[0].mxu0
    %v616 = vadd.f32 %v443, %v615
    %v617 = vpop.f32.mrb[0].mxu0
    %v618 = vpop.f32.mrb[0].mxu0
    %v619 = vadd.f32 %v443, %v618
    %v620 = vpop.f32.mrb[0].mxu0
    %621 = vmatprep.mubr.bf16.mxu0 0
    %622 = vmatmul.mubr.bf16.gmra.mrb[0].mxu0 %v402
    %v623 = vpop.f32.mrb[0].mxu0
    %v624 = vadd.f32 %v443, %v623
    %v625 = vpop.f32.mrb[0].mxu0
    %v626 = vpop.f32.mrb[0].mxu0
    %v627 = vadd.f32 %v443, %v626
    %v628 = vpop.f32.mrb[0].mxu0
    %629 = vmatprep.mubr.bf16.mxu0 0
    %630 = vmatmul.mubr.bf16.gmra.mrb[0].mxu0 %v403
    %v631 = vpop.f32.mrb[0].mxu0
    %v632 = vadd.f32 %v443, %v631
    %v633 = vpop.f32.mrb[0].mxu0
    %v634 = vpop.f32.mrb[0].mxu0
    %v635 = vadd.f32 %v443, %v634
    %v636 = vpop.f32.mrb[0].mxu0
    %637 = vmatprep.mubr.bf16.mxu0 0
    %638 = vmatmul.mubr.bf16.gmra.mrb[0].mxu0 %v404
    %v639 = vpop.f32.mrb[0].mxu0
    %v640 = vadd.f32 %v443, %v639
    %v641 = vpop.f32.mrb[0].mxu0
    %v642 = vpop.f32.mrb[0].mxu0
    %v643 = vadd.f32 %v443, %v642
    %v644 = vpop.f32.mrb[0].mxu0
    %645 = vmatprep.mubr.bf16.mxu0 0
    %646 = vmatmul.mubr.bf16.gmra.mrb[0].mxu0 %v405
    %v647 = vpop.f32.mrb[0].mxu0
    %v648 = vadd.f32 %v443, %v647
    %v649 = vpop.f32.mrb[0].mxu0
    %v650 = vpop.f32.mrb[0].mxu0
    %v651 = vadd.f32 %v443, %v650
    %v652 = vpop.f32.mrb[0].mxu0
    %653 = vmatprep.mubr.bf16.mxu0 0
    %654 = vmatmul.mubr.bf16.gmra.mrb[0].mxu0 %v406
    %v655 = vpop.f32.mrb[0].mxu0
    %v656 = vadd.f32 %v443, %v655
    %v657 = vpop.f32.mrb[0].mxu0
    %v658 = vpop.f32.mrb[0].mxu0
    %v659 = vadd.f32 %v443, %v658
    %v660 = vpop.f32.mrb[0].mxu0
    %661 = vmatprep.mubr.bf16.mxu0 0
    %662 = vmatmul.mubr.bf16.gmra.mrb[0].mxu0 %v407
    %v663 = vpop.f32.mrb[0].mxu0
    %v664 = vadd.f32 %v443, %v663
    %v665 = vpop.f32.mrb[0].mxu0
    %v666 = vpop.f32.mrb[0].mxu0
    %v667 = vadd.f32 %v443, %v666
    %v668 = vpop.f32.mrb[0].mxu0
    %669 = vmatprep.mubr.bf16.mxu0 0
    %670 = vmatmul.mubr.bf16.gmra.mrb[0].mxu0 %v408
    %v671 = vpop.f32.mrb[0].mxu0
    %v672 = vadd.f32 %v443, %v671
    %v673 = vpop.f32.mrb[0].mxu0
    %v674 = vpop.f32.mrb[0].mxu0
    %v675 = vadd.f32 %v443, %v674
    %v676 = vpop.f32.mrb[0].mxu0
    %677 = vmatprep.mubr.bf16.mxu0 0
    %678 = vmatmul.mubr.bf16.gmra.mrb[0].mxu0 %v409
    %v679 = vpop.f32.mrb[0].mxu0
    %v680 = vadd.f32 %v443, %v679
    %v681 = vpop.f32.mrb[0].mxu0
    %v682 = vpop.f32.mrb[0].mxu0
    %v683 = vadd.f32 %v443, %v682
    %v684 = vpop.f32.mrb[0].mxu0
    %685 = vmatprep.mubr.bf16.mxu0 0
    %686 = vmatmul.mubr.bf16.gmra.mrb[0].mxu0 %v410
    %v687 = vpop.f32.mrb[0].mxu0
    %v688 = vadd.f32 %v443, %v687
    %v689 = vpop.f32.mrb[0].mxu0
    %v690 = vpop.f32.mrb[0].mxu0
    %v691 = vadd.f32 %v443, %v690
    %v692 = vpop.f32.mrb[0].mxu0
    %693 = vmatprep.mubr.bf16.mxu0 0
    %694 = vmatmul.mubr.bf16.gmra.mrb[0].mxu0 %v411
    %v695 = vpop.f32.mrb[0].mxu0
    %v696 = vadd.f32 %v443, %v695
    %v697 = vpop.f32.mrb[0].mxu0
    %v698 = vpop.f32.mrb[0].mxu0
    %v699 = vadd.f32 %v443, %v698
    %v700 = vpop.f32.mrb[0].mxu0
    %701 = vmatprep.mubr.bf16.mxu0 0
    %702 = vmatmul.mubr.bf16.gmra.mrb[0].mxu0 %v412
    %v703 = vpop.f32.mrb[0].mxu0
    %v704 = vadd.f32 %v443, %v703
    %v705 = vpop.f32.mrb[0].mxu0
    %v706 = vpop.f32.mrb[0].mxu0
    %v707 = vadd.f32 %v443, %v706
    %v708 = vpop.f32.mrb[0].mxu0
    %709 = vmatprep.mubr.bf16.mxu0 0
    %710 = vmatmul.mubr.bf16.gmra.mrb[0].mxu0 %v413
    %v711 = vpop.f32.mrb[0].mxu0
    %v712 = vadd.f32 %v443, %v711
    %v713 = vpop.f32.mrb[0].mxu0
    %v714 = vpop.f32.mrb[0].mxu0
    %v715 = vadd.f32 %v443, %v714
    %v716 = vpop.f32.mrb[0].mxu0
    %717 = vmatprep.mubr.bf16.mxu0 0
    %718 = vmatmul.mubr.bf16.gmra.mrb[0].mxu0 %v414
    %v719 = vpop.f32.mrb[0].mxu0
    %v720 = vadd.f32 %v443, %v719
    %v721 = vpop.f32.mrb[0].mxu0
    %v722 = vpop.f32.mrb[0].mxu0
    %v723 = vadd.f32 %v443, %v722
    %v724 = vpop.f32.mrb[0].mxu0
    %725 = vmatprep.mubr.bf16.mxu0 0
    %726 = vmatmul.mubr.bf16.gmra.mrb[0].mxu0 %v415
    %v727 = vpop.f32.mrb[0].mxu0
    %v728 = vadd.f32 %v443, %v727
    %v729 = vpop.f32.mrb[0].mxu0
    %v730 = vpop.f32.mrb[0].mxu0
    %v731 = vadd.f32 %v443, %v730
    %v732 = vpop.f32.mrb[0].mxu0
    %733 = vmatprep.mubr.bf16.mxu0 0
    %734 = vmatmul.mubr.bf16.gmra.mrb[0].mxu0 %v416
    %v735 = vpop.f32.mrb[0].mxu0
    %v736 = vadd.f32 %v443, %v735
    %v737 = vpop.f32.mrb[0].mxu0
    %v738 = vpop.f32.mrb[0].mxu0
    %v739 = vadd.f32 %v443, %v738
    %v740 = vpop.f32.mrb[0].mxu0
    %741 = vmatprep.mubr.bf16.mxu0 0
    %742 = vmatmul.mubr.bf16.gmra.mrb[0].mxu0 %v417
    %v743 = vpop.f32.mrb[0].mxu0
    %v744 = vadd.f32 %v443, %v743
    %v745 = vpop.f32.mrb[0].mxu0
    %v746 = vpop.f32.mrb[0].mxu0
    %v747 = vadd.f32 %v443, %v746
    %v748 = vpop.f32.mrb[0].mxu0
    %749 = vmatprep.mubr.bf16.mxu0 0
    %750 = vmatmul.mubr.bf16.gmra.mrb[0].mxu0 %v418
    %v751 = vpop.f32.mrb[0].mxu0
    %v752 = vadd.f32 %v443, %v751
    %v753 = vpop.f32.mrb[0].mxu0
    %v754 = vpop.f32.mrb[0].mxu0
    %v755 = vadd.f32 %v443, %v754
    %v756 = vpop.f32.mrb[0].mxu0
    %757 = vmatprep.mubr.bf16.mxu0 0
    %758 = vmatmul.mubr.bf16.gmra.mrb[0].mxu0 %v419
    %v759 = vpop.f32.mrb[0].mxu0
    %v760 = vadd.f32 %v443, %v759
    %v761 = vpop.f32.mrb[0].mxu0
    %v762 = vpop.f32.mrb[0].mxu0
    %v763 = vadd.f32 %v443, %v762
    %v764 = vpop.f32.mrb[0].mxu0
    %765 = vmatprep.mubr.bf16.mxu0 0
    %766 = vmatmul.mubr.bf16.gmra.mrb[0].mxu0 %v420
    %v767 = vpop.f32.mrb[0].mxu0
    %v768 = vadd.f32 %v443, %v767
    %v769 = vpop.f32.mrb[0].mxu0
    %v770 = vpop.f32.mrb[0].mxu0
    %v771 = vadd.f32 %v443, %v770
    %v772 = vpop.f32.mrb[0].mxu0
    %773 = vmatprep.mubr.bf16.mxu0 0
    %774 = vmatmul.mubr.bf16.gmra.mrb[0].mxu0 %v421
    %v775 = vpop.f32.mrb[0].mxu0
    %v776 = vadd.f32 %v443, %v775
    %v777 = vpop.f32.mrb[0].mxu0
    %v778 = vpop.f32.mrb[0].mxu0
    %v779 = vadd.f32 %v443, %v778
    %v780 = vpop.f32.mrb[0].mxu0
    %781 = vdwg.mxu0
    %v782 = vld [vmem:[%s5] sm:$0x1]
    %v784 = vlaneseq
    %v785 = vshrl.u32 %v784, 7
    %v786 = vsub.s32 0, %v785
    %v787 = vrot.slane %v782, %v786
    %v789 = vmul.f32 %v528, %v787
    %v790 = vmul.f32 %v531, %v787
    %v791 = vmul.f32 %v536, %v787
    %v792 = vmul.f32 %v539, %v787
    %v793 = vmul.f32 %v544, %v787
    %v794 = vmul.f32 %v547, %v787
    %v795 = vmul.f32 %v552, %v787
    %v796 = vmul.f32 %v555, %v787
    %v797 = vmul.f32 %v560, %v787
    %v798 = vmul.f32 %v563, %v787
    %v799 = vmul.f32 %v568, %v787
    %v800 = vmul.f32 %v571, %v787
    %v801 = vmul.f32 %v576, %v787
    %v802 = vmul.f32 %v579, %v787
    %v803 = vmul.f32 %v584, %v787
    %v804 = vmul.f32 %v587, %v787
    %v805 = vmul.f32 %v592, %v787
    %v806 = vmul.f32 %v595, %v787
    %v807 = vmul.f32 %v600, %v787
    %v808 = vmul.f32 %v603, %v787
    %v809 = vmul.f32 %v608, %v787
    %v810 = vmul.f32 %v611, %v787
    %v811 = vmul.f32 %v616, %v787
    %v812 = vmul.f32 %v619, %v787
    %v813 = vmul.f32 %v624, %v787
    %v814 = vmul.f32 %v627, %v787
    %v815 = vmul.f32 %v632, %v787
    %v816 = vmul.f32 %v635, %v787
    %v817 = vmul.f32 %v640, %v787
    %v818 = vmul.f32 %v643, %v787
    %v819 = vmul.f32 %v648, %v787
    %v820 = vmul.f32 %v651, %v787
    %v821 = vmul.f32 %v656, %v787
    %v822 = vmul.f32 %v659, %v787
    %v823 = vmul.f32 %v664, %v787
    %v824 = vmul.f32 %v667, %v787
    %v825 = vmul.f32 %v672, %v787
    %v826 = vmul.f32 %v675, %v787
    %v827 = vmul.f32 %v680, %v787
    %v828 = vmul.f32 %v683, %v787
    %v829 = vmul.f32 %v688, %v787
    %v830 = vmul.f32 %v691, %v787
    %v831 = vmul.f32 %v696, %v787
    %v832 = vmul.f32 %v699, %v787
    %v833 = vmul.f32 %v704, %v787
    %v834 = vmul.f32 %v707, %v787
    %v835 = vmul.f32 %v712, %v787
    %v836 = vmul.f32 %v715, %v787
    %v837 = vmul.f32 %v720, %v787
    %v838 = vmul.f32 %v723, %v787
    %v839 = vmul.f32 %v728, %v787
    %v840 = vmul.f32 %v731, %v787
    %v841 = vmul.f32 %v736, %v787
    %v842 = vmul.f32 %v739, %v787
    %v843 = vmul.f32 %v744, %v787
    %v844 = vmul.f32 %v747, %v787
    %v845 = vmul.f32 %v752, %v787
    %v846 = vmul.f32 %v755, %v787
    %v847 = vmul.f32 %v760, %v787
    %v848 = vmul.f32 %v763, %v787
    %v849 = vmul.f32 %v768, %v787
    %v850 = vmul.f32 %v771, %v787
    %v851 = vmul.f32 %v776, %v787
    %v852 = vmul.f32 %v779, %v787
    %v853 = vld [vmem:[%s6] sm:$0x1]
    %v855 = vlaneseq
    %v856 = vshrl.u32 %v855, 7
    %v857 = vsub.s32 0, %v856
    %v858 = vrot.slane %v853, %v857
    %v860 = vadd.f32 %v789, %v858
    %v861 = vadd.f32 %v790, %v858
    %v862 = vadd.f32 %v791, %v858
    %v863 = vadd.f32 %v792, %v858
    %v864 = vadd.f32 %v793, %v858
    %v865 = vadd.f32 %v794, %v858
    %v866 = vadd.f32 %v795, %v858
    %v867 = vadd.f32 %v796, %v858
    %v868 = vadd.f32 %v797, %v858
    %v869 = vadd.f32 %v798, %v858
    %v870 = vadd.f32 %v799, %v858
    %v871 = vadd.f32 %v800, %v858
    %v872 = vadd.f32 %v801, %v858
    %v873 = vadd.f32 %v802, %v858
    %v874 = vadd.f32 %v803, %v858
    %v875 = vadd.f32 %v804, %v858
    %v876 = vadd.f32 %v805, %v858
    %v877 = vadd.f32 %v806, %v858
    %v878 = vadd.f32 %v807, %v858
    %v879 = vadd.f32 %v808, %v858
    %v880 = vadd.f32 %v809, %v858
    %v881 = vadd.f32 %v810, %v858
    %v882 = vadd.f32 %v811, %v858
    %v883 = vadd.f32 %v812, %v858
    %v884 = vadd.f32 %v813, %v858
    %v885 = vadd.f32 %v814, %v858
    %v886 = vadd.f32 %v815, %v858
    %v887 = vadd.f32 %v816, %v858
    %v888 = vadd.f32 %v817, %v858
    %v889 = vadd.f32 %v818, %v858
    %v890 = vadd.f32 %v819, %v858
    %v891 = vadd.f32 %v820, %v858
    %v892 = vadd.f32 %v821, %v858
    %v893 = vadd.f32 %v822, %v858
    %v894 = vadd.f32 %v823, %v858
    %v895 = vadd.f32 %v824, %v858
    %v896 = vadd.f32 %v825, %v858
    %v897 = vadd.f32 %v826, %v858
    %v898 = vadd.f32 %v827, %v858
    %v899 = vadd.f32 %v828, %v858
    %v900 = vadd.f32 %v829, %v858
    %v901 = vadd.f32 %v830, %v858
    %v902 = vadd.f32 %v831, %v858
    %v903 = vadd.f32 %v832, %v858
    %v904 = vadd.f32 %v833, %v858
    %v905 = vadd.f32 %v834, %v858
    %v906 = vadd.f32 %v835, %v858
    %v907 = vadd.f32 %v836, %v858
    %v908 = vadd.f32 %v837, %v858
    %v909 = vadd.f32 %v838, %v858
    %v910 = vadd.f32 %v839, %v858
    %v911 = vadd.f32 %v840, %v858
    %v912 = vadd.f32 %v841, %v858
    %v913 = vadd.f32 %v842, %v858
    %v914 = vadd.f32 %v843, %v858
    %v915 = vadd.f32 %v844, %v858
    %v916 = vadd.f32 %v845, %v858
    %v917 = vadd.f32 %v846, %v858
    %v918 = vadd.f32 %v847, %v858
    %v919 = vadd.f32 %v848, %v858
    %v920 = vadd.f32 %v849, %v858
    %v921 = vadd.f32 %v850, %v858
    %v922 = vadd.f32 %v851, %v858
    %v923 = vadd.f32 %v852, %v858
    %v924 = vmax.f32 %v860, 0.0
    %v925 = vmax.f32 %v861, 0.0
    %v926 = vmax.f32 %v862, 0.0
    %v927 = vmax.f32 %v863, 0.0
    %v928 = vmax.f32 %v864, 0.0
    %v929 = vmax.f32 %v865, 0.0
    %v930 = vmax.f32 %v866, 0.0
    %v931 = vmax.f32 %v867, 0.0
    %v932 = vmax.f32 %v868, 0.0
    %v933 = vmax.f32 %v869, 0.0
    %v934 = vmax.f32 %v870, 0.0
    %v935 = vmax.f32 %v871, 0.0
    %v936 = vmax.f32 %v872, 0.0
    %v937 = vmax.f32 %v873, 0.0
    %v938 = vmax.f32 %v874, 0.0
    %v939 = vmax.f32 %v875, 0.0
    %v940 = vmax.f32 %v876, 0.0
    %v941 = vmax.f32 %v877, 0.0
    %v942 = vmax.f32 %v878, 0.0
    %v943 = vmax.f32 %v879, 0.0
    %v944 = vmax.f32 %v880, 0.0
    %v945 = vmax.f32 %v881, 0.0
    %v946 = vmax.f32 %v882, 0.0
    %v947 = vmax.f32 %v883, 0.0
    %v948 = vmax.f32 %v884, 0.0
    %v949 = vmax.f32 %v885, 0.0
    %v950 = vmax.f32 %v886, 0.0
    %v951 = vmax.f32 %v887, 0.0
    %v952 = vmax.f32 %v888, 0.0
    %v953 = vmax.f32 %v889, 0.0
    %v954 = vmax.f32 %v890, 0.0
    %v955 = vmax.f32 %v891, 0.0
    %v956 = vmax.f32 %v892, 0.0
    %v957 = vmax.f32 %v893, 0.0
    %v958 = vmax.f32 %v894, 0.0
    %v959 = vmax.f32 %v895, 0.0
    %v960 = vmax.f32 %v896, 0.0
    %v961 = vmax.f32 %v897, 0.0
    %v962 = vmax.f32 %v898, 0.0
    %v963 = vmax.f32 %v899, 0.0
    %v964 = vmax.f32 %v900, 0.0
    %v965 = vmax.f32 %v901, 0.0
    %v966 = vmax.f32 %v902, 0.0
    %v967 = vmax.f32 %v903, 0.0
    %v968 = vmax.f32 %v904, 0.0
    %v969 = vmax.f32 %v905, 0.0
    %v970 = vmax.f32 %v906, 0.0
    %v971 = vmax.f32 %v907, 0.0
    %v972 = vmax.f32 %v908, 0.0
    %v973 = vmax.f32 %v909, 0.0
    %v974 = vmax.f32 %v910, 0.0
    %v975 = vmax.f32 %v911, 0.0
    %v976 = vmax.f32 %v912, 0.0
    %v977 = vmax.f32 %v913, 0.0
    %v978 = vmax.f32 %v914, 0.0
    %v979 = vmax.f32 %v915, 0.0
    %v980 = vmax.f32 %v916, 0.0
    %v981 = vmax.f32 %v917, 0.0
    %v982 = vmax.f32 %v918, 0.0
    %v983 = vmax.f32 %v919, 0.0
    %v984 = vmax.f32 %v920, 0.0
    %v985 = vmax.f32 %v921, 0.0
    %v986 = vmax.f32 %v922, 0.0
    %v987 = vmax.f32 %v923, 0.0
    %v988 = vpack.c.bf16 %v925, %v924
    %v989 = vpack.c.bf16 %v927, %v926
    %v990 = vpack.c.bf16 %v929, %v928
    %v991 = vpack.c.bf16 %v931, %v930
    %v992 = vpack.c.bf16 %v933, %v932
    %v993 = vpack.c.bf16 %v935, %v934
    %v994 = vpack.c.bf16 %v937, %v936
    %v995 = vpack.c.bf16 %v939, %v938
    %v996 = vpack.c.bf16 %v941, %v940
    %v997 = vpack.c.bf16 %v943, %v942
    %v998 = vpack.c.bf16 %v945, %v944
    %v999 = vpack.c.bf16 %v947, %v946
    %v1000 = vpack.c.bf16 %v949, %v948
    %v1001 = vpack.c.bf16 %v951, %v950
    %v1002 = vpack.c.bf16 %v953, %v952
    %v1003 = vpack.c.bf16 %v955, %v954
    %v1004 = vpack.c.bf16 %v957, %v956
    %v1005 = vpack.c.bf16 %v959, %v958
    %v1006 = vpack.c.bf16 %v961, %v960
    %v1007 = vpack.c.bf16 %v963, %v962
    %v1008 = vpack.c.bf16 %v965, %v964
    %v1009 = vpack.c.bf16 %v967, %v966
    %v1010 = vpack.c.bf16 %v969, %v968
    %v1011 = vpack.c.bf16 %v971, %v970
    %v1012 = vpack.c.bf16 %v973, %v972
    %v1013 = vpack.c.bf16 %v975, %v974
    %v1014 = vpack.c.bf16 %v977, %v976
    %v1015 = vpack.c.bf16 %v979, %v978
    %v1016 = vpack.c.bf16 %v981, %v980
    %v1017 = vpack.c.bf16 %v983, %v982
    %v1018 = vpack.c.bf16 %v985, %v984
    %v1019 = vpack.c.bf16 %v987, %v986
    %v1021 = vshrl.u32 0, 16
    %v1023 = vrot.slane %v1021, 7
    %v1024 = vshll.u32 0, 16
    %v1026 = vor.u32 %v1023, %v1024
    %v1028 = vshrl.u32 %v988, 16
    %v1030 = vrot.slane %v1028, 7
    %v1031 = vshll.u32 %v988, 16
    %v1033 = vor.u32 %v1030, %v1031
    %v1035 = vshrl.u32 %v989, 16
    %v1037 = vrot.slane %v1035, 7
    %v1038 = vshll.u32 %v989, 16
    %v1040 = vor.u32 %v1037, %v1038
    %v1042 = vshrl.u32 %v990, 16
    %v1044 = vrot.slane %v1042, 7
    %v1045 = vshll.u32 %v990, 16
    %v1047 = vor.u32 %v1044, %v1045
    %v1049 = vshrl.u32 %v991, 16
    %v1051 = vrot.slane %v1049, 7
    %v1052 = vshll.u32 %v991, 16
    %v1054 = vor.u32 %v1051, %v1052
    %v1056 = vshrl.u32 %v992, 16
    %v1058 = vrot.slane %v1056, 7
    %v1059 = vshll.u32 %v992, 16
    %v1061 = vor.u32 %v1058, %v1059
    %v1063 = vshrl.u32 %v993, 16
    %v1065 = vrot.slane %v1063, 7
    %v1066 = vshll.u32 %v993, 16
    %v1068 = vor.u32 %v1065, %v1066
    %v1070 = vshrl.u32 %v994, 16
    %v1072 = vrot.slane %v1070, 7
    %v1073 = vshll.u32 %v994, 16
    %v1075 = vor.u32 %v1072, %v1073
    %v1077 = vshrl.u32 %v995, 16
    %v1079 = vrot.slane %v1077, 7
    %v1080 = vshll.u32 %v995, 16
    %v1082 = vor.u32 %v1079, %v1080
    %v1084 = vshrl.u32 %v996, 16
    %v1086 = vrot.slane %v1084, 7
    %v1087 = vshll.u32 %v996, 16
    %v1089 = vor.u32 %v1086, %v1087
    %v1091 = vshrl.u32 %v997, 16
    %v1093 = vrot.slane %v1091, 7
    %v1094 = vshll.u32 %v997, 16
    %v1096 = vor.u32 %v1093, %v1094
    %v1098 = vshrl.u32 %v998, 16
    %v1100 = vrot.slane %v1098, 7
    %v1101 = vshll.u32 %v998, 16
    %v1103 = vor.u32 %v1100, %v1101
    %v1105 = vshrl.u32 %v999, 16
    %v1107 = vrot.slane %v1105, 7
    %v1108 = vshll.u32 %v999, 16
    %v1110 = vor.u32 %v1107, %v1108
    %v1112 = vshrl.u32 %v1000, 16
    %v1114 = vrot.slane %v1112, 7
    %v1115 = vshll.u32 %v1000, 16
    %v1117 = vor.u32 %v1114, %v1115
    %v1119 = vshrl.u32 %v1001, 16
    %v1121 = vrot.slane %v1119, 7
    %v1122 = vshll.u32 %v1001, 16
    %v1124 = vor.u32 %v1121, %v1122
    %v1126 = vshrl.u32 %v1002, 16
    %v1128 = vrot.slane %v1126, 7
    %v1129 = vshll.u32 %v1002, 16
    %v1131 = vor.u32 %v1128, %v1129
    %v1133 = vshrl.u32 %v1003, 16
    %v1135 = vrot.slane %v1133, 7
    %v1136 = vshll.u32 %v1003, 16
    %v1138 = vor.u32 %v1135, %v1136
    %v1140 = vshrl.u32 %v1004, 16
    %v1142 = vrot.slane %v1140, 7
    %v1143 = vshll.u32 %v1004, 16
    %v1145 = vor.u32 %v1142, %v1143
    %v1147 = vshrl.u32 %v1005, 16
    %v1149 = vrot.slane %v1147, 7
    %v1150 = vshll.u32 %v1005, 16
    %v1152 = vor.u32 %v1149, %v1150
    %v1154 = vshrl.u32 %v1006, 16
    %v1156 = vrot.slane %v1154, 7
    %v1157 = vshll.u32 %v1006, 16
    %v1159 = vor.u32 %v1156, %v1157
    %v1161 = vshrl.u32 %v1007, 16
    %v1163 = vrot.slane %v1161, 7
    %v1164 = vshll.u32 %v1007, 16
    %v1166 = vor.u32 %v1163, %v1164
    %v1168 = vshrl.u32 %v1008, 16
    %v1170 = vrot.slane %v1168, 7
    %v1171 = vshll.u32 %v1008, 16
    %v1173 = vor.u32 %v1170, %v1171
    %v1175 = vshrl.u32 %v1009, 16
    %v1177 = vrot.slane %v1175, 7
    %v1178 = vshll.u32 %v1009, 16
    %v1180 = vor.u32 %v1177, %v1178
    %v1182 = vshrl.u32 %v1010, 16
    %v1184 = vrot.slane %v1182, 7
    %v1185 = vshll.u32 %v1010, 16
    %v1187 = vor.u32 %v1184, %v1185
    %v1189 = vshrl.u32 %v1011, 16
    %v1191 = vrot.slane %v1189, 7
    %v1192 = vshll.u32 %v1011, 16
    %v1194 = vor.u32 %v1191, %v1192
    %v1196 = vshrl.u32 %v1012, 16
    %v1198 = vrot.slane %v1196, 7
    %v1199 = vshll.u32 %v1012, 16
    %v1201 = vor.u32 %v1198, %v1199
    %v1203 = vshrl.u32 %v1013, 16
    %v1205 = vrot.slane %v1203, 7
    %v1206 = vshll.u32 %v1013, 16
    %v1208 = vor.u32 %v1205, %v1206
    %v1210 = vshrl.u32 %v1014, 16
    %v1212 = vrot.slane %v1210, 7
    %v1213 = vshll.u32 %v1014, 16
    %v1215 = vor.u32 %v1212, %v1213
    %v1217 = vshrl.u32 %v1015, 16
    %v1219 = vrot.slane %v1217, 7
    %v1220 = vshll.u32 %v1015, 16
    %v1222 = vor.u32 %v1219, %v1220
    %v1224 = vshrl.u32 %v1016, 16
    %v1226 = vrot.slane %v1224, 7
    %v1227 = vshll.u32 %v1016, 16
    %v1229 = vor.u32 %v1226, %v1227
    %v1231 = vshrl.u32 %v1017, 16
    %v1233 = vrot.slane %v1231, 7
    %v1234 = vshll.u32 %v1017, 16
    %v1236 = vor.u32 %v1233, %v1234
    %v1238 = vshrl.u32 %v1018, 16
    %v1240 = vrot.slane %v1238, 7
    %v1241 = vshll.u32 %v1018, 16
    %v1243 = vor.u32 %v1240, %v1241
    %v1245 = vshrl.u32 %v1019, 16
    %v1247 = vrot.slane %v1245, 7
    %v1248 = vshll.u32 %v1019, 16
    %v1250 = vor.u32 %v1247, %v1248
    %vm1317 = vcmask 1040384
    %vm1318 = vsmask.f32 256
    %vm1319 = vmand %vm1317, %vm1318
    %v1320 = vsel %vm1319, 0, %v1026
    %v1321 = vsel %vm1319, 0, %v1033
    %v1322 = vsel %vm1319, 0, %v1040
    %v1323 = vsel %vm1319, 0, %v1047
    %v1324 = vsel %vm1319, 0, %v1054
    %v1325 = vsel %vm1319, 0, %v1061
    %v1326 = vsel %vm1319, 0, %v1068
    %v1327 = vsel %vm1319, 0, %v1075
    %v1328 = vsel %vm1319, 0, %v1082
    %v1329 = vsel %vm1319, 0, %v1089
    %v1330 = vsel %vm1319, 0, %v1096
    %v1331 = vsel %vm1319, 0, %v1103
    %v1332 = vsel %vm1319, 0, %v1110
    %v1333 = vsel %vm1319, 0, %v1117
    %v1334 = vsel %vm1319, 0, %v1124
    %v1335 = vsel %vm1319, 0, %v1131
    %v1336 = vsel %vm1319, 0, %v1138
    %v1337 = vsel %vm1319, 0, %v1145
    %v1338 = vsel %vm1319, 0, %v1152
    %v1339 = vsel %vm1319, 0, %v1159
    %v1340 = vsel %vm1319, 0, %v1166
    %v1341 = vsel %vm1319, 0, %v1173
    %v1342 = vsel %vm1319, 0, %v1180
    %v1343 = vsel %vm1319, 0, %v1187
    %v1344 = vsel %vm1319, 0, %v1194
    %v1345 = vsel %vm1319, 0, %v1201
    %v1346 = vsel %vm1319, 0, %v1208
    %v1347 = vsel %vm1319, 0, %v1215
    %v1348 = vsel %vm1319, 0, %v1222
    %v1349 = vsel %vm1319, 0, %v1229
    %v1350 = vsel %vm1319, 0, %v1236
    %v1351 = vsel %vm1319, 0, %v1243
    %v1352 = vsel %vm1319, 0, %v1250
    %v1353 = vsel %vm1319, %v1023, 0
    %v1354 = vsel %vm1319, %v1030, 0
    %v1355 = vsel %vm1319, %v1037, 0
    %v1356 = vsel %vm1319, %v1044, 0
    %v1357 = vsel %vm1319, %v1051, 0
    %v1358 = vsel %vm1319, %v1058, 0
    %v1359 = vsel %vm1319, %v1065, 0
    %v1360 = vsel %vm1319, %v1072, 0
    %v1361 = vsel %vm1319, %v1079, 0
    %v1362 = vsel %vm1319, %v1086, 0
    %v1363 = vsel %vm1319, %v1093, 0
    %v1364 = vsel %vm1319, %v1100, 0
    %v1365 = vsel %vm1319, %v1107, 0
    %v1366 = vsel %vm1319, %v1114, 0
    %v1367 = vsel %vm1319, %v1121, 0
    %v1368 = vsel %vm1319, %v1128, 0
    %v1369 = vsel %vm1319, %v1135, 0
    %v1370 = vsel %vm1319, %v1142, 0
    %v1371 = vsel %vm1319, %v1149, 0
    %v1372 = vsel %vm1319, %v1156, 0
    %v1373 = vsel %vm1319, %v1163, 0
    %v1374 = vsel %vm1319, %v1170, 0
    %v1375 = vsel %vm1319, %v1177, 0
    %v1376 = vsel %vm1319, %v1184, 0
    %v1377 = vsel %vm1319, %v1191, 0
    %v1378 = vsel %vm1319, %v1198, 0
    %v1379 = vsel %vm1319, %v1205, 0
    %v1380 = vsel %vm1319, %v1212, 0
    %v1381 = vsel %vm1319, %v1219, 0
    %v1382 = vsel %vm1319, %v1226, 0
    %v1383 = vsel %vm1319, %v1233, 0
    %v1384 = vsel %vm1319, %v1240, 0
    %v1385 = vsel %vm1319, %v1247, 0
    %v1386 = vld [vmem:[#allocation7] sm:$0xf]
    %v1387 = vld [vmem:[#allocation7 + $0x4] sm:$0xf]
    %v1388 = vld [vmem:[#allocation7 + $0x8] sm:$0xf]
    %v1389 = vld [vmem:[#allocation7 + $0xc] sm:$0xf]
    %v1390 = vld [vmem:[#allocation7 + $0x10] sm:$0xf]
    %v1391 = vld [vmem:[#allocation7 + $0x14] sm:$0xf]
    %v1392 = vld [vmem:[#allocation7 + $0x18] sm:$0xf]
    %v1393 = vld [vmem:[#allocation7 + $0x1c] sm:$0xf]
    %v1394 = vld [vmem:[#allocation7 + $0x20] sm:$0xf]
    %v1395 = vld [vmem:[#allocation7 + $0x24] sm:$0xf]
    %v1396 = vld [vmem:[#allocation7 + $0x28] sm:$0xf]
    %v1397 = vld [vmem:[#allocation7 + $0x2c] sm:$0xf]
    %v1398 = vld [vmem:[#allocation7 + $0x30] sm:$0xf]
    %v1399 = vld [vmem:[#allocation7 + $0x34] sm:$0xf]
    %v1400 = vld [vmem:[#allocation7 + $0x38] sm:$0xf]
    %v1401 = vld [vmem:[#allocation7 + $0x3c] sm:$0xf]
    %vm1402 = vsmask.f32 7424
    %v1404 = vshrl.u32 %v1320, 16
    %v1406 = vshll.u32 %v1320, 16
    %v1408 = vrot.slane %v1406, 1
    %v1409 = vor.u32 %v1404, %v1408
    %v1411 = vshll.u32 %v1353, 16
    %v1413 = vrot.slane %v1411, 1
    %v1414 = vsel %vm1402, %v1409, %v1413
    %v1416 = vshrl.u32 %v1321, 16
    %v1418 = vshll.u32 %v1321, 16
    %v1420 = vrot.slane %v1418, 1
    %v1421 = vor.u32 %v1416, %v1420
    %v1423 = vshll.u32 %v1354, 16
    %v1425 = vrot.slane %v1423, 1
    %v1426 = vsel %vm1402, %v1421, %v1425
    %v1428 = vshrl.u32 %v1322, 16
    %v1430 = vshll.u32 %v1322, 16
    %v1432 = vrot.slane %v1430, 1
    %v1433 = vor.u32 %v1428, %v1432
    %v1435 = vshll.u32 %v1355, 16
    %v1437 = vrot.slane %v1435, 1
    %v1438 = vsel %vm1402, %v1433, %v1437
    %v1440 = vshrl.u32 %v1323, 16
    %v1442 = vshll.u32 %v1323, 16
    %v1444 = vrot.slane %v1442, 1
    %v1445 = vor.u32 %v1440, %v1444
    %v1447 = vshll.u32 %v1356, 16
    %v1449 = vrot.slane %v1447, 1
    %v1450 = vsel %vm1402, %v1445, %v1449
    %v1452 = vshrl.u32 %v1324, 16
    %v1454 = vshll.u32 %v1324, 16
    %v1456 = vrot.slane %v1454, 1
    %v1457 = vor.u32 %v1452, %v1456
    %v1459 = vshll.u32 %v1357, 16
    %v1461 = vrot.slane %v1459, 1
    %v1462 = vsel %vm1402, %v1457, %v1461
    %v1464 = vshrl.u32 %v1325, 16
    %v1466 = vshll.u32 %v1325, 16
    %v1468 = vrot.slane %v1466, 1
    %v1469 = vor.u32 %v1464, %v1468
    %v1471 = vshll.u32 %v1358, 16
    %v1473 = vrot.slane %v1471, 1
    %v1474 = vsel %vm1402, %v1469, %v1473
    %v1476 = vshrl.u32 %v1326, 16
    %v1478 = vshll.u32 %v1326, 16
    %v1480 = vrot.slane %v1478, 1
    %v1481 = vor.u32 %v1476, %v1480
    %v1483 = vshll.u32 %v1359, 16
    %v1485 = vrot.slane %v1483, 1
    %v1486 = vsel %vm1402, %v1481, %v1485
    %v1488 = vshrl.u32 %v1327, 16
    %v1490 = vshll.u32 %v1327, 16
    %v1492 = vrot.slane %v1490, 1
    %v1493 = vor.u32 %v1488, %v1492
    %v1495 = vshll.u32 %v1360, 16
    %v1497 = vrot.slane %v1495, 1
    %v1498 = vsel %vm1402, %v1493, %v1497
    %v1500 = vshrl.u32 %v1328, 16
    %v1502 = vshll.u32 %v1328, 16
    %v1504 = vrot.slane %v1502, 1
    %v1505 = vor.u32 %v1500, %v1504
    %v1507 = vshll.u32 %v1361, 16
    %v1509 = vrot.slane %v1507, 1
    %v1510 = vsel %vm1402, %v1505, %v1509
    %v1512 = vshrl.u32 %v1329, 16
    %v1514 = vshll.u32 %v1329, 16
    %v1516 = vrot.slane %v1514, 1
    %v1517 = vor.u32 %v1512, %v1516
    %v1519 = vshll.u32 %v1362, 16
    %v1521 = vrot.slane %v1519, 1
    %v1522 = vsel %vm1402, %v1517, %v1521
    %v1524 = vshrl.u32 %v1330, 16
    %v1526 = vshll.u32 %v1330, 16
    %v1528 = vrot.slane %v1526, 1
    %v1529 = vor.u32 %v1524, %v1528
    %v1531 = vshll.u32 %v1363, 16
    %v1533 = vrot.slane %v1531, 1
    %v1534 = vsel %vm1402, %v1529, %v1533
    %v1536 = vshrl.u32 %v1331, 16
    %v1538 = vshll.u32 %v1331, 16
    %v1540 = vrot.slane %v1538, 1
    %v1541 = vor.u32 %v1536, %v1540
    %v1543 = vshll.u32 %v1364, 16
    %v1545 = vrot.slane %v1543, 1
    %v1546 = vsel %vm1402, %v1541, %v1545
    %v1548 = vshrl.u32 %v1332, 16
    %v1550 = vshll.u32 %v1332, 16
    %v1552 = vrot.slane %v1550, 1
    %v1553 = vor.u32 %v1548, %v1552
    %v1555 = vshll.u32 %v1365, 16
    %v1557 = vrot.slane %v1555, 1
    %v1558 = vsel %vm1402, %v1553, %v1557
    %v1560 = vshrl.u32 %v1333, 16
    %v1562 = vshll.u32 %v1333, 16
    %v1564 = vrot.slane %v1562, 1
    %v1565 = vor.u32 %v1560, %v1564
    %v1567 = vshll.u32 %v1366, 16
    %v1569 = vrot.slane %v1567, 1
    %v1570 = vsel %vm1402, %v1565, %v1569
    %v1572 = vshrl.u32 %v1334, 16
    %v1574 = vshll.u32 %v1334, 16
    %v1576 = vrot.slane %v1574, 1
    %v1577 = vor.u32 %v1572, %v1576
    %v1579 = vshll.u32 %v1367, 16
    %v1581 = vrot.slane %v1579, 1
    %v1582 = vsel %vm1402, %v1577, %v1581
    %v1584 = vshrl.u32 %v1335, 16
    %v1586 = vshll.u32 %v1335, 16
    %v1588 = vrot.slane %v1586, 1
    %v1589 = vor.u32 %v1584, %v1588
    %v1591 = vshll.u32 %v1368, 16
    %v1593 = vrot.slane %v1591, 1
    %v1594 = vsel %vm1402, %v1589, %v1593
    %v1596 = vshrl.u32 %v1337, 16
    %v1598 = vshll.u32 %v1337, 16
    %v1600 = vrot.slane %v1598, 1
    %v1601 = vor.u32 %v1596, %v1600
    %v1603 = vshll.u32 %v1370, 16
    %v1605 = vrot.slane %v1603, 1
    %v1606 = vsel %vm1402, %v1601, %v1605
    %v1608 = vshrl.u32 %v1338, 16
    %v1610 = vshll.u32 %v1338, 16
    %v1612 = vrot.slane %v1610, 1
    %v1613 = vor.u32 %v1608, %v1612
    %v1615 = vshll.u32 %v1371, 16
    %v1617 = vrot.slane %v1615, 1
    %v1618 = vsel %vm1402, %v1613, %v1617
    %v1620 = vshrl.u32 %v1339, 16
    %v1622 = vshll.u32 %v1339, 16
    %v1624 = vrot.slane %v1622, 1
    %v1625 = vor.u32 %v1620, %v1624
    %v1627 = vshll.u32 %v1372, 16
    %v1629 = vrot.slane %v1627, 1
    %v1630 = vsel %vm1402, %v1625, %v1629
    %v1632 = vshrl.u32 %v1340, 16
    %v1634 = vshll.u32 %v1340, 16
    %v1636 = vrot.slane %v1634, 1
    %v1637 = vor.u32 %v1632, %v1636
    %v1639 = vshll.u32 %v1373, 16
    %v1641 = vrot.slane %v1639, 1
    %v1642 = vsel %vm1402, %v1637, %v1641
    %v1644 = vshrl.u32 %v1341, 16
    %v1646 = vshll.u32 %v1341, 16
    %v1648 = vrot.slane %v1646, 1
    %v1649 = vor.u32 %v1644, %v1648
    %v1651 = vshll.u32 %v1374, 16
    %v1653 = vrot.slane %v1651, 1
    %v1654 = vsel %vm1402, %v1649, %v1653
    %v1656 = vshrl.u32 %v1342, 16
    %v1658 = vshll.u32 %v1342, 16
    %v1660 = vrot.slane %v1658, 1
    %v1661 = vor.u32 %v1656, %v1660
    %v1663 = vshll.u32 %v1375, 16
    %v1665 = vrot.slane %v1663, 1
    %v1666 = vsel %vm1402, %v1661, %v1665
    %v1668 = vshrl.u32 %v1343, 16
    %v1670 = vshll.u32 %v1343, 16
    %v1672 = vrot.slane %v1670, 1
    %v1673 = vor.u32 %v1668, %v1672
    %v1675 = vshll.u32 %v1376, 16
    %v1677 = vrot.slane %v1675, 1
    %v1678 = vsel %vm1402, %v1673, %v1677
    %v1680 = vshrl.u32 %v1344, 16
    %v1682 = vshll.u32 %v1344, 16
    %v1684 = vrot.slane %v1682, 1
    %v1685 = vor.u32 %v1680, %v1684
    %v1687 = vshll.u32 %v1377, 16
    %v1689 = vrot.slane %v1687, 1
    %v1690 = vsel %vm1402, %v1685, %v1689
    %v1692 = vshrl.u32 %v1345, 16
    %v1694 = vshll.u32 %v1345, 16
    %v1696 = vrot.slane %v1694, 1
    %v1697 = vor.u32 %v1692, %v1696
    %v1699 = vshll.u32 %v1378, 16
    %v1701 = vrot.slane %v1699, 1
    %v1702 = vsel %vm1402, %v1697, %v1701
    %v1704 = vshrl.u32 %v1346, 16
    %v1706 = vshll.u32 %v1346, 16
    %v1708 = vrot.slane %v1706, 1
    %v1709 = vor.u32 %v1704, %v1708
    %v1711 = vshll.u32 %v1379, 16
    %v1713 = vrot.slane %v1711, 1
    %v1714 = vsel %vm1402, %v1709, %v1713
    %v1716 = vshrl.u32 %v1347, 16
    %v1718 = vshll.u32 %v1347, 16
    %v1720 = vrot.slane %v1718, 1
    %v1721 = vor.u32 %v1716, %v1720
    %v1723 = vshll.u32 %v1380, 16
    %v1725 = vrot.slane %v1723, 1
    %v1726 = vsel %vm1402, %v1721, %v1725
    %v1728 = vshrl.u32 %v1348, 16
    %v1730 = vshll.u32 %v1348, 16
    %v1732 = vrot.slane %v1730, 1
    %v1733 = vor.u32 %v1728, %v1732
    %v1735 = vshll.u32 %v1381, 16
    %v1737 = vrot.slane %v1735, 1
    %v1738 = vsel %vm1402, %v1733, %v1737
    %v1740 = vshrl.u32 %v1349, 16
    %v1742 = vshll.u32 %v1349, 16
    %v1744 = vrot.slane %v1742, 1
    %v1745 = vor.u32 %v1740, %v1744
    %v1747 = vshll.u32 %v1382, 16
    %v1749 = vrot.slane %v1747, 1
    %v1750 = vsel %vm1402, %v1745, %v1749
    %v1752 = vshrl.u32 %v1350, 16
    %v1754 = vshll.u32 %v1350, 16
    %v1756 = vrot.slane %v1754, 1
    %v1757 = vor.u32 %v1752, %v1756
    %v1759 = vshll.u32 %v1383, 16
    %v1761 = vrot.slane %v1759, 1
    %v1762 = vsel %vm1402, %v1757, %v1761
    %v1764 = vshrl.u32 %v1351, 16
    %v1766 = vshll.u32 %v1351, 16
    %v1768 = vrot.slane %v1766, 1
    %v1769 = vor.u32 %v1764, %v1768
    %v1771 = vshll.u32 %v1384, 16
    %v1773 = vrot.slane %v1771, 1
    %v1774 = vsel %vm1402, %v1769, %v1773
    %s1806 = scalar_lea.vmem [#allocation7], 64
    %v1807 = vld [vmem:[%s1806] sm:$0xf]
    %v1808 = vld [vmem:[%s1806 + $0x4] sm:$0xf]
    %v1809 = vld [vmem:[%s1806 + $0x8] sm:$0xf]
    %v1810 = vld [vmem:[%s1806 + $0xc] sm:$0xf]
    %v1811 = vld [vmem:[%s1806 + $0x10] sm:$0xf]
    %v1812 = vld [vmem:[%s1806 + $0x14] sm:$0xf]
    %v1813 = vld [vmem:[%s1806 + $0x18] sm:$0xf]
    %v1814 = vld [vmem:[%s1806 + $0x1c] sm:$0xf]
    %v1815 = vld [vmem:[%s1806 + $0x20] sm:$0xf]
    %v1816 = vld [vmem:[%s1806 + $0x24] sm:$0xf]
    %v1817 = vld [vmem:[%s1806 + $0x28] sm:$0xf]
    %v1818 = vld [vmem:[%s1806 + $0x2c] sm:$0xf]
    %v1819 = vld [vmem:[%s1806 + $0x30] sm:$0xf]
    %v1820 = vld [vmem:[%s1806 + $0x34] sm:$0xf]
    %v1821 = vld [vmem:[%s1806 + $0x38] sm:$0xf]
    %v1822 = vld [vmem:[%s1806 + $0x3c] sm:$0xf]
    %v1839 = vunpack.c.l.b16 %v1807
    %v1840 = vunpack.c.l.b16 %v1808
    %v1841 = vunpack.c.l.b16 %v1809
    %v1842 = vunpack.c.l.b16 %v1810
    %v1843 = vunpack.c.l.b16 %v1811
    %v1844 = vunpack.c.l.b16 %v1812
    %v1845 = vunpack.c.l.b16 %v1813
    %v1846 = vunpack.c.l.b16 %v1814
    %v1847 = vunpack.c.l.b16 %v1815
    %v1848 = vunpack.c.l.b16 %v1816
    %v1849 = vunpack.c.l.b16 %v1817
    %v1850 = vunpack.c.l.b16 %v1818
    %v1851 = vunpack.c.l.b16 %v1819
    %v1852 = vunpack.c.l.b16 %v1820
    %v1853 = vunpack.c.l.b16 %v1821
    %v1854 = vunpack.c.l.b16 %v1822
    %v1855 = vpack.c.b16 %v1840, %v1839
    %v1856 = vpack.c.b16 %v1842, %v1841
    %v1857 = vpack.c.b16 %v1844, %v1843
    %v1858 = vpack.c.b16 %v1846, %v1845
    %v1859 = vpack.c.b16 %v1848, %v1847
    %v1860 = vpack.c.b16 %v1850, %v1849
    %v1861 = vpack.c.b16 %v1852, %v1851
    %v1862 = vpack.c.b16 %v1854, %v1853
    %1871 = vmatprep.subr.bf16.mxu0 0
    %1872 = vmatpush1.bf16.msra.mxu0 %v1855
    %1873 = vmatprep.subr.bf16.mxu0 0
    %1874 = vmatpush1.bf16.msra.mxu0 %v1856
    %1875 = vmatprep.subr.bf16.mxu0 0
    %1876 = vmatpush1.bf16.msra.mxu0 %v1857
    %1877 = vmatprep.subr.bf16.mxu0 0
    %1878 = vmatpush1.bf16.msra.mxu0 %v1858
    %1879 = vmatprep.subr.bf16.mxu0 0
    %1880 = vmatpush1.bf16.msra.mxu0 %v1859
    %1881 = vmatprep.subr.bf16.mxu0 0
    %1882 = vmatpush1.bf16.msra.mxu0 %v1860
    %1883 = vmatprep.subr.bf16.mxu0 0
    %1884 = vmatpush1.bf16.msra.mxu0 %v1861
    %1885 = vmatprep.subr.bf16.mxu0 0
    %1886 = vmatpush1.bf16.msra.mxu0 %v1862
    %1887 = vmatprep.subr.bf16.mxu0 0
    %1888 = vmatpush1.bf16.msra.mxu0 0
    %1889 = vmatprep.subr.bf16.mxu0 0
    %1890 = vmatpush1.bf16.msra.mxu0 0
    %1891 = vmatprep.subr.bf16.mxu0 0
    %1892 = vmatpush1.bf16.msra.mxu0 0
    %1893 = vmatprep.subr.bf16.mxu0 0
    %1894 = vmatpush1.bf16.msra.mxu0 0
    %1895 = vmatprep.subr.bf16.mxu0 0
    %1896 = vmatpush1.bf16.msra.mxu0 0
    %1897 = vmatprep.subr.bf16.mxu0 0
    %1898 = vmatpush1.bf16.msra.mxu0 0
    %1899 = vmatprep.subr.bf16.mxu0 0
    %1900 = vmatpush1.bf16.msra.mxu0 0
    %1901 = vmatprep.subr.bf16.mxu0 0
    %1902 = vmatpush1.bf16.msra.mxu0 0
    %1903 = vmatprep.mubr.bf16.mxu0 0
    %1904 = vmatmul.mubr.bf16.gmra.mrb[0].mxu0 %v1414
    %v1905 = vpop.f32.mrb[0].mxu0
    %v1906 = vadd.f32 0.0, %v1905
    %v1907 = vpop.f32.mrb[0].mxu0
    %v1908 = vpop.f32.mrb[0].mxu0
    %v1909 = vadd.f32 0.0, %v1908
    %v1910 = vpop.f32.mrb[0].mxu0
    %1911 = vmatprep.mubr.bf16.mxu0 0
    %1912 = vmatmul.mubr.bf16.gmra.mrb[0].mxu0 %v1426
    %v1913 = vpop.f32.mrb[0].mxu0
    %v1914 = vadd.f32 0.0, %v1913
    %v1915 = vpop.f32.mrb[0].mxu0
    %v1916 = vpop.f32.mrb[0].mxu0
    %v1917 = vadd.f32 0.0, %v1916
    %v1918 = vpop.f32.mrb[0].mxu0
    %1919 = vmatprep.mubr.bf16.mxu0 0
    %1920 = vmatmul.mubr.bf16.gmra.mrb[0].mxu0 %v1438
    %v1921 = vpop.f32.mrb[0].mxu0
    %v1922 = vadd.f32 0.0, %v1921
    %v1923 = vpop.f32.mrb[0].mxu0
    %v1924 = vpop.f32.mrb[0].mxu0
    %v1925 = vadd.f32 0.0, %v1924
    %v1926 = vpop.f32.mrb[0].mxu0
    %1927 = vmatprep.mubr.bf16.mxu0 0
    %1928 = vmatmul.mubr.bf16.gmra.mrb[0].mxu0 %v1450
    %v1929 = vpop.f32.mrb[0].mxu0
    %v1930 = vadd.f32 0.0, %v1929
    %v1931 = vpop.f32.mrb[0].mxu0
    %v1932 = vpop.f32.mrb[0].mxu0
    %v1933 = vadd.f32 0.0, %v1932
    %v1934 = vpop.f32.mrb[0].mxu0
    %1935 = vmatprep.mubr.bf16.mxu0 0
    %1936 = vmatmul.mubr.bf16.gmra.mrb[0].mxu0 %v1462
    %v1937 = vpop.f32.mrb[0].mxu0
    %v1938 = vadd.f32 0.0, %v1937
    %v1939 = vpop.f32.mrb[0].mxu0
    %v1940 = vpop.f32.mrb[0].mxu0
    %v1941 = vadd.f32 0.0, %v1940
    %v1942 = vpop.f32.mrb[0].mxu0
    %1943 = vmatprep.mubr.bf16.mxu0 0
    %1944 = vmatmul.mubr.bf16.gmra.mrb[0].mxu0 %v1474
    %v1945 = vpop.f32.mrb[0].mxu0
    %v1946 = vadd.f32 0.0, %v1945
    %v1947 = vpop.f32.mrb[0].mxu0
    %v1948 = vpop.f32.mrb[0].mxu0
    %v1949 = vadd.f32 0.0, %v1948
    %v1950 = vpop.f32.mrb[0].mxu0
    %1951 = vmatprep.mubr.bf16.mxu0 0
    %1952 = vmatmul.mubr.bf16.gmra.mrb[0].mxu0 %v1486
    %v1953 = vpop.f32.mrb[0].mxu0
    %v1954 = vadd.f32 0.0, %v1953
    %v1955 = vpop.f32.mrb[0].mxu0
    %v1956 = vpop.f32.mrb[0].mxu0
    %v1957 = vadd.f32 0.0, %v1956
    %v1958 = vpop.f32.mrb[0].mxu0
    %1959 = vmatprep.mubr.bf16.mxu0 0
    %1960 = vmatmul.mubr.bf16.gmra.mrb[0].mxu0 %v1498
    %v1961 = vpop.f32.mrb[0].mxu0
    %v1962 = vadd.f32 0.0, %v1961
    %v1963 = vpop.f32.mrb[0].mxu0
    %v1964 = vpop.f32.mrb[0].mxu0
    %v1965 = vadd.f32 0.0, %v1964
    %v1966 = vpop.f32.mrb[0].mxu0
    %1967 = vmatprep.mubr.bf16.mxu0 0
    %1968 = vmatmul.mubr.bf16.gmra.mrb[0].mxu0 %v1510
    %v1969 = vpop.f32.mrb[0].mxu0
    %v1970 = vadd.f32 0.0, %v1969
    %v1971 = vpop.f32.mrb[0].mxu0
    %v1972 = vpop.f32.mrb[0].mxu0
    %v1973 = vadd.f32 0.0, %v1972
    %v1974 = vpop.f32.mrb[0].mxu0
    %1975 = vmatprep.mubr.bf16.mxu0 0
    %1976 = vmatmul.mubr.bf16.gmra.mrb[0].mxu0 %v1522
    %v1977 = vpop.f32.mrb[0].mxu0
    %v1978 = vadd.f32 0.0, %v1977
    %v1979 = vpop.f32.mrb[0].mxu0
    %v1980 = vpop.f32.mrb[0].mxu0
    %v1981 = vadd.f32 0.0, %v1980
    %v1982 = vpop.f32.mrb[0].mxu0
    %1983 = vmatprep.mubr.bf16.mxu0 0
    %1984 = vmatmul.mubr.bf16.gmra.mrb[0].mxu0 %v1534
    %v1985 = vpop.f32.mrb[0].mxu0
    %v1986 = vadd.f32 0.0, %v1985
    %v1987 = vpop.f32.mrb[0].mxu0
    %v1988 = vpop.f32.mrb[0].mxu0
    %v1989 = vadd.f32 0.0, %v1988
    %v1990 = vpop.f32.mrb[0].mxu0
    %1991 = vmatprep.mubr.bf16.mxu0 0
    %1992 = vmatmul.mubr.bf16.gmra.mrb[0].mxu0 %v1546
    %v1993 = vpop.f32.mrb[0].mxu0
    %v1994 = vadd.f32 0.0, %v1993
    %v1995 = vpop.f32.mrb[0].mxu0
    %v1996 = vpop.f32.mrb[0].mxu0
    %v1997 = vadd.f32 0.0, %v1996
    %v1998 = vpop.f32.mrb[0].mxu0
    %1999 = vmatprep.mubr.bf16.mxu0 0
    %2000 = vmatmul.mubr.bf16.gmra.mrb[0].mxu0 %v1558
    %v2001 = vpop.f32.mrb[0].mxu0
    %v2002 = vadd.f32 0.0, %v2001
    %v2003 = vpop.f32.mrb[0].mxu0
    %v2004 = vpop.f32.mrb[0].mxu0
    %v2005 = vadd.f32 0.0, %v2004
    %v2006 = vpop.f32.mrb[0].mxu0
    %2007 = vmatprep.mubr.bf16.mxu0 0
    %2008 = vmatmul.mubr.bf16.gmra.mrb[0].mxu0 %v1570
    %v2009 = vpop.f32.mrb[0].mxu0
    %v2010 = vadd.f32 0.0, %v2009
    %v2011 = vpop.f32.mrb[0].mxu0
    %v2012 = vpop.f32.mrb[0].mxu0
    %v2013 = vadd.f32 0.0, %v2012
    %v2014 = vpop.f32.mrb[0].mxu0
    %2015 = vmatprep.mubr.bf16.mxu0 0
    %2016 = vmatmul.mubr.bf16.gmra.mrb[0].mxu0 %v1582
    %v2017 = vpop.f32.mrb[0].mxu0
    %v2018 = vadd.f32 0.0, %v2017
    %v2019 = vpop.f32.mrb[0].mxu0
    %v2020 = vpop.f32.mrb[0].mxu0
    %v2021 = vadd.f32 0.0, %v2020
    %v2022 = vpop.f32.mrb[0].mxu0
    %2023 = vmatprep.mubr.bf16.mxu0 0
    %2024 = vmatmul.mubr.bf16.gmra.mrb[0].mxu0 %v1594
    %v2025 = vpop.f32.mrb[0].mxu0
    %v2026 = vadd.f32 0.0, %v2025
    %v2027 = vpop.f32.mrb[0].mxu0
    %v2028 = vpop.f32.mrb[0].mxu0
    %v2029 = vadd.f32 0.0, %v2028
    %v2030 = vpop.f32.mrb[0].mxu0
    %2031 = vmatprep.mubr.bf16.mxu0 0
    %2032 = vmatmul.mubr.bf16.gmra.mrb[0].mxu0 %v1414
    %v2033 = vpop.f32.mrb[0].mxu0
    %v2034 = vadd.f32 0.0, %v2033
    %v2035 = vpop.f32.mrb[0].mxu0
    %v2036 = vpop.f32.mrb[0].mxu0
    %v2037 = vadd.f32 0.0, %v2036
    %v2038 = vpop.f32.mrb[0].mxu0
    %2039 = vmatprep.mubr.bf16.mxu0 0
    %2040 = vmatmul.mubr.bf16.gmra.mrb[0].mxu0 %v1606
    %v2041 = vpop.f32.mrb[0].mxu0
    %v2042 = vadd.f32 0.0, %v2041
    %v2043 = vpop.f32.mrb[0].mxu0
    %v2044 = vpop.f32.mrb[0].mxu0
    %v2045 = vadd.f32 0.0, %v2044
    %v2046 = vpop.f32.mrb[0].mxu0
    %2047 = vmatprep.mubr.bf16.mxu0 0
    %2048 = vmatmul.mubr.bf16.gmra.mrb[0].mxu0 %v1618
    %v2049 = vpop.f32.mrb[0].mxu0
    %v2050 = vadd.f32 0.0, %v2049
    %v2051 = vpop.f32.mrb[0].mxu0
    %v2052 = vpop.f32.mrb[0].mxu0
    %v2053 = vadd.f32 0.0, %v2052
    %v2054 = vpop.f32.mrb[0].mxu0
    %2055 = vmatprep.mubr.bf16.mxu0 0
    %2056 = vmatmul.mubr.bf16.gmra.mrb[0].mxu0 %v1630
    %v2057 = vpop.f32.mrb[0].mxu0
    %v2058 = vadd.f32 0.0, %v2057
    %v2059 = vpop.f32.mrb[0].mxu0
    %v2060 = vpop.f32.mrb[0].mxu0
    %v2061 = vadd.f32 0.0, %v2060
    %v2062 = vpop.f32.mrb[0].mxu0
    %2063 = vmatprep.mubr.bf16.mxu0 0
    %2064 = vmatmul.mubr.bf16.gmra.mrb[0].mxu0 %v1642
    %v2065 = vpop.f32.mrb[0].mxu0
    %v2066 = vadd.f32 0.0, %v2065
    %v2067 = vpop.f32.mrb[0].mxu0
    %v2068 = vpop.f32.mrb[0].mxu0
    %v2069 = vadd.f32 0.0, %v2068
    %v2070 = vpop.f32.mrb[0].mxu0
    %2071 = vmatprep.mubr.bf16.mxu0 0
    %2072 = vmatmul.mubr.bf16.gmra.mrb[0].mxu0 %v1654
    %v2073 = vpop.f32.mrb[0].mxu0
    %v2074 = vadd.f32 0.0, %v2073
    %v2075 = vpop.f32.mrb[0].mxu0
    %v2076 = vpop.f32.mrb[0].mxu0
    %v2077 = vadd.f32 0.0, %v2076
    %v2078 = vpop.f32.mrb[0].mxu0
    %2079 = vmatprep.mubr.bf16.mxu0 0
    %2080 = vmatmul.mubr.bf16.gmra.mrb[0].mxu0 %v1666
    %v2081 = vpop.f32.mrb[0].mxu0
    %v2082 = vadd.f32 0.0, %v2081
    %v2083 = vpop.f32.mrb[0].mxu0
    %v2084 = vpop.f32.mrb[0].mxu0
    %v2085 = vadd.f32 0.0, %v2084
    %v2086 = vpop.f32.mrb[0].mxu0
    %2087 = vmatprep.mubr.bf16.mxu0 0
    %2088 = vmatmul.mubr.bf16.gmra.mrb[0].mxu0 %v1678
    %v2089 = vpop.f32.mrb[0].mxu0
    %v2090 = vadd.f32 0.0, %v2089
    %v2091 = vpop.f32.mrb[0].mxu0
    %v2092 = vpop.f32.mrb[0].mxu0
    %v2093 = vadd.f32 0.0, %v2092
    %v2094 = vpop.f32.mrb[0].mxu0
    %2095 = vmatprep.mubr.bf16.mxu0 0
    %2096 = vmatmul.mubr.bf16.gmra.mrb[0].mxu0 %v1690
    %v2097 = vpop.f32.mrb[0].mxu0
    %v2098 = vadd.f32 0.0, %v2097
    %v2099 = vpop.f32.mrb[0].mxu0
    %v2100 = vpop.f32.mrb[0].mxu0
    %v2101 = vadd.f32 0.0, %v2100
    %v2102 = vpop.f32.mrb[0].mxu0
    %2103 = vmatprep.mubr.bf16.mxu0 0
    %2104 = vmatmul.mubr.bf16.gmra.mrb[0].mxu0 %v1702
    %v2105 = vpop.f32.mrb[0].mxu0
    %v2106 = vadd.f32 0.0, %v2105
    %v2107 = vpop.f32.mrb[0].mxu0
    %v2108 = vpop.f32.mrb[0].mxu0
    %v2109 = vadd.f32 0.0, %v2108
    %v2110 = vpop.f32.mrb[0].mxu0
    %2111 = vmatprep.mubr.bf16.mxu0 0
    %2112 = vmatmul.mubr.bf16.gmra.mrb[0].mxu0 %v1714
    %v2113 = vpop.f32.mrb[0].mxu0
    %v2114 = vadd.f32 0.0, %v2113
    %v2115 = vpop.f32.mrb[0].mxu0
    %v2116 = vpop.f32.mrb[0].mxu0
    %v2117 = vadd.f32 0.0, %v2116
    %v2118 = vpop.f32.mrb[0].mxu0
    %2119 = vmatprep.mubr.bf16.mxu0 0
    %2120 = vmatmul.mubr.bf16.gmra.mrb[0].mxu0 %v1726
    %v2121 = vpop.f32.mrb[0].mxu0
    %v2122 = vadd.f32 0.0, %v2121
    %v2123 = vpop.f32.mrb[0].mxu0
    %v2124 = vpop.f32.mrb[0].mxu0
    %v2125 = vadd.f32 0.0, %v2124
    %v2126 = vpop.f32.mrb[0].mxu0
    %2127 = vmatprep.mubr.bf16.mxu0 0
    %2128 = vmatmul.mubr.bf16.gmra.mrb[0].mxu0 %v1738
    %v2129 = vpop.f32.mrb[0].mxu0
    %v2130 = vadd.f32 0.0, %v2129
    %v2131 = vpop.f32.mrb[0].mxu0
    %v2132 = vpop.f32.mrb[0].mxu0
    %v2133 = vadd.f32 0.0, %v2132
    %v2134 = vpop.f32.mrb[0].mxu0
    %2135 = vmatprep.mubr.bf16.mxu0 0
    %2136 = vmatmul.mubr.bf16.gmra.mrb[0].mxu0 %v1750
    %v2137 = vpop.f32.mrb[0].mxu0
    %v2138 = vadd.f32 0.0, %v2137
    %v2139 = vpop.f32.mrb[0].mxu0
    %v2140 = vpop.f32.mrb[0].mxu0
    %v2141 = vadd.f32 0.0, %v2140
    %v2142 = vpop.f32.mrb[0].mxu0
    %2143 = vmatprep.mubr.bf16.mxu0 0
    %2144 = vmatmul.mubr.bf16.gmra.mrb[0].mxu0 %v1762
    %v2145 = vpop.f32.mrb[0].mxu0
    %v2146 = vadd.f32 0.0, %v2145
    %v2147 = vpop.f32.mrb[0].mxu0
    %v2148 = vpop.f32.mrb[0].mxu0
    %v2149 = vadd.f32 0.0, %v2148
    %v2150 = vpop.f32.mrb[0].mxu0
    %2151 = vmatprep.mubr.bf16.mxu0 0
    %2152 = vmatmul.mubr.bf16.gmra.mrb[0].mxu0 %v1774
    %v2153 = vpop.f32.mrb[0].mxu0
    %v2154 = vadd.f32 0.0, %v2153
    %v2155 = vpop.f32.mrb[0].mxu0
    %v2156 = vpop.f32.mrb[0].mxu0
    %v2157 = vadd.f32 0.0, %v2156
    %v2158 = vpop.f32.mrb[0].mxu0
    %2159 = vdwg.mxu0
    %v2176 = vunpack.c.l.b16 %v1386
    %v2177 = vunpack.c.l.b16 %v1387
    %v2178 = vunpack.c.l.b16 %v1388
    %v2179 = vunpack.c.l.b16 %v1389
    %v2180 = vunpack.c.l.b16 %v1390
    %v2181 = vunpack.c.l.b16 %v1391
    %v2182 = vunpack.c.l.b16 %v1392
    %v2183 = vunpack.c.l.b16 %v1393
    %v2184 = vunpack.c.l.b16 %v1394
    %v2185 = vunpack.c.l.b16 %v1395
    %v2186 = vunpack.c.l.b16 %v1396
    %v2187 = vunpack.c.l.b16 %v1397
    %v2188 = vunpack.c.l.b16 %v1398
    %v2189 = vunpack.c.l.b16 %v1399
    %v2190 = vunpack.c.l.b16 %v1400
    %v2191 = vunpack.c.l.b16 %v1401
    %v2192 = vpack.c.b16 %v2177, %v2176
    %v2193 = vpack.c.b16 %v2179, %v2178
    %v2194 = vpack.c.b16 %v2181, %v2180
    %v2195 = vpack.c.b16 %v2183, %v2182
    %v2196 = vpack.c.b16 %v2185, %v2184
    %v2197 = vpack.c.b16 %v2187, %v2186
    %v2198 = vpack.c.b16 %v2189, %v2188
    %v2199 = vpack.c.b16 %v2191, %v2190
    %2208 = vmatprep.subr.bf16.mxu0 0
    %2209 = vmatpush1.bf16.msra.mxu0 %v2192
    %2210 = vmatprep.subr.bf16.mxu0 0
    %2211 = vmatpush1.bf16.msra.mxu0 %v2193
    %2212 = vmatprep.subr.bf16.mxu0 0
    %2213 = vmatpush1.bf16.msra.mxu0 %v2194
    %2214 = vmatprep.subr.bf16.mxu0 0
    %2215 = vmatpush1.bf16.msra.mxu0 %v2195
    %2216 = vmatprep.subr.bf16.mxu0 0
    %2217 = vmatpush1.bf16.msra.mxu0 %v2196
    %2218 = vmatprep.subr.bf16.mxu0 0
    %2219 = vmatpush1.bf16.msra.mxu0 %v2197
    %2220 = vmatprep.subr.bf16.mxu0 0
    %2221 = vmatpush1.bf16.msra.mxu0 %v2198
    %2222 = vmatprep.subr.bf16.mxu0 0
    %2223 = vmatpush1.bf16.msra.mxu0 %v2199
    %2224 = vmatprep.subr.bf16.mxu0 0
    %2225 = vmatpush1.bf16.msra.mxu0 0
    %2226 = vmatprep.subr.bf16.mxu0 0
    %2227 = vmatpush1.bf16.msra.mxu0 0
    %2228 = vmatprep.subr.bf16.mxu0 0
    %2229 = vmatpush1.bf16.msra.mxu0 0
    %2230 = vmatprep.subr.bf16.mxu0 0
    %2231 = vmatpush1.bf16.msra.mxu0 0
    %2232 = vmatprep.subr.bf16.mxu0 0
    %2233 = vmatpush1.bf16.msra.mxu0 0
    %2234 = vmatprep.subr.bf16.mxu0 0
    %2235 = vmatpush1.bf16.msra.mxu0 0
    %2236 = vmatprep.subr.bf16.mxu0 0
    %2237 = vmatpush1.bf16.msra.mxu0 0
    %2238 = vmatprep.subr.bf16.mxu0 0
    %2239 = vmatpush1.bf16.msra.mxu0 0
    %2240 = vmatprep.mubr.bf16.mxu0 0
    %2241 = vmatmul.mubr.bf16.gmra.mrb[0].mxu0 %v1320
    %v2242 = vpop.f32.mrb[0].mxu0
    %v2243 = vadd.f32 %v1906, %v2242
    %v2244 = vpop.f32.mrb[0].mxu0
    %v2245 = vpop.f32.mrb[0].mxu0
    %v2246 = vadd.f32 %v1909, %v2245
    %v2247 = vpop.f32.mrb[0].mxu0
    %2248 = vmatprep.mubr.bf16.mxu0 0
    %2249 = vmatmul.mubr.bf16.gmra.mrb[0].mxu0 %v1321
    %v2250 = vpop.f32.mrb[0].mxu0
    %v2251 = vadd.f32 %v1914, %v2250
    %v2252 = vpop.f32.mrb[0].mxu0
    %v2253 = vpop.f32.mrb[0].mxu0
    %v2254 = vadd.f32 %v1917, %v2253
    %v2255 = vpop.f32.mrb[0].mxu0
    %2256 = vmatprep.mubr.bf16.mxu0 0
    %2257 = vmatmul.mubr.bf16.gmra.mrb[0].mxu0 %v1322
    %v2258 = vpop.f32.mrb[0].mxu0
    %v2259 = vadd.f32 %v1922, %v2258
    %v2260 = vpop.f32.mrb[0].mxu0
    %v2261 = vpop.f32.mrb[0].mxu0
    %v2262 = vadd.f32 %v1925, %v2261
    %v2263 = vpop.f32.mrb[0].mxu0
    %2264 = vmatprep.mubr.bf16.mxu0 0
    %2265 = vmatmul.mubr.bf16.gmra.mrb[0].mxu0 %v1323
    %v2266 = vpop.f32.mrb[0].mxu0
    %v2267 = vadd.f32 %v1930, %v2266
    %v2268 = vpop.f32.mrb[0].mxu0
    %v2269 = vpop.f32.mrb[0].mxu0
    %v2270 = vadd.f32 %v1933, %v2269
    %v2271 = vpop.f32.mrb[0].mxu0
    %2272 = vmatprep.mubr.bf16.mxu0 0
    %2273 = vmatmul.mubr.bf16.gmra.mrb[0].mxu0 %v1324
    %v2274 = vpop.f32.mrb[0].mxu0
    %v2275 = vadd.f32 %v1938, %v2274
    %v2276 = vpop.f32.mrb[0].mxu0
    %v2277 = vpop.f32.mrb[0].mxu0
    %v2278 = vadd.f32 %v1941, %v2277
    %v2279 = vpop.f32.mrb[0].mxu0
    %2280 = vmatprep.mubr.bf16.mxu0 0
    %2281 = vmatmul.mubr.bf16.gmra.mrb[0].mxu0 %v1325
    %v2282 = vpop.f32.mrb[0].mxu0
    %v2283 = vadd.f32 %v1946, %v2282
    %v2284 = vpop.f32.mrb[0].mxu0
    %v2285 = vpop.f32.mrb[0].mxu0
    %v2286 = vadd.f32 %v1949, %v2285
    %v2287 = vpop.f32.mrb[0].mxu0
    %2288 = vmatprep.mubr.bf16.mxu0 0
    %2289 = vmatmul.mubr.bf16.gmra.mrb[0].mxu0 %v1326
    %v2290 = vpop.f32.mrb[0].mxu0
    %v2291 = vadd.f32 %v1954, %v2290
    %v2292 = vpop.f32.mrb[0].mxu0
    %v2293 = vpop.f32.mrb[0].mxu0
    %v2294 = vadd.f32 %v1957, %v2293
    %v2295 = vpop.f32.mrb[0].mxu0
    %2296 = vmatprep.mubr.bf16.mxu0 0
    %2297 = vmatmul.mubr.bf16.gmra.mrb[0].mxu0 %v1327
    %v2298 = vpop.f32.mrb[0].mxu0
    %v2299 = vadd.f32 %v1962, %v2298
    %v2300 = vpop.f32.mrb[0].mxu0
    %v2301 = vpop.f32.mrb[0].mxu0
    %v2302 = vadd.f32 %v1965, %v2301
    %v2303 = vpop.f32.mrb[0].mxu0
    %2304 = vmatprep.mubr.bf16.mxu0 0
    %2305 = vmatmul.mubr.bf16.gmra.mrb[0].mxu0 %v1328
    %v2306 = vpop.f32.mrb[0].mxu0
    %v2307 = vadd.f32 %v1970, %v2306
    %v2308 = vpop.f32.mrb[0].mxu0
    %v2309 = vpop.f32.mrb[0].mxu0
    %v2310 = vadd.f32 %v1973, %v2309
    %v2311 = vpop.f32.mrb[0].mxu0
    %2312 = vmatprep.mubr.bf16.mxu0 0
    %2313 = vmatmul.mubr.bf16.gmra.mrb[0].mxu0 %v1329
    %v2314 = vpop.f32.mrb[0].mxu0
    %v2315 = vadd.f32 %v1978, %v2314
    %v2316 = vpop.f32.mrb[0].mxu0
    %v2317 = vpop.f32.mrb[0].mxu0
    %v2318 = vadd.f32 %v1981, %v2317
    %v2319 = vpop.f32.mrb[0].mxu0
    %2320 = vmatprep.mubr.bf16.mxu0 0
    %2321 = vmatmul.mubr.bf16.gmra.mrb[0].mxu0 %v1330
    %v2322 = vpop.f32.mrb[0].mxu0
    %v2323 = vadd.f32 %v1986, %v2322
    %v2324 = vpop.f32.mrb[0].mxu0
    %v2325 = vpop.f32.mrb[0].mxu0
    %v2326 = vadd.f32 %v1989, %v2325
    %v2327 = vpop.f32.mrb[0].mxu0
    %2328 = vmatprep.mubr.bf16.mxu0 0
    %2329 = vmatmul.mubr.bf16.gmra.mrb[0].mxu0 %v1331
    %v2330 = vpop.f32.mrb[0].mxu0
    %v2331 = vadd.f32 %v1994, %v2330
    %v2332 = vpop.f32.mrb[0].mxu0
    %v2333 = vpop.f32.mrb[0].mxu0
    %v2334 = vadd.f32 %v1997, %v2333
    %v2335 = vpop.f32.mrb[0].mxu0
    %2336 = vmatprep.mubr.bf16.mxu0 0
    %2337 = vmatmul.mubr.bf16.gmra.mrb[0].mxu0 %v1332
    %v2338 = vpop.f32.mrb[0].mxu0
    %v2339 = vadd.f32 %v2002, %v2338
    %v2340 = vpop.f32.mrb[0].mxu0
    %v2341 = vpop.f32.mrb[0].mxu0
    %v2342 = vadd.f32 %v2005, %v2341
    %v2343 = vpop.f32.mrb[0].mxu0
    %2344 = vmatprep.mubr.bf16.mxu0 0
    %2345 = vmatmul.mubr.bf16.gmra.mrb[0].mxu0 %v1333
    %v2346 = vpop.f32.mrb[0].mxu0
    %v2347 = vadd.f32 %v2010, %v2346
    %v2348 = vpop.f32.mrb[0].mxu0
    %v2349 = vpop.f32.mrb[0].mxu0
    %v2350 = vadd.f32 %v2013, %v2349
    %v2351 = vpop.f32.mrb[0].mxu0
    %2352 = vmatprep.mubr.bf16.mxu0 0
    %2353 = vmatmul.mubr.bf16.gmra.mrb[0].mxu0 %v1334
    %v2354 = vpop.f32.mrb[0].mxu0
    %v2355 = vadd.f32 %v2018, %v2354
    %v2356 = vpop.f32.mrb[0].mxu0
    %v2357 = vpop.f32.mrb[0].mxu0
    %v2358 = vadd.f32 %v2021, %v2357
    %v2359 = vpop.f32.mrb[0].mxu0
    %2360 = vmatprep.mubr.bf16.mxu0 0
    %2361 = vmatmul.mubr.bf16.gmra.mrb[0].mxu0 %v1335
    %v2362 = vpop.f32.mrb[0].mxu0
    %v2363 = vadd.f32 %v2026, %v2362
    %v2364 = vpop.f32.mrb[0].mxu0
    %v2365 = vpop.f32.mrb[0].mxu0
    %v2366 = vadd.f32 %v2029, %v2365
    %v2367 = vpop.f32.mrb[0].mxu0
    %2368 = vmatprep.mubr.bf16.mxu0 0
    %2369 = vmatmul.mubr.bf16.gmra.mrb[0].mxu0 %v1320
    %v2370 = vpop.f32.mrb[0].mxu0
    %v2371 = vadd.f32 %v2034, %v2370
    %v2372 = vpop.f32.mrb[0].mxu0
    %v2373 = vpop.f32.mrb[0].mxu0
    %v2374 = vadd.f32 %v2037, %v2373
    %v2375 = vpop.f32.mrb[0].mxu0
    %2376 = vmatprep.mubr.bf16.mxu0 0
    %2377 = vmatmul.mubr.bf16.gmra.mrb[0].mxu0 %v1337
    %v2378 = vpop.f32.mrb[0].mxu0
    %v2379 = vadd.f32 %v2042, %v2378
    %v2380 = vpop.f32.mrb[0].mxu0
    %v2381 = vpop.f32.mrb[0].mxu0
    %v2382 = vadd.f32 %v2045, %v2381
    %v2383 = vpop.f32.mrb[0].mxu0
    %2384 = vmatprep.mubr.bf16.mxu0 0
    %2385 = vmatmul.mubr.bf16.gmra.mrb[0].mxu0 %v1338
    %v2386 = vpop.f32.mrb[0].mxu0
    %v2387 = vadd.f32 %v2050, %v2386
    %v2388 = vpop.f32.mrb[0].mxu0
    %v2389 = vpop.f32.mrb[0].mxu0
    %v2390 = vadd.f32 %v2053, %v2389
    %v2391 = vpop.f32.mrb[0].mxu0
    %2392 = vmatprep.mubr.bf16.mxu0 0
    %2393 = vmatmul.mubr.bf16.gmra.mrb[0].mxu0 %v1339
    %v2394 = vpop.f32.mrb[0].mxu0
    %v2395 = vadd.f32 %v2058, %v2394
    %v2396 = vpop.f32.mrb[0].mxu0
    %v2397 = vpop.f32.mrb[0].mxu0
    %v2398 = vadd.f32 %v2061, %v2397
    %v2399 = vpop.f32.mrb[0].mxu0
    %2400 = vmatprep.mubr.bf16.mxu0 0
    %2401 = vmatmul.mubr.bf16.gmra.mrb[0].mxu0 %v1340
    %v2402 = vpop.f32.mrb[0].mxu0
    %v2403 = vadd.f32 %v2066, %v2402
    %v2404 = vpop.f32.mrb[0].mxu0
    %v2405 = vpop.f32.mrb[0].mxu0
    %v2406 = vadd.f32 %v2069, %v2405
    %v2407 = vpop.f32.mrb[0].mxu0
    %2408 = vmatprep.mubr.bf16.mxu0 0
    %2409 = vmatmul.mubr.bf16.gmra.mrb[0].mxu0 %v1341
    %v2410 = vpop.f32.mrb[0].mxu0
    %v2411 = vadd.f32 %v2074, %v2410
    %v2412 = vpop.f32.mrb[0].mxu0
    %v2413 = vpop.f32.mrb[0].mxu0
    %v2414 = vadd.f32 %v2077, %v2413
    %v2415 = vpop.f32.mrb[0].mxu0
    %2416 = vmatprep.mubr.bf16.mxu0 0
    %2417 = vmatmul.mubr.bf16.gmra.mrb[0].mxu0 %v1342
    %v2418 = vpop.f32.mrb[0].mxu0
    %v2419 = vadd.f32 %v2082, %v2418
    %v2420 = vpop.f32.mrb[0].mxu0
    %v2421 = vpop.f32.mrb[0].mxu0
    %v2422 = vadd.f32 %v2085, %v2421
    %v2423 = vpop.f32.mrb[0].mxu0
    %2424 = vmatprep.mubr.bf16.mxu0 0
    %2425 = vmatmul.mubr.bf16.gmra.mrb[0].mxu0 %v1343
    %v2426 = vpop.f32.mrb[0].mxu0
    %v2427 = vadd.f32 %v2090, %v2426
    %v2428 = vpop.f32.mrb[0].mxu0
    %v2429 = vpop.f32.mrb[0].mxu0
    %v2430 = vadd.f32 %v2093, %v2429
    %v2431 = vpop.f32.mrb[0].mxu0
    %2432 = vmatprep.mubr.bf16.mxu0 0
    %2433 = vmatmul.mubr.bf16.gmra.mrb[0].mxu0 %v1344
    %v2434 = vpop.f32.mrb[0].mxu0
    %v2435 = vadd.f32 %v2098, %v2434
    %v2436 = vpop.f32.mrb[0].mxu0
    %v2437 = vpop.f32.mrb[0].mxu0
    %v2438 = vadd.f32 %v2101, %v2437
    %v2439 = vpop.f32.mrb[0].mxu0
    %2440 = vmatprep.mubr.bf16.mxu0 0
    %2441 = vmatmul.mubr.bf16.gmra.mrb[0].mxu0 %v1345
    %v2442 = vpop.f32.mrb[0].mxu0
    %v2443 = vadd.f32 %v2106, %v2442
    %v2444 = vpop.f32.mrb[0].mxu0
    %v2445 = vpop.f32.mrb[0].mxu0
    %v2446 = vadd.f32 %v2109, %v2445
    %v2447 = vpop.f32.mrb[0].mxu0
    %2448 = vmatprep.mubr.bf16.mxu0 0
    %2449 = vmatmul.mubr.bf16.gmra.mrb[0].mxu0 %v1346
    %v2450 = vpop.f32.mrb[0].mxu0
    %v2451 = vadd.f32 %v2114, %v2450
    %v2452 = vpop.f32.mrb[0].mxu0
    %v2453 = vpop.f32.mrb[0].mxu0
    %v2454 = vadd.f32 %v2117, %v2453
    %v2455 = vpop.f32.mrb[0].mxu0
    %2456 = vmatprep.mubr.bf16.mxu0 0
    %2457 = vmatmul.mubr.bf16.gmra.mrb[0].mxu0 %v1347
    %v2458 = vpop.f32.mrb[0].mxu0
    %v2459 = vadd.f32 %v2122, %v2458
    %v2460 = vpop.f32.mrb[0].mxu0
    %v2461 = vpop.f32.mrb[0].mxu0
    %v2462 = vadd.f32 %v2125, %v2461
    %v2463 = vpop.f32.mrb[0].mxu0
    %2464 = vmatprep.mubr.bf16.mxu0 0
    %2465 = vmatmul.mubr.bf16.gmra.mrb[0].mxu0 %v1348
    %v2466 = vpop.f32.mrb[0].mxu0
    %v2467 = vadd.f32 %v2130, %v2466
    %v2468 = vpop.f32.mrb[0].mxu0
    %v2469 = vpop.f32.mrb[0].mxu0
    %v2470 = vadd.f32 %v2133, %v2469
    %v2471 = vpop.f32.mrb[0].mxu0
    %2472 = vmatprep.mubr.bf16.mxu0 0
    %2473 = vmatmul.mubr.bf16.gmra.mrb[0].mxu0 %v1349
    %v2474 = vpop.f32.mrb[0].mxu0
    %v2475 = vadd.f32 %v2138, %v2474
    %v2476 = vpop.f32.mrb[0].mxu0
    %v2477 = vpop.f32.mrb[0].mxu0
    %v2478 = vadd.f32 %v2141, %v2477
    %v2479 = vpop.f32.mrb[0].mxu0
    %2480 = vmatprep.mubr.bf16.mxu0 0
    %2481 = vmatmul.mubr.bf16.gmra.mrb[0].mxu0 %v1350
    %v2482 = vpop.f32.mrb[0].mxu0
    %v2483 = vadd.f32 %v2146, %v2482
    %v2484 = vpop.f32.mrb[0].mxu0
    %v2485 = vpop.f32.mrb[0].mxu0
    %v2486 = vadd.f32 %v2149, %v2485
    %v2487 = vpop.f32.mrb[0].mxu0
    %2488 = vmatprep.mubr.bf16.mxu0 0
    %2489 = vmatmul.mubr.bf16.gmra.mrb[0].mxu0 %v1351
    %v2490 = vpop.f32.mrb[0].mxu0
    %v2491 = vadd.f32 %v2154, %v2490
    %v2492 = vpop.f32.mrb[0].mxu0
    %v2493 = vpop.f32.mrb[0].mxu0
    %v2494 = vadd.f32 %v2157, %v2493
    %v2495 = vpop.f32.mrb[0].mxu0
    %2496 = vdwg.mxu0
    %vm2559 = vcmask 1046528
    %v2560 = vrot.slane %v1320, 1
    %v2561 = vrot.slane %v1353, 1
    %v2562 = vsel %vm2559, %v2560, %v2561
    %v2563 = vrot.slane %v1321, 1
    %v2564 = vrot.slane %v1354, 1
    %v2565 = vsel %vm2559, %v2563, %v2564
    %v2566 = vrot.slane %v1322, 1
    %v2567 = vrot.slane %v1355, 1
    %v2568 = vsel %vm2559, %v2566, %v2567
    %v2569 = vrot.slane %v1323, 1
    %v2570 = vrot.slane %v1356, 1
    %v2571 = vsel %vm2559, %v2569, %v2570
    %v2572 = vrot.slane %v1324, 1
    %v2573 = vrot.slane %v1357, 1
    %v2574 = vsel %vm2559, %v2572, %v2573
    %v2575 = vrot.slane %v1325, 1
    %v2576 = vrot.slane %v1358, 1
    %v2577 = vsel %vm2559, %v2575, %v2576
    %v2578 = vrot.slane %v1326, 1
    %v2579 = vrot.slane %v1359, 1
    %v2580 = vsel %vm2559, %v2578, %v2579
    %v2581 = vrot.slane %v1327, 1
    %v2582 = vrot.slane %v1360, 1
    %v2583 = vsel %vm2559, %v2581, %v2582
    %v2584 = vrot.slane %v1328, 1
    %v2585 = vrot.slane %v1361, 1
    %v2586 = vsel %vm2559, %v2584, %v2585
    %v2587 = vrot.slane %v1329, 1
    %v2588 = vrot.slane %v1362, 1
    %v2589 = vsel %vm2559, %v2587, %v2588
    %v2590 = vrot.slane %v1330, 1
    %v2591 = vrot.slane %v1363, 1
    %v2592 = vsel %vm2559, %v2590, %v2591
    %v2593 = vrot.slane %v1331, 1
    %v2594 = vrot.slane %v1364, 1
    %v2595 = vsel %vm2559, %v2593, %v2594
    %v2596 = vrot.slane %v1332, 1
    %v2597 = vrot.slane %v1365, 1
    %v2598 = vsel %vm2559, %v2596, %v2597
    %v2599 = vrot.slane %v1333, 1
    %v2600 = vrot.slane %v1366, 1
    %v2601 = vsel %vm2559, %v2599, %v2600
    %v2602 = vrot.slane %v1334, 1
    %v2603 = vrot.slane %v1367, 1
    %v2604 = vsel %vm2559, %v2602, %v2603
    %v2605 = vrot.slane %v1335, 1
    %v2606 = vrot.slane %v1368, 1
    %v2607 = vsel %vm2559, %v2605, %v2606
    %v2608 = vrot.slane %v1337, 1
    %v2609 = vrot.slane %v1370, 1
    %v2610 = vsel %vm2559, %v2608, %v2609
    %v2611 = vrot.slane %v1338, 1
    %v2612 = vrot.slane %v1371, 1
    %v2613 = vsel %vm2559, %v2611, %v2612
    %v2614 = vrot.slane %v1339, 1
    %v2615 = vrot.slane %v1372, 1
    %v2616 = vsel %vm2559, %v2614, %v2615
    %v2617 = vrot.slane %v1340, 1
    %v2618 = vrot.slane %v1373, 1
    %v2619 = vsel %vm2559, %v2617, %v2618
    %v2620 = vrot.slane %v1341, 1
    %v2621 = vrot.slane %v1374, 1
    %v2622 = vsel %vm2559, %v2620, %v2621
    %v2623 = vrot.slane %v1342, 1
    %v2624 = vrot.slane %v1375, 1
    %v2625 = vsel %vm2559, %v2623, %v2624
    %v2626 = vrot.slane %v1343, 1
    %v2627 = vrot.slane %v1376, 1
    %v2628 = vsel %vm2559, %v2626, %v2627
    %v2629 = vrot.slane %v1344, 1
    %v2630 = vrot.slane %v1377, 1
    %v2631 = vsel %vm2559, %v2629, %v2630
    %v2632 = vrot.slane %v1345, 1
    %v2633 = vrot.slane %v1378, 1
    %v2634 = vsel %vm2559, %v2632, %v2633
    %v2635 = vrot.slane %v1346, 1
    %v2636 = vrot.slane %v1379, 1
    %v2637 = vsel %vm2559, %v2635, %v2636
    %v2638 = vrot.slane %v1347, 1
    %v2639 = vrot.slane %v1380, 1
    %v2640 = vsel %vm2559, %v2638, %v2639
    %v2641 = vrot.slane %v1348, 1
    %v2642 = vrot.slane %v1381, 1
    %v2643 = vsel %vm2559, %v2641, %v2642
    %v2644 = vrot.slane %v1349, 1
    %v2645 = vrot.slane %v1382, 1
    %v2646 = vsel %vm2559, %v2644, %v2645
    %v2647 = vrot.slane %v1350, 1
    %v2648 = vrot.slane %v1383, 1
    %v2649 = vsel %vm2559, %v2647, %v2648
    %v2650 = vrot.slane %v1351, 1
    %v2651 = vrot.slane %v1384, 1
    %v2652 = vsel %vm2559, %v2650, %v2651
    %s2684 = scalar_lea.vmem [#allocation7], 128
    %v2685 = vld [vmem:[%s2684] sm:$0xf]
    %v2686 = vld [vmem:[%s2684 + $0x4] sm:$0xf]
    %v2687 = vld [vmem:[%s2684 + $0x8] sm:$0xf]
    %v2688 = vld [vmem:[%s2684 + $0xc] sm:$0xf]
    %v2689 = vld [vmem:[%s2684 + $0x10] sm:$0xf]
    %v2690 = vld [vmem:[%s2684 + $0x14] sm:$0xf]
    %v2691 = vld [vmem:[%s2684 + $0x18] sm:$0xf]
    %v2692 = vld [vmem:[%s2684 + $0x1c] sm:$0xf]
    %v2693 = vld [vmem:[%s2684 + $0x20] sm:$0xf]
    %v2694 = vld [vmem:[%s2684 + $0x24] sm:$0xf]
    %v2695 = vld [vmem:[%s2684 + $0x28] sm:$0xf]
    %v2696 = vld [vmem:[%s2684 + $0x2c] sm:$0xf]
    %v2697 = vld [vmem:[%s2684 + $0x30] sm:$0xf]
    %v2698 = vld [vmem:[%s2684 + $0x34] sm:$0xf]
    %v2699 = vld [vmem:[%s2684 + $0x38] sm:$0xf]
    %v2700 = vld [vmem:[%s2684 + $0x3c] sm:$0xf]
    %v2717 = vunpack.c.l.b16 %v2685
    %v2718 = vunpack.c.l.b16 %v2686
    %v2719 = vunpack.c.l.b16 %v2687
    %v2720 = vunpack.c.l.b16 %v2688
    %v2721 = vunpack.c.l.b16 %v2689
    %v2722 = vunpack.c.l.b16 %v2690
    %v2723 = vunpack.c.l.b16 %v2691
    %v2724 = vunpack.c.l.b16 %v2692
    %v2725 = vunpack.c.l.b16 %v2693
    %v2726 = vunpack.c.l.b16 %v2694
    %v2727 = vunpack.c.l.b16 %v2695
    %v2728 = vunpack.c.l.b16 %v2696
    %v2729 = vunpack.c.l.b16 %v2697
    %v2730 = vunpack.c.l.b16 %v2698
    %v2731 = vunpack.c.l.b16 %v2699
    %v2732 = vunpack.c.l.b16 %v2700
    %v2733 = vpack.c.b16 %v2718, %v2717
    %v2734 = vpack.c.b16 %v2720, %v2719
    %v2735 = vpack.c.b16 %v2722, %v2721
    %v2736 = vpack.c.b16 %v2724, %v2723
    %v2737 = vpack.c.b16 %v2726, %v2725
    %v2738 = vpack.c.b16 %v2728, %v2727
    %v2739 = vpack.c.b16 %v2730, %v2729
    %v2740 = vpack.c.b16 %v2732, %v2731
    %2749 = vmatprep.subr.bf16.mxu0 0
    %2750 = vmatpush1.bf16.msra.mxu0 %v2733
    %2751 = vmatprep.subr.bf16.mxu0 0
    %2752 = vmatpush1.bf16.msra.mxu0 %v2734
    %2753 = vmatprep.subr.bf16.mxu0 0
    %2754 = vmatpush1.bf16.msra.mxu0 %v2735
    %2755 = vmatprep.subr.bf16.mxu0 0
    %2756 = vmatpush1.bf16.msra.mxu0 %v2736
    %2757 = vmatprep.subr.bf16.mxu0 0
    %2758 = vmatpush1.bf16.msra.mxu0 %v2737
    %2759 = vmatprep.subr.bf16.mxu0 0
    %2760 = vmatpush1.bf16.msra.mxu0 %v2738
    %2761 = vmatprep.subr.bf16.mxu0 0
    %2762 = vmatpush1.bf16.msra.mxu0 %v2739
    %2763 = vmatprep.subr.bf16.mxu0 0
    %2764 = vmatpush1.bf16.msra.mxu0 %v2740
    %2765 = vmatprep.subr.bf16.mxu0 0
    %2766 = vmatpush1.bf16.msra.mxu0 0
    %2767 = vmatprep.subr.bf16.mxu0 0
    %2768 = vmatpush1.bf16.msra.mxu0 0
    %2769 = vmatprep.subr.bf16.mxu0 0
    %2770 = vmatpush1.bf16.msra.mxu0 0
    %2771 = vmatprep.subr.bf16.mxu0 0
    %2772 = vmatpush1.bf16.msra.mxu0 0
    %2773 = vmatprep.subr.bf16.mxu0 0
    %2774 = vmatpush1.bf16.msra.mxu0 0
    %2775 = vmatprep.subr.bf16.mxu0 0
    %2776 = vmatpush1.bf16.msra.mxu0 0
    %2777 = vmatprep.subr.bf16.mxu0 0
    %2778 = vmatpush1.bf16.msra.mxu0 0
    %2779 = vmatprep.subr.bf16.mxu0 0
    %2780 = vmatpush1.bf16.msra.mxu0 0
    %2781 = vmatprep.mubr.bf16.mxu0 0
    %2782 = vmatmul.mubr.bf16.gmra.mrb[0].mxu0 %v2562
    %v2783 = vpop.f32.mrb[0].mxu0
    %v2784 = vadd.f32 0.0, %v2783
    %v2785 = vpop.f32.mrb[0].mxu0
    %v2786 = vpop.f32.mrb[0].mxu0
    %v2787 = vadd.f32 0.0, %v2786
    %v2788 = vpop.f32.mrb[0].mxu0
    %2789 = vmatprep.mubr.bf16.mxu0 0
    %2790 = vmatmul.mubr.bf16.gmra.mrb[0].mxu0 %v2565
    %v2791 = vpop.f32.mrb[0].mxu0
    %v2792 = vadd.f32 0.0, %v2791
    %v2793 = vpop.f32.mrb[0].mxu0
    %v2794 = vpop.f32.mrb[0].mxu0
    %v2795 = vadd.f32 0.0, %v2794
    %v2796 = vpop.f32.mrb[0].mxu0
    %2797 = vmatprep.mubr.bf16.mxu0 0
    %2798 = vmatmul.mubr.bf16.gmra.mrb[0].mxu0 %v2568
    %v2799 = vpop.f32.mrb[0].mxu0
    %v2800 = vadd.f32 0.0, %v2799
    %v2801 = vpop.f32.mrb[0].mxu0
    %v2802 = vpop.f32.mrb[0].mxu0
    %v2803 = vadd.f32 0.0, %v2802
    %v2804 = vpop.f32.mrb[0].mxu0
    %2805 = vmatprep.mubr.bf16.mxu0 0
    %2806 = vmatmul.mubr.bf16.gmra.mrb[0].mxu0 %v2571
    %v2807 = vpop.f32.mrb[0].mxu0
    %v2808 = vadd.f32 0.0, %v2807
    %v2809 = vpop.f32.mrb[0].mxu0
    %v2810 = vpop.f32.mrb[0].mxu0
    %v2811 = vadd.f32 0.0, %v2810
    %v2812 = vpop.f32.mrb[0].mxu0
    %2813 = vmatprep.mubr.bf16.mxu0 0
    %2814 = vmatmul.mubr.bf16.gmra.mrb[0].mxu0 %v2574
    %v2815 = vpop.f32.mrb[0].mxu0
    %v2816 = vadd.f32 0.0, %v2815
    %v2817 = vpop.f32.mrb[0].mxu0
    %v2818 = vpop.f32.mrb[0].mxu0
    %v2819 = vadd.f32 0.0, %v2818
    %v2820 = vpop.f32.mrb[0].mxu0
    %2821 = vmatprep.mubr.bf16.mxu0 0
    %2822 = vmatmul.mubr.bf16.gmra.mrb[0].mxu0 %v2577
    %v2823 = vpop.f32.mrb[0].mxu0
    %v2824 = vadd.f32 0.0, %v2823
    %v2825 = vpop.f32.mrb[0].mxu0
    %v2826 = vpop.f32.mrb[0].mxu0
    %v2827 = vadd.f32 0.0, %v2826
    %v2828 = vpop.f32.mrb[0].mxu0
    %2829 = vmatprep.mubr.bf16.mxu0 0
    %2830 = vmatmul.mubr.bf16.gmra.mrb[0].mxu0 %v2580
    %v2831 = vpop.f32.mrb[0].mxu0
    %v2832 = vadd.f32 0.0, %v2831
    %v2833 = vpop.f32.mrb[0].mxu0
    %v2834 = vpop.f32.mrb[0].mxu0
    %v2835 = vadd.f32 0.0, %v2834
    %v2836 = vpop.f32.mrb[0].mxu0
    %2837 = vmatprep.mubr.bf16.mxu0 0
    %2838 = vmatmul.mubr.bf16.gmra.mrb[0].mxu0 %v2583
    %v2839 = vpop.f32.mrb[0].mxu0
    %v2840 = vadd.f32 0.0, %v2839
    %v2841 = vpop.f32.mrb[0].mxu0
    %v2842 = vpop.f32.mrb[0].mxu0
    %v2843 = vadd.f32 0.0, %v2842
    %v2844 = vpop.f32.mrb[0].mxu0
    %2845 = vmatprep.mubr.bf16.mxu0 0
    %2846 = vmatmul.mubr.bf16.gmra.mrb[0].mxu0 %v2586
    %v2847 = vpop.f32.mrb[0].mxu0
    %v2848 = vadd.f32 0.0, %v2847
    %v2849 = vpop.f32.mrb[0].mxu0
    %v2850 = vpop.f32.mrb[0].mxu0
    %v2851 = vadd.f32 0.0, %v2850
    %v2852 = vpop.f32.mrb[0].mxu0
    %2853 = vmatprep.mubr.bf16.mxu0 0
    %2854 = vmatmul.mubr.bf16.gmra.mrb[0].mxu0 %v2589
    %v2855 = vpop.f32.mrb[0].mxu0
    %v2856 = vadd.f32 0.0, %v2855
    %v2857 = vpop.f32.mrb[0].mxu0
    %v2858 = vpop.f32.mrb[0].mxu0
    %v2859 = vadd.f32 0.0, %v2858
    %v2860 = vpop.f32.mrb[0].mxu0
    %2861 = vmatprep.mubr.bf16.mxu0 0
    %2862 = vmatmul.mubr.bf16.gmra.mrb[0].mxu0 %v2592
    %v2863 = vpop.f32.mrb[0].mxu0
    %v2864 = vadd.f32 0.0, %v2863
    %v2865 = vpop.f32.mrb[0].mxu0
    %v2866 = vpop.f32.mrb[0].mxu0
    %v2867 = vadd.f32 0.0, %v2866
    %v2868 = vpop.f32.mrb[0].mxu0
    %2869 = vmatprep.mubr.bf16.mxu0 0
    %2870 = vmatmul.mubr.bf16.gmra.mrb[0].mxu0 %v2595
    %v2871 = vpop.f32.mrb[0].mxu0
    %v2872 = vadd.f32 0.0, %v2871
    %v2873 = vpop.f32.mrb[0].mxu0
    %v2874 = vpop.f32.mrb[0].mxu0
    %v2875 = vadd.f32 0.0, %v2874
    %v2876 = vpop.f32.mrb[0].mxu0
    %2877 = vmatprep.mubr.bf16.mxu0 0
    %2878 = vmatmul.mubr.bf16.gmra.mrb[0].mxu0 %v2598
    %v2879 = vpop.f32.mrb[0].mxu0
    %v2880 = vadd.f32 0.0, %v2879
    %v2881 = vpop.f32.mrb[0].mxu0
    %v2882 = vpop.f32.mrb[0].mxu0
    %v2883 = vadd.f32 0.0, %v2882
    %v2884 = vpop.f32.mrb[0].mxu0
    %2885 = vmatprep.mubr.bf16.mxu0 0
    %2886 = vmatmul.mubr.bf16.gmra.mrb[0].mxu0 %v2601
    %v2887 = vpop.f32.mrb[0].mxu0
    %v2888 = vadd.f32 0.0, %v2887
    %v2889 = vpop.f32.mrb[0].mxu0
    %v2890 = vpop.f32.mrb[0].mxu0
    %v2891 = vadd.f32 0.0, %v2890
    %v2892 = vpop.f32.mrb[0].mxu0
    %2893 = vmatprep.mubr.bf16.mxu0 0
    %2894 = vmatmul.mubr.bf16.gmra.mrb[0].mxu0 %v2604
    %v2895 = vpop.f32.mrb[0].mxu0
    %v2896 = vadd.f32 0.0, %v2895
    %v2897 = vpop.f32.mrb[0].mxu0
    %v2898 = vpop.f32.mrb[0].mxu0
    %v2899 = vadd.f32 0.0, %v2898
    %v2900 = vpop.f32.mrb[0].mxu0
    %2901 = vmatprep.mubr.bf16.mxu0 0
    %2902 = vmatmul.mubr.bf16.gmra.mrb[0].mxu0 %v2607
    %v2903 = vpop.f32.mrb[0].mxu0
    %v2904 = vadd.f32 0.0, %v2903
    %v2905 = vpop.f32.mrb[0].mxu0
    %v2906 = vpop.f32.mrb[0].mxu0
    %v2907 = vadd.f32 0.0, %v2906
    %v2908 = vpop.f32.mrb[0].mxu0
    %2909 = vmatprep.mubr.bf16.mxu0 0
    %2910 = vmatmul.mubr.bf16.gmra.mrb[0].mxu0 %v2562
    %v2911 = vpop.f32.mrb[0].mxu0
    %v2912 = vadd.f32 0.0, %v2911
    %v2913 = vpop.f32.mrb[0].mxu0
    %v2914 = vpop.f32.mrb[0].mxu0
    %v2915 = vadd.f32 0.0, %v2914
    %v2916 = vpop.f32.mrb[0].mxu0
    %2917 = vmatprep.mubr.bf16.mxu0 0
    %2918 = vmatmul.mubr.bf16.gmra.mrb[0].mxu0 %v2610
    %v2919 = vpop.f32.mrb[0].mxu0
    %v2920 = vadd.f32 0.0, %v2919
    %v2921 = vpop.f32.mrb[0].mxu0
    %v2922 = vpop.f32.mrb[0].mxu0
    %v2923 = vadd.f32 0.0, %v2922
    %v2924 = vpop.f32.mrb[0].mxu0
    %2925 = vmatprep.mubr.bf16.mxu0 0
    %2926 = vmatmul.mubr.bf16.gmra.mrb[0].mxu0 %v2613
    %v2927 = vpop.f32.mrb[0].mxu0
    %v2928 = vadd.f32 0.0, %v2927
    %v2929 = vpop.f32.mrb[0].mxu0
    %v2930 = vpop.f32.mrb[0].mxu0
    %v2931 = vadd.f32 0.0, %v2930
    %v2932 = vpop.f32.mrb[0].mxu0
    %2933 = vmatprep.mubr.bf16.mxu0 0
    %2934 = vmatmul.mubr.bf16.gmra.mrb[0].mxu0 %v2616
    %v2935 = vpop.f32.mrb[0].mxu0
    %v2936 = vadd.f32 0.0, %v2935
    %v2937 = vpop.f32.mrb[0].mxu0
    %v2938 = vpop.f32.mrb[0].mxu0
    %v2939 = vadd.f32 0.0, %v2938
    %v2940 = vpop.f32.mrb[0].mxu0
    %2941 = vmatprep.mubr.bf16.mxu0 0
    %2942 = vmatmul.mubr.bf16.gmra.mrb[0].mxu0 %v2619
    %v2943 = vpop.f32.mrb[0].mxu0
    %v2944 = vadd.f32 0.0, %v2943
    %v2945 = vpop.f32.mrb[0].mxu0
    %v2946 = vpop.f32.mrb[0].mxu0
    %v2947 = vadd.f32 0.0, %v2946
    %v2948 = vpop.f32.mrb[0].mxu0
    %2949 = vmatprep.mubr.bf16.mxu0 0
    %2950 = vmatmul.mubr.bf16.gmra.mrb[0].mxu0 %v2622
    %v2951 = vpop.f32.mrb[0].mxu0
    %v2952 = vadd.f32 0.0, %v2951
    %v2953 = vpop.f32.mrb[0].mxu0
    %v2954 = vpop.f32.mrb[0].mxu0
    %v2955 = vadd.f32 0.0, %v2954
    %v2956 = vpop.f32.mrb[0].mxu0
    %2957 = vmatprep.mubr.bf16.mxu0 0
    %2958 = vmatmul.mubr.bf16.gmra.mrb[0].mxu0 %v2625
    %v2959 = vpop.f32.mrb[0].mxu0
    %v2960 = vadd.f32 0.0, %v2959
    %v2961 = vpop.f32.mrb[0].mxu0
    %v2962 = vpop.f32.mrb[0].mxu0
    %v2963 = vadd.f32 0.0, %v2962
    %v2964 = vpop.f32.mrb[0].mxu0
    %2965 = vmatprep.mubr.bf16.mxu0 0
    %2966 = vmatmul.mubr.bf16.gmra.mrb[0].mxu0 %v2628
    %v2967 = vpop.f32.mrb[0].mxu0
    %v2968 = vadd.f32 0.0, %v2967
    %v2969 = vpop.f32.mrb[0].mxu0
    %v2970 = vpop.f32.mrb[0].mxu0
    %v2971 = vadd.f32 0.0, %v2970
    %v2972 = vpop.f32.mrb[0].mxu0
    %2973 = vmatprep.mubr.bf16.mxu0 0
    %2974 = vmatmul.mubr.bf16.gmra.mrb[0].mxu0 %v2631
    %v2975 = vpop.f32.mrb[0].mxu0
    %v2976 = vadd.f32 0.0, %v2975
    %v2977 = vpop.f32.mrb[0].mxu0
    %v2978 = vpop.f32.mrb[0].mxu0
    %v2979 = vadd.f32 0.0, %v2978
    %v2980 = vpop.f32.mrb[0].mxu0
    %2981 = vmatprep.mubr.bf16.mxu0 0
    %2982 = vmatmul.mubr.bf16.gmra.mrb[0].mxu0 %v2634
    %v2983 = vpop.f32.mrb[0].mxu0
    %v2984 = vadd.f32 0.0, %v2983
    %v2985 = vpop.f32.mrb[0].mxu0
    %v2986 = vpop.f32.mrb[0].mxu0
    %v2987 = vadd.f32 0.0, %v2986
    %v2988 = vpop.f32.mrb[0].mxu0
    %2989 = vmatprep.mubr.bf16.mxu0 0
    %2990 = vmatmul.mubr.bf16.gmra.mrb[0].mxu0 %v2637
    %v2991 = vpop.f32.mrb[0].mxu0
    %v2992 = vadd.f32 0.0, %v2991
    %v2993 = vpop.f32.mrb[0].mxu0
    %v2994 = vpop.f32.mrb[0].mxu0
    %v2995 = vadd.f32 0.0, %v2994
    %v2996 = vpop.f32.mrb[0].mxu0
    %2997 = vmatprep.mubr.bf16.mxu0 0
    %2998 = vmatmul.mubr.bf16.gmra.mrb[0].mxu0 %v2640
    %v2999 = vpop.f32.mrb[0].mxu0
    %v3000 = vadd.f32 0.0, %v2999
    %v3001 = vpop.f32.mrb[0].mxu0
    %v3002 = vpop.f32.mrb[0].mxu0
    %v3003 = vadd.f32 0.0, %v3002
    %v3004 = vpop.f32.mrb[0].mxu0
    %3005 = vmatprep.mubr.bf16.mxu0 0
    %3006 = vmatmul.mubr.bf16.gmra.mrb[0].mxu0 %v2643
    %v3007 = vpop.f32.mrb[0].mxu0
    %v3008 = vadd.f32 0.0, %v3007
    %v3009 = vpop.f32.mrb[0].mxu0
    %v3010 = vpop.f32.mrb[0].mxu0
    %v3011 = vadd.f32 0.0, %v3010
    %v3012 = vpop.f32.mrb[0].mxu0
    %3013 = vmatprep.mubr.bf16.mxu0 0
    %3014 = vmatmul.mubr.bf16.gmra.mrb[0].mxu0 %v2646
    %v3015 = vpop.f32.mrb[0].mxu0
    %v3016 = vadd.f32 0.0, %v3015
    %v3017 = vpop.f32.mrb[0].mxu0
    %v3018 = vpop.f32.mrb[0].mxu0
    %v3019 = vadd.f32 0.0, %v3018
    %v3020 = vpop.f32.mrb[0].mxu0
    %3021 = vmatprep.mubr.bf16.mxu0 0
    %3022 = vmatmul.mubr.bf16.gmra.mrb[0].mxu0 %v2649
    %v3023 = vpop.f32.mrb[0].mxu0
    %v3024 = vadd.f32 0.0, %v3023
    %v3025 = vpop.f32.mrb[0].mxu0
    %v3026 = vpop.f32.mrb[0].mxu0
    %v3027 = vadd.f32 0.0, %v3026
    %v3028 = vpop.f32.mrb[0].mxu0
    %3029 = vmatprep.mubr.bf16.mxu0 0
    %3030 = vmatmul.mubr.bf16.gmra.mrb[0].mxu0 %v2652
    %v3031 = vpop.f32.mrb[0].mxu0
    %v3032 = vadd.f32 0.0, %v3031
    %v3033 = vpop.f32.mrb[0].mxu0
    %v3034 = vpop.f32.mrb[0].mxu0
    %v3035 = vadd.f32 0.0, %v3034
    %v3036 = vpop.f32.mrb[0].mxu0
    %3037 = vdwg.mxu0
    %v3038 = vadd.f32 %v2243, %v2784
    %v3039 = vadd.f32 %v2246, %v2787
    %v3040 = vadd.f32 %v2251, %v2792
    %v3041 = vadd.f32 %v2254, %v2795
    %v3042 = vadd.f32 %v2259, %v2800
    %v3043 = vadd.f32 %v2262, %v2803
    %v3044 = vadd.f32 %v2267, %v2808
    %v3045 = vadd.f32 %v2270, %v2811
    %v3046 = vadd.f32 %v2275, %v2816
    %v3047 = vadd.f32 %v2278, %v2819
    %v3048 = vadd.f32 %v2283, %v2824
    %v3049 = vadd.f32 %v2286, %v2827
    %v3050 = vadd.f32 %v2291, %v2832
    %v3051 = vadd.f32 %v2294, %v2835
    %v3052 = vadd.f32 %v2299, %v2840
    %v3053 = vadd.f32 %v2302, %v2843
    %v3054 = vadd.f32 %v2307, %v2848
    %v3055 = vadd.f32 %v2310, %v2851
    %v3056 = vadd.f32 %v2315, %v2856
    %v3057 = vadd.f32 %v2318, %v2859
    %v3058 = vadd.f32 %v2323, %v2864
    %v3059 = vadd.f32 %v2326, %v2867
    %v3060 = vadd.f32 %v2331, %v2872
    %v3061 = vadd.f32 %v2334, %v2875
    %v3062 = vadd.f32 %v2339, %v2880
    %v3063 = vadd.f32 %v2342, %v2883
    %v3064 = vadd.f32 %v2347, %v2888
    %v3065 = vadd.f32 %v2350, %v2891
    %v3066 = vadd.f32 %v2355, %v2896
    %v3067 = vadd.f32 %v2358, %v2899
    %v3068 = vadd.f32 %v2363, %v2904
    %v3069 = vadd.f32 %v2366, %v2907
    %v3070 = vadd.f32 %v2371, %v2912
    %v3071 = vadd.f32 %v2374, %v2915
    %v3072 = vadd.f32 %v2379, %v2920
    %v3073 = vadd.f32 %v2382, %v2923
    %v3074 = vadd.f32 %v2387, %v2928
    %v3075 = vadd.f32 %v2390, %v2931
    %v3076 = vadd.f32 %v2395, %v2936
    %v3077 = vadd.f32 %v2398, %v2939
    %v3078 = vadd.f32 %v2403, %v2944
    %v3079 = vadd.f32 %v2406, %v2947
    %v3080 = vadd.f32 %v2411, %v2952
    %v3081 = vadd.f32 %v2414, %v2955
    %v3082 = vadd.f32 %v2419, %v2960
    %v3083 = vadd.f32 %v2422, %v2963
    %v3084 = vadd.f32 %v2427, %v2968
    %v3085 = vadd.f32 %v2430, %v2971
    %v3086 = vadd.f32 %v2435, %v2976
    %v3087 = vadd.f32 %v2438, %v2979
    %v3088 = vadd.f32 %v2443, %v2984
    %v3089 = vadd.f32 %v2446, %v2987
    %v3090 = vadd.f32 %v2451, %v2992
    %v3091 = vadd.f32 %v2454, %v2995
    %v3092 = vadd.f32 %v2459, %v3000
    %v3093 = vadd.f32 %v2462, %v3003
    %v3094 = vadd.f32 %v2467, %v3008
    %v3095 = vadd.f32 %v2470, %v3011
    %v3096 = vadd.f32 %v2475, %v3016
    %v3097 = vadd.f32 %v2478, %v3019
    %v3098 = vadd.f32 %v2483, %v3024
    %v3099 = vadd.f32 %v2486, %v3027
    %v3100 = vadd.f32 %v2491, %v3032
    %v3101 = vadd.f32 %v2494, %v3035
    %s3102 = scalar_lea.vmem [#allocation7], 192
    %v3103 = vld [vmem:[%s3102] sm:$0xf]
    %v3104 = vld [vmem:[%s3102 + $0x4] sm:$0xf]
    %v3105 = vld [vmem:[%s3102 + $0x8] sm:$0xf]
    %v3106 = vld [vmem:[%s3102 + $0xc] sm:$0xf]
    %v3107 = vld [vmem:[%s3102 + $0x10] sm:$0xf]
    %v3108 = vld [vmem:[%s3102 + $0x14] sm:$0xf]
    %v3109 = vld [vmem:[%s3102 + $0x18] sm:$0xf]
    %v3110 = vld [vmem:[%s3102 + $0x1c] sm:$0xf]
    %v3111 = vld [vmem:[%s3102 + $0x20] sm:$0xf]
    %v3112 = vld [vmem:[%s3102 + $0x24] sm:$0xf]
    %v3113 = vld [vmem:[%s3102 + $0x28] sm:$0xf]
    %v3114 = vld [vmem:[%s3102 + $0x2c] sm:$0xf]
    %v3115 = vld [vmem:[%s3102 + $0x30] sm:$0xf]
    %v3116 = vld [vmem:[%s3102 + $0x34] sm:$0xf]
    %v3117 = vld [vmem:[%s3102 + $0x38] sm:$0xf]
    %v3118 = vld [vmem:[%s3102 + $0x3c] sm:$0xf]
    %v3135 = vunpack.c.l.b16 %v3103
    %v3136 = vunpack.c.l.b16 %v3104
    %v3137 = vunpack.c.l.b16 %v3105
    %v3138 = vunpack.c.l.b16 %v3106
    %v3139 = vunpack.c.l.b16 %v3107
    %v3140 = vunpack.c.l.b16 %v3108
    %v3141 = vunpack.c.l.b16 %v3109
    %v3142 = vunpack.c.l.b16 %v3110
    %v3143 = vunpack.c.l.b16 %v3111
    %v3144 = vunpack.c.l.b16 %v3112
    %v3145 = vunpack.c.l.b16 %v3113
    %v3146 = vunpack.c.l.b16 %v3114
    %v3147 = vunpack.c.l.b16 %v3115
    %v3148 = vunpack.c.l.b16 %v3116
    %v3149 = vunpack.c.l.b16 %v3117
    %v3150 = vunpack.c.l.b16 %v3118
    %v3151 = vpack.c.b16 %v3136, %v3135
    %v3152 = vpack.c.b16 %v3138, %v3137
    %v3153 = vpack.c.b16 %v3140, %v3139
    %v3154 = vpack.c.b16 %v3142, %v3141
    %v3155 = vpack.c.b16 %v3144, %v3143
    %v3156 = vpack.c.b16 %v3146, %v3145
    %v3157 = vpack.c.b16 %v3148, %v3147
    %v3158 = vpack.c.b16 %v3150, %v3149
    %3167 = vmatprep.subr.bf16.mxu0 0
    %3168 = vmatpush1.bf16.msra.mxu0 %v3151
    %3169 = vmatprep.subr.bf16.mxu0 0
    %3170 = vmatpush1.bf16.msra.mxu0 %v3152
    %3171 = vmatprep.subr.bf16.mxu0 0
    %3172 = vmatpush1.bf16.msra.mxu0 %v3153
    %3173 = vmatprep.subr.bf16.mxu0 0
    %3174 = vmatpush1.bf16.msra.mxu0 %v3154
    %3175 = vmatprep.subr.bf16.mxu0 0
    %3176 = vmatpush1.bf16.msra.mxu0 %v3155
    %3177 = vmatprep.subr.bf16.mxu0 0
    %3178 = vmatpush1.bf16.msra.mxu0 %v3156
    %3179 = vmatprep.subr.bf16.mxu0 0
    %3180 = vmatpush1.bf16.msra.mxu0 %v3157
    %3181 = vmatprep.subr.bf16.mxu0 0
    %3182 = vmatpush1.bf16.msra.mxu0 %v3158
    %3183 = vmatprep.subr.bf16.mxu0 0
    %3184 = vmatpush1.bf16.msra.mxu0 0
    %3185 = vmatprep.subr.bf16.mxu0 0
    %3186 = vmatpush1.bf16.msra.mxu0 0
    %3187 = vmatprep.subr.bf16.mxu0 0
    %3188 = vmatpush1.bf16.msra.mxu0 0
    %3189 = vmatprep.subr.bf16.mxu0 0
    %3190 = vmatpush1.bf16.msra.mxu0 0
    %3191 = vmatprep.subr.bf16.mxu0 0
    %3192 = vmatpush1.bf16.msra.mxu0 0
    %3193 = vmatprep.subr.bf16.mxu0 0
    %3194 = vmatpush1.bf16.msra.mxu0 0
    %3195 = vmatprep.subr.bf16.mxu0 0
    %3196 = vmatpush1.bf16.msra.mxu0 0
    %3197 = vmatprep.subr.bf16.mxu0 0
    %3198 = vmatpush1.bf16.msra.mxu0 0
    %3199 = vmatprep.mubr.bf16.mxu0 0
    %3200 = vmatmul.mubr.bf16.gmra.mrb[0].mxu0 %v1321
    %v3201 = vpop.f32.mrb[0].mxu0
    %v3202 = vadd.f32 0.0, %v3201
    %v3203 = vpop.f32.mrb[0].mxu0
    %v3204 = vpop.f32.mrb[0].mxu0
    %v3205 = vadd.f32 0.0, %v3204
    %v3206 = vpop.f32.mrb[0].mxu0
    %3207 = vmatprep.mubr.bf16.mxu0 0
    %3208 = vmatmul.mubr.bf16.gmra.mrb[0].mxu0 %v1322
    %v3209 = vpop.f32.mrb[0].mxu0
    %v3210 = vadd.f32 0.0, %v3209
    %v3211 = vpop.f32.mrb[0].mxu0
    %v3212 = vpop.f32.mrb[0].mxu0
    %v3213 = vadd.f32 0.0, %v3212
    %v3214 = vpop.f32.mrb[0].mxu0
    %3215 = vmatprep.mubr.bf16.mxu0 0
    %3216 = vmatmul.mubr.bf16.gmra.mrb[0].mxu0 %v1323
    %v3217 = vpop.f32.mrb[0].mxu0
    %v3218 = vadd.f32 0.0, %v3217
    %v3219 = vpop.f32.mrb[0].mxu0
    %v3220 = vpop.f32.mrb[0].mxu0
    %v3221 = vadd.f32 0.0, %v3220
    %v3222 = vpop.f32.mrb[0].mxu0
    %3223 = vmatprep.mubr.bf16.mxu0 0
    %3224 = vmatmul.mubr.bf16.gmra.mrb[0].mxu0 %v1324
    %v3225 = vpop.f32.mrb[0].mxu0
    %v3226 = vadd.f32 0.0, %v3225
    %v3227 = vpop.f32.mrb[0].mxu0
    %v3228 = vpop.f32.mrb[0].mxu0
    %v3229 = vadd.f32 0.0, %v3228
    %v3230 = vpop.f32.mrb[0].mxu0
    %3231 = vmatprep.mubr.bf16.mxu0 0
    %3232 = vmatmul.mubr.bf16.gmra.mrb[0].mxu0 %v1325
    %v3233 = vpop.f32.mrb[0].mxu0
    %v3234 = vadd.f32 0.0, %v3233
    %v3235 = vpop.f32.mrb[0].mxu0
    %v3236 = vpop.f32.mrb[0].mxu0
    %v3237 = vadd.f32 0.0, %v3236
    %v3238 = vpop.f32.mrb[0].mxu0
    %3239 = vmatprep.mubr.bf16.mxu0 0
    %3240 = vmatmul.mubr.bf16.gmra.mrb[0].mxu0 %v1326
    %v3241 = vpop.f32.mrb[0].mxu0
    %v3242 = vadd.f32 0.0, %v3241
    %v3243 = vpop.f32.mrb[0].mxu0
    %v3244 = vpop.f32.mrb[0].mxu0
    %v3245 = vadd.f32 0.0, %v3244
    %v3246 = vpop.f32.mrb[0].mxu0
    %3247 = vmatprep.mubr.bf16.mxu0 0
    %3248 = vmatmul.mubr.bf16.gmra.mrb[0].mxu0 %v1327
    %v3249 = vpop.f32.mrb[0].mxu0
    %v3250 = vadd.f32 0.0, %v3249
    %v3251 = vpop.f32.mrb[0].mxu0
    %v3252 = vpop.f32.mrb[0].mxu0
    %v3253 = vadd.f32 0.0, %v3252
    %v3254 = vpop.f32.mrb[0].mxu0
    %3255 = vmatprep.mubr.bf16.mxu0 0
    %3256 = vmatmul.mubr.bf16.gmra.mrb[0].mxu0 %v1328
    %v3257 = vpop.f32.mrb[0].mxu0
    %v3258 = vadd.f32 0.0, %v3257
    %v3259 = vpop.f32.mrb[0].mxu0
    %v3260 = vpop.f32.mrb[0].mxu0
    %v3261 = vadd.f32 0.0, %v3260
    %v3262 = vpop.f32.mrb[0].mxu0
    %3263 = vmatprep.mubr.bf16.mxu0 0
    %3264 = vmatmul.mubr.bf16.gmra.mrb[0].mxu0 %v1329
    %v3265 = vpop.f32.mrb[0].mxu0
    %v3266 = vadd.f32 0.0, %v3265
    %v3267 = vpop.f32.mrb[0].mxu0
    %v3268 = vpop.f32.mrb[0].mxu0
    %v3269 = vadd.f32 0.0, %v3268
    %v3270 = vpop.f32.mrb[0].mxu0
    %3271 = vmatprep.mubr.bf16.mxu0 0
    %3272 = vmatmul.mubr.bf16.gmra.mrb[0].mxu0 %v1330
    %v3273 = vpop.f32.mrb[0].mxu0
    %v3274 = vadd.f32 0.0, %v3273
    %v3275 = vpop.f32.mrb[0].mxu0
    %v3276 = vpop.f32.mrb[0].mxu0
    %v3277 = vadd.f32 0.0, %v3276
    %v3278 = vpop.f32.mrb[0].mxu0
    %3279 = vmatprep.mubr.bf16.mxu0 0
    %3280 = vmatmul.mubr.bf16.gmra.mrb[0].mxu0 %v1331
    %v3281 = vpop.f32.mrb[0].mxu0
    %v3282 = vadd.f32 0.0, %v3281
    %v3283 = vpop.f32.mrb[0].mxu0
    %v3284 = vpop.f32.mrb[0].mxu0
    %v3285 = vadd.f32 0.0, %v3284
    %v3286 = vpop.f32.mrb[0].mxu0
    %3287 = vmatprep.mubr.bf16.mxu0 0
    %3288 = vmatmul.mubr.bf16.gmra.mrb[0].mxu0 %v1332
    %v3289 = vpop.f32.mrb[0].mxu0
    %v3290 = vadd.f32 0.0, %v3289
    %v3291 = vpop.f32.mrb[0].mxu0
    %v3292 = vpop.f32.mrb[0].mxu0
    %v3293 = vadd.f32 0.0, %v3292
    %v3294 = vpop.f32.mrb[0].mxu0
    %3295 = vmatprep.mubr.bf16.mxu0 0
    %3296 = vmatmul.mubr.bf16.gmra.mrb[0].mxu0 %v1333
    %v3297 = vpop.f32.mrb[0].mxu0
    %v3298 = vadd.f32 0.0, %v3297
    %v3299 = vpop.f32.mrb[0].mxu0
    %v3300 = vpop.f32.mrb[0].mxu0
    %v3301 = vadd.f32 0.0, %v3300
    %v3302 = vpop.f32.mrb[0].mxu0
    %3303 = vmatprep.mubr.bf16.mxu0 0
    %3304 = vmatmul.mubr.bf16.gmra.mrb[0].mxu0 %v1334
    %v3305 = vpop.f32.mrb[0].mxu0
    %v3306 = vadd.f32 0.0, %v3305
    %v3307 = vpop.f32.mrb[0].mxu0
    %v3308 = vpop.f32.mrb[0].mxu0
    %v3309 = vadd.f32 0.0, %v3308
    %v3310 = vpop.f32.mrb[0].mxu0
    %3311 = vmatprep.mubr.bf16.mxu0 0
    %3312 = vmatmul.mubr.bf16.gmra.mrb[0].mxu0 %v1335
    %v3313 = vpop.f32.mrb[0].mxu0
    %v3314 = vadd.f32 0.0, %v3313
    %v3315 = vpop.f32.mrb[0].mxu0
    %v3316 = vpop.f32.mrb[0].mxu0
    %v3317 = vadd.f32 0.0, %v3316
    %v3318 = vpop.f32.mrb[0].mxu0
    %3319 = vmatprep.mubr.bf16.mxu0 0
    %3320 = vmatmul.mubr.bf16.gmra.mrb[0].mxu0 %v1336
    %v3321 = vpop.f32.mrb[0].mxu0
    %v3322 = vadd.f32 0.0, %v3321
    %v3323 = vpop.f32.mrb[0].mxu0
    %v3324 = vpop.f32.mrb[0].mxu0
    %v3325 = vadd.f32 0.0, %v3324
    %v3326 = vpop.f32.mrb[0].mxu0
    %3327 = vmatprep.mubr.bf16.mxu0 0
    %3328 = vmatmul.mubr.bf16.gmra.mrb[0].mxu0 %v1337
    %v3329 = vpop.f32.mrb[0].mxu0
    %v3330 = vadd.f32 0.0, %v3329
    %v3331 = vpop.f32.mrb[0].mxu0
    %v3332 = vpop.f32.mrb[0].mxu0
    %v3333 = vadd.f32 0.0, %v3332
    %v3334 = vpop.f32.mrb[0].mxu0
    %3335 = vmatprep.mubr.bf16.mxu0 0
    %3336 = vmatmul.mubr.bf16.gmra.mrb[0].mxu0 %v1338
    %v3337 = vpop.f32.mrb[0].mxu0
    %v3338 = vadd.f32 0.0, %v3337
    %v3339 = vpop.f32.mrb[0].mxu0
    %v3340 = vpop.f32.mrb[0].mxu0
    %v3341 = vadd.f32 0.0, %v3340
    %v3342 = vpop.f32.mrb[0].mxu0
    %3343 = vmatprep.mubr.bf16.mxu0 0
    %3344 = vmatmul.mubr.bf16.gmra.mrb[0].mxu0 %v1339
    %v3345 = vpop.f32.mrb[0].mxu0
    %v3346 = vadd.f32 0.0, %v3345
    %v3347 = vpop.f32.mrb[0].mxu0
    %v3348 = vpop.f32.mrb[0].mxu0
    %v3349 = vadd.f32 0.0, %v3348
    %v3350 = vpop.f32.mrb[0].mxu0
    %3351 = vmatprep.mubr.bf16.mxu0 0
    %3352 = vmatmul.mubr.bf16.gmra.mrb[0].mxu0 %v1340
    %v3353 = vpop.f32.mrb[0].mxu0
    %v3354 = vadd.f32 0.0, %v3353
    %v3355 = vpop.f32.mrb[0].mxu0
    %v3356 = vpop.f32.mrb[0].mxu0
    %v3357 = vadd.f32 0.0, %v3356
    %v3358 = vpop.f32.mrb[0].mxu0
    %3359 = vmatprep.mubr.bf16.mxu0 0
    %3360 = vmatmul.mubr.bf16.gmra.mrb[0].mxu0 %v1341
    %v3361 = vpop.f32.mrb[0].mxu0
    %v3362 = vadd.f32 0.0, %v3361
    %v3363 = vpop.f32.mrb[0].mxu0
    %v3364 = vpop.f32.mrb[0].mxu0
    %v3365 = vadd.f32 0.0, %v3364
    %v3366 = vpop.f32.mrb[0].mxu0
    %3367 = vmatprep.mubr.bf16.mxu0 0
    %3368 = vmatmul.mubr.bf16.gmra.mrb[0].mxu0 %v1342
    %v3369 = vpop.f32.mrb[0].mxu0
    %v3370 = vadd.f32 0.0, %v3369
    %v3371 = vpop.f32.mrb[0].mxu0
    %v3372 = vpop.f32.mrb[0].mxu0
    %v3373 = vadd.f32 0.0, %v3372
    %v3374 = vpop.f32.mrb[0].mxu0
    %3375 = vmatprep.mubr.bf16.mxu0 0
    %3376 = vmatmul.mubr.bf16.gmra.mrb[0].mxu0 %v1343
    %v3377 = vpop.f32.mrb[0].mxu0
    %v3378 = vadd.f32 0.0, %v3377
    %v3379 = vpop.f32.mrb[0].mxu0
    %v3380 = vpop.f32.mrb[0].mxu0
    %v3381 = vadd.f32 0.0, %v3380
    %v3382 = vpop.f32.mrb[0].mxu0
    %3383 = vmatprep.mubr.bf16.mxu0 0
    %3384 = vmatmul.mubr.bf16.gmra.mrb[0].mxu0 %v1344
    %v3385 = vpop.f32.mrb[0].mxu0
    %v3386 = vadd.f32 0.0, %v3385
    %v3387 = vpop.f32.mrb[0].mxu0
    %v3388 = vpop.f32.mrb[0].mxu0
    %v3389 = vadd.f32 0.0, %v3388
    %v3390 = vpop.f32.mrb[0].mxu0
    %3391 = vmatprep.mubr.bf16.mxu0 0
    %3392 = vmatmul.mubr.bf16.gmra.mrb[0].mxu0 %v1345
    %v3393 = vpop.f32.mrb[0].mxu0
    %v3394 = vadd.f32 0.0, %v3393
    %v3395 = vpop.f32.mrb[0].mxu0
    %v3396 = vpop.f32.mrb[0].mxu0
    %v3397 = vadd.f32 0.0, %v3396
    %v3398 = vpop.f32.mrb[0].mxu0
    %3399 = vmatprep.mubr.bf16.mxu0 0
    %3400 = vmatmul.mubr.bf16.gmra.mrb[0].mxu0 %v1346
    %v3401 = vpop.f32.mrb[0].mxu0
    %v3402 = vadd.f32 0.0, %v3401
    %v3403 = vpop.f32.mrb[0].mxu0
    %v3404 = vpop.f32.mrb[0].mxu0
    %v3405 = vadd.f32 0.0, %v3404
    %v3406 = vpop.f32.mrb[0].mxu0
    %3407 = vmatprep.mubr.bf16.mxu0 0
    %3408 = vmatmul.mubr.bf16.gmra.mrb[0].mxu0 %v1347
    %v3409 = vpop.f32.mrb[0].mxu0
    %v3410 = vadd.f32 0.0, %v3409
    %v3411 = vpop.f32.mrb[0].mxu0
    %v3412 = vpop.f32.mrb[0].mxu0
    %v3413 = vadd.f32 0.0, %v3412
    %v3414 = vpop.f32.mrb[0].mxu0
    %3415 = vmatprep.mubr.bf16.mxu0 0
    %3416 = vmatmul.mubr.bf16.gmra.mrb[0].mxu0 %v1348
    %v3417 = vpop.f32.mrb[0].mxu0
    %v3418 = vadd.f32 0.0, %v3417
    %v3419 = vpop.f32.mrb[0].mxu0
    %v3420 = vpop.f32.mrb[0].mxu0
    %v3421 = vadd.f32 0.0, %v3420
    %v3422 = vpop.f32.mrb[0].mxu0
    %3423 = vmatprep.mubr.bf16.mxu0 0
    %3424 = vmatmul.mubr.bf16.gmra.mrb[0].mxu0 %v1349
    %v3425 = vpop.f32.mrb[0].mxu0
    %v3426 = vadd.f32 0.0, %v3425
    %v3427 = vpop.f32.mrb[0].mxu0
    %v3428 = vpop.f32.mrb[0].mxu0
    %v3429 = vadd.f32 0.0, %v3428
    %v3430 = vpop.f32.mrb[0].mxu0
    %3431 = vmatprep.mubr.bf16.mxu0 0
    %3432 = vmatmul.mubr.bf16.gmra.mrb[0].mxu0 %v1350
    %v3433 = vpop.f32.mrb[0].mxu0
    %v3434 = vadd.f32 0.0, %v3433
    %v3435 = vpop.f32.mrb[0].mxu0
    %v3436 = vpop.f32.mrb[0].mxu0
    %v3437 = vadd.f32 0.0, %v3436
    %v3438 = vpop.f32.mrb[0].mxu0
    %3439 = vmatprep.mubr.bf16.mxu0 0
    %3440 = vmatmul.mubr.bf16.gmra.mrb[0].mxu0 %v1351
    %v3441 = vpop.f32.mrb[0].mxu0
    %v3442 = vadd.f32 0.0, %v3441
    %v3443 = vpop.f32.mrb[0].mxu0
    %v3444 = vpop.f32.mrb[0].mxu0
    %v3445 = vadd.f32 0.0, %v3444
    %v3446 = vpop.f32.mrb[0].mxu0
    %3447 = vmatprep.mubr.bf16.mxu0 0
    %3448 = vmatmul.mubr.bf16.gmra.mrb[0].mxu0 %v1352
    %v3449 = vpop.f32.mrb[0].mxu0
    %v3450 = vadd.f32 0.0, %v3449
    %v3451 = vpop.f32.mrb[0].mxu0
    %v3452 = vpop.f32.mrb[0].mxu0
    %v3453 = vadd.f32 0.0, %v3452
    %v3454 = vpop.f32.mrb[0].mxu0
    %3455 = vdwg.mxu0
    %v3456 = vadd.f32 %v3038, %v3202
    %v3457 = vadd.f32 %v3039, %v3205
    %v3458 = vadd.f32 %v3040, %v3210
    %v3459 = vadd.f32 %v3041, %v3213
    %v3460 = vadd.f32 %v3042, %v3218
    %v3461 = vadd.f32 %v3043, %v3221
    %v3462 = vadd.f32 %v3044, %v3226
    %v3463 = vadd.f32 %v3045, %v3229
    %v3464 = vadd.f32 %v3046, %v3234
    %v3465 = vadd.f32 %v3047, %v3237
    %v3466 = vadd.f32 %v3048, %v3242
    %v3467 = vadd.f32 %v3049, %v3245
    %v3468 = vadd.f32 %v3050, %v3250
    %v3469 = vadd.f32 %v3051, %v3253
    %v3470 = vadd.f32 %v3052, %v3258
    %v3471 = vadd.f32 %v3053, %v3261
    %v3472 = vadd.f32 %v3054, %v3266
    %v3473 = vadd.f32 %v3055, %v3269
    %v3474 = vadd.f32 %v3056, %v3274
    %v3475 = vadd.f32 %v3057, %v3277
    %v3476 = vadd.f32 %v3058, %v3282
    %v3477 = vadd.f32 %v3059, %v3285
    %v3478 = vadd.f32 %v3060, %v3290
    %v3479 = vadd.f32 %v3061, %v3293
    %v3480 = vadd.f32 %v3062, %v3298
    %v3481 = vadd.f32 %v3063, %v3301
    %v3482 = vadd.f32 %v3064, %v3306
    %v3483 = vadd.f32 %v3065, %v3309
    %v3484 = vadd.f32 %v3066, %v3314
    %v3485 = vadd.f32 %v3067, %v3317
    %v3486 = vadd.f32 %v3068, %v3322
    %v3487 = vadd.f32 %v3069, %v3325
    %v3488 = vadd.f32 %v3070, %v3330
    %v3489 = vadd.f32 %v3071, %v3333
    %v3490 = vadd.f32 %v3072, %v3338
    %v3491 = vadd.f32 %v3073, %v3341
    %v3492 = vadd.f32 %v3074, %v3346
    %v3493 = vadd.f32 %v3075, %v3349
    %v3494 = vadd.f32 %v3076, %v3354
    %v3495 = vadd.f32 %v3077, %v3357
    %v3496 = vadd.f32 %v3078, %v3362
    %v3497 = vadd.f32 %v3079, %v3365
    %v3498 = vadd.f32 %v3080, %v3370
    %v3499 = vadd.f32 %v3081, %v3373
    %v3500 = vadd.f32 %v3082, %v3378
    %v3501 = vadd.f32 %v3083, %v3381
    %v3502 = vadd.f32 %v3084, %v3386
    %v3503 = vadd.f32 %v3085, %v3389
    %v3504 = vadd.f32 %v3086, %v3394
    %v3505 = vadd.f32 %v3087, %v3397
    %v3506 = vadd.f32 %v3088, %v3402
    %v3507 = vadd.f32 %v3089, %v3405
    %v3508 = vadd.f32 %v3090, %v3410
    %v3509 = vadd.f32 %v3091, %v3413
    %v3510 = vadd.f32 %v3092, %v3418
    %v3511 = vadd.f32 %v3093, %v3421
    %v3512 = vadd.f32 %v3094, %v3426
    %v3513 = vadd.f32 %v3095, %v3429
    %v3514 = vadd.f32 %v3096, %v3434
    %v3515 = vadd.f32 %v3097, %v3437
    %v3516 = vadd.f32 %v3098, %v3442
    %v3517 = vadd.f32 %v3099, %v3445
    %v3518 = vadd.f32 %v3100, %v3450
    %v3519 = vadd.f32 %v3101, %v3453
    %v3521 = vshrl.u32 %v1336, 16
    %v3523 = vshll.u32 %v1336, 16
    %v3525 = vrot.slane %v3523, 1
    %v3526 = vor.u32 %v3521, %v3525
    %v3528 = vshll.u32 %v1369, 16
    %v3530 = vrot.slane %v3528, 1
    %v3531 = vsel %vm1402, %v3526, %v3530
    %v3533 = vshrl.u32 %v1352, 16
    %v3535 = vshll.u32 %v1352, 16
    %v3537 = vrot.slane %v3535, 1
    %v3538 = vor.u32 %v3533, %v3537
    %v3540 = vshll.u32 %v1385, 16
    %v3542 = vrot.slane %v3540, 1
    %v3543 = vsel %vm1402, %v3538, %v3542
    %s3546 = scalar_lea.vmem [#allocation7], 256
    %v3547 = vld [vmem:[%s3546] sm:$0xf]
    %v3548 = vld [vmem:[%s3546 + $0x4] sm:$0xf]
    %v3549 = vld [vmem:[%s3546 + $0x8] sm:$0xf]
    %v3550 = vld [vmem:[%s3546 + $0xc] sm:$0xf]
    %v3551 = vld [vmem:[%s3546 + $0x10] sm:$0xf]
    %v3552 = vld [vmem:[%s3546 + $0x14] sm:$0xf]
    %v3553 = vld [vmem:[%s3546 + $0x18] sm:$0xf]
    %v3554 = vld [vmem:[%s3546 + $0x1c] sm:$0xf]
    %v3555 = vld [vmem:[%s3546 + $0x20] sm:$0xf]
    %v3556 = vld [vmem:[%s3546 + $0x24] sm:$0xf]
    %v3557 = vld [vmem:[%s3546 + $0x28] sm:$0xf]
    %v3558 = vld [vmem:[%s3546 + $0x2c] sm:$0xf]
    %v3559 = vld [vmem:[%s3546 + $0x30] sm:$0xf]
    %v3560 = vld [vmem:[%s3546 + $0x34] sm:$0xf]
    %v3561 = vld [vmem:[%s3546 + $0x38] sm:$0xf]
    %v3562 = vld [vmem:[%s3546 + $0x3c] sm:$0xf]
    %v3579 = vunpack.c.l.b16 %v3547
    %v3580 = vunpack.c.l.b16 %v3548
    %v3581 = vunpack.c.l.b16 %v3549
    %v3582 = vunpack.c.l.b16 %v3550
    %v3583 = vunpack.c.l.b16 %v3551
    %v3584 = vunpack.c.l.b16 %v3552
    %v3585 = vunpack.c.l.b16 %v3553
    %v3586 = vunpack.c.l.b16 %v3554
    %v3587 = vunpack.c.l.b16 %v3555
    %v3588 = vunpack.c.l.b16 %v3556
    %v3589 = vunpack.c.l.b16 %v3557
    %v3590 = vunpack.c.l.b16 %v3558
    %v3591 = vunpack.c.l.b16 %v3559
    %v3592 = vunpack.c.l.b16 %v3560
    %v3593 = vunpack.c.l.b16 %v3561
    %v3594 = vunpack.c.l.b16 %v3562
    %v3595 = vpack.c.b16 %v3580, %v3579
    %v3596 = vpack.c.b16 %v3582, %v3581
    %v3597 = vpack.c.b16 %v3584, %v3583
    %v3598 = vpack.c.b16 %v3586, %v3585
    %v3599 = vpack.c.b16 %v3588, %v3587
    %v3600 = vpack.c.b16 %v3590, %v3589
    %v3601 = vpack.c.b16 %v3592, %v3591
    %v3602 = vpack.c.b16 %v3594, %v3593
    %3611 = vmatprep.subr.bf16.mxu0 0
    %3612 = vmatpush1.bf16.msra.mxu0 %v3595
    %3613 = vmatprep.subr.bf16.mxu0 0
    %3614 = vmatpush1.bf16.msra.mxu0 %v3596
    %3615 = vmatprep.subr.bf16.mxu0 0
    %3616 = vmatpush1.bf16.msra.mxu0 %v3597
    %3617 = vmatprep.subr.bf16.mxu0 0
    %3618 = vmatpush1.bf16.msra.mxu0 %v3598
    %3619 = vmatprep.subr.bf16.mxu0 0
    %3620 = vmatpush1.bf16.msra.mxu0 %v3599
    %3621 = vmatprep.subr.bf16.mxu0 0
    %3622 = vmatpush1.bf16.msra.mxu0 %v3600
    %3623 = vmatprep.subr.bf16.mxu0 0
    %3624 = vmatpush1.bf16.msra.mxu0 %v3601
    %3625 = vmatprep.subr.bf16.mxu0 0
    %3626 = vmatpush1.bf16.msra.mxu0 %v3602
    %3627 = vmatprep.subr.bf16.mxu0 0
    %3628 = vmatpush1.bf16.msra.mxu0 0
    %3629 = vmatprep.subr.bf16.mxu0 0
    %3630 = vmatpush1.bf16.msra.mxu0 0
    %3631 = vmatprep.subr.bf16.mxu0 0
    %3632 = vmatpush1.bf16.msra.mxu0 0
    %3633 = vmatprep.subr.bf16.mxu0 0
    %3634 = vmatpush1.bf16.msra.mxu0 0
    %3635 = vmatprep.subr.bf16.mxu0 0
    %3636 = vmatpush1.bf16.msra.mxu0 0
    %3637 = vmatprep.subr.bf16.mxu0 0
    %3638 = vmatpush1.bf16.msra.mxu0 0
    %3639 = vmatprep.subr.bf16.mxu0 0
    %3640 = vmatpush1.bf16.msra.mxu0 0
    %3641 = vmatprep.subr.bf16.mxu0 0
    %3642 = vmatpush1.bf16.msra.mxu0 0
    %3643 = vmatprep.mubr.bf16.mxu0 0
    %3644 = vmatmul.mubr.bf16.gmra.mrb[0].mxu0 %v1426
    %v3645 = vpop.f32.mrb[0].mxu0
    %v3646 = vadd.f32 0.0, %v3645
    %v3647 = vpop.f32.mrb[0].mxu0
    %v3648 = vpop.f32.mrb[0].mxu0
    %v3649 = vadd.f32 0.0, %v3648
    %v3650 = vpop.f32.mrb[0].mxu0
    %3651 = vmatprep.mubr.bf16.mxu0 0
    %3652 = vmatmul.mubr.bf16.gmra.mrb[0].mxu0 %v1438
    %v3653 = vpop.f32.mrb[0].mxu0
    %v3654 = vadd.f32 0.0, %v3653
    %v3655 = vpop.f32.mrb[0].mxu0
    %v3656 = vpop.f32.mrb[0].mxu0
    %v3657 = vadd.f32 0.0, %v3656
    %v3658 = vpop.f32.mrb[0].mxu0
    %3659 = vmatprep.mubr.bf16.mxu0 0
    %3660 = vmatmul.mubr.bf16.gmra.mrb[0].mxu0 %v1450
    %v3661 = vpop.f32.mrb[0].mxu0
    %v3662 = vadd.f32 0.0, %v3661
    %v3663 = vpop.f32.mrb[0].mxu0
    %v3664 = vpop.f32.mrb[0].mxu0
    %v3665 = vadd.f32 0.0, %v3664
    %v3666 = vpop.f32.mrb[0].mxu0
    %3667 = vmatprep.mubr.bf16.mxu0 0
    %3668 = vmatmul.mubr.bf16.gmra.mrb[0].mxu0 %v1462
    %v3669 = vpop.f32.mrb[0].mxu0
    %v3670 = vadd.f32 0.0, %v3669
    %v3671 = vpop.f32.mrb[0].mxu0
    %v3672 = vpop.f32.mrb[0].mxu0
    %v3673 = vadd.f32 0.0, %v3672
    %v3674 = vpop.f32.mrb[0].mxu0
    %3675 = vmatprep.mubr.bf16.mxu0 0
    %3676 = vmatmul.mubr.bf16.gmra.mrb[0].mxu0 %v1474
    %v3677 = vpop.f32.mrb[0].mxu0
    %v3678 = vadd.f32 0.0, %v3677
    %v3679 = vpop.f32.mrb[0].mxu0
    %v3680 = vpop.f32.mrb[0].mxu0
    %v3681 = vadd.f32 0.0, %v3680
    %v3682 = vpop.f32.mrb[0].mxu0
    %3683 = vmatprep.mubr.bf16.mxu0 0
    %3684 = vmatmul.mubr.bf16.gmra.mrb[0].mxu0 %v1486
    %v3685 = vpop.f32.mrb[0].mxu0
    %v3686 = vadd.f32 0.0, %v3685
    %v3687 = vpop.f32.mrb[0].mxu0
    %v3688 = vpop.f32.mrb[0].mxu0
    %v3689 = vadd.f32 0.0, %v3688
    %v3690 = vpop.f32.mrb[0].mxu0
    %3691 = vmatprep.mubr.bf16.mxu0 0
    %3692 = vmatmul.mubr.bf16.gmra.mrb[0].mxu0 %v1498
    %v3693 = vpop.f32.mrb[0].mxu0
    %v3694 = vadd.f32 0.0, %v3693
    %v3695 = vpop.f32.mrb[0].mxu0
    %v3696 = vpop.f32.mrb[0].mxu0
    %v3697 = vadd.f32 0.0, %v3696
    %v3698 = vpop.f32.mrb[0].mxu0
    %3699 = vmatprep.mubr.bf16.mxu0 0
    %3700 = vmatmul.mubr.bf16.gmra.mrb[0].mxu0 %v1510
    %v3701 = vpop.f32.mrb[0].mxu0
    %v3702 = vadd.f32 0.0, %v3701
    %v3703 = vpop.f32.mrb[0].mxu0
    %v3704 = vpop.f32.mrb[0].mxu0
    %v3705 = vadd.f32 0.0, %v3704
    %v3706 = vpop.f32.mrb[0].mxu0
    %3707 = vmatprep.mubr.bf16.mxu0 0
    %3708 = vmatmul.mubr.bf16.gmra.mrb[0].mxu0 %v1522
    %v3709 = vpop.f32.mrb[0].mxu0
    %v3710 = vadd.f32 0.0, %v3709
    %v3711 = vpop.f32.mrb[0].mxu0
    %v3712 = vpop.f32.mrb[0].mxu0
    %v3713 = vadd.f32 0.0, %v3712
    %v3714 = vpop.f32.mrb[0].mxu0
    %3715 = vmatprep.mubr.bf16.mxu0 0
    %3716 = vmatmul.mubr.bf16.gmra.mrb[0].mxu0 %v1534
    %v3717 = vpop.f32.mrb[0].mxu0
    %v3718 = vadd.f32 0.0, %v3717
    %v3719 = vpop.f32.mrb[0].mxu0
    %v3720 = vpop.f32.mrb[0].mxu0
    %v3721 = vadd.f32 0.0, %v3720
    %v3722 = vpop.f32.mrb[0].mxu0
    %3723 = vmatprep.mubr.bf16.mxu0 0
    %3724 = vmatmul.mubr.bf16.gmra.mrb[0].mxu0 %v1546
    %v3725 = vpop.f32.mrb[0].mxu0
    %v3726 = vadd.f32 0.0, %v3725
    %v3727 = vpop.f32.mrb[0].mxu0
    %v3728 = vpop.f32.mrb[0].mxu0
    %v3729 = vadd.f32 0.0, %v3728
    %v3730 = vpop.f32.mrb[0].mxu0
    %3731 = vmatprep.mubr.bf16.mxu0 0
    %3732 = vmatmul.mubr.bf16.gmra.mrb[0].mxu0 %v1558
    %v3733 = vpop.f32.mrb[0].mxu0
    %v3734 = vadd.f32 0.0, %v3733
    %v3735 = vpop.f32.mrb[0].mxu0
    %v3736 = vpop.f32.mrb[0].mxu0
    %v3737 = vadd.f32 0.0, %v3736
    %v3738 = vpop.f32.mrb[0].mxu0
    %3739 = vmatprep.mubr.bf16.mxu0 0
    %3740 = vmatmul.mubr.bf16.gmra.mrb[0].mxu0 %v1570
    %v3741 = vpop.f32.mrb[0].mxu0
    %v3742 = vadd.f32 0.0, %v3741
    %v3743 = vpop.f32.mrb[0].mxu0
    %v3744 = vpop.f32.mrb[0].mxu0
    %v3745 = vadd.f32 0.0, %v3744
    %v3746 = vpop.f32.mrb[0].mxu0
    %3747 = vmatprep.mubr.bf16.mxu0 0
    %3748 = vmatmul.mubr.bf16.gmra.mrb[0].mxu0 %v1582
    %v3749 = vpop.f32.mrb[0].mxu0
    %v3750 = vadd.f32 0.0, %v3749
    %v3751 = vpop.f32.mrb[0].mxu0
    %v3752 = vpop.f32.mrb[0].mxu0
    %v3753 = vadd.f32 0.0, %v3752
    %v3754 = vpop.f32.mrb[0].mxu0
    %3755 = vmatprep.mubr.bf16.mxu0 0
    %3756 = vmatmul.mubr.bf16.gmra.mrb[0].mxu0 %v1594
    %v3757 = vpop.f32.mrb[0].mxu0
    %v3758 = vadd.f32 0.0, %v3757
    %v3759 = vpop.f32.mrb[0].mxu0
    %v3760 = vpop.f32.mrb[0].mxu0
    %v3761 = vadd.f32 0.0, %v3760
    %v3762 = vpop.f32.mrb[0].mxu0
    %3763 = vmatprep.mubr.bf16.mxu0 0
    %3764 = vmatmul.mubr.bf16.gmra.mrb[0].mxu0 %v3531
    %v3765 = vpop.f32.mrb[0].mxu0
    %v3766 = vadd.f32 0.0, %v3765
    %v3767 = vpop.f32.mrb[0].mxu0
    %v3768 = vpop.f32.mrb[0].mxu0
    %v3769 = vadd.f32 0.0, %v3768
    %v3770 = vpop.f32.mrb[0].mxu0
    %3771 = vmatprep.mubr.bf16.mxu0 0
    %3772 = vmatmul.mubr.bf16.gmra.mrb[0].mxu0 %v1606
    %v3773 = vpop.f32.mrb[0].mxu0
    %v3774 = vadd.f32 0.0, %v3773
    %v3775 = vpop.f32.mrb[0].mxu0
    %v3776 = vpop.f32.mrb[0].mxu0
    %v3777 = vadd.f32 0.0, %v3776
    %v3778 = vpop.f32.mrb[0].mxu0
    %3779 = vmatprep.mubr.bf16.mxu0 0
    %3780 = vmatmul.mubr.bf16.gmra.mrb[0].mxu0 %v1618
    %v3781 = vpop.f32.mrb[0].mxu0
    %v3782 = vadd.f32 0.0, %v3781
    %v3783 = vpop.f32.mrb[0].mxu0
    %v3784 = vpop.f32.mrb[0].mxu0
    %v3785 = vadd.f32 0.0, %v3784
    %v3786 = vpop.f32.mrb[0].mxu0
    %3787 = vmatprep.mubr.bf16.mxu0 0
    %3788 = vmatmul.mubr.bf16.gmra.mrb[0].mxu0 %v1630
    %v3789 = vpop.f32.mrb[0].mxu0
    %v3790 = vadd.f32 0.0, %v3789
    %v3791 = vpop.f32.mrb[0].mxu0
    %v3792 = vpop.f32.mrb[0].mxu0
    %v3793 = vadd.f32 0.0, %v3792
    %v3794 = vpop.f32.mrb[0].mxu0
    %3795 = vmatprep.mubr.bf16.mxu0 0
    %3796 = vmatmul.mubr.bf16.gmra.mrb[0].mxu0 %v1642
    %v3797 = vpop.f32.mrb[0].mxu0
    %v3798 = vadd.f32 0.0, %v3797
    %v3799 = vpop.f32.mrb[0].mxu0
    %v3800 = vpop.f32.mrb[0].mxu0
    %v3801 = vadd.f32 0.0, %v3800
    %v3802 = vpop.f32.mrb[0].mxu0
    %3803 = vmatprep.mubr.bf16.mxu0 0
    %3804 = vmatmul.mubr.bf16.gmra.mrb[0].mxu0 %v1654
    %v3805 = vpop.f32.mrb[0].mxu0
    %v3806 = vadd.f32 0.0, %v3805
    %v3807 = vpop.f32.mrb[0].mxu0
    %v3808 = vpop.f32.mrb[0].mxu0
    %v3809 = vadd.f32 0.0, %v3808
    %v3810 = vpop.f32.mrb[0].mxu0
    %3811 = vmatprep.mubr.bf16.mxu0 0
    %3812 = vmatmul.mubr.bf16.gmra.mrb[0].mxu0 %v1666
    %v3813 = vpop.f32.mrb[0].mxu0
    %v3814 = vadd.f32 0.0, %v3813
    %v3815 = vpop.f32.mrb[0].mxu0
    %v3816 = vpop.f32.mrb[0].mxu0
    %v3817 = vadd.f32 0.0, %v3816
    %v3818 = vpop.f32.mrb[0].mxu0
    %3819 = vmatprep.mubr.bf16.mxu0 0
    %3820 = vmatmul.mubr.bf16.gmra.mrb[0].mxu0 %v1678
    %v3821 = vpop.f32.mrb[0].mxu0
    %v3822 = vadd.f32 0.0, %v3821
    %v3823 = vpop.f32.mrb[0].mxu0
    %v3824 = vpop.f32.mrb[0].mxu0
    %v3825 = vadd.f32 0.0, %v3824
    %v3826 = vpop.f32.mrb[0].mxu0
    %3827 = vmatprep.mubr.bf16.mxu0 0
    %3828 = vmatmul.mubr.bf16.gmra.mrb[0].mxu0 %v1690
    %v3829 = vpop.f32.mrb[0].mxu0
    %v3830 = vadd.f32 0.0, %v3829
    %v3831 = vpop.f32.mrb[0].mxu0
    %v3832 = vpop.f32.mrb[0].mxu0
    %v3833 = vadd.f32 0.0, %v3832
    %v3834 = vpop.f32.mrb[0].mxu0
    %3835 = vmatprep.mubr.bf16.mxu0 0
    %3836 = vmatmul.mubr.bf16.gmra.mrb[0].mxu0 %v1702
    %v3837 = vpop.f32.mrb[0].mxu0
    %v3838 = vadd.f32 0.0, %v3837
    %v3839 = vpop.f32.mrb[0].mxu0
    %v3840 = vpop.f32.mrb[0].mxu0
    %v3841 = vadd.f32 0.0, %v3840
    %v3842 = vpop.f32.mrb[0].mxu0
    %3843 = vmatprep.mubr.bf16.mxu0 0
    %3844 = vmatmul.mubr.bf16.gmra.mrb[0].mxu0 %v1714
    %v3845 = vpop.f32.mrb[0].mxu0
    %v3846 = vadd.f32 0.0, %v3845
    %v3847 = vpop.f32.mrb[0].mxu0
    %v3848 = vpop.f32.mrb[0].mxu0
    %v3849 = vadd.f32 0.0, %v3848
    %v3850 = vpop.f32.mrb[0].mxu0
    %3851 = vmatprep.mubr.bf16.mxu0 0
    %3852 = vmatmul.mubr.bf16.gmra.mrb[0].mxu0 %v1726
    %v3853 = vpop.f32.mrb[0].mxu0
    %v3854 = vadd.f32 0.0, %v3853
    %v3855 = vpop.f32.mrb[0].mxu0
    %v3856 = vpop.f32.mrb[0].mxu0
    %v3857 = vadd.f32 0.0, %v3856
    %v3858 = vpop.f32.mrb[0].mxu0
    %3859 = vmatprep.mubr.bf16.mxu0 0
    %3860 = vmatmul.mubr.bf16.gmra.mrb[0].mxu0 %v1738
    %v3861 = vpop.f32.mrb[0].mxu0
    %v3862 = vadd.f32 0.0, %v3861
    %v3863 = vpop.f32.mrb[0].mxu0
    %v3864 = vpop.f32.mrb[0].mxu0
    %v3865 = vadd.f32 0.0, %v3864
    %v3866 = vpop.f32.mrb[0].mxu0
    %3867 = vmatprep.mubr.bf16.mxu0 0
    %3868 = vmatmul.mubr.bf16.gmra.mrb[0].mxu0 %v1750
    %v3869 = vpop.f32.mrb[0].mxu0
    %v3870 = vadd.f32 0.0, %v3869
    %v3871 = vpop.f32.mrb[0].mxu0
    %v3872 = vpop.f32.mrb[0].mxu0
    %v3873 = vadd.f32 0.0, %v3872
    %v3874 = vpop.f32.mrb[0].mxu0
    %3875 = vmatprep.mubr.bf16.mxu0 0
    %3876 = vmatmul.mubr.bf16.gmra.mrb[0].mxu0 %v1762
    %v3877 = vpop.f32.mrb[0].mxu0
    %v3878 = vadd.f32 0.0, %v3877
    %v3879 = vpop.f32.mrb[0].mxu0
    %v3880 = vpop.f32.mrb[0].mxu0
    %v3881 = vadd.f32 0.0, %v3880
    %v3882 = vpop.f32.mrb[0].mxu0
    %3883 = vmatprep.mubr.bf16.mxu0 0
    %3884 = vmatmul.mubr.bf16.gmra.mrb[0].mxu0 %v1774
    %v3885 = vpop.f32.mrb[0].mxu0
    %v3886 = vadd.f32 0.0, %v3885
    %v3887 = vpop.f32.mrb[0].mxu0
    %v3888 = vpop.f32.mrb[0].mxu0
    %v3889 = vadd.f32 0.0, %v3888
    %v3890 = vpop.f32.mrb[0].mxu0
    %3891 = vmatprep.mubr.bf16.mxu0 0
    %3892 = vmatmul.mubr.bf16.gmra.mrb[0].mxu0 %v3543
    %v3893 = vpop.f32.mrb[0].mxu0
    %v3894 = vadd.f32 0.0, %v3893
    %v3895 = vpop.f32.mrb[0].mxu0
    %v3896 = vpop.f32.mrb[0].mxu0
    %v3897 = vadd.f32 0.0, %v3896
    %v3898 = vpop.f32.mrb[0].mxu0
    %3899 = vdwg.mxu0
    %v3900 = vadd.f32 %v3456, %v3646
    %v3901 = vadd.f32 %v3457, %v3649
    %v3902 = vadd.f32 %v3458, %v3654
    %v3903 = vadd.f32 %v3459, %v3657
    %v3904 = vadd.f32 %v3460, %v3662
    %v3905 = vadd.f32 %v3461, %v3665
    %v3906 = vadd.f32 %v3462, %v3670
    %v3907 = vadd.f32 %v3463, %v3673
    %v3908 = vadd.f32 %v3464, %v3678
    %v3909 = vadd.f32 %v3465, %v3681
    %v3910 = vadd.f32 %v3466, %v3686
    %v3911 = vadd.f32 %v3467, %v3689
    %v3912 = vadd.f32 %v3468, %v3694
    %v3913 = vadd.f32 %v3469, %v3697
    %v3914 = vadd.f32 %v3470, %v3702
    %v3915 = vadd.f32 %v3471, %v3705
    %v3916 = vadd.f32 %v3472, %v3710
    %v3917 = vadd.f32 %v3473, %v3713
    %v3918 = vadd.f32 %v3474, %v3718
    %v3919 = vadd.f32 %v3475, %v3721
    %v3920 = vadd.f32 %v3476, %v3726
    %v3921 = vadd.f32 %v3477, %v3729
    %v3922 = vadd.f32 %v3478, %v3734
    %v3923 = vadd.f32 %v3479, %v3737
    %v3924 = vadd.f32 %v3480, %v3742
    %v3925 = vadd.f32 %v3481, %v3745
    %v3926 = vadd.f32 %v3482, %v3750
    %v3927 = vadd.f32 %v3483, %v3753
    %v3928 = vadd.f32 %v3484, %v3758
    %v3929 = vadd.f32 %v3485, %v3761
    %v3930 = vadd.f32 %v3486, %v3766
    %v3931 = vadd.f32 %v3487, %v3769
    %v3932 = vadd.f32 %v3488, %v3774
    %v3933 = vadd.f32 %v3489, %v3777
    %v3934 = vadd.f32 %v3490, %v3782
    %v3935 = vadd.f32 %v3491, %v3785
    %v3936 = vadd.f32 %v3492, %v3790
    %v3937 = vadd.f32 %v3493, %v3793
    %v3938 = vadd.f32 %v3494, %v3798
    %v3939 = vadd.f32 %v3495, %v3801
    %v3940 = vadd.f32 %v3496, %v3806
    %v3941 = vadd.f32 %v3497, %v3809
    %v3942 = vadd.f32 %v3498, %v3814
    %v3943 = vadd.f32 %v3499, %v3817
    %v3944 = vadd.f32 %v3500, %v3822
    %v3945 = vadd.f32 %v3501, %v3825
    %v3946 = vadd.f32 %v3502, %v3830
    %v3947 = vadd.f32 %v3503, %v3833
    %v3948 = vadd.f32 %v3504, %v3838
    %v3949 = vadd.f32 %v3505, %v3841
    %v3950 = vadd.f32 %v3506, %v3846
    %v3951 = vadd.f32 %v3507, %v3849
    %v3952 = vadd.f32 %v3508, %v3854
    %v3953 = vadd.f32 %v3509, %v3857
    %v3954 = vadd.f32 %v3510, %v3862
    %v3955 = vadd.f32 %v3511, %v3865
    %v3956 = vadd.f32 %v3512, %v3870
    %v3957 = vadd.f32 %v3513, %v3873
    %v3958 = vadd.f32 %v3514, %v3878
    %v3959 = vadd.f32 %v3515, %v3881
    %v3960 = vadd.f32 %v3516, %v3886
    %v3961 = vadd.f32 %v3517, %v3889
    %v3962 = vadd.f32 %v3518, %v3894
    %v3963 = vadd.f32 %v3519, %v3897
    %v3968 = vrot.slane %v1336, 1
    %v3969 = vrot.slane %v1369, 1
    %v3970 = vsel %vm2559, %v3968, %v3969
    %v3971 = vrot.slane %v1352, 1
    %v3972 = vrot.slane %v1385, 1
    %v3973 = vsel %vm2559, %v3971, %v3972
    %s3976 = scalar_lea.vmem [#allocation7], 320
    %v3977 = vld [vmem:[%s3976] sm:$0xf]
    %v3978 = vld [vmem:[%s3976 + $0x4] sm:$0xf]
    %v3979 = vld [vmem:[%s3976 + $0x8] sm:$0xf]
    %v3980 = vld [vmem:[%s3976 + $0xc] sm:$0xf]
    %v3981 = vld [vmem:[%s3976 + $0x10] sm:$0xf]
    %v3982 = vld [vmem:[%s3976 + $0x14] sm:$0xf]
    %v3983 = vld [vmem:[%s3976 + $0x18] sm:$0xf]
    %v3984 = vld [vmem:[%s3976 + $0x1c] sm:$0xf]
    %v3985 = vld [vmem:[%s3976 + $0x20] sm:$0xf]
    %v3986 = vld [vmem:[%s3976 + $0x24] sm:$0xf]
    %v3987 = vld [vmem:[%s3976 + $0x28] sm:$0xf]
    %v3988 = vld [vmem:[%s3976 + $0x2c] sm:$0xf]
    %v3989 = vld [vmem:[%s3976 + $0x30] sm:$0xf]
    %v3990 = vld [vmem:[%s3976 + $0x34] sm:$0xf]
    %v3991 = vld [vmem:[%s3976 + $0x38] sm:$0xf]
    %v3992 = vld [vmem:[%s3976 + $0x3c] sm:$0xf]
    %v4009 = vunpack.c.l.b16 %v3977
    %v4010 = vunpack.c.l.b16 %v3978
    %v4011 = vunpack.c.l.b16 %v3979
    %v4012 = vunpack.c.l.b16 %v3980
    %v4013 = vunpack.c.l.b16 %v3981
    %v4014 = vunpack.c.l.b16 %v3982
    %v4015 = vunpack.c.l.b16 %v3983
    %v4016 = vunpack.c.l.b16 %v3984
    %v4017 = vunpack.c.l.b16 %v3985
    %v4018 = vunpack.c.l.b16 %v3986
    %v4019 = vunpack.c.l.b16 %v3987
    %v4020 = vunpack.c.l.b16 %v3988
    %v4021 = vunpack.c.l.b16 %v3989
    %v4022 = vunpack.c.l.b16 %v3990
    %v4023 = vunpack.c.l.b16 %v3991
    %v4024 = vunpack.c.l.b16 %v3992
    %v4025 = vpack.c.b16 %v4010, %v4009
    %v4026 = vpack.c.b16 %v4012, %v4011
    %v4027 = vpack.c.b16 %v4014, %v4013
    %v4028 = vpack.c.b16 %v4016, %v4015
    %v4029 = vpack.c.b16 %v4018, %v4017
    %v4030 = vpack.c.b16 %v4020, %v4019
    %v4031 = vpack.c.b16 %v4022, %v4021
    %v4032 = vpack.c.b16 %v4024, %v4023
    %4041 = vmatprep.subr.bf16.mxu0 0
    %4042 = vmatpush1.bf16.msra.mxu0 %v4025
    %4043 = vmatprep.subr.bf16.mxu0 0
    %4044 = vmatpush1.bf16.msra.mxu0 %v4026
    %4045 = vmatprep.subr.bf16.mxu0 0
    %4046 = vmatpush1.bf16.msra.mxu0 %v4027
    %4047 = vmatprep.subr.bf16.mxu0 0
    %4048 = vmatpush1.bf16.msra.mxu0 %v4028
    %4049 = vmatprep.subr.bf16.mxu0 0
    %4050 = vmatpush1.bf16.msra.mxu0 %v4029
    %4051 = vmatprep.subr.bf16.mxu0 0
    %4052 = vmatpush1.bf16.msra.mxu0 %v4030
    %4053 = vmatprep.subr.bf16.mxu0 0
    %4054 = vmatpush1.bf16.msra.mxu0 %v4031
    %4055 = vmatprep.subr.bf16.mxu0 0
    %4056 = vmatpush1.bf16.msra.mxu0 %v4032
    %4057 = vmatprep.subr.bf16.mxu0 0
    %4058 = vmatpush1.bf16.msra.mxu0 0
    %4059 = vmatprep.subr.bf16.mxu0 0
    %4060 = vmatpush1.bf16.msra.mxu0 0
    %4061 = vmatprep.subr.bf16.mxu0 0
    %4062 = vmatpush1.bf16.msra.mxu0 0
    %4063 = vmatprep.subr.bf16.mxu0 0
    %4064 = vmatpush1.bf16.msra.mxu0 0
    %4065 = vmatprep.subr.bf16.mxu0 0
    %4066 = vmatpush1.bf16.msra.mxu0 0
    %4067 = vmatprep.subr.bf16.mxu0 0
    %4068 = vmatpush1.bf16.msra.mxu0 0
    %4069 = vmatprep.subr.bf16.mxu0 0
    %4070 = vmatpush1.bf16.msra.mxu0 0
    %4071 = vmatprep.subr.bf16.mxu0 0
    %4072 = vmatpush1.bf16.msra.mxu0 0
    %4073 = vmatprep.mubr.bf16.mxu0 0
    %4074 = vmatmul.mubr.bf16.gmra.mrb[0].mxu0 %v2565
    %v4075 = vpop.f32.mrb[0].mxu0
    %v4076 = vadd.f32 0.0, %v4075
    %v4077 = vpop.f32.mrb[0].mxu0
    %v4078 = vpop.f32.mrb[0].mxu0
    %v4079 = vadd.f32 0.0, %v4078
    %v4080 = vpop.f32.mrb[0].mxu0
    %4081 = vmatprep.mubr.bf16.mxu0 0
    %4082 = vmatmul.mubr.bf16.gmra.mrb[0].mxu0 %v2568
    %v4083 = vpop.f32.mrb[0].mxu0
    %v4084 = vadd.f32 0.0, %v4083
    %v4085 = vpop.f32.mrb[0].mxu0
    %v4086 = vpop.f32.mrb[0].mxu0
    %v4087 = vadd.f32 0.0, %v4086
    %v4088 = vpop.f32.mrb[0].mxu0
    %4089 = vmatprep.mubr.bf16.mxu0 0
    %4090 = vmatmul.mubr.bf16.gmra.mrb[0].mxu0 %v2571
    %v4091 = vpop.f32.mrb[0].mxu0
    %v4092 = vadd.f32 0.0, %v4091
    %v4093 = vpop.f32.mrb[0].mxu0
    %v4094 = vpop.f32.mrb[0].mxu0
    %v4095 = vadd.f32 0.0, %v4094
    %v4096 = vpop.f32.mrb[0].mxu0
    %4097 = vmatprep.mubr.bf16.mxu0 0
    %4098 = vmatmul.mubr.bf16.gmra.mrb[0].mxu0 %v2574
    %v4099 = vpop.f32.mrb[0].mxu0
    %v4100 = vadd.f32 0.0, %v4099
    %v4101 = vpop.f32.mrb[0].mxu0
    %v4102 = vpop.f32.mrb[0].mxu0
    %v4103 = vadd.f32 0.0, %v4102
    %v4104 = vpop.f32.mrb[0].mxu0
    %4105 = vmatprep.mubr.bf16.mxu0 0
    %4106 = vmatmul.mubr.bf16.gmra.mrb[0].mxu0 %v2577
    %v4107 = vpop.f32.mrb[0].mxu0
    %v4108 = vadd.f32 0.0, %v4107
    %v4109 = vpop.f32.mrb[0].mxu0
    %v4110 = vpop.f32.mrb[0].mxu0
    %v4111 = vadd.f32 0.0, %v4110
    %v4112 = vpop.f32.mrb[0].mxu0
    %4113 = vmatprep.mubr.bf16.mxu0 0
    %4114 = vmatmul.mubr.bf16.gmra.mrb[0].mxu0 %v2580
    %v4115 = vpop.f32.mrb[0].mxu0
    %v4116 = vadd.f32 0.0, %v4115
    %v4117 = vpop.f32.mrb[0].mxu0
    %v4118 = vpop.f32.mrb[0].mxu0
    %v4119 = vadd.f32 0.0, %v4118
    %v4120 = vpop.f32.mrb[0].mxu0
    %4121 = vmatprep.mubr.bf16.mxu0 0
    %4122 = vmatmul.mubr.bf16.gmra.mrb[0].mxu0 %v2583
    %v4123 = vpop.f32.mrb[0].mxu0
    %v4124 = vadd.f32 0.0, %v4123
    %v4125 = vpop.f32.mrb[0].mxu0
    %v4126 = vpop.f32.mrb[0].mxu0
    %v4127 = vadd.f32 0.0, %v4126
    %v4128 = vpop.f32.mrb[0].mxu0
    %4129 = vmatprep.mubr.bf16.mxu0 0
    %4130 = vmatmul.mubr.bf16.gmra.mrb[0].mxu0 %v2586
    %v4131 = vpop.f32.mrb[0].mxu0
    %v4132 = vadd.f32 0.0, %v4131
    %v4133 = vpop.f32.mrb[0].mxu0
    %v4134 = vpop.f32.mrb[0].mxu0
    %v4135 = vadd.f32 0.0, %v4134
    %v4136 = vpop.f32.mrb[0].mxu0
    %4137 = vmatprep.mubr.bf16.mxu0 0
    %4138 = vmatmul.mubr.bf16.gmra.mrb[0].mxu0 %v2589
    %v4139 = vpop.f32.mrb[0].mxu0
    %v4140 = vadd.f32 0.0, %v4139
    %v4141 = vpop.f32.mrb[0].mxu0
    %v4142 = vpop.f32.mrb[0].mxu0
    %v4143 = vadd.f32 0.0, %v4142
    %v4144 = vpop.f32.mrb[0].mxu0
    %4145 = vmatprep.mubr.bf16.mxu0 0
    %4146 = vmatmul.mubr.bf16.gmra.mrb[0].mxu0 %v2592
    %v4147 = vpop.f32.mrb[0].mxu0
    %v4148 = vadd.f32 0.0, %v4147
    %v4149 = vpop.f32.mrb[0].mxu0
    %v4150 = vpop.f32.mrb[0].mxu0
    %v4151 = vadd.f32 0.0, %v4150
    %v4152 = vpop.f32.mrb[0].mxu0
    %4153 = vmatprep.mubr.bf16.mxu0 0
    %4154 = vmatmul.mubr.bf16.gmra.mrb[0].mxu0 %v2595
    %v4155 = vpop.f32.mrb[0].mxu0
    %v4156 = vadd.f32 0.0, %v4155
    %v4157 = vpop.f32.mrb[0].mxu0
    %v4158 = vpop.f32.mrb[0].mxu0
    %v4159 = vadd.f32 0.0, %v4158
    %v4160 = vpop.f32.mrb[0].mxu0
    %4161 = vmatprep.mubr.bf16.mxu0 0
    %4162 = vmatmul.mubr.bf16.gmra.mrb[0].mxu0 %v2598
    %v4163 = vpop.f32.mrb[0].mxu0
    %v4164 = vadd.f32 0.0, %v4163
    %v4165 = vpop.f32.mrb[0].mxu0
    %v4166 = vpop.f32.mrb[0].mxu0
    %v4167 = vadd.f32 0.0, %v4166
    %v4168 = vpop.f32.mrb[0].mxu0
    %4169 = vmatprep.mubr.bf16.mxu0 0
    %4170 = vmatmul.mubr.bf16.gmra.mrb[0].mxu0 %v2601
    %v4171 = vpop.f32.mrb[0].mxu0
    %v4172 = vadd.f32 0.0, %v4171
    %v4173 = vpop.f32.mrb[0].mxu0
    %v4174 = vpop.f32.mrb[0].mxu0
    %v4175 = vadd.f32 0.0, %v4174
    %v4176 = vpop.f32.mrb[0].mxu0
    %4177 = vmatprep.mubr.bf16.mxu0 0
    %4178 = vmatmul.mubr.bf16.gmra.mrb[0].mxu0 %v2604
    %v4179 = vpop.f32.mrb[0].mxu0
    %v4180 = vadd.f32 0.0, %v4179
    %v4181 = vpop.f32.mrb[0].mxu0
    %v4182 = vpop.f32.mrb[0].mxu0
    %v4183 = vadd.f32 0.0, %v4182
    %v4184 = vpop.f32.mrb[0].mxu0
    %4185 = vmatprep.mubr.bf16.mxu0 0
    %4186 = vmatmul.mubr.bf16.gmra.mrb[0].mxu0 %v2607
    %v4187 = vpop.f32.mrb[0].mxu0
    %v4188 = vadd.f32 0.0, %v4187
    %v4189 = vpop.f32.mrb[0].mxu0
    %v4190 = vpop.f32.mrb[0].mxu0
    %v4191 = vadd.f32 0.0, %v4190
    %v4192 = vpop.f32.mrb[0].mxu0
    %4193 = vmatprep.mubr.bf16.mxu0 0
    %4194 = vmatmul.mubr.bf16.gmra.mrb[0].mxu0 %v3970
    %v4195 = vpop.f32.mrb[0].mxu0
    %v4196 = vadd.f32 0.0, %v4195
    %v4197 = vpop.f32.mrb[0].mxu0
    %v4198 = vpop.f32.mrb[0].mxu0
    %v4199 = vadd.f32 0.0, %v4198
    %v4200 = vpop.f32.mrb[0].mxu0
    %4201 = vmatprep.mubr.bf16.mxu0 0
    %4202 = vmatmul.mubr.bf16.gmra.mrb[0].mxu0 %v2610
    %v4203 = vpop.f32.mrb[0].mxu0
    %v4204 = vadd.f32 0.0, %v4203
    %v4205 = vpop.f32.mrb[0].mxu0
    %v4206 = vpop.f32.mrb[0].mxu0
    %v4207 = vadd.f32 0.0, %v4206
    %v4208 = vpop.f32.mrb[0].mxu0
    %4209 = vmatprep.mubr.bf16.mxu0 0
    %4210 = vmatmul.mubr.bf16.gmra.mrb[0].mxu0 %v2613
    %v4211 = vpop.f32.mrb[0].mxu0
    %v4212 = vadd.f32 0.0, %v4211
    %v4213 = vpop.f32.mrb[0].mxu0
    %v4214 = vpop.f32.mrb[0].mxu0
    %v4215 = vadd.f32 0.0, %v4214
    %v4216 = vpop.f32.mrb[0].mxu0
    %4217 = vmatprep.mubr.bf16.mxu0 0
    %4218 = vmatmul.mubr.bf16.gmra.mrb[0].mxu0 %v2616
    %v4219 = vpop.f32.mrb[0].mxu0
    %v4220 = vadd.f32 0.0, %v4219
    %v4221 = vpop.f32.mrb[0].mxu0
    %v4222 = vpop.f32.mrb[0].mxu0
    %v4223 = vadd.f32 0.0, %v4222
    %v4224 = vpop.f32.mrb[0].mxu0
    %4225 = vmatprep.mubr.bf16.mxu0 0
    %4226 = vmatmul.mubr.bf16.gmra.mrb[0].mxu0 %v2619
    %v4227 = vpop.f32.mrb[0].mxu0
    %v4228 = vadd.f32 0.0, %v4227
    %v4229 = vpop.f32.mrb[0].mxu0
    %v4230 = vpop.f32.mrb[0].mxu0
    %v4231 = vadd.f32 0.0, %v4230
    %v4232 = vpop.f32.mrb[0].mxu0
    %4233 = vmatprep.mubr.bf16.mxu0 0
    %4234 = vmatmul.mubr.bf16.gmra.mrb[0].mxu0 %v2622
    %v4235 = vpop.f32.mrb[0].mxu0
    %v4236 = vadd.f32 0.0, %v4235
    %v4237 = vpop.f32.mrb[0].mxu0
    %v4238 = vpop.f32.mrb[0].mxu0
    %v4239 = vadd.f32 0.0, %v4238
    %v4240 = vpop.f32.mrb[0].mxu0
    %4241 = vmatprep.mubr.bf16.mxu0 0
    %4242 = vmatmul.mubr.bf16.gmra.mrb[0].mxu0 %v2625
    %v4243 = vpop.f32.mrb[0].mxu0
    %v4244 = vadd.f32 0.0, %v4243
    %v4245 = vpop.f32.mrb[0].mxu0
    %v4246 = vpop.f32.mrb[0].mxu0
    %v4247 = vadd.f32 0.0, %v4246
    %v4248 = vpop.f32.mrb[0].mxu0
    %4249 = vmatprep.mubr.bf16.mxu0 0
    %4250 = vmatmul.mubr.bf16.gmra.mrb[0].mxu0 %v2628
    %v4251 = vpop.f32.mrb[0].mxu0
    %v4252 = vadd.f32 0.0, %v4251
    %v4253 = vpop.f32.mrb[0].mxu0
    %v4254 = vpop.f32.mrb[0].mxu0
    %v4255 = vadd.f32 0.0, %v4254
    %v4256 = vpop.f32.mrb[0].mxu0
    %4257 = vmatprep.mubr.bf16.mxu0 0
    %4258 = vmatmul.mubr.bf16.gmra.mrb[0].mxu0 %v2631
    %v4259 = vpop.f32.mrb[0].mxu0
    %v4260 = vadd.f32 0.0, %v4259
    %v4261 = vpop.f32.mrb[0].mxu0
    %v4262 = vpop.f32.mrb[0].mxu0
    %v4263 = vadd.f32 0.0, %v4262
    %v4264 = vpop.f32.mrb[0].mxu0
    %4265 = vmatprep.mubr.bf16.mxu0 0
    %4266 = vmatmul.mubr.bf16.gmra.mrb[0].mxu0 %v2634
    %v4267 = vpop.f32.mrb[0].mxu0
    %v4268 = vadd.f32 0.0, %v4267
    %v4269 = vpop.f32.mrb[0].mxu0
    %v4270 = vpop.f32.mrb[0].mxu0
    %v4271 = vadd.f32 0.0, %v4270
    %v4272 = vpop.f32.mrb[0].mxu0
    %4273 = vmatprep.mubr.bf16.mxu0 0
    %4274 = vmatmul.mubr.bf16.gmra.mrb[0].mxu0 %v2637
    %v4275 = vpop.f32.mrb[0].mxu0
    %v4276 = vadd.f32 0.0, %v4275
    %v4277 = vpop.f32.mrb[0].mxu0
    %v4278 = vpop.f32.mrb[0].mxu0
    %v4279 = vadd.f32 0.0, %v4278
    %v4280 = vpop.f32.mrb[0].mxu0
    %4281 = vmatprep.mubr.bf16.mxu0 0
    %4282 = vmatmul.mubr.bf16.gmra.mrb[0].mxu0 %v2640
    %v4283 = vpop.f32.mrb[0].mxu0
    %v4284 = vadd.f32 0.0, %v4283
    %v4285 = vpop.f32.mrb[0].mxu0
    %v4286 = vpop.f32.mrb[0].mxu0
    %v4287 = vadd.f32 0.0, %v4286
    %v4288 = vpop.f32.mrb[0].mxu0
    %4289 = vmatprep.mubr.bf16.mxu0 0
    %4290 = vmatmul.mubr.bf16.gmra.mrb[0].mxu0 %v2643
    %v4291 = vpop.f32.mrb[0].mxu0
    %v4292 = vadd.f32 0.0, %v4291
    %v4293 = vpop.f32.mrb[0].mxu0
    %v4294 = vpop.f32.mrb[0].mxu0
    %v4295 = vadd.f32 0.0, %v4294
    %v4296 = vpop.f32.mrb[0].mxu0
    %4297 = vmatprep.mubr.bf16.mxu0 0
    %4298 = vmatmul.mubr.bf16.gmra.mrb[0].mxu0 %v2646
    %v4299 = vpop.f32.mrb[0].mxu0
    %v4300 = vadd.f32 0.0, %v4299
    %v4301 = vpop.f32.mrb[0].mxu0
    %v4302 = vpop.f32.mrb[0].mxu0
    %v4303 = vadd.f32 0.0, %v4302
    %v4304 = vpop.f32.mrb[0].mxu0
    %4305 = vmatprep.mubr.bf16.mxu0 0
    %4306 = vmatmul.mubr.bf16.gmra.mrb[0].mxu0 %v2649
    %v4307 = vpop.f32.mrb[0].mxu0
    %v4308 = vadd.f32 0.0, %v4307
    %v4309 = vpop.f32.mrb[0].mxu0
    %v4310 = vpop.f32.mrb[0].mxu0
    %v4311 = vadd.f32 0.0, %v4310
    %v4312 = vpop.f32.mrb[0].mxu0
    %4313 = vmatprep.mubr.bf16.mxu0 0
    %4314 = vmatmul.mubr.bf16.gmra.mrb[0].mxu0 %v2652
    %v4315 = vpop.f32.mrb[0].mxu0
    %v4316 = vadd.f32 0.0, %v4315
    %v4317 = vpop.f32.mrb[0].mxu0
    %v4318 = vpop.f32.mrb[0].mxu0
    %v4319 = vadd.f32 0.0, %v4318
    %v4320 = vpop.f32.mrb[0].mxu0
    %4321 = vmatprep.mubr.bf16.mxu0 0
    %4322 = vmatmul.mubr.bf16.gmra.mrb[0].mxu0 %v3973
    %v4323 = vpop.f32.mrb[0].mxu0
    %v4324 = vadd.f32 0.0, %v4323
    %v4325 = vpop.f32.mrb[0].mxu0
    %v4326 = vpop.f32.mrb[0].mxu0
    %v4327 = vadd.f32 0.0, %v4326
    %v4328 = vpop.f32.mrb[0].mxu0
    %4329 = vdwg.mxu0
    %v4330 = vadd.f32 %v3900, %v4076
    %v4331 = vadd.f32 %v3901, %v4079
    %v4332 = vadd.f32 %v3902, %v4084
    %v4333 = vadd.f32 %v3903, %v4087
    %v4334 = vadd.f32 %v3904, %v4092
    %v4335 = vadd.f32 %v3905, %v4095
    %v4336 = vadd.f32 %v3906, %v4100
    %v4337 = vadd.f32 %v3907, %v4103
    %v4338 = vadd.f32 %v3908, %v4108
    %v4339 = vadd.f32 %v3909, %v4111
    %v4340 = vadd.f32 %v3910, %v4116
    %v4341 = vadd.f32 %v3911, %v4119
    %v4342 = vadd.f32 %v3912, %v4124
    %v4343 = vadd.f32 %v3913, %v4127
    %v4344 = vadd.f32 %v3914, %v4132
    %v4345 = vadd.f32 %v3915, %v4135
    %v4346 = vadd.f32 %v3916, %v4140
    %v4347 = vadd.f32 %v3917, %v4143
    %v4348 = vadd.f32 %v3918, %v4148
    %v4349 = vadd.f32 %v3919, %v4151
    %v4350 = vadd.f32 %v3920, %v4156
    %v4351 = vadd.f32 %v3921, %v4159
    %v4352 = vadd.f32 %v3922, %v4164
    %v4353 = vadd.f32 %v3923, %v4167
    %v4354 = vadd.f32 %v3924, %v4172
    %v4355 = vadd.f32 %v3925, %v4175
    %v4356 = vadd.f32 %v3926, %v4180
    %v4357 = vadd.f32 %v3927, %v4183
    %v4358 = vadd.f32 %v3928, %v4188
    %v4359 = vadd.f32 %v3929, %v4191
    %v4360 = vadd.f32 %v3930, %v4196
    %v4361 = vadd.f32 %v3931, %v4199
    %v4362 = vadd.f32 %v3932, %v4204
    %v4363 = vadd.f32 %v3933, %v4207
    %v4364 = vadd.f32 %v3934, %v4212
    %v4365 = vadd.f32 %v3935, %v4215
    %v4366 = vadd.f32 %v3936, %v4220
    %v4367 = vadd.f32 %v3937, %v4223
    %v4368 = vadd.f32 %v3938, %v4228
    %v4369 = vadd.f32 %v3939, %v4231
    %v4370 = vadd.f32 %v3940, %v4236
    %v4371 = vadd.f32 %v3941, %v4239
    %v4372 = vadd.f32 %v3942, %v4244
    %v4373 = vadd.f32 %v3943, %v4247
    %v4374 = vadd.f32 %v3944, %v4252
    %v4375 = vadd.f32 %v3945, %v4255
    %v4376 = vadd.f32 %v3946, %v4260
    %v4377 = vadd.f32 %v3947, %v4263
    %v4378 = vadd.f32 %v3948, %v4268
    %v4379 = vadd.f32 %v3949, %v4271
    %v4380 = vadd.f32 %v3950, %v4276
    %v4381 = vadd.f32 %v3951, %v4279
    %v4382 = vadd.f32 %v3952, %v4284
    %v4383 = vadd.f32 %v3953, %v4287
    %v4384 = vadd.f32 %v3954, %v4292
    %v4385 = vadd.f32 %v3955, %v4295
    %v4386 = vadd.f32 %v3956, %v4300
    %v4387 = vadd.f32 %v3957, %v4303
    %v4388 = vadd.f32 %v3958, %v4308
    %v4389 = vadd.f32 %v3959, %v4311
    %v4390 = vadd.f32 %v3960, %v4316
    %v4391 = vadd.f32 %v3961, %v4319
    %v4392 = vadd.f32 %v3962, %v4324
    %v4393 = vadd.f32 %v3963, %v4327
    %s4394 = scalar_lea.vmem [#allocation7], 384
    %v4395 = vld [vmem:[%s4394] sm:$0xf]
    %v4396 = vld [vmem:[%s4394 + $0x4] sm:$0xf]
    %v4397 = vld [vmem:[%s4394 + $0x8] sm:$0xf]
    %v4398 = vld [vmem:[%s4394 + $0xc] sm:$0xf]
    %v4399 = vld [vmem:[%s4394 + $0x10] sm:$0xf]
    %v4400 = vld [vmem:[%s4394 + $0x14] sm:$0xf]
    %v4401 = vld [vmem:[%s4394 + $0x18] sm:$0xf]
    %v4402 = vld [vmem:[%s4394 + $0x1c] sm:$0xf]
    %v4403 = vld [vmem:[%s4394 + $0x20] sm:$0xf]
    %v4404 = vld [vmem:[%s4394 + $0x24] sm:$0xf]
    %v4405 = vld [vmem:[%s4394 + $0x28] sm:$0xf]
    %v4406 = vld [vmem:[%s4394 + $0x2c] sm:$0xf]
    %v4407 = vld [vmem:[%s4394 + $0x30] sm:$0xf]
    %v4408 = vld [vmem:[%s4394 + $0x34] sm:$0xf]
    %v4409 = vld [vmem:[%s4394 + $0x38] sm:$0xf]
    %v4410 = vld [vmem:[%s4394 + $0x3c] sm:$0xf]
    %v4427 = vunpack.c.l.b16 %v4395
    %v4428 = vunpack.c.l.b16 %v4396
    %v4429 = vunpack.c.l.b16 %v4397
    %v4430 = vunpack.c.l.b16 %v4398
    %v4431 = vunpack.c.l.b16 %v4399
    %v4432 = vunpack.c.l.b16 %v4400
    %v4433 = vunpack.c.l.b16 %v4401
    %v4434 = vunpack.c.l.b16 %v4402
    %v4435 = vunpack.c.l.b16 %v4403
    %v4436 = vunpack.c.l.b16 %v4404
    %v4437 = vunpack.c.l.b16 %v4405
    %v4438 = vunpack.c.l.b16 %v4406
    %v4439 = vunpack.c.l.b16 %v4407
    %v4440 = vunpack.c.l.b16 %v4408
    %v4441 = vunpack.c.l.b16 %v4409
    %v4442 = vunpack.c.l.b16 %v4410
    %v4443 = vpack.c.b16 %v4428, %v4427
    %v4444 = vpack.c.b16 %v4430, %v4429
    %v4445 = vpack.c.b16 %v4432, %v4431
    %v4446 = vpack.c.b16 %v4434, %v4433
    %v4447 = vpack.c.b16 %v4436, %v4435
    %v4448 = vpack.c.b16 %v4438, %v4437
    %v4449 = vpack.c.b16 %v4440, %v4439
    %v4450 = vpack.c.b16 %v4442, %v4441
    %4459 = vmatprep.subr.bf16.mxu0 0
    %4460 = vmatpush1.bf16.msra.mxu0 %v4443
    %4461 = vmatprep.subr.bf16.mxu0 0
    %4462 = vmatpush1.bf16.msra.mxu0 %v4444
    %4463 = vmatprep.subr.bf16.mxu0 0
    %4464 = vmatpush1.bf16.msra.mxu0 %v4445
    %4465 = vmatprep.subr.bf16.mxu0 0
    %4466 = vmatpush1.bf16.msra.mxu0 %v4446
    %4467 = vmatprep.subr.bf16.mxu0 0
    %4468 = vmatpush1.bf16.msra.mxu0 %v4447
    %4469 = vmatprep.subr.bf16.mxu0 0
    %4470 = vmatpush1.bf16.msra.mxu0 %v4448
    %4471 = vmatprep.subr.bf16.mxu0 0
    %4472 = vmatpush1.bf16.msra.mxu0 %v4449
    %4473 = vmatprep.subr.bf16.mxu0 0
    %4474 = vmatpush1.bf16.msra.mxu0 %v4450
    %4475 = vmatprep.subr.bf16.mxu0 0
    %4476 = vmatpush1.bf16.msra.mxu0 0
    %4477 = vmatprep.subr.bf16.mxu0 0
    %4478 = vmatpush1.bf16.msra.mxu0 0
    %4479 = vmatprep.subr.bf16.mxu0 0
    %4480 = vmatpush1.bf16.msra.mxu0 0
    %4481 = vmatprep.subr.bf16.mxu0 0
    %4482 = vmatpush1.bf16.msra.mxu0 0
    %4483 = vmatprep.subr.bf16.mxu0 0
    %4484 = vmatpush1.bf16.msra.mxu0 0
    %4485 = vmatprep.subr.bf16.mxu0 0
    %4486 = vmatpush1.bf16.msra.mxu0 0
    %4487 = vmatprep.subr.bf16.mxu0 0
    %4488 = vmatpush1.bf16.msra.mxu0 0
    %4489 = vmatprep.subr.bf16.mxu0 0
    %4490 = vmatpush1.bf16.msra.mxu0 0
    %4491 = vmatprep.mubr.bf16.mxu0 0
    %4492 = vmatmul.mubr.bf16.gmra.mrb[0].mxu0 %v1322
    %v4493 = vpop.f32.mrb[0].mxu0
    %v4494 = vadd.f32 0.0, %v4493
    %v4495 = vpop.f32.mrb[0].mxu0
    %v4496 = vpop.f32.mrb[0].mxu0
    %v4497 = vadd.f32 0.0, %v4496
    %v4498 = vpop.f32.mrb[0].mxu0
    %4499 = vmatprep.mubr.bf16.mxu0 0
    %4500 = vmatmul.mubr.bf16.gmra.mrb[0].mxu0 %v1323
    %v4501 = vpop.f32.mrb[0].mxu0
    %v4502 = vadd.f32 0.0, %v4501
    %v4503 = vpop.f32.mrb[0].mxu0
    %v4504 = vpop.f32.mrb[0].mxu0
    %v4505 = vadd.f32 0.0, %v4504
    %v4506 = vpop.f32.mrb[0].mxu0
    %4507 = vmatprep.mubr.bf16.mxu0 0
    %4508 = vmatmul.mubr.bf16.gmra.mrb[0].mxu0 %v1324
    %v4509 = vpop.f32.mrb[0].mxu0
    %v4510 = vadd.f32 0.0, %v4509
    %v4511 = vpop.f32.mrb[0].mxu0
    %v4512 = vpop.f32.mrb[0].mxu0
    %v4513 = vadd.f32 0.0, %v4512
    %v4514 = vpop.f32.mrb[0].mxu0
    %4515 = vmatprep.mubr.bf16.mxu0 0
    %4516 = vmatmul.mubr.bf16.gmra.mrb[0].mxu0 %v1325
    %v4517 = vpop.f32.mrb[0].mxu0
    %v4518 = vadd.f32 0.0, %v4517
    %v4519 = vpop.f32.mrb[0].mxu0
    %v4520 = vpop.f32.mrb[0].mxu0
    %v4521 = vadd.f32 0.0, %v4520
    %v4522 = vpop.f32.mrb[0].mxu0
    %4523 = vmatprep.mubr.bf16.mxu0 0
    %4524 = vmatmul.mubr.bf16.gmra.mrb[0].mxu0 %v1326
    %v4525 = vpop.f32.mrb[0].mxu0
    %v4526 = vadd.f32 0.0, %v4525
    %v4527 = vpop.f32.mrb[0].mxu0
    %v4528 = vpop.f32.mrb[0].mxu0
    %v4529 = vadd.f32 0.0, %v4528
    %v4530 = vpop.f32.mrb[0].mxu0
    %4531 = vmatprep.mubr.bf16.mxu0 0
    %4532 = vmatmul.mubr.bf16.gmra.mrb[0].mxu0 %v1327
    %v4533 = vpop.f32.mrb[0].mxu0
    %v4534 = vadd.f32 0.0, %v4533
    %v4535 = vpop.f32.mrb[0].mxu0
    %v4536 = vpop.f32.mrb[0].mxu0
    %v4537 = vadd.f32 0.0, %v4536
    %v4538 = vpop.f32.mrb[0].mxu0
    %4539 = vmatprep.mubr.bf16.mxu0 0
    %4540 = vmatmul.mubr.bf16.gmra.mrb[0].mxu0 %v1328
    %v4541 = vpop.f32.mrb[0].mxu0
    %v4542 = vadd.f32 0.0, %v4541
    %v4543 = vpop.f32.mrb[0].mxu0
    %v4544 = vpop.f32.mrb[0].mxu0
    %v4545 = vadd.f32 0.0, %v4544
    %v4546 = vpop.f32.mrb[0].mxu0
    %4547 = vmatprep.mubr.bf16.mxu0 0
    %4548 = vmatmul.mubr.bf16.gmra.mrb[0].mxu0 %v1329
    %v4549 = vpop.f32.mrb[0].mxu0
    %v4550 = vadd.f32 0.0, %v4549
    %v4551 = vpop.f32.mrb[0].mxu0
    %v4552 = vpop.f32.mrb[0].mxu0
    %v4553 = vadd.f32 0.0, %v4552
    %v4554 = vpop.f32.mrb[0].mxu0
    %4555 = vmatprep.mubr.bf16.mxu0 0
    %4556 = vmatmul.mubr.bf16.gmra.mrb[0].mxu0 %v1330
    %v4557 = vpop.f32.mrb[0].mxu0
    %v4558 = vadd.f32 0.0, %v4557
    %v4559 = vpop.f32.mrb[0].mxu0
    %v4560 = vpop.f32.mrb[0].mxu0
    %v4561 = vadd.f32 0.0, %v4560
    %v4562 = vpop.f32.mrb[0].mxu0
    %4563 = vmatprep.mubr.bf16.mxu0 0
    %4564 = vmatmul.mubr.bf16.gmra.mrb[0].mxu0 %v1331
    %v4565 = vpop.f32.mrb[0].mxu0
    %v4566 = vadd.f32 0.0, %v4565
    %v4567 = vpop.f32.mrb[0].mxu0
    %v4568 = vpop.f32.mrb[0].mxu0
    %v4569 = vadd.f32 0.0, %v4568
    %v4570 = vpop.f32.mrb[0].mxu0
    %4571 = vmatprep.mubr.bf16.mxu0 0
    %4572 = vmatmul.mubr.bf16.gmra.mrb[0].mxu0 %v1332
    %v4573 = vpop.f32.mrb[0].mxu0
    %v4574 = vadd.f32 0.0, %v4573
    %v4575 = vpop.f32.mrb[0].mxu0
    %v4576 = vpop.f32.mrb[0].mxu0
    %v4577 = vadd.f32 0.0, %v4576
    %v4578 = vpop.f32.mrb[0].mxu0
    %4579 = vmatprep.mubr.bf16.mxu0 0
    %4580 = vmatmul.mubr.bf16.gmra.mrb[0].mxu0 %v1333
    %v4581 = vpop.f32.mrb[0].mxu0
    %v4582 = vadd.f32 0.0, %v4581
    %v4583 = vpop.f32.mrb[0].mxu0
    %v4584 = vpop.f32.mrb[0].mxu0
    %v4585 = vadd.f32 0.0, %v4584
    %v4586 = vpop.f32.mrb[0].mxu0
    %4587 = vmatprep.mubr.bf16.mxu0 0
    %4588 = vmatmul.mubr.bf16.gmra.mrb[0].mxu0 %v1334
    %v4589 = vpop.f32.mrb[0].mxu0
    %v4590 = vadd.f32 0.0, %v4589
    %v4591 = vpop.f32.mrb[0].mxu0
    %v4592 = vpop.f32.mrb[0].mxu0
    %v4593 = vadd.f32 0.0, %v4592
    %v4594 = vpop.f32.mrb[0].mxu0
    %4595 = vmatprep.mubr.bf16.mxu0 0
    %4596 = vmatmul.mubr.bf16.gmra.mrb[0].mxu0 %v1335
    %v4597 = vpop.f32.mrb[0].mxu0
    %v4598 = vadd.f32 0.0, %v4597
    %v4599 = vpop.f32.mrb[0].mxu0
    %v4600 = vpop.f32.mrb[0].mxu0
    %v4601 = vadd.f32 0.0, %v4600
    %v4602 = vpop.f32.mrb[0].mxu0
    %4603 = vmatprep.mubr.bf16.mxu0 0
    %4604 = vmatmul.mubr.bf16.gmra.mrb[0].mxu0 %v1336
    %v4605 = vpop.f32.mrb[0].mxu0
    %v4606 = vadd.f32 0.0, %v4605
    %v4607 = vpop.f32.mrb[0].mxu0
    %v4608 = vpop.f32.mrb[0].mxu0
    %v4609 = vadd.f32 0.0, %v4608
    %v4610 = vpop.f32.mrb[0].mxu0
    %4611 = vmatprep.mubr.bf16.mxu0 0
    %4612 = vmatmul.mubr.bf16.gmra.mrb[0].mxu0 %v1320
    %v4613 = vpop.f32.mrb[0].mxu0
    %v4614 = vadd.f32 0.0, %v4613
    %v4615 = vpop.f32.mrb[0].mxu0
    %v4616 = vpop.f32.mrb[0].mxu0
    %v4617 = vadd.f32 0.0, %v4616
    %v4618 = vpop.f32.mrb[0].mxu0
    %4619 = vmatprep.mubr.bf16.mxu0 0
    %4620 = vmatmul.mubr.bf16.gmra.mrb[0].mxu0 %v1338
    %v4621 = vpop.f32.mrb[0].mxu0
    %v4622 = vadd.f32 0.0, %v4621
    %v4623 = vpop.f32.mrb[0].mxu0
    %v4624 = vpop.f32.mrb[0].mxu0
    %v4625 = vadd.f32 0.0, %v4624
    %v4626 = vpop.f32.mrb[0].mxu0
    %4627 = vmatprep.mubr.bf16.mxu0 0
    %4628 = vmatmul.mubr.bf16.gmra.mrb[0].mxu0 %v1339
    %v4629 = vpop.f32.mrb[0].mxu0
    %v4630 = vadd.f32 0.0, %v4629
    %v4631 = vpop.f32.mrb[0].mxu0
    %v4632 = vpop.f32.mrb[0].mxu0
    %v4633 = vadd.f32 0.0, %v4632
    %v4634 = vpop.f32.mrb[0].mxu0
    %4635 = vmatprep.mubr.bf16.mxu0 0
    %4636 = vmatmul.mubr.bf16.gmra.mrb[0].mxu0 %v1340
    %v4637 = vpop.f32.mrb[0].mxu0
    %v4638 = vadd.f32 0.0, %v4637
    %v4639 = vpop.f32.mrb[0].mxu0
    %v4640 = vpop.f32.mrb[0].mxu0
    %v4641 = vadd.f32 0.0, %v4640
    %v4642 = vpop.f32.mrb[0].mxu0
    %4643 = vmatprep.mubr.bf16.mxu0 0
    %4644 = vmatmul.mubr.bf16.gmra.mrb[0].mxu0 %v1341
    %v4645 = vpop.f32.mrb[0].mxu0
    %v4646 = vadd.f32 0.0, %v4645
    %v4647 = vpop.f32.mrb[0].mxu0
    %v4648 = vpop.f32.mrb[0].mxu0
    %v4649 = vadd.f32 0.0, %v4648
    %v4650 = vpop.f32.mrb[0].mxu0
    %4651 = vmatprep.mubr.bf16.mxu0 0
    %4652 = vmatmul.mubr.bf16.gmra.mrb[0].mxu0 %v1342
    %v4653 = vpop.f32.mrb[0].mxu0
    %v4654 = vadd.f32 0.0, %v4653
    %v4655 = vpop.f32.mrb[0].mxu0
    %v4656 = vpop.f32.mrb[0].mxu0
    %v4657 = vadd.f32 0.0, %v4656
    %v4658 = vpop.f32.mrb[0].mxu0
    %4659 = vmatprep.mubr.bf16.mxu0 0
    %4660 = vmatmul.mubr.bf16.gmra.mrb[0].mxu0 %v1343
    %v4661 = vpop.f32.mrb[0].mxu0
    %v4662 = vadd.f32 0.0, %v4661
    %v4663 = vpop.f32.mrb[0].mxu0
    %v4664 = vpop.f32.mrb[0].mxu0
    %v4665 = vadd.f32 0.0, %v4664
    %v4666 = vpop.f32.mrb[0].mxu0
    %4667 = vmatprep.mubr.bf16.mxu0 0
    %4668 = vmatmul.mubr.bf16.gmra.mrb[0].mxu0 %v1344
    %v4669 = vpop.f32.mrb[0].mxu0
    %v4670 = vadd.f32 0.0, %v4669
    %v4671 = vpop.f32.mrb[0].mxu0
    %v4672 = vpop.f32.mrb[0].mxu0
    %v4673 = vadd.f32 0.0, %v4672
    %v4674 = vpop.f32.mrb[0].mxu0
    %4675 = vmatprep.mubr.bf16.mxu0 0
    %4676 = vmatmul.mubr.bf16.gmra.mrb[0].mxu0 %v1345
    %v4677 = vpop.f32.mrb[0].mxu0
    %v4678 = vadd.f32 0.0, %v4677
    %v4679 = vpop.f32.mrb[0].mxu0
    %v4680 = vpop.f32.mrb[0].mxu0
    %v4681 = vadd.f32 0.0, %v4680
    %v4682 = vpop.f32.mrb[0].mxu0
    %4683 = vmatprep.mubr.bf16.mxu0 0
    %4684 = vmatmul.mubr.bf16.gmra.mrb[0].mxu0 %v1346
    %v4685 = vpop.f32.mrb[0].mxu0
    %v4686 = vadd.f32 0.0, %v4685
    %v4687 = vpop.f32.mrb[0].mxu0
    %v4688 = vpop.f32.mrb[0].mxu0
    %v4689 = vadd.f32 0.0, %v4688
    %v4690 = vpop.f32.mrb[0].mxu0
    %4691 = vmatprep.mubr.bf16.mxu0 0
    %4692 = vmatmul.mubr.bf16.gmra.mrb[0].mxu0 %v1347
    %v4693 = vpop.f32.mrb[0].mxu0
    %v4694 = vadd.f32 0.0, %v4693
    %v4695 = vpop.f32.mrb[0].mxu0
    %v4696 = vpop.f32.mrb[0].mxu0
    %v4697 = vadd.f32 0.0, %v4696
    %v4698 = vpop.f32.mrb[0].mxu0
    %4699 = vmatprep.mubr.bf16.mxu0 0
    %4700 = vmatmul.mubr.bf16.gmra.mrb[0].mxu0 %v1348
    %v4701 = vpop.f32.mrb[0].mxu0
    %v4702 = vadd.f32 0.0, %v4701
    %v4703 = vpop.f32.mrb[0].mxu0
    %v4704 = vpop.f32.mrb[0].mxu0
    %v4705 = vadd.f32 0.0, %v4704
    %v4706 = vpop.f32.mrb[0].mxu0
    %4707 = vmatprep.mubr.bf16.mxu0 0
    %4708 = vmatmul.mubr.bf16.gmra.mrb[0].mxu0 %v1349
    %v4709 = vpop.f32.mrb[0].mxu0
    %v4710 = vadd.f32 0.0, %v4709
    %v4711 = vpop.f32.mrb[0].mxu0
    %v4712 = vpop.f32.mrb[0].mxu0
    %v4713 = vadd.f32 0.0, %v4712
    %v4714 = vpop.f32.mrb[0].mxu0
    %4715 = vmatprep.mubr.bf16.mxu0 0
    %4716 = vmatmul.mubr.bf16.gmra.mrb[0].mxu0 %v1350
    %v4717 = vpop.f32.mrb[0].mxu0
    %v4718 = vadd.f32 0.0, %v4717
    %v4719 = vpop.f32.mrb[0].mxu0
    %v4720 = vpop.f32.mrb[0].mxu0
    %v4721 = vadd.f32 0.0, %v4720
    %v4722 = vpop.f32.mrb[0].mxu0
    %4723 = vmatprep.mubr.bf16.mxu0 0
    %4724 = vmatmul.mubr.bf16.gmra.mrb[0].mxu0 %v1351
    %v4725 = vpop.f32.mrb[0].mxu0
    %v4726 = vadd.f32 0.0, %v4725
    %v4727 = vpop.f32.mrb[0].mxu0
    %v4728 = vpop.f32.mrb[0].mxu0
    %v4729 = vadd.f32 0.0, %v4728
    %v4730 = vpop.f32.mrb[0].mxu0
    %4731 = vmatprep.mubr.bf16.mxu0 0
    %4732 = vmatmul.mubr.bf16.gmra.mrb[0].mxu0 %v1352
    %v4733 = vpop.f32.mrb[0].mxu0
    %v4734 = vadd.f32 0.0, %v4733
    %v4735 = vpop.f32.mrb[0].mxu0
    %v4736 = vpop.f32.mrb[0].mxu0
    %v4737 = vadd.f32 0.0, %v4736
    %v4738 = vpop.f32.mrb[0].mxu0
    %4739 = vmatprep.mubr.bf16.mxu0 0
    %4740 = vmatmul.mubr.bf16.gmra.mrb[0].mxu0 %v1320
    %v4741 = vpop.f32.mrb[0].mxu0
    %v4742 = vadd.f32 0.0, %v4741
    %v4743 = vpop.f32.mrb[0].mxu0
    %v4744 = vpop.f32.mrb[0].mxu0
    %v4745 = vadd.f32 0.0, %v4744
    %v4746 = vpop.f32.mrb[0].mxu0
    %4747 = vdwg.mxu0
    %v4748 = vadd.f32 %v4330, %v4494
    %v4749 = vadd.f32 %v4331, %v4497
    %v4750 = vadd.f32 %v4332, %v4502
    %v4751 = vadd.f32 %v4333, %v4505
    %v4752 = vadd.f32 %v4334, %v4510
    %v4753 = vadd.f32 %v4335, %v4513
    %v4754 = vadd.f32 %v4336, %v4518
    %v4755 = vadd.f32 %v4337, %v4521
    %v4756 = vadd.f32 %v4338, %v4526
    %v4757 = vadd.f32 %v4339, %v4529
    %v4758 = vadd.f32 %v4340, %v4534
    %v4759 = vadd.f32 %v4341, %v4537
    %v4760 = vadd.f32 %v4342, %v4542
    %v4761 = vadd.f32 %v4343, %v4545
    %v4762 = vadd.f32 %v4344, %v4550
    %v4763 = vadd.f32 %v4345, %v4553
    %v4764 = vadd.f32 %v4346, %v4558
    %v4765 = vadd.f32 %v4347, %v4561
    %v4766 = vadd.f32 %v4348, %v4566
    %v4767 = vadd.f32 %v4349, %v4569
    %v4768 = vadd.f32 %v4350, %v4574
    %v4769 = vadd.f32 %v4351, %v4577
    %v4770 = vadd.f32 %v4352, %v4582
    %v4771 = vadd.f32 %v4353, %v4585
    %v4772 = vadd.f32 %v4354, %v4590
    %v4773 = vadd.f32 %v4355, %v4593
    %v4774 = vadd.f32 %v4356, %v4598
    %v4775 = vadd.f32 %v4357, %v4601
    %v4776 = vadd.f32 %v4358, %v4606
    %v4777 = vadd.f32 %v4359, %v4609
    %v4778 = vadd.f32 %v4360, %v4614
    %v4779 = vadd.f32 %v4361, %v4617
    %v4780 = vadd.f32 %v4362, %v4622
    %v4781 = vadd.f32 %v4363, %v4625
    %v4782 = vadd.f32 %v4364, %v4630
    %v4783 = vadd.f32 %v4365, %v4633
    %v4784 = vadd.f32 %v4366, %v4638
    %v4785 = vadd.f32 %v4367, %v4641
    %v4786 = vadd.f32 %v4368, %v4646
    %v4787 = vadd.f32 %v4369, %v4649
    %v4788 = vadd.f32 %v4370, %v4654
    %v4789 = vadd.f32 %v4371, %v4657
    %v4790 = vadd.f32 %v4372, %v4662
    %v4791 = vadd.f32 %v4373, %v4665
    %v4792 = vadd.f32 %v4374, %v4670
    %v4793 = vadd.f32 %v4375, %v4673
    %v4794 = vadd.f32 %v4376, %v4678
    %v4795 = vadd.f32 %v4377, %v4681
    %v4796 = vadd.f32 %v4378, %v4686
    %v4797 = vadd.f32 %v4379, %v4689
    %v4798 = vadd.f32 %v4380, %v4694
    %v4799 = vadd.f32 %v4381, %v4697
    %v4800 = vadd.f32 %v4382, %v4702
    %v4801 = vadd.f32 %v4383, %v4705
    %v4802 = vadd.f32 %v4384, %v4710
    %v4803 = vadd.f32 %v4385, %v4713
    %v4804 = vadd.f32 %v4386, %v4718
    %v4805 = vadd.f32 %v4387, %v4721
    %v4806 = vadd.f32 %v4388, %v4726
    %v4807 = vadd.f32 %v4389, %v4729
    %v4808 = vadd.f32 %v4390, %v4734
    %v4809 = vadd.f32 %v4391, %v4737
    %v4810 = vadd.f32 %v4392, %v4742
    %v4811 = vadd.f32 %v4393, %v4745
    %s4812 = scalar_lea.vmem [#allocation7], 448
    %v4813 = vld [vmem:[%s4812] sm:$0xf]
    %v4814 = vld [vmem:[%s4812 + $0x4] sm:$0xf]
    %v4815 = vld [vmem:[%s4812 + $0x8] sm:$0xf]
    %v4816 = vld [vmem:[%s4812 + $0xc] sm:$0xf]
    %v4817 = vld [vmem:[%s4812 + $0x10] sm:$0xf]
    %v4818 = vld [vmem:[%s4812 + $0x14] sm:$0xf]
    %v4819 = vld [vmem:[%s4812 + $0x18] sm:$0xf]
    %v4820 = vld [vmem:[%s4812 + $0x1c] sm:$0xf]
    %v4821 = vld [vmem:[%s4812 + $0x20] sm:$0xf]
    %v4822 = vld [vmem:[%s4812 + $0x24] sm:$0xf]
    %v4823 = vld [vmem:[%s4812 + $0x28] sm:$0xf]
    %v4824 = vld [vmem:[%s4812 + $0x2c] sm:$0xf]
    %v4825 = vld [vmem:[%s4812 + $0x30] sm:$0xf]
    %v4826 = vld [vmem:[%s4812 + $0x34] sm:$0xf]
    %v4827 = vld [vmem:[%s4812 + $0x38] sm:$0xf]
    %v4828 = vld [vmem:[%s4812 + $0x3c] sm:$0xf]
    %v4845 = vunpack.c.l.b16 %v4813
    %v4846 = vunpack.c.l.b16 %v4814
    %v4847 = vunpack.c.l.b16 %v4815
    %v4848 = vunpack.c.l.b16 %v4816
    %v4849 = vunpack.c.l.b16 %v4817
    %v4850 = vunpack.c.l.b16 %v4818
    %v4851 = vunpack.c.l.b16 %v4819
    %v4852 = vunpack.c.l.b16 %v4820
    %v4853 = vunpack.c.l.b16 %v4821
    %v4854 = vunpack.c.l.b16 %v4822
    %v4855 = vunpack.c.l.b16 %v4823
    %v4856 = vunpack.c.l.b16 %v4824
    %v4857 = vunpack.c.l.b16 %v4825
    %v4858 = vunpack.c.l.b16 %v4826
    %v4859 = vunpack.c.l.b16 %v4827
    %v4860 = vunpack.c.l.b16 %v4828
    %v4861 = vpack.c.b16 %v4846, %v4845
    %v4862 = vpack.c.b16 %v4848, %v4847
    %v4863 = vpack.c.b16 %v4850, %v4849
    %v4864 = vpack.c.b16 %v4852, %v4851
    %v4865 = vpack.c.b16 %v4854, %v4853
    %v4866 = vpack.c.b16 %v4856, %v4855
    %v4867 = vpack.c.b16 %v4858, %v4857
    %v4868 = vpack.c.b16 %v4860, %v4859
    %4877 = vmatprep.subr.bf16.mxu0 0
    %4878 = vmatpush1.bf16.msra.mxu0 %v4861
    %4879 = vmatprep.subr.bf16.mxu0 0
    %4880 = vmatpush1.bf16.msra.mxu0 %v4862
    %4881 = vmatprep.subr.bf16.mxu0 0
    %4882 = vmatpush1.bf16.msra.mxu0 %v4863
    %4883 = vmatprep.subr.bf16.mxu0 0
    %4884 = vmatpush1.bf16.msra.mxu0 %v4864
    %4885 = vmatprep.subr.bf16.mxu0 0
    %4886 = vmatpush1.bf16.msra.mxu0 %v4865
    %4887 = vmatprep.subr.bf16.mxu0 0
    %4888 = vmatpush1.bf16.msra.mxu0 %v4866
    %4889 = vmatprep.subr.bf16.mxu0 0
    %4890 = vmatpush1.bf16.msra.mxu0 %v4867
    %4891 = vmatprep.subr.bf16.mxu0 0
    %4892 = vmatpush1.bf16.msra.mxu0 %v4868
    %4893 = vmatprep.subr.bf16.mxu0 0
    %4894 = vmatpush1.bf16.msra.mxu0 0
    %4895 = vmatprep.subr.bf16.mxu0 0
    %4896 = vmatpush1.bf16.msra.mxu0 0
    %4897 = vmatprep.subr.bf16.mxu0 0
    %4898 = vmatpush1.bf16.msra.mxu0 0
    %4899 = vmatprep.subr.bf16.mxu0 0
    %4900 = vmatpush1.bf16.msra.mxu0 0
    %4901 = vmatprep.subr.bf16.mxu0 0
    %4902 = vmatpush1.bf16.msra.mxu0 0
    %4903 = vmatprep.subr.bf16.mxu0 0
    %4904 = vmatpush1.bf16.msra.mxu0 0
    %4905 = vmatprep.subr.bf16.mxu0 0
    %4906 = vmatpush1.bf16.msra.mxu0 0
    %4907 = vmatprep.subr.bf16.mxu0 0
    %4908 = vmatpush1.bf16.msra.mxu0 0
    %4909 = vmatprep.mubr.bf16.mxu0 0
    %4910 = vmatmul.mubr.bf16.gmra.mrb[0].mxu0 %v1438
    %v4911 = vpop.f32.mrb[0].mxu0
    %v4912 = vadd.f32 0.0, %v4911
    %v4913 = vpop.f32.mrb[0].mxu0
    %v4914 = vpop.f32.mrb[0].mxu0
    %v4915 = vadd.f32 0.0, %v4914
    %v4916 = vpop.f32.mrb[0].mxu0
    %4917 = vmatprep.mubr.bf16.mxu0 0
    %4918 = vmatmul.mubr.bf16.gmra.mrb[0].mxu0 %v1450
    %v4919 = vpop.f32.mrb[0].mxu0
    %v4920 = vadd.f32 0.0, %v4919
    %v4921 = vpop.f32.mrb[0].mxu0
    %v4922 = vpop.f32.mrb[0].mxu0
    %v4923 = vadd.f32 0.0, %v4922
    %v4924 = vpop.f32.mrb[0].mxu0
    %4925 = vmatprep.mubr.bf16.mxu0 0
    %4926 = vmatmul.mubr.bf16.gmra.mrb[0].mxu0 %v1462
    %v4927 = vpop.f32.mrb[0].mxu0
    %v4928 = vadd.f32 0.0, %v4927
    %v4929 = vpop.f32.mrb[0].mxu0
    %v4930 = vpop.f32.mrb[0].mxu0
    %v4931 = vadd.f32 0.0, %v4930
    %v4932 = vpop.f32.mrb[0].mxu0
    %4933 = vmatprep.mubr.bf16.mxu0 0
    %4934 = vmatmul.mubr.bf16.gmra.mrb[0].mxu0 %v1474
    %v4935 = vpop.f32.mrb[0].mxu0
    %v4936 = vadd.f32 0.0, %v4935
    %v4937 = vpop.f32.mrb[0].mxu0
    %v4938 = vpop.f32.mrb[0].mxu0
    %v4939 = vadd.f32 0.0, %v4938
    %v4940 = vpop.f32.mrb[0].mxu0
    %4941 = vmatprep.mubr.bf16.mxu0 0
    %4942 = vmatmul.mubr.bf16.gmra.mrb[0].mxu0 %v1486
    %v4943 = vpop.f32.mrb[0].mxu0
    %v4944 = vadd.f32 0.0, %v4943
    %v4945 = vpop.f32.mrb[0].mxu0
    %v4946 = vpop.f32.mrb[0].mxu0
    %v4947 = vadd.f32 0.0, %v4946
    %v4948 = vpop.f32.mrb[0].mxu0
    %4949 = vmatprep.mubr.bf16.mxu0 0
    %4950 = vmatmul.mubr.bf16.gmra.mrb[0].mxu0 %v1498
    %v4951 = vpop.f32.mrb[0].mxu0
    %v4952 = vadd.f32 0.0, %v4951
    %v4953 = vpop.f32.mrb[0].mxu0
    %v4954 = vpop.f32.mrb[0].mxu0
    %v4955 = vadd.f32 0.0, %v4954
    %v4956 = vpop.f32.mrb[0].mxu0
    %4957 = vmatprep.mubr.bf16.mxu0 0
    %4958 = vmatmul.mubr.bf16.gmra.mrb[0].mxu0 %v1510
    %v4959 = vpop.f32.mrb[0].mxu0
    %v4960 = vadd.f32 0.0, %v4959
    %v4961 = vpop.f32.mrb[0].mxu0
    %v4962 = vpop.f32.mrb[0].mxu0
    %v4963 = vadd.f32 0.0, %v4962
    %v4964 = vpop.f32.mrb[0].mxu0
    %4965 = vmatprep.mubr.bf16.mxu0 0
    %4966 = vmatmul.mubr.bf16.gmra.mrb[0].mxu0 %v1522
    %v4967 = vpop.f32.mrb[0].mxu0
    %v4968 = vadd.f32 0.0, %v4967
    %v4969 = vpop.f32.mrb[0].mxu0
    %v4970 = vpop.f32.mrb[0].mxu0
    %v4971 = vadd.f32 0.0, %v4970
    %v4972 = vpop.f32.mrb[0].mxu0
    %4973 = vmatprep.mubr.bf16.mxu0 0
    %4974 = vmatmul.mubr.bf16.gmra.mrb[0].mxu0 %v1534
    %v4975 = vpop.f32.mrb[0].mxu0
    %v4976 = vadd.f32 0.0, %v4975
    %v4977 = vpop.f32.mrb[0].mxu0
    %v4978 = vpop.f32.mrb[0].mxu0
    %v4979 = vadd.f32 0.0, %v4978
    %v4980 = vpop.f32.mrb[0].mxu0
    %4981 = vmatprep.mubr.bf16.mxu0 0
    %4982 = vmatmul.mubr.bf16.gmra.mrb[0].mxu0 %v1546
    %v4983 = vpop.f32.mrb[0].mxu0
    %v4984 = vadd.f32 0.0, %v4983
    %v4985 = vpop.f32.mrb[0].mxu0
    %v4986 = vpop.f32.mrb[0].mxu0
    %v4987 = vadd.f32 0.0, %v4986
    %v4988 = vpop.f32.mrb[0].mxu0
    %4989 = vmatprep.mubr.bf16.mxu0 0
    %4990 = vmatmul.mubr.bf16.gmra.mrb[0].mxu0 %v1558
    %v4991 = vpop.f32.mrb[0].mxu0
    %v4992 = vadd.f32 0.0, %v4991
    %v4993 = vpop.f32.mrb[0].mxu0
    %v4994 = vpop.f32.mrb[0].mxu0
    %v4995 = vadd.f32 0.0, %v4994
    %v4996 = vpop.f32.mrb[0].mxu0
    %4997 = vmatprep.mubr.bf16.mxu0 0
    %4998 = vmatmul.mubr.bf16.gmra.mrb[0].mxu0 %v1570
    %v4999 = vpop.f32.mrb[0].mxu0
    %v5000 = vadd.f32 0.0, %v4999
    %v5001 = vpop.f32.mrb[0].mxu0
    %v5002 = vpop.f32.mrb[0].mxu0
    %v5003 = vadd.f32 0.0, %v5002
    %v5004 = vpop.f32.mrb[0].mxu0
    %5005 = vmatprep.mubr.bf16.mxu0 0
    %5006 = vmatmul.mubr.bf16.gmra.mrb[0].mxu0 %v1582
    %v5007 = vpop.f32.mrb[0].mxu0
    %v5008 = vadd.f32 0.0, %v5007
    %v5009 = vpop.f32.mrb[0].mxu0
    %v5010 = vpop.f32.mrb[0].mxu0
    %v5011 = vadd.f32 0.0, %v5010
    %v5012 = vpop.f32.mrb[0].mxu0
    %5013 = vmatprep.mubr.bf16.mxu0 0
    %5014 = vmatmul.mubr.bf16.gmra.mrb[0].mxu0 %v1594
    %v5015 = vpop.f32.mrb[0].mxu0
    %v5016 = vadd.f32 0.0, %v5015
    %v5017 = vpop.f32.mrb[0].mxu0
    %v5018 = vpop.f32.mrb[0].mxu0
    %v5019 = vadd.f32 0.0, %v5018
    %v5020 = vpop.f32.mrb[0].mxu0
    %5021 = vmatprep.mubr.bf16.mxu0 0
    %5022 = vmatmul.mubr.bf16.gmra.mrb[0].mxu0 %v3531
    %v5023 = vpop.f32.mrb[0].mxu0
    %v5024 = vadd.f32 0.0, %v5023
    %v5025 = vpop.f32.mrb[0].mxu0
    %v5026 = vpop.f32.mrb[0].mxu0
    %v5027 = vadd.f32 0.0, %v5026
    %v5028 = vpop.f32.mrb[0].mxu0
    %5029 = vmatprep.mubr.bf16.mxu0 0
    %5030 = vmatmul.mubr.bf16.gmra.mrb[0].mxu0 %v1414
    %v5031 = vpop.f32.mrb[0].mxu0
    %v5032 = vadd.f32 0.0, %v5031
    %v5033 = vpop.f32.mrb[0].mxu0
    %v5034 = vpop.f32.mrb[0].mxu0
    %v5035 = vadd.f32 0.0, %v5034
    %v5036 = vpop.f32.mrb[0].mxu0
    %5037 = vmatprep.mubr.bf16.mxu0 0
    %5038 = vmatmul.mubr.bf16.gmra.mrb[0].mxu0 %v1618
    %v5039 = vpop.f32.mrb[0].mxu0
    %v5040 = vadd.f32 0.0, %v5039
    %v5041 = vpop.f32.mrb[0].mxu0
    %v5042 = vpop.f32.mrb[0].mxu0
    %v5043 = vadd.f32 0.0, %v5042
    %v5044 = vpop.f32.mrb[0].mxu0
    %5045 = vmatprep.mubr.bf16.mxu0 0
    %5046 = vmatmul.mubr.bf16.gmra.mrb[0].mxu0 %v1630
    %v5047 = vpop.f32.mrb[0].mxu0
    %v5048 = vadd.f32 0.0, %v5047
    %v5049 = vpop.f32.mrb[0].mxu0
    %v5050 = vpop.f32.mrb[0].mxu0
    %v5051 = vadd.f32 0.0, %v5050
    %v5052 = vpop.f32.mrb[0].mxu0
    %5053 = vmatprep.mubr.bf16.mxu0 0
    %5054 = vmatmul.mubr.bf16.gmra.mrb[0].mxu0 %v1642
    %v5055 = vpop.f32.mrb[0].mxu0
    %v5056 = vadd.f32 0.0, %v5055
    %v5057 = vpop.f32.mrb[0].mxu0
    %v5058 = vpop.f32.mrb[0].mxu0
    %v5059 = vadd.f32 0.0, %v5058
    %v5060 = vpop.f32.mrb[0].mxu0
    %5061 = vmatprep.mubr.bf16.mxu0 0
    %5062 = vmatmul.mubr.bf16.gmra.mrb[0].mxu0 %v1654
    %v5063 = vpop.f32.mrb[0].mxu0
    %v5064 = vadd.f32 0.0, %v5063
    %v5065 = vpop.f32.mrb[0].mxu0
    %v5066 = vpop.f32.mrb[0].mxu0
    %v5067 = vadd.f32 0.0, %v5066
    %v5068 = vpop.f32.mrb[0].mxu0
    %5069 = vmatprep.mubr.bf16.mxu0 0
    %5070 = vmatmul.mubr.bf16.gmra.mrb[0].mxu0 %v1666
    %v5071 = vpop.f32.mrb[0].mxu0
    %v5072 = vadd.f32 0.0, %v5071
    %v5073 = vpop.f32.mrb[0].mxu0
    %v5074 = vpop.f32.mrb[0].mxu0
    %v5075 = vadd.f32 0.0, %v5074
    %v5076 = vpop.f32.mrb[0].mxu0
    %5077 = vmatprep.mubr.bf16.mxu0 0
    %5078 = vmatmul.mubr.bf16.gmra.mrb[0].mxu0 %v1678
    %v5079 = vpop.f32.mrb[0].mxu0
    %v5080 = vadd.f32 0.0, %v5079
    %v5081 = vpop.f32.mrb[0].mxu0
    %v5082 = vpop.f32.mrb[0].mxu0
    %v5083 = vadd.f32 0.0, %v5082
    %v5084 = vpop.f32.mrb[0].mxu0
    %5085 = vmatprep.mubr.bf16.mxu0 0
    %5086 = vmatmul.mubr.bf16.gmra.mrb[0].mxu0 %v1690
    %v5087 = vpop.f32.mrb[0].mxu0
    %v5088 = vadd.f32 0.0, %v5087
    %v5089 = vpop.f32.mrb[0].mxu0
    %v5090 = vpop.f32.mrb[0].mxu0
    %v5091 = vadd.f32 0.0, %v5090
    %v5092 = vpop.f32.mrb[0].mxu0
    %5093 = vmatprep.mubr.bf16.mxu0 0
    %5094 = vmatmul.mubr.bf16.gmra.mrb[0].mxu0 %v1702
    %v5095 = vpop.f32.mrb[0].mxu0
    %v5096 = vadd.f32 0.0, %v5095
    %v5097 = vpop.f32.mrb[0].mxu0
    %v5098 = vpop.f32.mrb[0].mxu0
    %v5099 = vadd.f32 0.0, %v5098
    %v5100 = vpop.f32.mrb[0].mxu0
    %5101 = vmatprep.mubr.bf16.mxu0 0
    %5102 = vmatmul.mubr.bf16.gmra.mrb[0].mxu0 %v1714
    %v5103 = vpop.f32.mrb[0].mxu0
    %v5104 = vadd.f32 0.0, %v5103
    %v5105 = vpop.f32.mrb[0].mxu0
    %v5106 = vpop.f32.mrb[0].mxu0
    %v5107 = vadd.f32 0.0, %v5106
    %v5108 = vpop.f32.mrb[0].mxu0
    %5109 = vmatprep.mubr.bf16.mxu0 0
    %5110 = vmatmul.mubr.bf16.gmra.mrb[0].mxu0 %v1726
    %v5111 = vpop.f32.mrb[0].mxu0
    %v5112 = vadd.f32 0.0, %v5111
    %v5113 = vpop.f32.mrb[0].mxu0
    %v5114 = vpop.f32.mrb[0].mxu0
    %v5115 = vadd.f32 0.0, %v5114
    %v5116 = vpop.f32.mrb[0].mxu0
    %5117 = vmatprep.mubr.bf16.mxu0 0
    %5118 = vmatmul.mubr.bf16.gmra.mrb[0].mxu0 %v1738
    %v5119 = vpop.f32.mrb[0].mxu0
    %v5120 = vadd.f32 0.0, %v5119
    %v5121 = vpop.f32.mrb[0].mxu0
    %v5122 = vpop.f32.mrb[0].mxu0
    %v5123 = vadd.f32 0.0, %v5122
    %v5124 = vpop.f32.mrb[0].mxu0
    %5125 = vmatprep.mubr.bf16.mxu0 0
    %5126 = vmatmul.mubr.bf16.gmra.mrb[0].mxu0 %v1750
    %v5127 = vpop.f32.mrb[0].mxu0
    %v5128 = vadd.f32 0.0, %v5127
    %v5129 = vpop.f32.mrb[0].mxu0
    %v5130 = vpop.f32.mrb[0].mxu0
    %v5131 = vadd.f32 0.0, %v5130
    %v5132 = vpop.f32.mrb[0].mxu0
    %5133 = vmatprep.mubr.bf16.mxu0 0
    %5134 = vmatmul.mubr.bf16.gmra.mrb[0].mxu0 %v1762
    %v5135 = vpop.f32.mrb[0].mxu0
    %v5136 = vadd.f32 0.0, %v5135
    %v5137 = vpop.f32.mrb[0].mxu0
    %v5138 = vpop.f32.mrb[0].mxu0
    %v5139 = vadd.f32 0.0, %v5138
    %v5140 = vpop.f32.mrb[0].mxu0
    %5141 = vmatprep.mubr.bf16.mxu0 0
    %5142 = vmatmul.mubr.bf16.gmra.mrb[0].mxu0 %v1774
    %v5143 = vpop.f32.mrb[0].mxu0
    %v5144 = vadd.f32 0.0, %v5143
    %v5145 = vpop.f32.mrb[0].mxu0
    %v5146 = vpop.f32.mrb[0].mxu0
    %v5147 = vadd.f32 0.0, %v5146
    %v5148 = vpop.f32.mrb[0].mxu0
    %5149 = vmatprep.mubr.bf16.mxu0 0
    %5150 = vmatmul.mubr.bf16.gmra.mrb[0].mxu0 %v3543
    %v5151 = vpop.f32.mrb[0].mxu0
    %v5152 = vadd.f32 0.0, %v5151
    %v5153 = vpop.f32.mrb[0].mxu0
    %v5154 = vpop.f32.mrb[0].mxu0
    %v5155 = vadd.f32 0.0, %v5154
    %v5156 = vpop.f32.mrb[0].mxu0
    %5157 = vmatprep.mubr.bf16.mxu0 0
    %5158 = vmatmul.mubr.bf16.gmra.mrb[0].mxu0 %v1414
    %v5159 = vpop.f32.mrb[0].mxu0
    %v5160 = vadd.f32 0.0, %v5159
    %v5161 = vpop.f32.mrb[0].mxu0
    %v5162 = vpop.f32.mrb[0].mxu0
    %v5163 = vadd.f32 0.0, %v5162
    %v5164 = vpop.f32.mrb[0].mxu0
    %5165 = vdwg.mxu0
    %v5166 = vadd.f32 %v4748, %v4912
    %v5167 = vadd.f32 %v4749, %v4915
    %v5168 = vadd.f32 %v4750, %v4920
    %v5169 = vadd.f32 %v4751, %v4923
    %v5170 = vadd.f32 %v4752, %v4928
    %v5171 = vadd.f32 %v4753, %v4931
    %v5172 = vadd.f32 %v4754, %v4936
    %v5173 = vadd.f32 %v4755, %v4939
    %v5174 = vadd.f32 %v4756, %v4944
    %v5175 = vadd.f32 %v4757, %v4947
    %v5176 = vadd.f32 %v4758, %v4952
    %v5177 = vadd.f32 %v4759, %v4955
    %v5178 = vadd.f32 %v4760, %v4960
    %v5179 = vadd.f32 %v4761, %v4963
    %v5180 = vadd.f32 %v4762, %v4968
    %v5181 = vadd.f32 %v4763, %v4971
    %v5182 = vadd.f32 %v4764, %v4976
    %v5183 = vadd.f32 %v4765, %v4979
    %v5184 = vadd.f32 %v4766, %v4984
    %v5185 = vadd.f32 %v4767, %v4987
    %v5186 = vadd.f32 %v4768, %v4992
    %v5187 = vadd.f32 %v4769, %v4995
    %v5188 = vadd.f32 %v4770, %v5000
    %v5189 = vadd.f32 %v4771, %v5003
    %v5190 = vadd.f32 %v4772, %v5008
    %v5191 = vadd.f32 %v4773, %v5011
    %v5192 = vadd.f32 %v4774, %v5016
    %v5193 = vadd.f32 %v4775, %v5019
    %v5194 = vadd.f32 %v4776, %v5024
    %v5195 = vadd.f32 %v4777, %v5027
    %v5196 = vadd.f32 %v4778, %v5032
    %v5197 = vadd.f32 %v4779, %v5035
    %v5198 = vadd.f32 %v4780, %v5040
    %v5199 = vadd.f32 %v4781, %v5043
    %v5200 = vadd.f32 %v4782, %v5048
    %v5201 = vadd.f32 %v4783, %v5051
    %v5202 = vadd.f32 %v4784, %v5056
    %v5203 = vadd.f32 %v4785, %v5059
    %v5204 = vadd.f32 %v4786, %v5064
    %v5205 = vadd.f32 %v4787, %v5067
    %v5206 = vadd.f32 %v4788, %v5072
    %v5207 = vadd.f32 %v4789, %v5075
    %v5208 = vadd.f32 %v4790, %v5080
    %v5209 = vadd.f32 %v4791, %v5083
    %v5210 = vadd.f32 %v4792, %v5088
    %v5211 = vadd.f32 %v4793, %v5091
    %v5212 = vadd.f32 %v4794, %v5096
    %v5213 = vadd.f32 %v4795, %v5099
    %v5214 = vadd.f32 %v4796, %v5104
    %v5215 = vadd.f32 %v4797, %v5107
    %v5216 = vadd.f32 %v4798, %v5112
    %v5217 = vadd.f32 %v4799, %v5115
    %v5218 = vadd.f32 %v4800, %v5120
    %v5219 = vadd.f32 %v4801, %v5123
    %v5220 = vadd.f32 %v4802, %v5128
    %v5221 = vadd.f32 %v4803, %v5131
    %v5222 = vadd.f32 %v4804, %v5136
    %v5223 = vadd.f32 %v4805, %v5139
    %v5224 = vadd.f32 %v4806, %v5144
    %v5225 = vadd.f32 %v4807, %v5147
    %v5226 = vadd.f32 %v4808, %v5152
    %v5227 = vadd.f32 %v4809, %v5155
    %v5228 = vadd.f32 %v4810, %v5160
    %v5229 = vadd.f32 %v4811, %v5163
    %s5230 = scalar_lea.vmem [#allocation7], 512
    %v5231 = vld [vmem:[%s5230] sm:$0xf]
    %v5232 = vld [vmem:[%s5230 + $0x4] sm:$0xf]
    %v5233 = vld [vmem:[%s5230 + $0x8] sm:$0xf]
    %v5234 = vld [vmem:[%s5230 + $0xc] sm:$0xf]
    %v5235 = vld [vmem:[%s5230 + $0x10] sm:$0xf]
    %v5236 = vld [vmem:[%s5230 + $0x14] sm:$0xf]
    %v5237 = vld [vmem:[%s5230 + $0x18] sm:$0xf]
    %v5238 = vld [vmem:[%s5230 + $0x1c] sm:$0xf]
    %v5239 = vld [vmem:[%s5230 + $0x20] sm:$0xf]
    %v5240 = vld [vmem:[%s5230 + $0x24] sm:$0xf]
    %v5241 = vld [vmem:[%s5230 + $0x28] sm:$0xf]
    %v5242 = vld [vmem:[%s5230 + $0x2c] sm:$0xf]
    %v5243 = vld [vmem:[%s5230 + $0x30] sm:$0xf]
    %v5244 = vld [vmem:[%s5230 + $0x34] sm:$0xf]
    %v5245 = vld [vmem:[%s5230 + $0x38] sm:$0xf]
    %v5246 = vld [vmem:[%s5230 + $0x3c] sm:$0xf]
    %v5263 = vunpack.c.l.b16 %v5231
    %v5264 = vunpack.c.l.b16 %v5232
    %v5265 = vunpack.c.l.b16 %v5233
    %v5266 = vunpack.c.l.b16 %v5234
    %v5267 = vunpack.c.l.b16 %v5235
    %v5268 = vunpack.c.l.b16 %v5236
    %v5269 = vunpack.c.l.b16 %v5237
    %v5270 = vunpack.c.l.b16 %v5238
    %v5271 = vunpack.c.l.b16 %v5239
    %v5272 = vunpack.c.l.b16 %v5240
    %v5273 = vunpack.c.l.b16 %v5241
    %v5274 = vunpack.c.l.b16 %v5242
    %v5275 = vunpack.c.l.b16 %v5243
    %v5276 = vunpack.c.l.b16 %v5244
    %v5277 = vunpack.c.l.b16 %v5245
    %v5278 = vunpack.c.l.b16 %v5246
    %v5279 = vpack.c.b16 %v5264, %v5263
    %v5280 = vpack.c.b16 %v5266, %v5265
    %v5281 = vpack.c.b16 %v5268, %v5267
    %v5282 = vpack.c.b16 %v5270, %v5269
    %v5283 = vpack.c.b16 %v5272, %v5271
    %v5284 = vpack.c.b16 %v5274, %v5273
    %v5285 = vpack.c.b16 %v5276, %v5275
    %v5286 = vpack.c.b16 %v5278, %v5277
    %5295 = vmatprep.subr.bf16.mxu0 0
    %5296 = vmatpush1.bf16.msra.mxu0 %v5279
    %5297 = vmatprep.subr.bf16.mxu0 0
    %5298 = vmatpush1.bf16.msra.mxu0 %v5280
    %5299 = vmatprep.subr.bf16.mxu0 0
    %5300 = vmatpush1.bf16.msra.mxu0 %v5281
    %5301 = vmatprep.subr.bf16.mxu0 0
    %5302 = vmatpush1.bf16.msra.mxu0 %v5282
    %5303 = vmatprep.subr.bf16.mxu0 0
    %5304 = vmatpush1.bf16.msra.mxu0 %v5283
    %5305 = vmatprep.subr.bf16.mxu0 0
    %5306 = vmatpush1.bf16.msra.mxu0 %v5284
    %5307 = vmatprep.subr.bf16.mxu0 0
    %5308 = vmatpush1.bf16.msra.mxu0 %v5285
    %5309 = vmatprep.subr.bf16.mxu0 0
    %5310 = vmatpush1.bf16.msra.mxu0 %v5286
    %5311 = vmatprep.subr.bf16.mxu0 0
    %5312 = vmatpush1.bf16.msra.mxu0 0
    %5313 = vmatprep.subr.bf16.mxu0 0
    %5314 = vmatpush1.bf16.msra.mxu0 0
    %5315 = vmatprep.subr.bf16.mxu0 0
    %5316 = vmatpush1.bf16.msra.mxu0 0
    %5317 = vmatprep.subr.bf16.mxu0 0
    %5318 = vmatpush1.bf16.msra.mxu0 0
    %5319 = vmatprep.subr.bf16.mxu0 0
    %5320 = vmatpush1.bf16.msra.mxu0 0
    %5321 = vmatprep.subr.bf16.mxu0 0
    %5322 = vmatpush1.bf16.msra.mxu0 0
    %5323 = vmatprep.subr.bf16.mxu0 0
    %5324 = vmatpush1.bf16.msra.mxu0 0
    %5325 = vmatprep.subr.bf16.mxu0 0
    %5326 = vmatpush1.bf16.msra.mxu0 0
    %5327 = vmatprep.mubr.bf16.mxu0 0
    %5328 = vmatmul.mubr.bf16.gmra.mrb[0].mxu0 %v2568
    %v5329 = vpop.f32.mrb[0].mxu0
    %v5330 = vadd.f32 0.0, %v5329
    %v5331 = vpop.f32.mrb[0].mxu0
    %v5332 = vpop.f32.mrb[0].mxu0
    %v5333 = vadd.f32 0.0, %v5332
    %v5334 = vpop.f32.mrb[0].mxu0
    %5335 = vmatprep.mubr.bf16.mxu0 0
    %5336 = vmatmul.mubr.bf16.gmra.mrb[0].mxu0 %v2571
    %v5337 = vpop.f32.mrb[0].mxu0
    %v5338 = vadd.f32 0.0, %v5337
    %v5339 = vpop.f32.mrb[0].mxu0
    %v5340 = vpop.f32.mrb[0].mxu0
    %v5341 = vadd.f32 0.0, %v5340
    %v5342 = vpop.f32.mrb[0].mxu0
    %5343 = vmatprep.mubr.bf16.mxu0 0
    %5344 = vmatmul.mubr.bf16.gmra.mrb[0].mxu0 %v2574
    %v5345 = vpop.f32.mrb[0].mxu0
    %v5346 = vadd.f32 0.0, %v5345
    %v5347 = vpop.f32.mrb[0].mxu0
    %v5348 = vpop.f32.mrb[0].mxu0
    %v5349 = vadd.f32 0.0, %v5348
    %v5350 = vpop.f32.mrb[0].mxu0
    %5351 = vmatprep.mubr.bf16.mxu0 0
    %5352 = vmatmul.mubr.bf16.gmra.mrb[0].mxu0 %v2577
    %v5353 = vpop.f32.mrb[0].mxu0
    %v5354 = vadd.f32 0.0, %v5353
    %v5355 = vpop.f32.mrb[0].mxu0
    %v5356 = vpop.f32.mrb[0].mxu0
    %v5357 = vadd.f32 0.0, %v5356
    %v5358 = vpop.f32.mrb[0].mxu0
    %5359 = vmatprep.mubr.bf16.mxu0 0
    %5360 = vmatmul.mubr.bf16.gmra.mrb[0].mxu0 %v2580
    %v5361 = vpop.f32.mrb[0].mxu0
    %v5362 = vadd.f32 0.0, %v5361
    %v5363 = vpop.f32.mrb[0].mxu0
    %v5364 = vpop.f32.mrb[0].mxu0
    %v5365 = vadd.f32 0.0, %v5364
    %v5366 = vpop.f32.mrb[0].mxu0
    %5367 = vmatprep.mubr.bf16.mxu0 0
    %5368 = vmatmul.mubr.bf16.gmra.mrb[0].mxu0 %v2583
    %v5369 = vpop.f32.mrb[0].mxu0
    %v5370 = vadd.f32 0.0, %v5369
    %v5371 = vpop.f32.mrb[0].mxu0
    %v5372 = vpop.f32.mrb[0].mxu0
    %v5373 = vadd.f32 0.0, %v5372
    %v5374 = vpop.f32.mrb[0].mxu0
    %5375 = vmatprep.mubr.bf16.mxu0 0
    %5376 = vmatmul.mubr.bf16.gmra.mrb[0].mxu0 %v2586
    %v5377 = vpop.f32.mrb[0].mxu0
    %v5378 = vadd.f32 0.0, %v5377
    %v5379 = vpop.f32.mrb[0].mxu0
    %v5380 = vpop.f32.mrb[0].mxu0
    %v5381 = vadd.f32 0.0, %v5380
    %v5382 = vpop.f32.mrb[0].mxu0
    %5383 = vmatprep.mubr.bf16.mxu0 0
    %5384 = vmatmul.mubr.bf16.gmra.mrb[0].mxu0 %v2589
    %v5385 = vpop.f32.mrb[0].mxu0
    %v5386 = vadd.f32 0.0, %v5385
    %v5387 = vpop.f32.mrb[0].mxu0
    %v5388 = vpop.f32.mrb[0].mxu0
    %v5389 = vadd.f32 0.0, %v5388
    %v5390 = vpop.f32.mrb[0].mxu0
    %5391 = vmatprep.mubr.bf16.mxu0 0
    %5392 = vmatmul.mubr.bf16.gmra.mrb[0].mxu0 %v2592
    %v5393 = vpop.f32.mrb[0].mxu0
    %v5394 = vadd.f32 0.0, %v5393
    %v5395 = vpop.f32.mrb[0].mxu0
    %v5396 = vpop.f32.mrb[0].mxu0
    %v5397 = vadd.f32 0.0, %v5396
    %v5398 = vpop.f32.mrb[0].mxu0
    %5399 = vmatprep.mubr.bf16.mxu0 0
    %5400 = vmatmul.mubr.bf16.gmra.mrb[0].mxu0 %v2595
    %v5401 = vpop.f32.mrb[0].mxu0
    %v5402 = vadd.f32 0.0, %v5401
    %v5403 = vpop.f32.mrb[0].mxu0
    %v5404 = vpop.f32.mrb[0].mxu0
    %v5405 = vadd.f32 0.0, %v5404
    %v5406 = vpop.f32.mrb[0].mxu0
    %5407 = vmatprep.mubr.bf16.mxu0 0
    %5408 = vmatmul.mubr.bf16.gmra.mrb[0].mxu0 %v2598
    %v5409 = vpop.f32.mrb[0].mxu0
    %v5410 = vadd.f32 0.0, %v5409
    %v5411 = vpop.f32.mrb[0].mxu0
    %v5412 = vpop.f32.mrb[0].mxu0
    %v5413 = vadd.f32 0.0, %v5412
    %v5414 = vpop.f32.mrb[0].mxu0
    %5415 = vmatprep.mubr.bf16.mxu0 0
    %5416 = vmatmul.mubr.bf16.gmra.mrb[0].mxu0 %v2601
    %v5417 = vpop.f32.mrb[0].mxu0
    %v5418 = vadd.f32 0.0, %v5417
    %v5419 = vpop.f32.mrb[0].mxu0
    %v5420 = vpop.f32.mrb[0].mxu0
    %v5421 = vadd.f32 0.0, %v5420
    %v5422 = vpop.f32.mrb[0].mxu0
    %5423 = vmatprep.mubr.bf16.mxu0 0
    %5424 = vmatmul.mubr.bf16.gmra.mrb[0].mxu0 %v2604
    %v5425 = vpop.f32.mrb[0].mxu0
    %v5426 = vadd.f32 0.0, %v5425
    %v5427 = vpop.f32.mrb[0].mxu0
    %v5428 = vpop.f32.mrb[0].mxu0
    %v5429 = vadd.f32 0.0, %v5428
    %v5430 = vpop.f32.mrb[0].mxu0
    %5431 = vmatprep.mubr.bf16.mxu0 0
    %5432 = vmatmul.mubr.bf16.gmra.mrb[0].mxu0 %v2607
    %v5433 = vpop.f32.mrb[0].mxu0
    %v5434 = vadd.f32 0.0, %v5433
    %v5435 = vpop.f32.mrb[0].mxu0
    %v5436 = vpop.f32.mrb[0].mxu0
    %v5437 = vadd.f32 0.0, %v5436
    %v5438 = vpop.f32.mrb[0].mxu0
    %5439 = vmatprep.mubr.bf16.mxu0 0
    %5440 = vmatmul.mubr.bf16.gmra.mrb[0].mxu0 %v3970
    %v5441 = vpop.f32.mrb[0].mxu0
    %v5442 = vadd.f32 0.0, %v5441
    %v5443 = vpop.f32.mrb[0].mxu0
    %v5444 = vpop.f32.mrb[0].mxu0
    %v5445 = vadd.f32 0.0, %v5444
    %v5446 = vpop.f32.mrb[0].mxu0
    %5447 = vmatprep.mubr.bf16.mxu0 0
    %5448 = vmatmul.mubr.bf16.gmra.mrb[0].mxu0 %v2562
    %v5449 = vpop.f32.mrb[0].mxu0
    %v5450 = vadd.f32 0.0, %v5449
    %v5451 = vpop.f32.mrb[0].mxu0
    %v5452 = vpop.f32.mrb[0].mxu0
    %v5453 = vadd.f32 0.0, %v5452
    %v5454 = vpop.f32.mrb[0].mxu0
    %5455 = vmatprep.mubr.bf16.mxu0 0
    %5456 = vmatmul.mubr.bf16.gmra.mrb[0].mxu0 %v2613
    %v5457 = vpop.f32.mrb[0].mxu0
    %v5458 = vadd.f32 0.0, %v5457
    %v5459 = vpop.f32.mrb[0].mxu0
    %v5460 = vpop.f32.mrb[0].mxu0
    %v5461 = vadd.f32 0.0, %v5460
    %v5462 = vpop.f32.mrb[0].mxu0
    %5463 = vmatprep.mubr.bf16.mxu0 0
    %5464 = vmatmul.mubr.bf16.gmra.mrb[0].mxu0 %v2616
    %v5465 = vpop.f32.mrb[0].mxu0
    %v5466 = vadd.f32 0.0, %v5465
    %v5467 = vpop.f32.mrb[0].mxu0
    %v5468 = vpop.f32.mrb[0].mxu0
    %v5469 = vadd.f32 0.0, %v5468
    %v5470 = vpop.f32.mrb[0].mxu0
    %5471 = vmatprep.mubr.bf16.mxu0 0
    %5472 = vmatmul.mubr.bf16.gmra.mrb[0].mxu0 %v2619
    %v5473 = vpop.f32.mrb[0].mxu0
    %v5474 = vadd.f32 0.0, %v5473
    %v5475 = vpop.f32.mrb[0].mxu0
    %v5476 = vpop.f32.mrb[0].mxu0
    %v5477 = vadd.f32 0.0, %v5476
    %v5478 = vpop.f32.mrb[0].mxu0
    %5479 = vmatprep.mubr.bf16.mxu0 0
    %5480 = vmatmul.mubr.bf16.gmra.mrb[0].mxu0 %v2622
    %v5481 = vpop.f32.mrb[0].mxu0
    %v5482 = vadd.f32 0.0, %v5481
    %v5483 = vpop.f32.mrb[0].mxu0
    %v5484 = vpop.f32.mrb[0].mxu0
    %v5485 = vadd.f32 0.0, %v5484
    %v5486 = vpop.f32.mrb[0].mxu0
    %5487 = vmatprep.mubr.bf16.mxu0 0
    %5488 = vmatmul.mubr.bf16.gmra.mrb[0].mxu0 %v2625
    %v5489 = vpop.f32.mrb[0].mxu0
    %v5490 = vadd.f32 0.0, %v5489
    %v5491 = vpop.f32.mrb[0].mxu0
    %v5492 = vpop.f32.mrb[0].mxu0
    %v5493 = vadd.f32 0.0, %v5492
    %v5494 = vpop.f32.mrb[0].mxu0
    %5495 = vmatprep.mubr.bf16.mxu0 0
    %5496 = vmatmul.mubr.bf16.gmra.mrb[0].mxu0 %v2628
    %v5497 = vpop.f32.mrb[0].mxu0
    %v5498 = vadd.f32 0.0, %v5497
    %v5499 = vpop.f32.mrb[0].mxu0
    %v5500 = vpop.f32.mrb[0].mxu0
    %v5501 = vadd.f32 0.0, %v5500
    %v5502 = vpop.f32.mrb[0].mxu0
    %5503 = vmatprep.mubr.bf16.mxu0 0
    %5504 = vmatmul.mubr.bf16.gmra.mrb[0].mxu0 %v2631
    %v5505 = vpop.f32.mrb[0].mxu0
    %v5506 = vadd.f32 0.0, %v5505
    %v5507 = vpop.f32.mrb[0].mxu0
    %v5508 = vpop.f32.mrb[0].mxu0
    %v5509 = vadd.f32 0.0, %v5508
    %v5510 = vpop.f32.mrb[0].mxu0
    %5511 = vmatprep.mubr.bf16.mxu0 0
    %5512 = vmatmul.mubr.bf16.gmra.mrb[0].mxu0 %v2634
    %v5513 = vpop.f32.mrb[0].mxu0
    %v5514 = vadd.f32 0.0, %v5513
    %v5515 = vpop.f32.mrb[0].mxu0
    %v5516 = vpop.f32.mrb[0].mxu0
    %v5517 = vadd.f32 0.0, %v5516
    %v5518 = vpop.f32.mrb[0].mxu0
    %5519 = vmatprep.mubr.bf16.mxu0 0
    %5520 = vmatmul.mubr.bf16.gmra.mrb[0].mxu0 %v2637
    %v5521 = vpop.f32.mrb[0].mxu0
    %v5522 = vadd.f32 0.0, %v5521
    %v5523 = vpop.f32.mrb[0].mxu0
    %v5524 = vpop.f32.mrb[0].mxu0
    %v5525 = vadd.f32 0.0, %v5524
    %v5526 = vpop.f32.mrb[0].mxu0
    %5527 = vmatprep.mubr.bf16.mxu0 0
    %5528 = vmatmul.mubr.bf16.gmra.mrb[0].mxu0 %v2640
    %v5529 = vpop.f32.mrb[0].mxu0
    %v5530 = vadd.f32 0.0, %v5529
    %v5531 = vpop.f32.mrb[0].mxu0
    %v5532 = vpop.f32.mrb[0].mxu0
    %v5533 = vadd.f32 0.0, %v5532
    %v5534 = vpop.f32.mrb[0].mxu0
    %5535 = vmatprep.mubr.bf16.mxu0 0
    %5536 = vmatmul.mubr.bf16.gmra.mrb[0].mxu0 %v2643
    %v5537 = vpop.f32.mrb[0].mxu0
    %v5538 = vadd.f32 0.0, %v5537
    %v5539 = vpop.f32.mrb[0].mxu0
    %v5540 = vpop.f32.mrb[0].mxu0
    %v5541 = vadd.f32 0.0, %v5540
    %v5542 = vpop.f32.mrb[0].mxu0
    %5543 = vmatprep.mubr.bf16.mxu0 0
    %5544 = vmatmul.mubr.bf16.gmra.mrb[0].mxu0 %v2646
    %v5545 = vpop.f32.mrb[0].mxu0
    %v5546 = vadd.f32 0.0, %v5545
    %v5547 = vpop.f32.mrb[0].mxu0
    %v5548 = vpop.f32.mrb[0].mxu0
    %v5549 = vadd.f32 0.0, %v5548
    %v5550 = vpop.f32.mrb[0].mxu0
    %5551 = vmatprep.mubr.bf16.mxu0 0
    %5552 = vmatmul.mubr.bf16.gmra.mrb[0].mxu0 %v2649
    %v5553 = vpop.f32.mrb[0].mxu0
    %v5554 = vadd.f32 0.0, %v5553
    %v5555 = vpop.f32.mrb[0].mxu0
    %v5556 = vpop.f32.mrb[0].mxu0
    %v5557 = vadd.f32 0.0, %v5556
    %v5558 = vpop.f32.mrb[0].mxu0
    %5559 = vmatprep.mubr.bf16.mxu0 0
    %5560 = vmatmul.mubr.bf16.gmra.mrb[0].mxu0 %v2652
    %v5561 = vpop.f32.mrb[0].mxu0
    %v5562 = vadd.f32 0.0, %v5561
    %v5563 = vpop.f32.mrb[0].mxu0
    %v5564 = vpop.f32.mrb[0].mxu0
    %v5565 = vadd.f32 0.0, %v5564
    %v5566 = vpop.f32.mrb[0].mxu0
    %5567 = vmatprep.mubr.bf16.mxu0 0
    %5568 = vmatmul.mubr.bf16.gmra.mrb[0].mxu0 %v3973
    %v5569 = vpop.f32.mrb[0].mxu0
    %v5570 = vadd.f32 0.0, %v5569
    %v5571 = vpop.f32.mrb[0].mxu0
    %v5572 = vpop.f32.mrb[0].mxu0
    %v5573 = vadd.f32 0.0, %v5572
    %v5574 = vpop.f32.mrb[0].mxu0
    %5575 = vmatprep.mubr.bf16.mxu0 0
    %5576 = vmatmul.mubr.bf16.gmra.mrb[0].mxu0 %v2562
    %v5577 = vpop.f32.mrb[0].mxu0
    %v5578 = vadd.f32 0.0, %v5577
    %v5579 = vpop.f32.mrb[0].mxu0
    %v5580 = vpop.f32.mrb[0].mxu0
    %v5581 = vadd.f32 0.0, %v5580
    %v5582 = vpop.f32.mrb[0].mxu0
    %5583 = vdwg.mxu0
    %v5584 = vadd.f32 %v5166, %v5330
    %v5585 = vadd.f32 %v5167, %v5333
    %v5586 = vadd.f32 %v5168, %v5338
    %v5587 = vadd.f32 %v5169, %v5341
    %v5588 = vadd.f32 %v5170, %v5346
    %v5589 = vadd.f32 %v5171, %v5349
    %v5590 = vadd.f32 %v5172, %v5354
    %v5591 = vadd.f32 %v5173, %v5357
    %v5592 = vadd.f32 %v5174, %v5362
    %v5593 = vadd.f32 %v5175, %v5365
    %v5594 = vadd.f32 %v5176, %v5370
    %v5595 = vadd.f32 %v5177, %v5373
    %v5596 = vadd.f32 %v5178, %v5378
    %v5597 = vadd.f32 %v5179, %v5381
    %v5598 = vadd.f32 %v5180, %v5386
    %v5599 = vadd.f32 %v5181, %v5389
    %v5600 = vadd.f32 %v5182, %v5394
    %v5601 = vadd.f32 %v5183, %v5397
    %v5602 = vadd.f32 %v5184, %v5402
    %v5603 = vadd.f32 %v5185, %v5405
    %v5604 = vadd.f32 %v5186, %v5410
    %v5605 = vadd.f32 %v5187, %v5413
    %v5606 = vadd.f32 %v5188, %v5418
    %v5607 = vadd.f32 %v5189, %v5421
    %v5608 = vadd.f32 %v5190, %v5426
    %v5609 = vadd.f32 %v5191, %v5429
    %v5610 = vadd.f32 %v5192, %v5434
    %v5611 = vadd.f32 %v5193, %v5437
    %v5612 = vadd.f32 %v5194, %v5442
    %v5613 = vadd.f32 %v5195, %v5445
    %v5614 = vadd.f32 %v5196, %v5450
    %v5615 = vadd.f32 %v5197, %v5453
    %v5616 = vadd.f32 %v5198, %v5458
    %v5617 = vadd.f32 %v5199, %v5461
    %v5618 = vadd.f32 %v5200, %v5466
    %v5619 = vadd.f32 %v5201, %v5469
    %v5620 = vadd.f32 %v5202, %v5474
    %v5621 = vadd.f32 %v5203, %v5477
    %v5622 = vadd.f32 %v5204, %v5482
    %v5623 = vadd.f32 %v5205, %v5485
    %v5624 = vadd.f32 %v5206, %v5490
    %v5625 = vadd.f32 %v5207, %v5493
    %v5626 = vadd.f32 %v5208, %v5498
    %v5627 = vadd.f32 %v5209, %v5501
    %v5628 = vadd.f32 %v5210, %v5506
    %v5629 = vadd.f32 %v5211, %v5509
    %v5630 = vadd.f32 %v5212, %v5514
    %v5631 = vadd.f32 %v5213, %v5517
    %v5632 = vadd.f32 %v5214, %v5522
    %v5633 = vadd.f32 %v5215, %v5525
    %v5634 = vadd.f32 %v5216, %v5530
    %v5635 = vadd.f32 %v5217, %v5533
    %v5636 = vadd.f32 %v5218, %v5538
    %v5637 = vadd.f32 %v5219, %v5541
    %v5638 = vadd.f32 %v5220, %v5546
    %v5639 = vadd.f32 %v5221, %v5549
    %v5640 = vadd.f32 %v5222, %v5554
    %v5641 = vadd.f32 %v5223, %v5557
    %v5642 = vadd.f32 %v5224, %v5562
    %v5643 = vadd.f32 %v5225, %v5565
    %v5644 = vadd.f32 %v5226, %v5570
    %v5645 = vadd.f32 %v5227, %v5573
    %v5646 = vadd.f32 %v5228, %v5578
    %v5647 = vadd.f32 %v5229, %v5581
    %v5648 = vld [vmem:[%s8] sm:$0x1]
    %v5650 = vlaneseq
    %v5651 = vshrl.u32 %v5650, 7
    %v5652 = vsub.s32 0, %v5651
    %v5653 = vrot.slane %v5648, %v5652
    %v5655 = vadd.f32 %v5584, %v5653
    %v5656 = vadd.f32 %v5585, %v5653
    %v5657 = vadd.f32 %v5586, %v5653
    %v5658 = vadd.f32 %v5587, %v5653
    %v5659 = vadd.f32 %v5588, %v5653
    %v5660 = vadd.f32 %v5589, %v5653
    %v5661 = vadd.f32 %v5590, %v5653
    %v5662 = vadd.f32 %v5591, %v5653
    %v5663 = vadd.f32 %v5592, %v5653
    %v5664 = vadd.f32 %v5593, %v5653
    %v5665 = vadd.f32 %v5594, %v5653
    %v5666 = vadd.f32 %v5595, %v5653
    %v5667 = vadd.f32 %v5596, %v5653
    %v5668 = vadd.f32 %v5597, %v5653
    %v5669 = vadd.f32 %v5598, %v5653
    %v5670 = vadd.f32 %v5599, %v5653
    %v5671 = vadd.f32 %v5600, %v5653
    %v5672 = vadd.f32 %v5601, %v5653
    %v5673 = vadd.f32 %v5602, %v5653
    %v5674 = vadd.f32 %v5603, %v5653
    %v5675 = vadd.f32 %v5604, %v5653
    %v5676 = vadd.f32 %v5605, %v5653
    %v5677 = vadd.f32 %v5606, %v5653
    %v5678 = vadd.f32 %v5607, %v5653
    %v5679 = vadd.f32 %v5608, %v5653
    %v5680 = vadd.f32 %v5609, %v5653
    %v5681 = vadd.f32 %v5610, %v5653
    %v5682 = vadd.f32 %v5611, %v5653
    %v5683 = vadd.f32 %v5612, %v5653
    %v5684 = vadd.f32 %v5613, %v5653
    %v5685 = vadd.f32 %v5614, %v5653
    %v5686 = vadd.f32 %v5615, %v5653
    %v5687 = vadd.f32 %v5616, %v5653
    %v5688 = vadd.f32 %v5617, %v5653
    %v5689 = vadd.f32 %v5618, %v5653
    %v5690 = vadd.f32 %v5619, %v5653
    %v5691 = vadd.f32 %v5620, %v5653
    %v5692 = vadd.f32 %v5621, %v5653
    %v5693 = vadd.f32 %v5622, %v5653
    %v5694 = vadd.f32 %v5623, %v5653
    %v5695 = vadd.f32 %v5624, %v5653
    %v5696 = vadd.f32 %v5625, %v5653
    %v5697 = vadd.f32 %v5626, %v5653
    %v5698 = vadd.f32 %v5627, %v5653
    %v5699 = vadd.f32 %v5628, %v5653
    %v5700 = vadd.f32 %v5629, %v5653
    %v5701 = vadd.f32 %v5630, %v5653
    %v5702 = vadd.f32 %v5631, %v5653
    %v5703 = vadd.f32 %v5632, %v5653
    %v5704 = vadd.f32 %v5633, %v5653
    %v5705 = vadd.f32 %v5634, %v5653
    %v5706 = vadd.f32 %v5635, %v5653
    %v5707 = vadd.f32 %v5636, %v5653
    %v5708 = vadd.f32 %v5637, %v5653
    %v5709 = vadd.f32 %v5638, %v5653
    %v5710 = vadd.f32 %v5639, %v5653
    %v5711 = vadd.f32 %v5640, %v5653
    %v5712 = vadd.f32 %v5641, %v5653
    %v5713 = vadd.f32 %v5642, %v5653
    %v5714 = vadd.f32 %v5643, %v5653
    %v5715 = vadd.f32 %v5644, %v5653
    %v5716 = vadd.f32 %v5645, %v5653
    %v5717 = vadd.f32 %v5646, %v5653
    %v5718 = vadd.f32 %v5647, %v5653
    %v5719 = vld [vmem:[%s9] sm:$0x1]
    %v5721 = vlaneseq
    %v5722 = vshrl.u32 %v5721, 7
    %v5723 = vsub.s32 0, %v5722
    %v5724 = vrot.slane %v5719, %v5723
    %v5726 = vmul.f32 %v5655, %v5724
    %v5727 = vmul.f32 %v5656, %v5724
    %v5728 = vmul.f32 %v5657, %v5724
    %v5729 = vmul.f32 %v5658, %v5724
    %v5730 = vmul.f32 %v5659, %v5724
    %v5731 = vmul.f32 %v5660, %v5724
    %v5732 = vmul.f32 %v5661, %v5724
    %v5733 = vmul.f32 %v5662, %v5724
    %v5734 = vmul.f32 %v5663, %v5724
    %v5735 = vmul.f32 %v5664, %v5724
    %v5736 = vmul.f32 %v5665, %v5724
    %v5737 = vmul.f32 %v5666, %v5724
    %v5738 = vmul.f32 %v5667, %v5724
    %v5739 = vmul.f32 %v5668, %v5724
    %v5740 = vmul.f32 %v5669, %v5724
    %v5741 = vmul.f32 %v5670, %v5724
    %v5742 = vmul.f32 %v5671, %v5724
    %v5743 = vmul.f32 %v5672, %v5724
    %v5744 = vmul.f32 %v5673, %v5724
    %v5745 = vmul.f32 %v5674, %v5724
    %v5746 = vmul.f32 %v5675, %v5724
    %v5747 = vmul.f32 %v5676, %v5724
    %v5748 = vmul.f32 %v5677, %v5724
    %v5749 = vmul.f32 %v5678, %v5724
    %v5750 = vmul.f32 %v5679, %v5724
    %v5751 = vmul.f32 %v5680, %v5724
    %v5752 = vmul.f32 %v5681, %v5724
    %v5753 = vmul.f32 %v5682, %v5724
    %v5754 = vmul.f32 %v5683, %v5724
    %v5755 = vmul.f32 %v5684, %v5724
    %v5756 = vmul.f32 %v5685, %v5724
    %v5757 = vmul.f32 %v5686, %v5724
    %v5758 = vmul.f32 %v5687, %v5724
    %v5759 = vmul.f32 %v5688, %v5724
    %v5760 = vmul.f32 %v5689, %v5724
    %v5761 = vmul.f32 %v5690, %v5724
    %v5762 = vmul.f32 %v5691, %v5724
    %v5763 = vmul.f32 %v5692, %v5724
    %v5764 = vmul.f32 %v5693, %v5724
    %v5765 = vmul.f32 %v5694, %v5724
    %v5766 = vmul.f32 %v5695, %v5724
    %v5767 = vmul.f32 %v5696, %v5724
    %v5768 = vmul.f32 %v5697, %v5724
    %v5769 = vmul.f32 %v5698, %v5724
    %v5770 = vmul.f32 %v5699, %v5724
    %v5771 = vmul.f32 %v5700, %v5724
    %v5772 = vmul.f32 %v5701, %v5724
    %v5773 = vmul.f32 %v5702, %v5724
    %v5774 = vmul.f32 %v5703, %v5724
    %v5775 = vmul.f32 %v5704, %v5724
    %v5776 = vmul.f32 %v5705, %v5724
    %v5777 = vmul.f32 %v5706, %v5724
    %v5778 = vmul.f32 %v5707, %v5724
    %v5779 = vmul.f32 %v5708, %v5724
    %v5780 = vmul.f32 %v5709, %v5724
    %v5781 = vmul.f32 %v5710, %v5724
    %v5782 = vmul.f32 %v5711, %v5724
    %v5783 = vmul.f32 %v5712, %v5724
    %v5784 = vmul.f32 %v5713, %v5724
    %v5785 = vmul.f32 %v5714, %v5724
    %v5786 = vmul.f32 %v5715, %v5724
    %v5787 = vmul.f32 %v5716, %v5724
    %v5788 = vmul.f32 %v5717, %v5724
    %v5789 = vmul.f32 %v5718, %v5724
    %v5790 = vld [vmem:[%s10] sm:$0x1]
    %v5792 = vlaneseq
    %v5793 = vshrl.u32 %v5792, 7
    %v5794 = vsub.s32 0, %v5793
    %v5795 = vrot.slane %v5790, %v5794
    %v5797 = vadd.f32 %v5726, %v5795
    %v5798 = vadd.f32 %v5727, %v5795
    %v5799 = vadd.f32 %v5728, %v5795
    %v5800 = vadd.f32 %v5729, %v5795
    %v5801 = vadd.f32 %v5730, %v5795
    %v5802 = vadd.f32 %v5731, %v5795
    %v5803 = vadd.f32 %v5732, %v5795
    %v5804 = vadd.f32 %v5733, %v5795
    %v5805 = vadd.f32 %v5734, %v5795
    %v5806 = vadd.f32 %v5735, %v5795
    %v5807 = vadd.f32 %v5736, %v5795
    %v5808 = vadd.f32 %v5737, %v5795
    %v5809 = vadd.f32 %v5738, %v5795
    %v5810 = vadd.f32 %v5739, %v5795
    %v5811 = vadd.f32 %v5740, %v5795
    %v5812 = vadd.f32 %v5741, %v5795
    %v5813 = vadd.f32 %v5742, %v5795
    %v5814 = vadd.f32 %v5743, %v5795
    %v5815 = vadd.f32 %v5744, %v5795
    %v5816 = vadd.f32 %v5745, %v5795
    %v5817 = vadd.f32 %v5746, %v5795
    %v5818 = vadd.f32 %v5747, %v5795
    %v5819 = vadd.f32 %v5748, %v5795
    %v5820 = vadd.f32 %v5749, %v5795
    %v5821 = vadd.f32 %v5750, %v5795
    %v5822 = vadd.f32 %v5751, %v5795
    %v5823 = vadd.f32 %v5752, %v5795
    %v5824 = vadd.f32 %v5753, %v5795
    %v5825 = vadd.f32 %v5754, %v5795
    %v5826 = vadd.f32 %v5755, %v5795
    %v5827 = vadd.f32 %v5756, %v5795
    %v5828 = vadd.f32 %v5757, %v5795
    %v5829 = vadd.f32 %v5758, %v5795
    %v5830 = vadd.f32 %v5759, %v5795
    %v5831 = vadd.f32 %v5760, %v5795
    %v5832 = vadd.f32 %v5761, %v5795
    %v5833 = vadd.f32 %v5762, %v5795
    %v5834 = vadd.f32 %v5763, %v5795
    %v5835 = vadd.f32 %v5764, %v5795
    %v5836 = vadd.f32 %v5765, %v5795
    %v5837 = vadd.f32 %v5766, %v5795
    %v5838 = vadd.f32 %v5767, %v5795
    %v5839 = vadd.f32 %v5768, %v5795
    %v5840 = vadd.f32 %v5769, %v5795
    %v5841 = vadd.f32 %v5770, %v5795
    %v5842 = vadd.f32 %v5771, %v5795
    %v5843 = vadd.f32 %v5772, %v5795
    %v5844 = vadd.f32 %v5773, %v5795
    %v5845 = vadd.f32 %v5774, %v5795
    %v5846 = vadd.f32 %v5775, %v5795
    %v5847 = vadd.f32 %v5776, %v5795
    %v5848 = vadd.f32 %v5777, %v5795
    %v5849 = vadd.f32 %v5778, %v5795
    %v5850 = vadd.f32 %v5779, %v5795
    %v5851 = vadd.f32 %v5780, %v5795
    %v5852 = vadd.f32 %v5781, %v5795
    %v5853 = vadd.f32 %v5782, %v5795
    %v5854 = vadd.f32 %v5783, %v5795
    %v5855 = vadd.f32 %v5784, %v5795
    %v5856 = vadd.f32 %v5785, %v5795
    %v5857 = vadd.f32 %v5786, %v5795
    %v5858 = vadd.f32 %v5787, %v5795
    %v5859 = vadd.f32 %v5788, %v5795
    %v5860 = vadd.f32 %v5789, %v5795
    %v5861 = vmax.f32 %v5797, 0.0
    %v5862 = vmax.f32 %v5798, 0.0
    %v5863 = vmax.f32 %v5799, 0.0
    %v5864 = vmax.f32 %v5800, 0.0
    %v5865 = vmax.f32 %v5801, 0.0
    %v5866 = vmax.f32 %v5802, 0.0
    %v5867 = vmax.f32 %v5803, 0.0
    %v5868 = vmax.f32 %v5804, 0.0
    %v5869 = vmax.f32 %v5805, 0.0
    %v5870 = vmax.f32 %v5806, 0.0
    %v5871 = vmax.f32 %v5807, 0.0
    %v5872 = vmax.f32 %v5808, 0.0
    %v5873 = vmax.f32 %v5809, 0.0
    %v5874 = vmax.f32 %v5810, 0.0
    %v5875 = vmax.f32 %v5811, 0.0
    %v5876 = vmax.f32 %v5812, 0.0
    %v5877 = vmax.f32 %v5813, 0.0
    %v5878 = vmax.f32 %v5814, 0.0
    %v5879 = vmax.f32 %v5815, 0.0
    %v5880 = vmax.f32 %v5816, 0.0
    %v5881 = vmax.f32 %v5817, 0.0
    %v5882 = vmax.f32 %v5818, 0.0
    %v5883 = vmax.f32 %v5819, 0.0
    %v5884 = vmax.f32 %v5820, 0.0
    %v5885 = vmax.f32 %v5821, 0.0
    %v5886 = vmax.f32 %v5822, 0.0
    %v5887 = vmax.f32 %v5823, 0.0
    %v5888 = vmax.f32 %v5824, 0.0
    %v5889 = vmax.f32 %v5825, 0.0
    %v5890 = vmax.f32 %v5826, 0.0
    %v5891 = vmax.f32 %v5827, 0.0
    %v5892 = vmax.f32 %v5828, 0.0
    %v5893 = vmax.f32 %v5829, 0.0
    %v5894 = vmax.f32 %v5830, 0.0
    %v5895 = vmax.f32 %v5831, 0.0
    %v5896 = vmax.f32 %v5832, 0.0
    %v5897 = vmax.f32 %v5833, 0.0
    %v5898 = vmax.f32 %v5834, 0.0
    %v5899 = vmax.f32 %v5835, 0.0
    %v5900 = vmax.f32 %v5836, 0.0
    %v5901 = vmax.f32 %v5837, 0.0
    %v5902 = vmax.f32 %v5838, 0.0
    %v5903 = vmax.f32 %v5839, 0.0
    %v5904 = vmax.f32 %v5840, 0.0
    %v5905 = vmax.f32 %v5841, 0.0
    %v5906 = vmax.f32 %v5842, 0.0
    %v5907 = vmax.f32 %v5843, 0.0
    %v5908 = vmax.f32 %v5844, 0.0
    %v5909 = vmax.f32 %v5845, 0.0
    %v5910 = vmax.f32 %v5846, 0.0
    %v5911 = vmax.f32 %v5847, 0.0
    %v5912 = vmax.f32 %v5848, 0.0
    %v5913 = vmax.f32 %v5849, 0.0
    %v5914 = vmax.f32 %v5850, 0.0
    %v5915 = vmax.f32 %v5851, 0.0
    %v5916 = vmax.f32 %v5852, 0.0
    %v5917 = vmax.f32 %v5853, 0.0
    %v5918 = vmax.f32 %v5854, 0.0
    %v5919 = vmax.f32 %v5855, 0.0
    %v5920 = vmax.f32 %v5856, 0.0
    %v5921 = vmax.f32 %v5857, 0.0
    %v5922 = vmax.f32 %v5858, 0.0
    %v5923 = vmax.f32 %v5859, 0.0
    %v5924 = vmax.f32 %v5860, 0.0
    %v5925 = vpack.c.bf16 %v5862, %v5861
    %v5926 = vpack.c.bf16 %v5864, %v5863
    %v5927 = vpack.c.bf16 %v5866, %v5865
    %v5928 = vpack.c.bf16 %v5868, %v5867
    %v5929 = vpack.c.bf16 %v5870, %v5869
    %v5930 = vpack.c.bf16 %v5872, %v5871
    %v5931 = vpack.c.bf16 %v5874, %v5873
    %v5932 = vpack.c.bf16 %v5876, %v5875
    %v5933 = vpack.c.bf16 %v5878, %v5877
    %v5934 = vpack.c.bf16 %v5880, %v5879
    %v5935 = vpack.c.bf16 %v5882, %v5881
    %v5936 = vpack.c.bf16 %v5884, %v5883
    %v5937 = vpack.c.bf16 %v5886, %v5885
    %v5938 = vpack.c.bf16 %v5888, %v5887
    %v5939 = vpack.c.bf16 %v5890, %v5889
    %v5940 = vpack.c.bf16 %v5892, %v5891
    %v5941 = vpack.c.bf16 %v5894, %v5893
    %v5942 = vpack.c.bf16 %v5896, %v5895
    %v5943 = vpack.c.bf16 %v5898, %v5897
    %v5944 = vpack.c.bf16 %v5900, %v5899
    %v5945 = vpack.c.bf16 %v5902, %v5901
    %v5946 = vpack.c.bf16 %v5904, %v5903
    %v5947 = vpack.c.bf16 %v5906, %v5905
    %v5948 = vpack.c.bf16 %v5908, %v5907
    %v5949 = vpack.c.bf16 %v5910, %v5909
    %v5950 = vpack.c.bf16 %v5912, %v5911
    %v5951 = vpack.c.bf16 %v5914, %v5913
    %v5952 = vpack.c.bf16 %v5916, %v5915
    %v5953 = vpack.c.bf16 %v5918, %v5917
    %v5954 = vpack.c.bf16 %v5920, %v5919
    %v5955 = vpack.c.bf16 %v5922, %v5921
    %v5956 = vpack.c.bf16 %v5924, %v5923
    %v5957 = vld [vmem:[#allocation8] sm:$0xf]
    %v5958 = vld [vmem:[#allocation8 + $0x4] sm:$0xf]
    %v5959 = vld [vmem:[#allocation8 + $0x8] sm:$0xf]
    %v5960 = vld [vmem:[#allocation8 + $0xc] sm:$0xf]
    %v5961 = vld [vmem:[#allocation8 + $0x10] sm:$0xf]
    %v5962 = vld [vmem:[#allocation8 + $0x14] sm:$0xf]
    %v5963 = vld [vmem:[#allocation8 + $0x18] sm:$0xf]
    %v5964 = vld [vmem:[#allocation8 + $0x1c] sm:$0xf]
    %v5965 = vld [vmem:[#allocation8 + $0x20] sm:$0xf]
    %v5966 = vld [vmem:[#allocation8 + $0x24] sm:$0xf]
    %v5967 = vld [vmem:[#allocation8 + $0x28] sm:$0xf]
    %v5968 = vld [vmem:[#allocation8 + $0x2c] sm:$0xf]
    %v5969 = vld [vmem:[#allocation8 + $0x30] sm:$0xf]
    %v5970 = vld [vmem:[#allocation8 + $0x34] sm:$0xf]
    %v5971 = vld [vmem:[#allocation8 + $0x38] sm:$0xf]
    %v5972 = vld [vmem:[#allocation8 + $0x3c] sm:$0xf]
    %v5973 = vld [vmem:[%s12] sm:$0x1]
    %v5975 = vlaneseq
    %v5976 = vshrl.u32 %v5975, 7
    %v5977 = vsub.s32 0, %v5976
    %v5978 = vrot.slane %v5973, %v5977
    %v5996 = vunpack.c.l.b16 %v5957
    %v5997 = vunpack.c.l.b16 %v5958
    %v5998 = vunpack.c.l.b16 %v5959
    %v5999 = vunpack.c.l.b16 %v5960
    %v6000 = vunpack.c.l.b16 %v5961
    %v6001 = vunpack.c.l.b16 %v5962
    %v6002 = vunpack.c.l.b16 %v5963
    %v6003 = vunpack.c.l.b16 %v5964
    %v6004 = vunpack.c.l.b16 %v5965
    %v6005 = vunpack.c.l.b16 %v5966
    %v6006 = vunpack.c.l.b16 %v5967
    %v6007 = vunpack.c.l.b16 %v5968
    %v6008 = vunpack.c.l.b16 %v5969
    %v6009 = vunpack.c.l.b16 %v5970
    %v6010 = vunpack.c.l.b16 %v5971
    %v6011 = vunpack.c.l.b16 %v5972
    %v6012 = vpack.c.b16 %v5997, %v5996
    %v6013 = vpack.c.b16 %v5999, %v5998
    %v6014 = vpack.c.b16 %v6001, %v6000
    %v6015 = vpack.c.b16 %v6003, %v6002
    %v6016 = vpack.c.b16 %v6005, %v6004
    %v6017 = vpack.c.b16 %v6007, %v6006
    %v6018 = vpack.c.b16 %v6009, %v6008
    %v6019 = vpack.c.b16 %v6011, %v6010
    %6028 = vmatprep.subr.bf16.mxu0 0
    %6029 = vmatpush1.bf16.msra.mxu0 %v6012
    %6030 = vmatprep.subr.bf16.mxu0 0
    %6031 = vmatpush1.bf16.msra.mxu0 %v6013
    %6032 = vmatprep.subr.bf16.mxu0 0
    %6033 = vmatpush1.bf16.msra.mxu0 %v6014
    %6034 = vmatprep.subr.bf16.mxu0 0
    %6035 = vmatpush1.bf16.msra.mxu0 %v6015
    %6036 = vmatprep.subr.bf16.mxu0 0
    %6037 = vmatpush1.bf16.msra.mxu0 %v6016
    %6038 = vmatprep.subr.bf16.mxu0 0
    %6039 = vmatpush1.bf16.msra.mxu0 %v6017
    %6040 = vmatprep.subr.bf16.mxu0 0
    %6041 = vmatpush1.bf16.msra.mxu0 %v6018
    %6042 = vmatprep.subr.bf16.mxu0 0
    %6043 = vmatpush1.bf16.msra.mxu0 %v6019
    %6044 = vmatprep.subr.bf16.mxu0 0
    %6045 = vmatpush1.bf16.msra.mxu0 0
    %6046 = vmatprep.subr.bf16.mxu0 0
    %6047 = vmatpush1.bf16.msra.mxu0 0
    %6048 = vmatprep.subr.bf16.mxu0 0
    %6049 = vmatpush1.bf16.msra.mxu0 0
    %6050 = vmatprep.subr.bf16.mxu0 0
    %6051 = vmatpush1.bf16.msra.mxu0 0
    %6052 = vmatprep.subr.bf16.mxu0 0
    %6053 = vmatpush1.bf16.msra.mxu0 0
    %6054 = vmatprep.subr.bf16.mxu0 0
    %6055 = vmatpush1.bf16.msra.mxu0 0
    %6056 = vmatprep.subr.bf16.mxu0 0
    %6057 = vmatpush1.bf16.msra.mxu0 0
    %6058 = vmatprep.subr.bf16.mxu0 0
    %6059 = vmatpush1.bf16.msra.mxu0 0
    %6060 = vmatprep.mubr.bf16.mxu0 0
    %6061 = vmatmul.mubr.bf16.gmra.mrb[0].mxu0 %v5925
    %v6062 = vpop.f32.mrb[0].mxu0
    %v6063 = vadd.f32 %v5978, %v6062
    %v6064 = vpop.f32.mrb[0].mxu0
    %v6065 = vpop.f32.mrb[0].mxu0
    %v6066 = vadd.f32 %v5978, %v6065
    %v6067 = vpop.f32.mrb[0].mxu0
    %6068 = vmatprep.mubr.bf16.mxu0 0
    %6069 = vmatmul.mubr.bf16.gmra.mrb[0].mxu0 %v5926
    %v6070 = vpop.f32.mrb[0].mxu0
    %v6071 = vadd.f32 %v5978, %v6070
    %v6072 = vpop.f32.mrb[0].mxu0
    %v6073 = vpop.f32.mrb[0].mxu0
    %v6074 = vadd.f32 %v5978, %v6073
    %v6075 = vpop.f32.mrb[0].mxu0
    %6076 = vmatprep.mubr.bf16.mxu0 0
    %6077 = vmatmul.mubr.bf16.gmra.mrb[0].mxu0 %v5927
    %v6078 = vpop.f32.mrb[0].mxu0
    %v6079 = vadd.f32 %v5978, %v6078
    %v6080 = vpop.f32.mrb[0].mxu0
    %v6081 = vpop.f32.mrb[0].mxu0
    %v6082 = vadd.f32 %v5978, %v6081
    %v6083 = vpop.f32.mrb[0].mxu0
    %6084 = vmatprep.mubr.bf16.mxu0 0
    %6085 = vmatmul.mubr.bf16.gmra.mrb[0].mxu0 %v5928
    %v6086 = vpop.f32.mrb[0].mxu0
    %v6087 = vadd.f32 %v5978, %v6086
    %v6088 = vpop.f32.mrb[0].mxu0
    %v6089 = vpop.f32.mrb[0].mxu0
    %v6090 = vadd.f32 %v5978, %v6089
    %v6091 = vpop.f32.mrb[0].mxu0
    %6092 = vmatprep.mubr.bf16.mxu0 0
    %6093 = vmatmul.mubr.bf16.gmra.mrb[0].mxu0 %v5929
    %v6094 = vpop.f32.mrb[0].mxu0
    %v6095 = vadd.f32 %v5978, %v6094
    %v6096 = vpop.f32.mrb[0].mxu0
    %v6097 = vpop.f32.mrb[0].mxu0
    %v6098 = vadd.f32 %v5978, %v6097
    %v6099 = vpop.f32.mrb[0].mxu0
    %6100 = vmatprep.mubr.bf16.mxu0 0
    %6101 = vmatmul.mubr.bf16.gmra.mrb[0].mxu0 %v5930
    %v6102 = vpop.f32.mrb[0].mxu0
    %v6103 = vadd.f32 %v5978, %v6102
    %v6104 = vpop.f32.mrb[0].mxu0
    %v6105 = vpop.f32.mrb[0].mxu0
    %v6106 = vadd.f32 %v5978, %v6105
    %v6107 = vpop.f32.mrb[0].mxu0
    %6108 = vmatprep.mubr.bf16.mxu0 0
    %6109 = vmatmul.mubr.bf16.gmra.mrb[0].mxu0 %v5931
    %v6110 = vpop.f32.mrb[0].mxu0
    %v6111 = vadd.f32 %v5978, %v6110
    %v6112 = vpop.f32.mrb[0].mxu0
    %v6113 = vpop.f32.mrb[0].mxu0
    %v6114 = vadd.f32 %v5978, %v6113
    %v6115 = vpop.f32.mrb[0].mxu0
    %6116 = vmatprep.mubr.bf16.mxu0 0
    %6117 = vmatmul.mubr.bf16.gmra.mrb[0].mxu0 %v5932
    %v6118 = vpop.f32.mrb[0].mxu0
    %v6119 = vadd.f32 %v5978, %v6118
    %v6120 = vpop.f32.mrb[0].mxu0
    %v6121 = vpop.f32.mrb[0].mxu0
    %v6122 = vadd.f32 %v5978, %v6121
    %v6123 = vpop.f32.mrb[0].mxu0
    %6124 = vmatprep.mubr.bf16.mxu0 0
    %6125 = vmatmul.mubr.bf16.gmra.mrb[0].mxu0 %v5933
    %v6126 = vpop.f32.mrb[0].mxu0
    %v6127 = vadd.f32 %v5978, %v6126
    %v6128 = vpop.f32.mrb[0].mxu0
    %v6129 = vpop.f32.mrb[0].mxu0
    %v6130 = vadd.f32 %v5978, %v6129
    %v6131 = vpop.f32.mrb[0].mxu0
    %6132 = vmatprep.mubr.bf16.mxu0 0
    %6133 = vmatmul.mubr.bf16.gmra.mrb[0].mxu0 %v5934
    %v6134 = vpop.f32.mrb[0].mxu0
    %v6135 = vadd.f32 %v5978, %v6134
    %v6136 = vpop.f32.mrb[0].mxu0
    %v6137 = vpop.f32.mrb[0].mxu0
    %v6138 = vadd.f32 %v5978, %v6137
    %v6139 = vpop.f32.mrb[0].mxu0
    %6140 = vmatprep.mubr.bf16.mxu0 0
    %6141 = vmatmul.mubr.bf16.gmra.mrb[0].mxu0 %v5935
    %v6142 = vpop.f32.mrb[0].mxu0
    %v6143 = vadd.f32 %v5978, %v6142
    %v6144 = vpop.f32.mrb[0].mxu0
    %v6145 = vpop.f32.mrb[0].mxu0
    %v6146 = vadd.f32 %v5978, %v6145
    %v6147 = vpop.f32.mrb[0].mxu0
    %6148 = vmatprep.mubr.bf16.mxu0 0
    %6149 = vmatmul.mubr.bf16.gmra.mrb[0].mxu0 %v5936
    %v6150 = vpop.f32.mrb[0].mxu0
    %v6151 = vadd.f32 %v5978, %v6150
    %v6152 = vpop.f32.mrb[0].mxu0
    %v6153 = vpop.f32.mrb[0].mxu0
    %v6154 = vadd.f32 %v5978, %v6153
    %v6155 = vpop.f32.mrb[0].mxu0
    %6156 = vmatprep.mubr.bf16.mxu0 0
    %6157 = vmatmul.mubr.bf16.gmra.mrb[0].mxu0 %v5937
    %v6158 = vpop.f32.mrb[0].mxu0
    %v6159 = vadd.f32 %v5978, %v6158
    %v6160 = vpop.f32.mrb[0].mxu0
    %v6161 = vpop.f32.mrb[0].mxu0
    %v6162 = vadd.f32 %v5978, %v6161
    %v6163 = vpop.f32.mrb[0].mxu0
    %6164 = vmatprep.mubr.bf16.mxu0 0
    %6165 = vmatmul.mubr.bf16.gmra.mrb[0].mxu0 %v5938
    %v6166 = vpop.f32.mrb[0].mxu0
    %v6167 = vadd.f32 %v5978, %v6166
    %v6168 = vpop.f32.mrb[0].mxu0
    %v6169 = vpop.f32.mrb[0].mxu0
    %v6170 = vadd.f32 %v5978, %v6169
    %v6171 = vpop.f32.mrb[0].mxu0
    %6172 = vmatprep.mubr.bf16.mxu0 0
    %6173 = vmatmul.mubr.bf16.gmra.mrb[0].mxu0 %v5939
    %v6174 = vpop.f32.mrb[0].mxu0
    %v6175 = vadd.f32 %v5978, %v6174
    %v6176 = vpop.f32.mrb[0].mxu0
    %v6177 = vpop.f32.mrb[0].mxu0
    %v6178 = vadd.f32 %v5978, %v6177
    %v6179 = vpop.f32.mrb[0].mxu0
    %6180 = vmatprep.mubr.bf16.mxu0 0
    %6181 = vmatmul.mubr.bf16.gmra.mrb[0].mxu0 %v5940
    %v6182 = vpop.f32.mrb[0].mxu0
    %v6183 = vadd.f32 %v5978, %v6182
    %v6184 = vpop.f32.mrb[0].mxu0
    %v6185 = vpop.f32.mrb[0].mxu0
    %v6186 = vadd.f32 %v5978, %v6185
    %v6187 = vpop.f32.mrb[0].mxu0
    %6188 = vmatprep.mubr.bf16.mxu0 0
    %6189 = vmatmul.mubr.bf16.gmra.mrb[0].mxu0 %v5941
    %v6190 = vpop.f32.mrb[0].mxu0
    %v6191 = vadd.f32 %v5978, %v6190
    %v6192 = vpop.f32.mrb[0].mxu0
    %v6193 = vpop.f32.mrb[0].mxu0
    %v6194 = vadd.f32 %v5978, %v6193
    %v6195 = vpop.f32.mrb[0].mxu0
    %6196 = vmatprep.mubr.bf16.mxu0 0
    %6197 = vmatmul.mubr.bf16.gmra.mrb[0].mxu0 %v5942
    %v6198 = vpop.f32.mrb[0].mxu0
    %v6199 = vadd.f32 %v5978, %v6198
    %v6200 = vpop.f32.mrb[0].mxu0
    %v6201 = vpop.f32.mrb[0].mxu0
    %v6202 = vadd.f32 %v5978, %v6201
    %v6203 = vpop.f32.mrb[0].mxu0
    %6204 = vmatprep.mubr.bf16.mxu0 0
    %6205 = vmatmul.mubr.bf16.gmra.mrb[0].mxu0 %v5943
    %v6206 = vpop.f32.mrb[0].mxu0
    %v6207 = vadd.f32 %v5978, %v6206
    %v6208 = vpop.f32.mrb[0].mxu0
    %v6209 = vpop.f32.mrb[0].mxu0
    %v6210 = vadd.f32 %v5978, %v6209
    %v6211 = vpop.f32.mrb[0].mxu0
    %6212 = vmatprep.mubr.bf16.mxu0 0
    %6213 = vmatmul.mubr.bf16.gmra.mrb[0].mxu0 %v5944
    %v6214 = vpop.f32.mrb[0].mxu0
    %v6215 = vadd.f32 %v5978, %v6214
    %v6216 = vpop.f32.mrb[0].mxu0
    %v6217 = vpop.f32.mrb[0].mxu0
    %v6218 = vadd.f32 %v5978, %v6217
    %v6219 = vpop.f32.mrb[0].mxu0
    %6220 = vmatprep.mubr.bf16.mxu0 0
    %6221 = vmatmul.mubr.bf16.gmra.mrb[0].mxu0 %v5945
    %v6222 = vpop.f32.mrb[0].mxu0
    %v6223 = vadd.f32 %v5978, %v6222
    %v6224 = vpop.f32.mrb[0].mxu0
    %v6225 = vpop.f32.mrb[0].mxu0
    %v6226 = vadd.f32 %v5978, %v6225
    %v6227 = vpop.f32.mrb[0].mxu0
    %6228 = vmatprep.mubr.bf16.mxu0 0
    %6229 = vmatmul.mubr.bf16.gmra.mrb[0].mxu0 %v5946
    %v6230 = vpop.f32.mrb[0].mxu0
    %v6231 = vadd.f32 %v5978, %v6230
    %v6232 = vpop.f32.mrb[0].mxu0
    %v6233 = vpop.f32.mrb[0].mxu0
    %v6234 = vadd.f32 %v5978, %v6233
    %v6235 = vpop.f32.mrb[0].mxu0
    %6236 = vmatprep.mubr.bf16.mxu0 0
    %6237 = vmatmul.mubr.bf16.gmra.mrb[0].mxu0 %v5947
    %v6238 = vpop.f32.mrb[0].mxu0
    %v6239 = vadd.f32 %v5978, %v6238
    %v6240 = vpop.f32.mrb[0].mxu0
    %v6241 = vpop.f32.mrb[0].mxu0
    %v6242 = vadd.f32 %v5978, %v6241
    %v6243 = vpop.f32.mrb[0].mxu0
    %6244 = vmatprep.mubr.bf16.mxu0 0
    %6245 = vmatmul.mubr.bf16.gmra.mrb[0].mxu0 %v5948
    %v6246 = vpop.f32.mrb[0].mxu0
    %v6247 = vadd.f32 %v5978, %v6246
    %v6248 = vpop.f32.mrb[0].mxu0
    %v6249 = vpop.f32.mrb[0].mxu0
    %v6250 = vadd.f32 %v5978, %v6249
    %v6251 = vpop.f32.mrb[0].mxu0
    %6252 = vmatprep.mubr.bf16.mxu0 0
    %6253 = vmatmul.mubr.bf16.gmra.mrb[0].mxu0 %v5949
    %v6254 = vpop.f32.mrb[0].mxu0
    %v6255 = vadd.f32 %v5978, %v6254
    %v6256 = vpop.f32.mrb[0].mxu0
    %v6257 = vpop.f32.mrb[0].mxu0
    %v6258 = vadd.f32 %v5978, %v6257
    %v6259 = vpop.f32.mrb[0].mxu0
    %6260 = vmatprep.mubr.bf16.mxu0 0
    %6261 = vmatmul.mubr.bf16.gmra.mrb[0].mxu0 %v5950
    %v6262 = vpop.f32.mrb[0].mxu0
    %v6263 = vadd.f32 %v5978, %v6262
    %v6264 = vpop.f32.mrb[0].mxu0
    %v6265 = vpop.f32.mrb[0].mxu0
    %v6266 = vadd.f32 %v5978, %v6265
    %v6267 = vpop.f32.mrb[0].mxu0
    %6268 = vmatprep.mubr.bf16.mxu0 0
    %6269 = vmatmul.mubr.bf16.gmra.mrb[0].mxu0 %v5951
    %v6270 = vpop.f32.mrb[0].mxu0
    %v6271 = vadd.f32 %v5978, %v6270
    %v6272 = vpop.f32.mrb[0].mxu0
    %v6273 = vpop.f32.mrb[0].mxu0
    %v6274 = vadd.f32 %v5978, %v6273
    %v6275 = vpop.f32.mrb[0].mxu0
    %6276 = vmatprep.mubr.bf16.mxu0 0
    %6277 = vmatmul.mubr.bf16.gmra.mrb[0].mxu0 %v5952
    %v6278 = vpop.f32.mrb[0].mxu0
    %v6279 = vadd.f32 %v5978, %v6278
    %v6280 = vpop.f32.mrb[0].mxu0
    %v6281 = vpop.f32.mrb[0].mxu0
    %v6282 = vadd.f32 %v5978, %v6281
    %v6283 = vpop.f32.mrb[0].mxu0
    %6284 = vmatprep.mubr.bf16.mxu0 0
    %6285 = vmatmul.mubr.bf16.gmra.mrb[0].mxu0 %v5953
    %v6286 = vpop.f32.mrb[0].mxu0
    %v6287 = vadd.f32 %v5978, %v6286
    %v6288 = vpop.f32.mrb[0].mxu0
    %v6289 = vpop.f32.mrb[0].mxu0
    %v6290 = vadd.f32 %v5978, %v6289
    %v6291 = vpop.f32.mrb[0].mxu0
    %6292 = vmatprep.mubr.bf16.mxu0 0
    %6293 = vmatmul.mubr.bf16.gmra.mrb[0].mxu0 %v5954
    %v6294 = vpop.f32.mrb[0].mxu0
    %v6295 = vadd.f32 %v5978, %v6294
    %v6296 = vpop.f32.mrb[0].mxu0
    %v6297 = vpop.f32.mrb[0].mxu0
    %v6298 = vadd.f32 %v5978, %v6297
    %v6299 = vpop.f32.mrb[0].mxu0
    %6300 = vmatprep.mubr.bf16.mxu0 0
    %6301 = vmatmul.mubr.bf16.gmra.mrb[0].mxu0 %v5955
    %v6302 = vpop.f32.mrb[0].mxu0
    %v6303 = vadd.f32 %v5978, %v6302
    %v6304 = vpop.f32.mrb[0].mxu0
    %v6305 = vpop.f32.mrb[0].mxu0
    %v6306 = vadd.f32 %v5978, %v6305
    %v6307 = vpop.f32.mrb[0].mxu0
    %6308 = vmatprep.mubr.bf16.mxu0 0
    %6309 = vmatmul.mubr.bf16.gmra.mrb[0].mxu0 %v5956
    %v6310 = vpop.f32.mrb[0].mxu0
    %v6311 = vadd.f32 %v5978, %v6310
    %v6312 = vpop.f32.mrb[0].mxu0
    %v6313 = vpop.f32.mrb[0].mxu0
    %v6314 = vadd.f32 %v5978, %v6313
    %v6315 = vpop.f32.mrb[0].mxu0
    %6316 = vdwg.mxu0
    %v6317 = vpack.c.bf16 %v121, %v120
    %v6318 = vpack.c.bf16 %v123, %v122
    %v6319 = vpack.c.bf16 %v125, %v124
    %v6320 = vpack.c.bf16 %v127, %v126
    %v6321 = vpack.c.bf16 %v129, %v128
    %v6322 = vpack.c.bf16 %v131, %v130
    %v6323 = vpack.c.bf16 %v133, %v132
    %v6324 = vpack.c.bf16 %v135, %v134
    %v6325 = vpack.c.bf16 %v137, %v136
    %v6326 = vpack.c.bf16 %v139, %v138
    %v6327 = vpack.c.bf16 %v141, %v140
    %v6328 = vpack.c.bf16 %v143, %v142
    %v6329 = vpack.c.bf16 %v145, %v144
    %v6330 = vpack.c.bf16 %v147, %v146
    %v6331 = vpack.c.bf16 %v149, %v148
    %v6332 = vpack.c.bf16 %v151, %v150
    %v6333 = vpack.c.bf16 %v153, %v152
    %v6334 = vpack.c.bf16 %v155, %v154
    %v6335 = vpack.c.bf16 %v157, %v156
    %v6336 = vpack.c.bf16 %v159, %v158
    %v6337 = vpack.c.bf16 %v161, %v160
    %v6338 = vpack.c.bf16 %v163, %v162
    %v6339 = vpack.c.bf16 %v165, %v164
    %v6340 = vpack.c.bf16 %v167, %v166
    %v6341 = vpack.c.bf16 %v169, %v168
    %v6342 = vpack.c.bf16 %v171, %v170
    %v6343 = vpack.c.bf16 %v173, %v172
    %v6344 = vpack.c.bf16 %v175, %v174
    %v6345 = vpack.c.bf16 %v177, %v176
    %v6346 = vpack.c.bf16 %v179, %v178
    %v6347 = vpack.c.bf16 %v181, %v180
    %v6348 = vpack.c.bf16 %v183, %v182
    %v6349 = vld [vmem:[#allocation10] sm:$0xf]
    %v6350 = vld [vmem:[#allocation10 + $0x4] sm:$0xf]
    %v6351 = vld [vmem:[#allocation10 + $0x8] sm:$0xf]
    %v6352 = vld [vmem:[#allocation10 + $0xc] sm:$0xf]
    %v6353 = vld [vmem:[#allocation10 + $0x10] sm:$0xf]
    %v6354 = vld [vmem:[#allocation10 + $0x14] sm:$0xf]
    %v6355 = vld [vmem:[#allocation10 + $0x18] sm:$0xf]
    %v6356 = vld [vmem:[#allocation10 + $0x1c] sm:$0xf]
    %v6357 = vld [vmem:[#allocation10 + $0x20] sm:$0xf]
    %v6358 = vld [vmem:[#allocation10 + $0x24] sm:$0xf]
    %v6359 = vld [vmem:[#allocation10 + $0x28] sm:$0xf]
    %v6360 = vld [vmem:[#allocation10 + $0x2c] sm:$0xf]
    %v6361 = vld [vmem:[#allocation10 + $0x30] sm:$0xf]
    %v6362 = vld [vmem:[#allocation10 + $0x34] sm:$0xf]
    %v6363 = vld [vmem:[#allocation10 + $0x38] sm:$0xf]
    %v6364 = vld [vmem:[#allocation10 + $0x3c] sm:$0xf]
    %v6365 = vld [vmem:[%s14] sm:$0x1]
    %v6367 = vlaneseq
    %v6368 = vshrl.u32 %v6367, 7
    %v6369 = vsub.s32 0, %v6368
    %v6370 = vrot.slane %v6365, %v6369
    %v6388 = vunpack.c.l.b16 %v6349
    %v6389 = vunpack.c.l.b16 %v6350
    %v6390 = vunpack.c.l.b16 %v6351
    %v6391 = vunpack.c.l.b16 %v6352
    %v6392 = vunpack.c.l.b16 %v6353
    %v6393 = vunpack.c.l.b16 %v6354
    %v6394 = vunpack.c.l.b16 %v6355
    %v6395 = vunpack.c.l.b16 %v6356
    %v6396 = vunpack.c.l.b16 %v6357
    %v6397 = vunpack.c.l.b16 %v6358
    %v6398 = vunpack.c.l.b16 %v6359
    %v6399 = vunpack.c.l.b16 %v6360
    %v6400 = vunpack.c.l.b16 %v6361
    %v6401 = vunpack.c.l.b16 %v6362
    %v6402 = vunpack.c.l.b16 %v6363
    %v6403 = vunpack.c.l.b16 %v6364
    %v6404 = vpack.c.b16 %v6389, %v6388
    %v6405 = vpack.c.b16 %v6391, %v6390
    %v6406 = vpack.c.b16 %v6393, %v6392
    %v6407 = vpack.c.b16 %v6395, %v6394
    %v6408 = vpack.c.b16 %v6397, %v6396
    %v6409 = vpack.c.b16 %v6399, %v6398
    %v6410 = vpack.c.b16 %v6401, %v6400
    %v6411 = vpack.c.b16 %v6403, %v6402
    %6420 = vmatprep.subr.bf16.mxu0 0
    %6421 = vmatpush1.bf16.msra.mxu0 %v6404
    %6422 = vmatprep.subr.bf16.mxu0 0
    %6423 = vmatpush1.bf16.msra.mxu0 %v6405
    %6424 = vmatprep.subr.bf16.mxu0 0
    %6425 = vmatpush1.bf16.msra.mxu0 %v6406
    %6426 = vmatprep.subr.bf16.mxu0 0
    %6427 = vmatpush1.bf16.msra.mxu0 %v6407
    %6428 = vmatprep.subr.bf16.mxu0 0
    %6429 = vmatpush1.bf16.msra.mxu0 %v6408
    %6430 = vmatprep.subr.bf16.mxu0 0
    %6431 = vmatpush1.bf16.msra.mxu0 %v6409
    %6432 = vmatprep.subr.bf16.mxu0 0
    %6433 = vmatpush1.bf16.msra.mxu0 %v6410
    %6434 = vmatprep.subr.bf16.mxu0 0
    %6435 = vmatpush1.bf16.msra.mxu0 %v6411
    %6436 = vmatprep.subr.bf16.mxu0 0
    %6437 = vmatpush1.bf16.msra.mxu0 0
    %6438 = vmatprep.subr.bf16.mxu0 0
    %6439 = vmatpush1.bf16.msra.mxu0 0
    %6440 = vmatprep.subr.bf16.mxu0 0
    %6441 = vmatpush1.bf16.msra.mxu0 0
    %6442 = vmatprep.subr.bf16.mxu0 0
    %6443 = vmatpush1.bf16.msra.mxu0 0
    %6444 = vmatprep.subr.bf16.mxu0 0
    %6445 = vmatpush1.bf16.msra.mxu0 0
    %6446 = vmatprep.subr.bf16.mxu0 0
    %6447 = vmatpush1.bf16.msra.mxu0 0
    %6448 = vmatprep.subr.bf16.mxu0 0
    %6449 = vmatpush1.bf16.msra.mxu0 0
    %6450 = vmatprep.subr.bf16.mxu0 0
    %6451 = vmatpush1.bf16.msra.mxu0 0
    %6452 = vmatprep.mubr.bf16.mxu0 0
    %6453 = vmatmul.mubr.bf16.gmra.mrb[0].mxu0 %v6317
    %v6454 = vpop.f32.mrb[0].mxu0
    %v6455 = vadd.f32 %v6370, %v6454
    %v6456 = vpop.f32.mrb[0].mxu0
    %v6457 = vpop.f32.mrb[0].mxu0
    %v6458 = vadd.f32 %v6370, %v6457
    %v6459 = vpop.f32.mrb[0].mxu0
    %6460 = vmatprep.mubr.bf16.mxu0 0
    %6461 = vmatmul.mubr.bf16.gmra.mrb[0].mxu0 %v6318
    %v6462 = vpop.f32.mrb[0].mxu0
    %v6463 = vadd.f32 %v6370, %v6462
    %v6464 = vpop.f32.mrb[0].mxu0
    %v6465 = vpop.f32.mrb[0].mxu0
    %v6466 = vadd.f32 %v6370, %v6465
    %v6467 = vpop.f32.mrb[0].mxu0
    %6468 = vmatprep.mubr.bf16.mxu0 0
    %6469 = vmatmul.mubr.bf16.gmra.mrb[0].mxu0 %v6319
    %v6470 = vpop.f32.mrb[0].mxu0
    %v6471 = vadd.f32 %v6370, %v6470
    %v6472 = vpop.f32.mrb[0].mxu0
    %v6473 = vpop.f32.mrb[0].mxu0
    %v6474 = vadd.f32 %v6370, %v6473
    %v6475 = vpop.f32.mrb[0].mxu0
    %6476 = vmatprep.mubr.bf16.mxu0 0
    %6477 = vmatmul.mubr.bf16.gmra.mrb[0].mxu0 %v6320
    %v6478 = vpop.f32.mrb[0].mxu0
    %v6479 = vadd.f32 %v6370, %v6478
    %v6480 = vpop.f32.mrb[0].mxu0
    %v6481 = vpop.f32.mrb[0].mxu0
    %v6482 = vadd.f32 %v6370, %v6481
    %v6483 = vpop.f32.mrb[0].mxu0
    %6484 = vmatprep.mubr.bf16.mxu0 0
    %6485 = vmatmul.mubr.bf16.gmra.mrb[0].mxu0 %v6321
    %v6486 = vpop.f32.mrb[0].mxu0
    %v6487 = vadd.f32 %v6370, %v6486
    %v6488 = vpop.f32.mrb[0].mxu0
    %v6489 = vpop.f32.mrb[0].mxu0
    %v6490 = vadd.f32 %v6370, %v6489
    %v6491 = vpop.f32.mrb[0].mxu0
    %6492 = vmatprep.mubr.bf16.mxu0 0
    %6493 = vmatmul.mubr.bf16.gmra.mrb[0].mxu0 %v6322
    %v6494 = vpop.f32.mrb[0].mxu0
    %v6495 = vadd.f32 %v6370, %v6494
    %v6496 = vpop.f32.mrb[0].mxu0
    %v6497 = vpop.f32.mrb[0].mxu0
    %v6498 = vadd.f32 %v6370, %v6497
    %v6499 = vpop.f32.mrb[0].mxu0
    %6500 = vmatprep.mubr.bf16.mxu0 0
    %6501 = vmatmul.mubr.bf16.gmra.mrb[0].mxu0 %v6323
    %v6502 = vpop.f32.mrb[0].mxu0
    %v6503 = vadd.f32 %v6370, %v6502
    %v6504 = vpop.f32.mrb[0].mxu0
    %v6505 = vpop.f32.mrb[0].mxu0
    %v6506 = vadd.f32 %v6370, %v6505
    %v6507 = vpop.f32.mrb[0].mxu0
    %6508 = vmatprep.mubr.bf16.mxu0 0
    %6509 = vmatmul.mubr.bf16.gmra.mrb[0].mxu0 %v6324
    %v6510 = vpop.f32.mrb[0].mxu0
    %v6511 = vadd.f32 %v6370, %v6510
    %v6512 = vpop.f32.mrb[0].mxu0
    %v6513 = vpop.f32.mrb[0].mxu0
    %v6514 = vadd.f32 %v6370, %v6513
    %v6515 = vpop.f32.mrb[0].mxu0
    %6516 = vmatprep.mubr.bf16.mxu0 0
    %6517 = vmatmul.mubr.bf16.gmra.mrb[0].mxu0 %v6325
    %v6518 = vpop.f32.mrb[0].mxu0
    %v6519 = vadd.f32 %v6370, %v6518
    %v6520 = vpop.f32.mrb[0].mxu0
    %v6521 = vpop.f32.mrb[0].mxu0
    %v6522 = vadd.f32 %v6370, %v6521
    %v6523 = vpop.f32.mrb[0].mxu0
    %6524 = vmatprep.mubr.bf16.mxu0 0
    %6525 = vmatmul.mubr.bf16.gmra.mrb[0].mxu0 %v6326
    %v6526 = vpop.f32.mrb[0].mxu0
    %v6527 = vadd.f32 %v6370, %v6526
    %v6528 = vpop.f32.mrb[0].mxu0
    %v6529 = vpop.f32.mrb[0].mxu0
    %v6530 = vadd.f32 %v6370, %v6529
    %v6531 = vpop.f32.mrb[0].mxu0
    %6532 = vmatprep.mubr.bf16.mxu0 0
    %6533 = vmatmul.mubr.bf16.gmra.mrb[0].mxu0 %v6327
    %v6534 = vpop.f32.mrb[0].mxu0
    %v6535 = vadd.f32 %v6370, %v6534
    %v6536 = vpop.f32.mrb[0].mxu0
    %v6537 = vpop.f32.mrb[0].mxu0
    %v6538 = vadd.f32 %v6370, %v6537
    %v6539 = vpop.f32.mrb[0].mxu0
    %6540 = vmatprep.mubr.bf16.mxu0 0
    %6541 = vmatmul.mubr.bf16.gmra.mrb[0].mxu0 %v6328
    %v6542 = vpop.f32.mrb[0].mxu0
    %v6543 = vadd.f32 %v6370, %v6542
    %v6544 = vpop.f32.mrb[0].mxu0
    %v6545 = vpop.f32.mrb[0].mxu0
    %v6546 = vadd.f32 %v6370, %v6545
    %v6547 = vpop.f32.mrb[0].mxu0
    %6548 = vmatprep.mubr.bf16.mxu0 0
    %6549 = vmatmul.mubr.bf16.gmra.mrb[0].mxu0 %v6329
    %v6550 = vpop.f32.mrb[0].mxu0
    %v6551 = vadd.f32 %v6370, %v6550
    %v6552 = vpop.f32.mrb[0].mxu0
    %v6553 = vpop.f32.mrb[0].mxu0
    %v6554 = vadd.f32 %v6370, %v6553
    %v6555 = vpop.f32.mrb[0].mxu0
    %6556 = vmatprep.mubr.bf16.mxu0 0
    %6557 = vmatmul.mubr.bf16.gmra.mrb[0].mxu0 %v6330
    %v6558 = vpop.f32.mrb[0].mxu0
    %v6559 = vadd.f32 %v6370, %v6558
    %v6560 = vpop.f32.mrb[0].mxu0
    %v6561 = vpop.f32.mrb[0].mxu0
    %v6562 = vadd.f32 %v6370, %v6561
    %v6563 = vpop.f32.mrb[0].mxu0
    %6564 = vmatprep.mubr.bf16.mxu0 0
    %6565 = vmatmul.mubr.bf16.gmra.mrb[0].mxu0 %v6331
    %v6566 = vpop.f32.mrb[0].mxu0
    %v6567 = vadd.f32 %v6370, %v6566
    %v6568 = vpop.f32.mrb[0].mxu0
    %v6569 = vpop.f32.mrb[0].mxu0
    %v6570 = vadd.f32 %v6370, %v6569
    %v6571 = vpop.f32.mrb[0].mxu0
    %6572 = vmatprep.mubr.bf16.mxu0 0
    %6573 = vmatmul.mubr.bf16.gmra.mrb[0].mxu0 %v6332
    %v6574 = vpop.f32.mrb[0].mxu0
    %v6575 = vadd.f32 %v6370, %v6574
    %v6576 = vpop.f32.mrb[0].mxu0
    %v6577 = vpop.f32.mrb[0].mxu0
    %v6578 = vadd.f32 %v6370, %v6577
    %v6579 = vpop.f32.mrb[0].mxu0
    %6580 = vmatprep.mubr.bf16.mxu0 0
    %6581 = vmatmul.mubr.bf16.gmra.mrb[0].mxu0 %v6333
    %v6582 = vpop.f32.mrb[0].mxu0
    %v6583 = vadd.f32 %v6370, %v6582
    %v6584 = vpop.f32.mrb[0].mxu0
    %v6585 = vpop.f32.mrb[0].mxu0
    %v6586 = vadd.f32 %v6370, %v6585
    %v6587 = vpop.f32.mrb[0].mxu0
    %6588 = vmatprep.mubr.bf16.mxu0 0
    %6589 = vmatmul.mubr.bf16.gmra.mrb[0].mxu0 %v6334
    %v6590 = vpop.f32.mrb[0].mxu0
    %v6591 = vadd.f32 %v6370, %v6590
    %v6592 = vpop.f32.mrb[0].mxu0
    %v6593 = vpop.f32.mrb[0].mxu0
    %v6594 = vadd.f32 %v6370, %v6593
    %v6595 = vpop.f32.mrb[0].mxu0
    %6596 = vmatprep.mubr.bf16.mxu0 0
    %6597 = vmatmul.mubr.bf16.gmra.mrb[0].mxu0 %v6335
    %v6598 = vpop.f32.mrb[0].mxu0
    %v6599 = vadd.f32 %v6370, %v6598
    %v6600 = vpop.f32.mrb[0].mxu0
    %v6601 = vpop.f32.mrb[0].mxu0
    %v6602 = vadd.f32 %v6370, %v6601
    %v6603 = vpop.f32.mrb[0].mxu0
    %6604 = vmatprep.mubr.bf16.mxu0 0
    %6605 = vmatmul.mubr.bf16.gmra.mrb[0].mxu0 %v6336
    %v6606 = vpop.f32.mrb[0].mxu0
    %v6607 = vadd.f32 %v6370, %v6606
    %v6608 = vpop.f32.mrb[0].mxu0
    %v6609 = vpop.f32.mrb[0].mxu0
    %v6610 = vadd.f32 %v6370, %v6609
    %v6611 = vpop.f32.mrb[0].mxu0
    %6612 = vmatprep.mubr.bf16.mxu0 0
    %6613 = vmatmul.mubr.bf16.gmra.mrb[0].mxu0 %v6337
    %v6614 = vpop.f32.mrb[0].mxu0
    %v6615 = vadd.f32 %v6370, %v6614
    %v6616 = vpop.f32.mrb[0].mxu0
    %v6617 = vpop.f32.mrb[0].mxu0
    %v6618 = vadd.f32 %v6370, %v6617
    %v6619 = vpop.f32.mrb[0].mxu0
    %6620 = vmatprep.mubr.bf16.mxu0 0
    %6621 = vmatmul.mubr.bf16.gmra.mrb[0].mxu0 %v6338
    %v6622 = vpop.f32.mrb[0].mxu0
    %v6623 = vadd.f32 %v6370, %v6622
    %v6624 = vpop.f32.mrb[0].mxu0
    %v6625 = vpop.f32.mrb[0].mxu0
    %v6626 = vadd.f32 %v6370, %v6625
    %v6627 = vpop.f32.mrb[0].mxu0
    %6628 = vmatprep.mubr.bf16.mxu0 0
    %6629 = vmatmul.mubr.bf16.gmra.mrb[0].mxu0 %v6339
    %v6630 = vpop.f32.mrb[0].mxu0
    %v6631 = vadd.f32 %v6370, %v6630
    %v6632 = vpop.f32.mrb[0].mxu0
    %v6633 = vpop.f32.mrb[0].mxu0
    %v6634 = vadd.f32 %v6370, %v6633
    %v6635 = vpop.f32.mrb[0].mxu0
    %6636 = vmatprep.mubr.bf16.mxu0 0
    %6637 = vmatmul.mubr.bf16.gmra.mrb[0].mxu0 %v6340
    %v6638 = vpop.f32.mrb[0].mxu0
    %v6639 = vadd.f32 %v6370, %v6638
    %v6640 = vpop.f32.mrb[0].mxu0
    %v6641 = vpop.f32.mrb[0].mxu0
    %v6642 = vadd.f32 %v6370, %v6641
    %v6643 = vpop.f32.mrb[0].mxu0
    %6644 = vmatprep.mubr.bf16.mxu0 0
    %6645 = vmatmul.mubr.bf16.gmra.mrb[0].mxu0 %v6341
    %v6646 = vpop.f32.mrb[0].mxu0
    %v6647 = vadd.f32 %v6370, %v6646
    %v6648 = vpop.f32.mrb[0].mxu0
    %v6649 = vpop.f32.mrb[0].mxu0
    %v6650 = vadd.f32 %v6370, %v6649
    %v6651 = vpop.f32.mrb[0].mxu0
    %6652 = vmatprep.mubr.bf16.mxu0 0
    %6653 = vmatmul.mubr.bf16.gmra.mrb[0].mxu0 %v6342
    %v6654 = vpop.f32.mrb[0].mxu0
    %v6655 = vadd.f32 %v6370, %v6654
    %v6656 = vpop.f32.mrb[0].mxu0
    %v6657 = vpop.f32.mrb[0].mxu0
    %v6658 = vadd.f32 %v6370, %v6657
    %v6659 = vpop.f32.mrb[0].mxu0
    %6660 = vmatprep.mubr.bf16.mxu0 0
    %6661 = vmatmul.mubr.bf16.gmra.mrb[0].mxu0 %v6343
    %v6662 = vpop.f32.mrb[0].mxu0
    %v6663 = vadd.f32 %v6370, %v6662
    %v6664 = vpop.f32.mrb[0].mxu0
    %v6665 = vpop.f32.mrb[0].mxu0
    %v6666 = vadd.f32 %v6370, %v6665
    %v6667 = vpop.f32.mrb[0].mxu0
    %6668 = vmatprep.mubr.bf16.mxu0 0
    %6669 = vmatmul.mubr.bf16.gmra.mrb[0].mxu0 %v6344
    %v6670 = vpop.f32.mrb[0].mxu0
    %v6671 = vadd.f32 %v6370, %v6670
    %v6672 = vpop.f32.mrb[0].mxu0
    %v6673 = vpop.f32.mrb[0].mxu0
    %v6674 = vadd.f32 %v6370, %v6673
    %v6675 = vpop.f32.mrb[0].mxu0
    %6676 = vmatprep.mubr.bf16.mxu0 0
    %6677 = vmatmul.mubr.bf16.gmra.mrb[0].mxu0 %v6345
    %v6678 = vpop.f32.mrb[0].mxu0
    %v6679 = vadd.f32 %v6370, %v6678
    %v6680 = vpop.f32.mrb[0].mxu0
    %v6681 = vpop.f32.mrb[0].mxu0
    %v6682 = vadd.f32 %v6370, %v6681
    %v6683 = vpop.f32.mrb[0].mxu0
    %6684 = vmatprep.mubr.bf16.mxu0 0
    %6685 = vmatmul.mubr.bf16.gmra.mrb[0].mxu0 %v6346
    %v6686 = vpop.f32.mrb[0].mxu0
    %v6687 = vadd.f32 %v6370, %v6686
    %v6688 = vpop.f32.mrb[0].mxu0
    %v6689 = vpop.f32.mrb[0].mxu0
    %v6690 = vadd.f32 %v6370, %v6689
    %v6691 = vpop.f32.mrb[0].mxu0
    %6692 = vmatprep.mubr.bf16.mxu0 0
    %6693 = vmatmul.mubr.bf16.gmra.mrb[0].mxu0 %v6347
    %v6694 = vpop.f32.mrb[0].mxu0
    %v6695 = vadd.f32 %v6370, %v6694
    %v6696 = vpop.f32.mrb[0].mxu0
    %v6697 = vpop.f32.mrb[0].mxu0
    %v6698 = vadd.f32 %v6370, %v6697
    %v6699 = vpop.f32.mrb[0].mxu0
    %6700 = vmatprep.mubr.bf16.mxu0 0
    %6701 = vmatmul.mubr.bf16.gmra.mrb[0].mxu0 %v6348
    %v6702 = vpop.f32.mrb[0].mxu0
    %v6703 = vadd.f32 %v6370, %v6702
    %v6704 = vpop.f32.mrb[0].mxu0
    %v6705 = vpop.f32.mrb[0].mxu0
    %v6706 = vadd.f32 %v6370, %v6705
    %v6707 = vpop.f32.mrb[0].mxu0
    %6708 = vdwg.mxu0
    %v6709 = vadd.f32 %v6063, %v6455
    %v6710 = vadd.f32 %v6066, %v6458
    %v6711 = vadd.f32 %v6071, %v6463
    %v6712 = vadd.f32 %v6074, %v6466
    %v6713 = vadd.f32 %v6079, %v6471
    %v6714 = vadd.f32 %v6082, %v6474
    %v6715 = vadd.f32 %v6087, %v6479
    %v6716 = vadd.f32 %v6090, %v6482
    %v6717 = vadd.f32 %v6095, %v6487
    %v6718 = vadd.f32 %v6098, %v6490
    %v6719 = vadd.f32 %v6103, %v6495
    %v6720 = vadd.f32 %v6106, %v6498
    %v6721 = vadd.f32 %v6111, %v6503
    %v6722 = vadd.f32 %v6114, %v6506
    %v6723 = vadd.f32 %v6119, %v6511
    %v6724 = vadd.f32 %v6122, %v6514
    %v6725 = vadd.f32 %v6127, %v6519
    %v6726 = vadd.f32 %v6130, %v6522
    %v6727 = vadd.f32 %v6135, %v6527
    %v6728 = vadd.f32 %v6138, %v6530
    %v6729 = vadd.f32 %v6143, %v6535
    %v6730 = vadd.f32 %v6146, %v6538
    %v6731 = vadd.f32 %v6151, %v6543
    %v6732 = vadd.f32 %v6154, %v6546
    %v6733 = vadd.f32 %v6159, %v6551
    %v6734 = vadd.f32 %v6162, %v6554
    %v6735 = vadd.f32 %v6167, %v6559
    %v6736 = vadd.f32 %v6170, %v6562
    %v6737 = vadd.f32 %v6175, %v6567
    %v6738 = vadd.f32 %v6178, %v6570
    %v6739 = vadd.f32 %v6183, %v6575
    %v6740 = vadd.f32 %v6186, %v6578
    %v6741 = vadd.f32 %v6191, %v6583
    %v6742 = vadd.f32 %v6194, %v6586
    %v6743 = vadd.f32 %v6199, %v6591
    %v6744 = vadd.f32 %v6202, %v6594
    %v6745 = vadd.f32 %v6207, %v6599
    %v6746 = vadd.f32 %v6210, %v6602
    %v6747 = vadd.f32 %v6215, %v6607
    %v6748 = vadd.f32 %v6218, %v6610
    %v6749 = vadd.f32 %v6223, %v6615
    %v6750 = vadd.f32 %v6226, %v6618
    %v6751 = vadd.f32 %v6231, %v6623
    %v6752 = vadd.f32 %v6234, %v6626
    %v6753 = vadd.f32 %v6239, %v6631
    %v6754 = vadd.f32 %v6242, %v6634
    %v6755 = vadd.f32 %v6247, %v6639
    %v6756 = vadd.f32 %v6250, %v6642
    %v6757 = vadd.f32 %v6255, %v6647
    %v6758 = vadd.f32 %v6258, %v6650
    %v6759 = vadd.f32 %v6263, %v6655
    %v6760 = vadd.f32 %v6266, %v6658
    %v6761 = vadd.f32 %v6271, %v6663
    %v6762 = vadd.f32 %v6274, %v6666
    %v6763 = vadd.f32 %v6279, %v6671
    %v6764 = vadd.f32 %v6282, %v6674
    %v6765 = vadd.f32 %v6287, %v6679
    %v6766 = vadd.f32 %v6290, %v6682
    %v6767 = vadd.f32 %v6295, %v6687
    %v6768 = vadd.f32 %v6298, %v6690
    %v6769 = vadd.f32 %v6303, %v6695
    %v6770 = vadd.f32 %v6306, %v6698
    %v6771 = vadd.f32 %v6311, %v6703
    %v6772 = vadd.f32 %v6314, %v6706
    %6773 = vst [vmem:[#allocation11] sm:$0xff] %v6709
    %6774 = vst [vmem:[#allocation11 + $0x8] sm:$0xff] %v6710
    %6775 = vst [vmem:[#allocation11 + $0x10] sm:$0xff] %v6711
    %6776 = vst [vmem:[#allocation11 + $0x18] sm:$0xff] %v6712
    %6777 = vst [vmem:[#allocation11 + $0x20] sm:$0xff] %v6713
    %6778 = vst [vmem:[#allocation11 + $0x28] sm:$0xff] %v6714
    %6779 = vst [vmem:[#allocation11 + $0x30] sm:$0xff] %v6715
    %6780 = vst [vmem:[#allocation11 + $0x38] sm:$0xff] %v6716
    %6781 = vst [vmem:[#allocation11 + $0x40] sm:$0xff] %v6717
    %6782 = vst [vmem:[#allocation11 + $0x48] sm:$0xff] %v6718
    %6783 = vst [vmem:[#allocation11 + $0x50] sm:$0xff] %v6719
    %6784 = vst [vmem:[#allocation11 + $0x58] sm:$0xff] %v6720
    %6785 = vst [vmem:[#allocation11 + $0x60] sm:$0xff] %v6721
    %6786 = vst [vmem:[#allocation11 + $0x68] sm:$0xff] %v6722
    %6787 = vst [vmem:[#allocation11 + $0x70] sm:$0xff] %v6723
    %6788 = vst [vmem:[#allocation11 + $0x78] sm:$0xff] %v6724
    %6789 = vst [vmem:[#allocation11 + $0x80] sm:$0xff] %v6725
    %6790 = vst [vmem:[#allocation11 + $0x88] sm:$0xff] %v6726
    %6791 = vst [vmem:[#allocation11 + $0x90] sm:$0xff] %v6727
    %6792 = vst [vmem:[#allocation11 + $0x98] sm:$0xff] %v6728
    %6793 = vst [vmem:[#allocation11 + $0xa0] sm:$0xff] %v6729
    %6794 = vst [vmem:[#allocation11 + $0xa8] sm:$0xff] %v6730
    %6795 = vst [vmem:[#allocation11 + $0xb0] sm:$0xff] %v6731
    %6796 = vst [vmem:[#allocation11 + $0xb8] sm:$0xff] %v6732
    %6797 = vst [vmem:[#allocation11 + $0xc0] sm:$0xff] %v6733
    %6798 = vst [vmem:[#allocation11 + $0xc8] sm:$0xff] %v6734
    %6799 = vst [vmem:[#allocation11 + $0xd0] sm:$0xff] %v6735
    %6800 = vst [vmem:[#allocation11 + $0xd8] sm:$0xff] %v6736
    %6801 = vst [vmem:[#allocation11 + $0xe0] sm:$0xff] %v6737
    %6802 = vst [vmem:[#allocation11 + $0xe8] sm:$0xff] %v6738
    %6803 = vst [vmem:[#allocation11 + $0xf0] sm:$0xff] %v6739
    %6804 = vst [vmem:[#allocation11 + $0xf8] sm:$0xff] %v6740
    %6805 = vst [vmem:[#allocation11 + $0x100] sm:$0xff] %v6741
    %6806 = vst [vmem:[#allocation11 + $0x108] sm:$0xff] %v6742
    %6807 = vst [vmem:[#allocation11 + $0x110] sm:$0xff] %v6743
    %6808 = vst [vmem:[#allocation11 + $0x118] sm:$0xff] %v6744
    %6809 = vst [vmem:[#allocation11 + $0x120] sm:$0xff] %v6745
    %6810 = vst [vmem:[#allocation11 + $0x128] sm:$0xff] %v6746
    %6811 = vst [vmem:[#allocation11 + $0x130] sm:$0xff] %v6747
    %6812 = vst [vmem:[#allocation11 + $0x138] sm:$0xff] %v6748
    %6813 = vst [vmem:[#allocation11 + $0x140] sm:$0xff] %v6749
    %6814 = vst [vmem:[#allocation11 + $0x148] sm:$0xff] %v6750
    %6815 = vst [vmem:[#allocation11 + $0x150] sm:$0xff] %v6751
    %6816 = vst [vmem:[#allocation11 + $0x158] sm:$0xff] %v6752
    %6817 = vst [vmem:[#allocation11 + $0x160] sm:$0xff] %v6753
    %6818 = vst [vmem:[#allocation11 + $0x168] sm:$0xff] %v6754
    %6819 = vst [vmem:[#allocation11 + $0x170] sm:$0xff] %v6755
    %6820 = vst [vmem:[#allocation11 + $0x178] sm:$0xff] %v6756
    %6821 = vst [vmem:[#allocation11 + $0x180] sm:$0xff] %v6757
    %6822 = vst [vmem:[#allocation11 + $0x188] sm:$0xff] %v6758
    %6823 = vst [vmem:[#allocation11 + $0x190] sm:$0xff] %v6759
    %6824 = vst [vmem:[#allocation11 + $0x198] sm:$0xff] %v6760
    %6825 = vst [vmem:[#allocation11 + $0x1a0] sm:$0xff] %v6761
    %6826 = vst [vmem:[#allocation11 + $0x1a8] sm:$0xff] %v6762
    %6827 = vst [vmem:[#allocation11 + $0x1b0] sm:$0xff] %v6763
    %6828 = vst [vmem:[#allocation11 + $0x1b8] sm:$0xff] %v6764
    %6829 = vst [vmem:[#allocation11 + $0x1c0] sm:$0xff] %v6765
    %6830 = vst [vmem:[#allocation11 + $0x1c8] sm:$0xff] %v6766
    %6831 = vst [vmem:[#allocation11 + $0x1d0] sm:$0xff] %v6767
    %6832 = vst [vmem:[#allocation11 + $0x1d8] sm:$0xff] %v6768
    %6833 = vst [vmem:[#allocation11 + $0x1e0] sm:$0xff] %v6769
    %6834 = vst [vmem:[#allocation11 + $0x1e8] sm:$0xff] %v6770
    %6835 = vst [vmem:[#allocation11 + $0x1f0] sm:$0xff] %v6771
    %6836 = vst [vmem:[#allocation11 + $0x1f8] sm:$0xff] %v6772
    // Predicated region
    $region82: #{tpu_custom_call.1} parent=1 // pred_check
      _
    $region83: #{tpu_custom_call.1} parent=1 // pred_check_branch
      %6838 = sbr.rel (0) target = $region85
    $region84: #{tpu_custom_call.1} parent=1 // pred_region
      %s6840 = ssub.s32 8192, 8192
      %6841 = vsyncadd [#allocation4], %s6840
      %s6842 = sshll.u32 [#allocation11], 4
      %s6843 = int_to_ptr.vmem [resolvable:$true] %s6842
      %6848 = dma.vmem_to_hbm [thread:$0]  %s6843, 8192, %s15, [#allocation4], 128, 128, 8
    $region85: #{tpu_custom_call.1} parent=1 // pred_fallthru
      _
    // Predicated region
    $region86: #{tpu_custom_call.1} parent=1 // pred_check
      _
    $region87: #{tpu_custom_call.1} parent=1 // pred_check_branch
      %6850 = sbr.rel (0) target = $region89
    $region88: #{tpu_custom_call.1} parent=1 // pred_region
      %6851 = dma.done [#allocation4], 8192
    $region89: #{tpu_custom_call.1} parent=1 // pred_fallthru
      _
    %6852 = vsyncpa [#allocation3], 1
    %6853 = vsyncpa [#allocation6], 1
    %6854 = vsyncpa [#allocation9], 1
    %6855 = vsyncpa [#allocation4], 1

</llo_original>
